<compile_context>
chip_gen: v5e
topology: v5e:2x2
jax: 0.10.0
libtpu: 0.0.40
codegen_flags: <defaults>
</compile_context>

<pallas_src>
import functools

import jax
import jax.numpy as jnp
from jax.experimental import pallas as pl
from jax.experimental.pallas import tpu as pltpu

FEAT_C = 1280           # mobilenet_v2 feature channels (fc1 in_features)
HIDDEN = 128            # fc1 out_features
NUM_CLASSES = 2         # fc2 out_features
LANE_OUT = 128          # lane-dense padded output width
DROP_P = 0.5
X_BLOCK_BUDGET = 8 << 20   # target bytes per x block (BlockSpec double-buffers -> 2x)
VMEM_CAP = 48 << 20        # under v7x's 64 MiB/TC physical VMEM; v5e/v6e have 128 MiB


def _head_kernel(x_ref, w1_ref, b1_ref, w2_ref, b2_ref, mask_ref, out_ref,
                 acc_ref, *, inv_hw, rem, thw, apply_dropout):
    # NOTE: program_id / num_programs only at top level (inside pl.when bodies
    # they break the CPU interpret fallback).
    s = pl.program_id(1)
    ns = pl.num_programs(1)

    @pl.when(s == 0)
    def _():
        acc_ref[...] = jnp.zeros_like(acc_ref)

    x = x_ref[...]                                          # [TB, 1280, THW]
    if rem:
        # Ragged final HW tile: lanes >= rem are out-of-range reads; zero them
        # in-register instead of padding the feature map in HBM. `rem` is a
        # static Python int, so this code only exists when needed.
        lane = jax.lax.broadcasted_iota(jnp.int32, x.shape, dimension=2)
        limit = jnp.where(s == ns - 1, rem, thw)
        x = jnp.where(lane < limit, x, jnp.zeros_like(x))
    # Spatial sum accumulated in f32 without materializing an f32 copy of x.
    acc_ref[...] += jnp.sum(x, axis=-1, dtype=jnp.float32)

    @pl.when(s == ns - 1)
    def _():
        pooled = acc_ref[...] * inv_hw                      # [TB, 1280] f32 mean
        h = jnp.dot(pooled.astype(w1_ref.dtype), w1_ref[...],
                    preferred_element_type=jnp.float32) + b1_ref[...]
        h = jnp.maximum(h, 0.0)                             # ReLU
        if apply_dropout:                                   # inverted dropout
            h = h * mask_ref[...]
        out = jnp.dot(h.astype(w2_ref.dtype), w2_ref[...],
                      preferred_element_type=jnp.float32) + b2_ref[...]
        out_ref[...] = out.astype(out_ref.dtype)


def _pick_batch_tile(B):
    if B <= 16:
        return B                      # tiny batches: single tile (== full dim)
    if B <= 128:
        # Aim for >= 2 batch tiles (v7x has 2 TensorCores), TB a multiple of 8.
        tb = -(-B // 2)
        return min(-(-tb // 8) * 8, B)
    return 64


def init_head_params(key):
    """Deterministic init mirroring nn.Linear default (uniform(+-1/sqrt(fan_in)))."""
    k1, k2, k3, k4 = jax.random.split(key, 4)
    bound1 = 1.0 / (FEAT_C ** 0.5)
    bound2 = 1.0 / (HIDDEN ** 0.5)
    # Stored already transposed for the kernel: [in, out].
    w1 = jax.random.uniform(k1, (FEAT_C, HIDDEN), jnp.float32, -bound1, bound1)
    b1 = jax.random.uniform(k2, (1, HIDDEN), jnp.float32, -bound1, bound1)
    w2 = jax.random.uniform(k3, (HIDDEN, NUM_CLASSES), jnp.float32, -bound2, bound2)
    b2 = jax.random.uniform(k4, (1, NUM_CLASSES), jnp.float32, -bound2, bound2)
    return {"w1": w1, "b1": b1, "w2": w2, "b2": b2}


@functools.partial(jax.jit, static_argnames=("training", "x_block_budget"))
def fake_image_model_head(features_nchw, params, seed=0, training=False,
                          x_block_budget=X_BLOCK_BUDGET):
    """features_nchw: [B, 1280, H, W] backbone output (f32 or bf16)."""
    B, C, H, W = features_nchw.shape
    assert C == FEAT_C
    HW = H * W
    # Free reshape (no transpose, no extra HBM traffic): [B, C, HW].
    x = features_nchw.reshape(B, C, HW)
    itemsize = x.dtype.itemsize
    wdt = jnp.bfloat16 if x.dtype == jnp.bfloat16 else jnp.float32

    # --- batch tiling -------------------------------------------------------
    TB = _pick_batch_tile(B)
    col_bytes = FEAT_C * itemsize
    # Shrink TB (keeping a multiple of 8) if even a 128-lane-wide block would
    # blow the per-buffer budget (f32 activations / huge feature maps).
    while TB > 8 and TB % 8 == 0 and TB * col_bytes * min(HW, 128) > x_block_budget:
        TB -= 8
    nb = -(-B // TB)

    # --- HW tiling (no jnp.pad; ragged tail masked in-kernel) ----------------
    max_thw = x_block_budget // (TB * col_bytes)
    if HW <= max_thw:
        THW = HW
    else:
        THW = max(128, (max_thw // 128) * 128)      # lane-aligned HW tiles
        if THW >= HW:
            THW = HW
    ns = -(-HW // THW)
    rem = HW % THW
    inv_hw = float(1.0 / HW)

    # --- weights (activation dtype for the MXU; biases stay f32) -------------
    w1 = params["w1"].astype(wdt)                                       # [1280,128]
    b1 = params["b1"].astype(jnp.float32).reshape(1, HIDDEN)
    w2p = jnp.zeros((HIDDEN, LANE_OUT), jnp.float32)
    w2p = w2p.at[:, :NUM_CLASSES].set(params["w2"].astype(jnp.float32)).astype(wdt)
    b2p = jnp.zeros((1, LANE_OUT), jnp.float32)
    b2p = b2p.at[:, :NUM_CLASSES].set(
        params["b2"].astype(jnp.float32).reshape(1, NUM_CLASSES))

    # --- dropout mask (precomputed inverted dropout; interpret/TPU safe) -----
    if training:
        keep = jax.random.bernoulli(jax.random.PRNGKey(seed), 1.0 - DROP_P,
                                    (B, HIDDEN))
        mask = keep.astype(jnp.float32) * (1.0 / (1.0 - DROP_P))
        mask_spec = pl.BlockSpec((TB, HIDDEN), lambda b, s: (b, 0))
    else:
        mask = jnp.ones((1, HIDDEN), jnp.float32)   # unused in eval kernel path
        mask_spec = pl.BlockSpec((1, HIDDEN), lambda b, s: (0, 0))

    # --- specs ----------------------------------------------------------------
    x_spec = pl.BlockSpec((TB, FEAT_C, THW), lambda b, s: (b, 0, s))
    w1_spec = pl.BlockSpec((FEAT_C, HIDDEN), lambda b, s: (0, 0))
    b1_spec = pl.BlockSpec((1, HIDDEN), lambda b, s: (0, 0))
    w2_spec = pl.BlockSpec((HIDDEN, LANE_OUT), lambda b, s: (0, 0))
    b2_spec = pl.BlockSpec((1, LANE_OUT), lambda b, s: (0, 0))
    out_spec = pl.BlockSpec((TB, LANE_OUT), lambda b, s: (b, 0))
    out_shape = jax.ShapeDtypeStruct((B, LANE_OUT), jnp.float32)
    scratch = [pltpu.VMEM((TB, FEAT_C), jnp.float32)]

    # --- VMEM budget: 2x double-buffered x block + resident weights + out -----
    # (Weights are small; with <=~20 MiB total there is no need to force
    #  single-buffering them via pl.Buffered(1).)
    x_block_bytes = TB * FEAT_C * THW * itemsize
    resident = (w1.size * w1.dtype.itemsize + b1.size * 4
                + w2p.size * w2p.dtype.itemsize + b2p.size * 4
                + min(TB, mask.shape[0]) * HIDDEN * 4)
    vmem_limit = int(2 * x_block_bytes + 2 * resident
                     + 2 * TB * LANE_OUT * 4 + TB * FEAT_C * 4 + (4 << 20))
    vmem_limit = min(max(vmem_limit, 16 << 20), VMEM_CAP)

    compiler_params = pltpu.CompilerParams(
        dimension_semantics=("parallel", "arbitrary"),
        vmem_limit_bytes=vmem_limit)
    cost = pl.CostEstimate(
        flops=B * HW * FEAT_C + 2 * B * (FEAT_C * HIDDEN + HIDDEN * LANE_OUT),
        transcendentals=0,
        bytes_accessed=x.size * itemsize + resident + B * LANE_OUT * 4)

    kernel = functools.partial(_head_kernel, inv_hw=inv_hw, rem=int(rem),
                               thw=int(THW), apply_dropout=bool(training))
    grid_spec = pltpu.PrefetchScalarGridSpec(
        num_scalar_prefetch=0, grid=(nb, ns),
        in_specs=[x_spec, w1_spec, b1_spec, w2_spec, b2_spec, mask_spec],
        out_specs=out_spec, scratch_shapes=scratch)
    out_full = pl.pallas_call(
        kernel, out_shape=out_shape, grid_spec=grid_spec,
        compiler_params=compiler_params, cost_estimate=cost,
    )(x, w1, b1, w2p, b2p, mask)

    return out_full[:, :NUM_CLASSES]


def _reference_head(features_nchw, params):
    x = features_nchw.astype(jnp.float32)
    pooled = jnp.mean(x, axis=(2, 3))                          # [B, 1280]
    h = jnp.maximum(pooled @ params["w1"] + params["b1"], 0.0)
    return h @ params["w2"] + params["b2"]                     # dropout = identity (eval)


if __name__ == "__main__":
    key = jax.random.PRNGKey(0)
    k_feat, k_params, k_feat2 = jax.random.split(key, 3)
    params = init_head_params(k_params)

    # 1) Small bf16 feature map (B=2, 1280, 4, 4): single-step reduction.
    B, Hs, Ws = 2, 4, 4
    feats = jax.random.normal(
        k_feat, (B, FEAT_C, Hs, Ws), jnp.float32).astype(jnp.bfloat16)
    out = jax.block_until_ready(fake_image_model_head(feats, params))
    ref = _reference_head(feats, params)
    assert out.shape == (B, NUM_CLASSES)
    assert jnp.allclose(out, ref, atol=1e-2, rtol=1e-2), (out, ref)

    # 2) Multi-step HW reduction with a ragged final tile (tiny budget override).
    feats2 = jax.random.normal(
        k_feat2, (2, FEAT_C, 15, 15), jnp.float32).astype(jnp.bfloat16)
    out2 = jax.block_until_ready(
        fake_image_model_head(feats2, params, x_block_budget=64 << 10))
    ref2 = _reference_head(feats2, params)
    assert jnp.allclose(out2, ref2, atol=1e-2, rtol=1e-2), (out2, ref2)

    # 3) Ragged batch tile (B=20 -> TB=16, nb=2) with f32 activations.
    feats3 = jax.random.normal(
        jax.random.PRNGKey(7), (20, FEAT_C, 4, 4), jnp.float32)
    out3 = jax.block_until_ready(fake_image_model_head(feats3, params))
    ref3 = _reference_head(feats3, params)
    assert out3.shape == (20, NUM_CLASSES)
    assert jnp.allclose(out3, ref3, atol=1e-2, rtol=1e-2), (out3, ref3)

    # 4) Training path (inverted dropout via precomputed mask): shape + finite.
    out_tr = jax.block_until_ready(
        fake_image_model_head(feats, params, seed=123, training=True))
    assert out_tr.shape == (B, NUM_CLASSES)
    assert bool(jnp.all(jnp.isfinite(out_tr)))

    print("KERNEL_OK")
</pallas_src>

<mosaic_0001>
module attributes {stable_mosaic.version = 11 : i64} {
  func.func @_head_kernel(%arg0: i32, %arg1: i32, %arg2: memref<2x1280x16xbf16, #tpu.memory_space<vmem>>, %arg3: memref<1280x128xbf16, #tpu.memory_space<vmem>>, %arg4: memref<1x128xf32, #tpu.memory_space<vmem>>, %arg5: memref<128x128xbf16, #tpu.memory_space<vmem>>, %arg6: memref<1x128xf32, #tpu.memory_space<vmem>>, %arg7: memref<1x128xf32, #tpu.memory_space<vmem>>, %arg8: memref<2x128xf32, #tpu.memory_space<vmem>>, %arg9: memref<2x1280xf32, #tpu.memory_space<vmem>>) attributes {dimension_semantics = [#tpu.dimension_semantics<parallel>, #tpu.dimension_semantics<arbitrary>], iteration_bounds = array<i64: 1, 1>, scalar_prefetch = 0 : i64, scratch_operands = 1 : i64, tpu.core_type = #tpu.core_type<tc>, window_params = [{transform_indices = @transform_0, window_bounds = array<i64: 2, 1280, 16>}, {pipeline_mode = #tpu.pipeline_mode<synchronous>, transform_indices = @transform_1, window_bounds = array<i64: 1280, 128>}, {pipeline_mode = #tpu.pipeline_mode<synchronous>, transform_indices = @transform_2, window_bounds = array<i64: 1, 128>}, {pipeline_mode = #tpu.pipeline_mode<synchronous>, transform_indices = @transform_3, window_bounds = array<i64: 128, 128>}, {pipeline_mode = #tpu.pipeline_mode<synchronous>, transform_indices = @transform_4, window_bounds = array<i64: 1, 128>}, {pipeline_mode = #tpu.pipeline_mode<synchronous>, transform_indices = @transform_5, window_bounds = array<i64: 1, 128>}, {transform_indices = @transform_6, window_bounds = array<i64: 2, 128>}]} {
    %c0_i32 = arith.constant 0 : i32
    %0 = arith.cmpi eq, %arg1, %c0_i32 : i32
    %1 = arith.extui %0 : i1 to i32
    %c0_i32_0 = arith.constant 0 : i32
    %2 = arith.cmpi ne, %1, %c0_i32_0 : i32
    scf.if %2 {
      %cst_9 = arith.constant 0.000000e+00 : f32
      %12 = vector.broadcast %cst_9 : f32 to vector<2x1280xf32>
      %c0_10 = arith.constant 0 : index
      %c0_11 = arith.constant 0 : index
      %13 = vector.load %arg9[%c0_10, %c0_11] : memref<2x1280xf32, #tpu.memory_space<vmem>>, vector<2x1280xf32>
      tpu.vector_store %arg9[%c0_10, %c0_11], %12 {strides = array<i32>} : memref<2x1280xf32, #tpu.memory_space<vmem>>, vector<2x1280xf32>,
    } else {
    }
    %c0 = arith.constant 0 : index
    %c0_1 = arith.constant 0 : index
    %c0_2 = arith.constant 0 : index
    %3 = vector.load %arg2[%c0, %c0_1, %c0_2] : memref<2x1280x16xbf16, #tpu.memory_space<vmem>>, vector<2x1280x16xbf16>
    %c0_3 = arith.constant 0 : index
    %c0_4 = arith.constant 0 : index
    %4 = vector.load %arg9[%c0_3, %c0_4] : memref<2x1280xf32, #tpu.memory_space<vmem>>, vector<2x1280xf32>
    %5 = arith.extf %3 : vector<2x1280x16xbf16> to vector<2x1280x16xf32>
    %cst = arith.constant dense<0.000000e+00> : vector<2x1280xf32>
    %6 = vector.multi_reduction <add>, %5, %cst [2] : vector<2x1280x16xf32> to vector<2x1280xf32>
    %7 = arith.addf %4, %6 : vector<2x1280xf32>
    %c0_5 = arith.constant 0 : index
    %c0_6 = arith.constant 0 : index
    %8 = vector.load %arg9[%c0_5, %c0_6] : memref<2x1280xf32, #tpu.memory_space<vmem>>, vector<2x1280xf32>
    tpu.vector_store %arg9[%c0_5, %c0_6], %7 {strides = array<i32>} : memref<2x1280xf32, #tpu.memory_space<vmem>>, vector<2x1280xf32>,
    %c0_i32_7 = arith.constant 0 : i32
    %9 = arith.cmpi eq, %arg1, %c0_i32_7 : i32
    %10 = arith.extui %9 : i1 to i32
    %c0_i32_8 = arith.constant 0 : i32
    %11 = arith.cmpi ne, %10, %c0_i32_8 : i32
    scf.if %11 {
      %c0_9 = arith.constant 0 : index
      %c0_10 = arith.constant 0 : index
      %12 = vector.load %arg9[%c0_9, %c0_10] : memref<2x1280xf32, #tpu.memory_space<vmem>>, vector<2x1280xf32>
      %cst_11 = arith.constant 6.250000e-02 : f32
      %13 = vector.broadcast %cst_11 : f32 to vector<2x1280xf32>
      %14 = arith.mulf %12, %13 : vector<2x1280xf32>
      %15 = arith.truncf %14 : vector<2x1280xf32> to vector<2x1280xbf16>
      %c0_12 = arith.constant 0 : index
      %c0_13 = arith.constant 0 : index
      %16 = vector.load %arg3[%c0_12, %c0_13] : memref<1280x128xbf16, #tpu.memory_space<vmem>>, vector<1280x128xbf16>
      %cst_14 = arith.constant dense<0.000000e+00> : vector<2x128xf32>
      %17 = tpu.matmul %15, %16, %cst_14 {dimension_numbers = #tpu.dot_dimension_numbers<[1], [0], [0], [1], [0, 0, 1, 1], [], []>} : vector<2x1280xbf16>, vector<1280x128xbf16>, vector<2x128xf32> -> vector<2x128xf32>
      %c0_15 = arith.constant 0 : index
      %c0_16 = arith.constant 0 : index
      %18 = vector.load %arg4[%c0_15, %c0_16] : memref<1x128xf32, #tpu.memory_space<vmem>>, vector<1x128xf32>
      %19 = vector.broadcast %18 : vector<1x128xf32> to vector<2x128xf32>
      %20 = arith.addf %17, %19 : vector<2x128xf32>
      %cst_17 = arith.constant 0.000000e+00 : f32
      %21 = vector.broadcast %cst_17 : f32 to vector<2x128xf32>
      %22 = arith.maximumf %20, %21 : vector<2x128xf32>
      %23 = arith.truncf %22 : vector<2x128xf32> to vector<2x128xbf16>
      %c0_18 = arith.constant 0 : index
      %c0_19 = arith.constant 0 : index
      %24 = vector.load %arg5[%c0_18, %c0_19] : memref<128x128xbf16, #tpu.memory_space<vmem>>, vector<128x128xbf16>
      %cst_20 = arith.constant dense<0.000000e+00> : vector<2x128xf32>
      %25 = tpu.matmul %23, %24, %cst_20 {dimension_numbers = #tpu.dot_dimension_numbers<[1], [0], [0], [1], [0, 0, 1, 1], [], []>} : vector<2x128xbf16>, vector<128x128xbf16>, vector<2x128xf32> -> vector<2x128xf32>
      %c0_21 = arith.constant 0 : index
      %c0_22 = arith.constant 0 : index
      %26 = vector.load %arg6[%c0_21, %c0_22] : memref<1x128xf32, #tpu.memory_space<vmem>>, vector<1x128xf32>
      %27 = vector.broadcast %26 : vector<1x128xf32> to vector<2x128xf32>
      %28 = arith.addf %25, %27 : vector<2x128xf32>
      %c0_23 = arith.constant 0 : index
      %c0_24 = arith.constant 0 : index
      %29 = vector.load %arg8[%c0_23, %c0_24] : memref<2x128xf32, #tpu.memory_space<vmem>>, vector<2x128xf32>
      tpu.vector_store %arg8[%c0_23, %c0_24], %28 {strides = array<i32>} : memref<2x128xf32, #tpu.memory_space<vmem>>, vector<2x128xf32>,
    } else {
    }
    return
  }
  func.func @transform_0(%arg0: i32, %arg1: i32) -> (i32, i32, i32) {
    %c0_i32 = arith.constant 0 : i32
    %c0_i32_0 = arith.constant 0 : i32
    return %arg0, %c0_i32, %arg1 : i32, i32, i32
  }
  func.func @transform_1(%arg0: i32, %arg1: i32) -> (i32, i32) {
    %c0_i32 = arith.constant 0 : i32
    %c0_i32_0 = arith.constant 0 : i32
    %c0_i32_1 = arith.constant 0 : i32
    return %c0_i32, %c0_i32_0 : i32, i32
  }
  func.func @transform_2(%arg0: i32, %arg1: i32) -> (i32, i32) {
    %c0_i32 = arith.constant 0 : i32
    %c0_i32_0 = arith.constant 0 : i32
    %c0_i32_1 = arith.constant 0 : i32
    return %c0_i32, %c0_i32_0 : i32, i32
  }
  func.func @transform_3(%arg0: i32, %arg1: i32) -> (i32, i32) {
    %c0_i32 = arith.constant 0 : i32
    %c0_i32_0 = arith.constant 0 : i32
    %c0_i32_1 = arith.constant 0 : i32
    return %c0_i32, %c0_i32_0 : i32, i32
  }
  func.func @transform_4(%arg0: i32, %arg1: i32) -> (i32, i32) {
    %c0_i32 = arith.constant 0 : i32
    %c0_i32_0 = arith.constant 0 : i32
    %c0_i32_1 = arith.constant 0 : i32
    return %c0_i32, %c0_i32_0 : i32, i32
  }
  func.func @transform_5(%arg0: i32, %arg1: i32) -> (i32, i32) {
    %c0_i32 = arith.constant 0 : i32
    %c0_i32_0 = arith.constant 0 : i32
    %c0_i32_1 = arith.constant 0 : i32
    return %c0_i32, %c0_i32_0 : i32, i32
  }
  func.func @transform_6(%arg0: i32, %arg1: i32) -> (i32, i32) {
    %c0_i32 = arith.constant 0 : i32
    %c0_i32_0 = arith.constant 0 : i32
    return %arg0, %c0_i32 : i32, i32
  }
}

</mosaic_0001>

<llo_original>
// kernel: fake_image_model_head.1
$region0: #{fake_image_model_head.1}
  #allocation0 [shape = 'u32[]', space=smem, size = 0x4, offset = 0x4, fixed_abs, tag = 'smem constant byte address 0x4 - core index']
  #allocation1 [shape = 'u32[72,128]{1,0:T(1,128)}', space=vmem, size = 0x9000, scoped, tag = 'internal scratch']
  #allocation2 [shape = 'f32[2,1280]{1,0:T(2,128)}', space=vmem, size = 0x2800, scoped, tag = 'scratch operand']
  %s0 = inlined_call_operand.vmem [shape: bf16[2,1280,16], index: 0, kind: input, shape index: {}]
  %s1 = inlined_call_operand.vmem [shape: bf16[1280,128], index: 1, kind: input, shape index: {}]
  %s2 = inlined_call_operand.vmem [shape: f32[1,128], index: 2, kind: input, shape index: {}]
  %s3 = inlined_call_operand.vmem [shape: bf16[128,128], index: 3, kind: input, shape index: {}]
  %s4 = inlined_call_operand.vmem [shape: f32[1,128], index: 4, kind: input, shape index: {}]
  %s5 = inlined_call_operand.vmem [shape: f32[1,128], index: 5, kind: input, shape index: {}]
  %s6 = inlined_call_operand.hbm [shape: f32[2,128], index: 6, kind: output, shape index: {}]
  %s7 = sld [smem:[#allocation0]]
  $region42: #{fake_image_model_head.1} parent=0
    _
  %s9 = ssub.s32 1, %s7
  %s10 = scalar_select 0, %s9, %s7
  $region1: #{fake_image_model_head.1} parent=0
    #allocation3 [shape = 'u8[1024]{0}', space=vmem, size = 0x400, scoped, tag = 'output window, operand 0, single buffered']
    #allocation4 [shape = 's32[1]{0}', space=sflag, size = 0x4, scoped, tag = 'scoped memory for fake_image_model_head.1']
    %11 = vsyncpa [#allocation4], 0
    // Predicated region
    $region2: #{fake_image_model_head.1} parent=1 // pred_check
      _
    $region3: #{fake_image_model_head.1} parent=1 // pred_check_branch
      %13 = sbr.rel (0) target = $region5
    $region4: #{fake_image_model_head.1} parent=1 // pred_region
      _
    $region5: #{fake_image_model_head.1} parent=1 // pred_fallthru
      _
    // Predicated region
    $region6: #{fake_image_model_head.1} parent=1 // pred_check
      _
    $region7: #{fake_image_model_head.1} parent=1 // pred_check_branch
      %15 = sbr.rel (0) target = $region9
    $region8: #{fake_image_model_head.1} parent=1 // pred_region
      _
    $region9: #{fake_image_model_head.1} parent=1 // pred_fallthru
      _
    // Predicated region
    $region10: #{fake_image_model_head.1} parent=1 // pred_check
      _
    $region11: #{fake_image_model_head.1} parent=1 // pred_check_branch
      %17 = sbr.rel (0) target = $region13
    $region12: #{fake_image_model_head.1} parent=1 // pred_region
      _
    $region13: #{fake_image_model_head.1} parent=1 // pred_fallthru
      _
    // Predicated region
    $region14: #{fake_image_model_head.1} parent=1 // pred_check
      _
    $region15: #{fake_image_model_head.1} parent=1 // pred_check_branch
      %19 = sbr.rel (0) target = $region17
    $region16: #{fake_image_model_head.1} parent=1 // pred_region
      _
    $region17: #{fake_image_model_head.1} parent=1 // pred_fallthru
      _
    // Predicated region
    $region18: #{fake_image_model_head.1} parent=1 // pred_check
      _
    $region19: #{fake_image_model_head.1} parent=1 // pred_check_branch
      %21 = sbr.rel (0) target = $region21
    $region20: #{fake_image_model_head.1} parent=1 // pred_region
      _
    $region21: #{fake_image_model_head.1} parent=1 // pred_fallthru
      _
    // Predicated region
    $region22: #{fake_image_model_head.1} parent=1 // pred_check
      _
    $region23: #{fake_image_model_head.1} parent=1 // pred_check_branch
      %23 = sbr.rel (0) target = $region25
    $region24: #{fake_image_model_head.1} parent=1 // pred_region
      _
    $region25: #{fake_image_model_head.1} parent=1 // pred_fallthru
      _
    %p24 = scmp.eq.s32.totalorder 0, 0
    // Predicated region
    $region26: #{fake_image_model_head.1} parent=1 // pred_check
      %p25 = pneg %p24
    $region27: #{fake_image_model_head.1} parent=1 // pred_check_branch
      %27 = sbr.rel (%p25) target = $region29
    $region28: #{fake_image_model_head.1} parent=1 // pred_region
      %28 = vst [vmem:[#allocation2] sm:$0xff] 0.0
      %29 = vst [vmem:[#allocation2 + $0x8] sm:$0xff] 0.0
      %30 = vst [vmem:[#allocation2 + $0x10] sm:$0xf] 0.0
    $region29: #{fake_image_model_head.1} parent=1 // pred_fallthru
      _
    %v31 = vld [vmem:[%s0] sm:$0xf]
    %v32 = vld [vmem:[%s0 + $0x4] sm:$0xf]
    %v33 = vld [vmem:[%s0 + $0x8] sm:$0xf]
    %v34 = vld [vmem:[%s0 + $0xc] sm:$0xf]
    %v35 = vld [vmem:[%s0 + $0x10] sm:$0xf]
    %v36 = vld [vmem:[%s0 + $0x14] sm:$0xf]
    %v37 = vld [vmem:[%s0 + $0x18] sm:$0xf]
    %v38 = vld [vmem:[%s0 + $0x1c] sm:$0xf]
    %v39 = vld [vmem:[%s0 + $0x20] sm:$0xf]
    %v40 = vld [vmem:[%s0 + $0x24] sm:$0xf]
    %v41 = vld [vmem:[%s0 + $0x28] sm:$0xf]
    %v42 = vld [vmem:[%s0 + $0x2c] sm:$0xf]
    %v43 = vld [vmem:[%s0 + $0x30] sm:$0xf]
    %v44 = vld [vmem:[%s0 + $0x34] sm:$0xf]
    %v45 = vld [vmem:[%s0 + $0x38] sm:$0xf]
    %v46 = vld [vmem:[%s0 + $0x3c] sm:$0xf]
    %v47 = vld [vmem:[%s0 + $0x40] sm:$0xf]
    %v48 = vld [vmem:[%s0 + $0x44] sm:$0xf]
    %v49 = vld [vmem:[%s0 + $0x48] sm:$0xf]
    %v50 = vld [vmem:[%s0 + $0x4c] sm:$0xf]
    %v51 = vld [vmem:[%s0 + $0x50] sm:$0xf]
    %v52 = vld [vmem:[%s0 + $0x54] sm:$0xf]
    %v53 = vld [vmem:[%s0 + $0x58] sm:$0xf]
    %v54 = vld [vmem:[%s0 + $0x5c] sm:$0xf]
    %v55 = vld [vmem:[%s0 + $0x60] sm:$0xf]
    %v56 = vld [vmem:[%s0 + $0x64] sm:$0xf]
    %v57 = vld [vmem:[%s0 + $0x68] sm:$0xf]
    %v58 = vld [vmem:[%s0 + $0x6c] sm:$0xf]
    %v59 = vld [vmem:[%s0 + $0x70] sm:$0xf]
    %v60 = vld [vmem:[%s0 + $0x74] sm:$0xf]
    %v61 = vld [vmem:[%s0 + $0x78] sm:$0xf]
    %v62 = vld [vmem:[%s0 + $0x7c] sm:$0xf]
    %v63 = vld [vmem:[%s0 + $0x80] sm:$0xf]
    %v64 = vld [vmem:[%s0 + $0x84] sm:$0xf]
    %v65 = vld [vmem:[%s0 + $0x88] sm:$0xf]
    %v66 = vld [vmem:[%s0 + $0x8c] sm:$0xf]
    %v67 = vld [vmem:[%s0 + $0x90] sm:$0xf]
    %v68 = vld [vmem:[%s0 + $0x94] sm:$0xf]
    %v69 = vld [vmem:[%s0 + $0x98] sm:$0xf]
    %v70 = vld [vmem:[%s0 + $0x9c] sm:$0xf]
    %v71 = vld [vmem:[%s0 + $0xa0] sm:$0xf]
    %v72 = vld [vmem:[%s0 + $0xa4] sm:$0xf]
    %v73 = vld [vmem:[%s0 + $0xa8] sm:$0xf]
    %v74 = vld [vmem:[%s0 + $0xac] sm:$0xf]
    %v75 = vld [vmem:[%s0 + $0xb0] sm:$0xf]
    %v76 = vld [vmem:[%s0 + $0xb4] sm:$0xf]
    %v77 = vld [vmem:[%s0 + $0xb8] sm:$0xf]
    %v78 = vld [vmem:[%s0 + $0xbc] sm:$0xf]
    %v79 = vld [vmem:[%s0 + $0xc0] sm:$0xf]
    %v80 = vld [vmem:[%s0 + $0xc4] sm:$0xf]
    %v81 = vld [vmem:[%s0 + $0xc8] sm:$0xf]
    %v82 = vld [vmem:[%s0 + $0xcc] sm:$0xf]
    %v83 = vld [vmem:[%s0 + $0xd0] sm:$0xf]
    %v84 = vld [vmem:[%s0 + $0xd4] sm:$0xf]
    %v85 = vld [vmem:[%s0 + $0xd8] sm:$0xf]
    %v86 = vld [vmem:[%s0 + $0xdc] sm:$0xf]
    %v87 = vld [vmem:[%s0 + $0xe0] sm:$0xf]
    %v88 = vld [vmem:[%s0 + $0xe4] sm:$0xf]
    %v89 = vld [vmem:[%s0 + $0xe8] sm:$0xf]
    %v90 = vld [vmem:[%s0 + $0xec] sm:$0xf]
    %v91 = vld [vmem:[%s0 + $0xf0] sm:$0xf]
    %v92 = vld [vmem:[%s0 + $0xf4] sm:$0xf]
    %v93 = vld [vmem:[%s0 + $0xf8] sm:$0xf]
    %v94 = vld [vmem:[%s0 + $0xfc] sm:$0xf]
    %v95 = vld [vmem:[%s0 + $0x100] sm:$0xf]
    %v96 = vld [vmem:[%s0 + $0x104] sm:$0xf]
    %v97 = vld [vmem:[%s0 + $0x108] sm:$0xf]
    %v98 = vld [vmem:[%s0 + $0x10c] sm:$0xf]
    %v99 = vld [vmem:[%s0 + $0x110] sm:$0xf]
    %v100 = vld [vmem:[%s0 + $0x114] sm:$0xf]
    %v101 = vld [vmem:[%s0 + $0x118] sm:$0xf]
    %v102 = vld [vmem:[%s0 + $0x11c] sm:$0xf]
    %v103 = vld [vmem:[%s0 + $0x120] sm:$0xf]
    %v104 = vld [vmem:[%s0 + $0x124] sm:$0xf]
    %v105 = vld [vmem:[%s0 + $0x128] sm:$0xf]
    %v106 = vld [vmem:[%s0 + $0x12c] sm:$0xf]
    %v107 = vld [vmem:[%s0 + $0x130] sm:$0xf]
    %v108 = vld [vmem:[%s0 + $0x134] sm:$0xf]
    %v109 = vld [vmem:[%s0 + $0x138] sm:$0xf]
    %v110 = vld [vmem:[%s0 + $0x13c] sm:$0xf]
    %v111 = vld [vmem:[%s0 + $0x140] sm:$0xf]
    %v112 = vld [vmem:[%s0 + $0x144] sm:$0xf]
    %v113 = vld [vmem:[%s0 + $0x148] sm:$0xf]
    %v114 = vld [vmem:[%s0 + $0x14c] sm:$0xf]
    %v115 = vld [vmem:[%s0 + $0x150] sm:$0xf]
    %v116 = vld [vmem:[%s0 + $0x154] sm:$0xf]
    %v117 = vld [vmem:[%s0 + $0x158] sm:$0xf]
    %v118 = vld [vmem:[%s0 + $0x15c] sm:$0xf]
    %v119 = vld [vmem:[%s0 + $0x160] sm:$0xf]
    %v120 = vld [vmem:[%s0 + $0x164] sm:$0xf]
    %v121 = vld [vmem:[%s0 + $0x168] sm:$0xf]
    %v122 = vld [vmem:[%s0 + $0x16c] sm:$0xf]
    %v123 = vld [vmem:[%s0 + $0x170] sm:$0xf]
    %v124 = vld [vmem:[%s0 + $0x174] sm:$0xf]
    %v125 = vld [vmem:[%s0 + $0x178] sm:$0xf]
    %v126 = vld [vmem:[%s0 + $0x17c] sm:$0xf]
    %v127 = vld [vmem:[%s0 + $0x180] sm:$0xf]
    %v128 = vld [vmem:[%s0 + $0x184] sm:$0xf]
    %v129 = vld [vmem:[%s0 + $0x188] sm:$0xf]
    %v130 = vld [vmem:[%s0 + $0x18c] sm:$0xf]
    %v131 = vld [vmem:[%s0 + $0x190] sm:$0xf]
    %v132 = vld [vmem:[%s0 + $0x194] sm:$0xf]
    %v133 = vld [vmem:[%s0 + $0x198] sm:$0xf]
    %v134 = vld [vmem:[%s0 + $0x19c] sm:$0xf]
    %v135 = vld [vmem:[%s0 + $0x1a0] sm:$0xf]
    %v136 = vld [vmem:[%s0 + $0x1a4] sm:$0xf]
    %v137 = vld [vmem:[%s0 + $0x1a8] sm:$0xf]
    %v138 = vld [vmem:[%s0 + $0x1ac] sm:$0xf]
    %v139 = vld [vmem:[%s0 + $0x1b0] sm:$0xf]
    %v140 = vld [vmem:[%s0 + $0x1b4] sm:$0xf]
    %v141 = vld [vmem:[%s0 + $0x1b8] sm:$0xf]
    %v142 = vld [vmem:[%s0 + $0x1bc] sm:$0xf]
    %v143 = vld [vmem:[%s0 + $0x1c0] sm:$0xf]
    %v144 = vld [vmem:[%s0 + $0x1c4] sm:$0xf]
    %v145 = vld [vmem:[%s0 + $0x1c8] sm:$0xf]
    %v146 = vld [vmem:[%s0 + $0x1cc] sm:$0xf]
    %v147 = vld [vmem:[%s0 + $0x1d0] sm:$0xf]
    %v148 = vld [vmem:[%s0 + $0x1d4] sm:$0xf]
    %v149 = vld [vmem:[%s0 + $0x1d8] sm:$0xf]
    %v150 = vld [vmem:[%s0 + $0x1dc] sm:$0xf]
    %v151 = vld [vmem:[%s0 + $0x1e0] sm:$0xf]
    %v152 = vld [vmem:[%s0 + $0x1e4] sm:$0xf]
    %v153 = vld [vmem:[%s0 + $0x1e8] sm:$0xf]
    %v154 = vld [vmem:[%s0 + $0x1ec] sm:$0xf]
    %v155 = vld [vmem:[%s0 + $0x1f0] sm:$0xf]
    %v156 = vld [vmem:[%s0 + $0x1f4] sm:$0xf]
    %v157 = vld [vmem:[%s0 + $0x1f8] sm:$0xf]
    %v158 = vld [vmem:[%s0 + $0x1fc] sm:$0xf]
    %v159 = vld [vmem:[%s0 + $0x200] sm:$0xf]
    %v160 = vld [vmem:[%s0 + $0x204] sm:$0xf]
    %v161 = vld [vmem:[%s0 + $0x208] sm:$0xf]
    %v162 = vld [vmem:[%s0 + $0x20c] sm:$0xf]
    %v163 = vld [vmem:[%s0 + $0x210] sm:$0xf]
    %v164 = vld [vmem:[%s0 + $0x214] sm:$0xf]
    %v165 = vld [vmem:[%s0 + $0x218] sm:$0xf]
    %v166 = vld [vmem:[%s0 + $0x21c] sm:$0xf]
    %v167 = vld [vmem:[%s0 + $0x220] sm:$0xf]
    %v168 = vld [vmem:[%s0 + $0x224] sm:$0xf]
    %v169 = vld [vmem:[%s0 + $0x228] sm:$0xf]
    %v170 = vld [vmem:[%s0 + $0x22c] sm:$0xf]
    %v171 = vld [vmem:[%s0 + $0x230] sm:$0xf]
    %v172 = vld [vmem:[%s0 + $0x234] sm:$0xf]
    %v173 = vld [vmem:[%s0 + $0x238] sm:$0xf]
    %v174 = vld [vmem:[%s0 + $0x23c] sm:$0xf]
    %v175 = vld [vmem:[%s0 + $0x240] sm:$0xf]
    %v176 = vld [vmem:[%s0 + $0x244] sm:$0xf]
    %v177 = vld [vmem:[%s0 + $0x248] sm:$0xf]
    %v178 = vld [vmem:[%s0 + $0x24c] sm:$0xf]
    %v179 = vld [vmem:[%s0 + $0x250] sm:$0xf]
    %v180 = vld [vmem:[%s0 + $0x254] sm:$0xf]
    %v181 = vld [vmem:[%s0 + $0x258] sm:$0xf]
    %v182 = vld [vmem:[%s0 + $0x25c] sm:$0xf]
    %v183 = vld [vmem:[%s0 + $0x260] sm:$0xf]
    %v184 = vld [vmem:[%s0 + $0x264] sm:$0xf]
    %v185 = vld [vmem:[%s0 + $0x268] sm:$0xf]
    %v186 = vld [vmem:[%s0 + $0x26c] sm:$0xf]
    %v187 = vld [vmem:[%s0 + $0x270] sm:$0xf]
    %v188 = vld [vmem:[%s0 + $0x274] sm:$0xf]
    %v189 = vld [vmem:[%s0 + $0x278] sm:$0xf]
    %v190 = vld [vmem:[%s0 + $0x27c] sm:$0xf]
    %v191 = vld [vmem:[%s0 + $0x280] sm:$0xf]
    %v192 = vld [vmem:[%s0 + $0x284] sm:$0xf]
    %v193 = vld [vmem:[%s0 + $0x288] sm:$0xf]
    %v194 = vld [vmem:[%s0 + $0x28c] sm:$0xf]
    %v195 = vld [vmem:[%s0 + $0x290] sm:$0xf]
    %v196 = vld [vmem:[%s0 + $0x294] sm:$0xf]
    %v197 = vld [vmem:[%s0 + $0x298] sm:$0xf]
    %v198 = vld [vmem:[%s0 + $0x29c] sm:$0xf]
    %v199 = vld [vmem:[%s0 + $0x2a0] sm:$0xf]
    %v200 = vld [vmem:[%s0 + $0x2a4] sm:$0xf]
    %v201 = vld [vmem:[%s0 + $0x2a8] sm:$0xf]
    %v202 = vld [vmem:[%s0 + $0x2ac] sm:$0xf]
    %v203 = vld [vmem:[%s0 + $0x2b0] sm:$0xf]
    %v204 = vld [vmem:[%s0 + $0x2b4] sm:$0xf]
    %v205 = vld [vmem:[%s0 + $0x2b8] sm:$0xf]
    %v206 = vld [vmem:[%s0 + $0x2bc] sm:$0xf]
    %v207 = vld [vmem:[%s0 + $0x2c0] sm:$0xf]
    %v208 = vld [vmem:[%s0 + $0x2c4] sm:$0xf]
    %v209 = vld [vmem:[%s0 + $0x2c8] sm:$0xf]
    %v210 = vld [vmem:[%s0 + $0x2cc] sm:$0xf]
    %v211 = vld [vmem:[%s0 + $0x2d0] sm:$0xf]
    %v212 = vld [vmem:[%s0 + $0x2d4] sm:$0xf]
    %v213 = vld [vmem:[%s0 + $0x2d8] sm:$0xf]
    %v214 = vld [vmem:[%s0 + $0x2dc] sm:$0xf]
    %v215 = vld [vmem:[%s0 + $0x2e0] sm:$0xf]
    %v216 = vld [vmem:[%s0 + $0x2e4] sm:$0xf]
    %v217 = vld [vmem:[%s0 + $0x2e8] sm:$0xf]
    %v218 = vld [vmem:[%s0 + $0x2ec] sm:$0xf]
    %v219 = vld [vmem:[%s0 + $0x2f0] sm:$0xf]
    %v220 = vld [vmem:[%s0 + $0x2f4] sm:$0xf]
    %v221 = vld [vmem:[%s0 + $0x2f8] sm:$0xf]
    %v222 = vld [vmem:[%s0 + $0x2fc] sm:$0xf]
    %v223 = vld [vmem:[%s0 + $0x300] sm:$0xf]
    %v224 = vld [vmem:[%s0 + $0x304] sm:$0xf]
    %v225 = vld [vmem:[%s0 + $0x308] sm:$0xf]
    %v226 = vld [vmem:[%s0 + $0x30c] sm:$0xf]
    %v227 = vld [vmem:[%s0 + $0x310] sm:$0xf]
    %v228 = vld [vmem:[%s0 + $0x314] sm:$0xf]
    %v229 = vld [vmem:[%s0 + $0x318] sm:$0xf]
    %v230 = vld [vmem:[%s0 + $0x31c] sm:$0xf]
    %v231 = vld [vmem:[%s0 + $0x320] sm:$0xf]
    %v232 = vld [vmem:[%s0 + $0x324] sm:$0xf]
    %v233 = vld [vmem:[%s0 + $0x328] sm:$0xf]
    %v234 = vld [vmem:[%s0 + $0x32c] sm:$0xf]
    %v235 = vld [vmem:[%s0 + $0x330] sm:$0xf]
    %v236 = vld [vmem:[%s0 + $0x334] sm:$0xf]
    %v237 = vld [vmem:[%s0 + $0x338] sm:$0xf]
    %v238 = vld [vmem:[%s0 + $0x33c] sm:$0xf]
    %v239 = vld [vmem:[%s0 + $0x340] sm:$0xf]
    %v240 = vld [vmem:[%s0 + $0x344] sm:$0xf]
    %v241 = vld [vmem:[%s0 + $0x348] sm:$0xf]
    %v242 = vld [vmem:[%s0 + $0x34c] sm:$0xf]
    %v243 = vld [vmem:[%s0 + $0x350] sm:$0xf]
    %v244 = vld [vmem:[%s0 + $0x354] sm:$0xf]
    %v245 = vld [vmem:[%s0 + $0x358] sm:$0xf]
    %v246 = vld [vmem:[%s0 + $0x35c] sm:$0xf]
    %v247 = vld [vmem:[%s0 + $0x360] sm:$0xf]
    %v248 = vld [vmem:[%s0 + $0x364] sm:$0xf]
    %v249 = vld [vmem:[%s0 + $0x368] sm:$0xf]
    %v250 = vld [vmem:[%s0 + $0x36c] sm:$0xf]
    %v251 = vld [vmem:[%s0 + $0x370] sm:$0xf]
    %v252 = vld [vmem:[%s0 + $0x374] sm:$0xf]
    %v253 = vld [vmem:[%s0 + $0x378] sm:$0xf]
    %v254 = vld [vmem:[%s0 + $0x37c] sm:$0xf]
    %v255 = vld [vmem:[%s0 + $0x380] sm:$0xf]
    %v256 = vld [vmem:[%s0 + $0x384] sm:$0xf]
    %v257 = vld [vmem:[%s0 + $0x388] sm:$0xf]
    %v258 = vld [vmem:[%s0 + $0x38c] sm:$0xf]
    %v259 = vld [vmem:[%s0 + $0x390] sm:$0xf]
    %v260 = vld [vmem:[%s0 + $0x394] sm:$0xf]
    %v261 = vld [vmem:[%s0 + $0x398] sm:$0xf]
    %v262 = vld [vmem:[%s0 + $0x39c] sm:$0xf]
    %v263 = vld [vmem:[%s0 + $0x3a0] sm:$0xf]
    %v264 = vld [vmem:[%s0 + $0x3a4] sm:$0xf]
    %v265 = vld [vmem:[%s0 + $0x3a8] sm:$0xf]
    %v266 = vld [vmem:[%s0 + $0x3ac] sm:$0xf]
    %v267 = vld [vmem:[%s0 + $0x3b0] sm:$0xf]
    %v268 = vld [vmem:[%s0 + $0x3b4] sm:$0xf]
    %v269 = vld [vmem:[%s0 + $0x3b8] sm:$0xf]
    %v270 = vld [vmem:[%s0 + $0x3bc] sm:$0xf]
    %v271 = vld [vmem:[%s0 + $0x3c0] sm:$0xf]
    %v272 = vld [vmem:[%s0 + $0x3c4] sm:$0xf]
    %v273 = vld [vmem:[%s0 + $0x3c8] sm:$0xf]
    %v274 = vld [vmem:[%s0 + $0x3cc] sm:$0xf]
    %v275 = vld [vmem:[%s0 + $0x3d0] sm:$0xf]
    %v276 = vld [vmem:[%s0 + $0x3d4] sm:$0xf]
    %v277 = vld [vmem:[%s0 + $0x3d8] sm:$0xf]
    %v278 = vld [vmem:[%s0 + $0x3dc] sm:$0xf]
    %v279 = vld [vmem:[%s0 + $0x3e0] sm:$0xf]
    %v280 = vld [vmem:[%s0 + $0x3e4] sm:$0xf]
    %v281 = vld [vmem:[%s0 + $0x3e8] sm:$0xf]
    %v282 = vld [vmem:[%s0 + $0x3ec] sm:$0xf]
    %v283 = vld [vmem:[%s0 + $0x3f0] sm:$0xf]
    %v284 = vld [vmem:[%s0 + $0x3f4] sm:$0xf]
    %v285 = vld [vmem:[%s0 + $0x3f8] sm:$0xf]
    %v286 = vld [vmem:[%s0 + $0x3fc] sm:$0xf]
    %v287 = vld [vmem:[%s0 + $0x400] sm:$0xf]
    %v288 = vld [vmem:[%s0 + $0x404] sm:$0xf]
    %v289 = vld [vmem:[%s0 + $0x408] sm:$0xf]
    %v290 = vld [vmem:[%s0 + $0x40c] sm:$0xf]
    %v291 = vld [vmem:[%s0 + $0x410] sm:$0xf]
    %v292 = vld [vmem:[%s0 + $0x414] sm:$0xf]
    %v293 = vld [vmem:[%s0 + $0x418] sm:$0xf]
    %v294 = vld [vmem:[%s0 + $0x41c] sm:$0xf]
    %v295 = vld [vmem:[%s0 + $0x420] sm:$0xf]
    %v296 = vld [vmem:[%s0 + $0x424] sm:$0xf]
    %v297 = vld [vmem:[%s0 + $0x428] sm:$0xf]
    %v298 = vld [vmem:[%s0 + $0x42c] sm:$0xf]
    %v299 = vld [vmem:[%s0 + $0x430] sm:$0xf]
    %v300 = vld [vmem:[%s0 + $0x434] sm:$0xf]
    %v301 = vld [vmem:[%s0 + $0x438] sm:$0xf]
    %v302 = vld [vmem:[%s0 + $0x43c] sm:$0xf]
    %v303 = vld [vmem:[%s0 + $0x440] sm:$0xf]
    %v304 = vld [vmem:[%s0 + $0x444] sm:$0xf]
    %v305 = vld [vmem:[%s0 + $0x448] sm:$0xf]
    %v306 = vld [vmem:[%s0 + $0x44c] sm:$0xf]
    %v307 = vld [vmem:[%s0 + $0x450] sm:$0xf]
    %v308 = vld [vmem:[%s0 + $0x454] sm:$0xf]
    %v309 = vld [vmem:[%s0 + $0x458] sm:$0xf]
    %v310 = vld [vmem:[%s0 + $0x45c] sm:$0xf]
    %v311 = vld [vmem:[%s0 + $0x460] sm:$0xf]
    %v312 = vld [vmem:[%s0 + $0x464] sm:$0xf]
    %v313 = vld [vmem:[%s0 + $0x468] sm:$0xf]
    %v314 = vld [vmem:[%s0 + $0x46c] sm:$0xf]
    %v315 = vld [vmem:[%s0 + $0x470] sm:$0xf]
    %v316 = vld [vmem:[%s0 + $0x474] sm:$0xf]
    %v317 = vld [vmem:[%s0 + $0x478] sm:$0xf]
    %v318 = vld [vmem:[%s0 + $0x47c] sm:$0xf]
    %v319 = vld [vmem:[%s0 + $0x480] sm:$0xf]
    %v320 = vld [vmem:[%s0 + $0x484] sm:$0xf]
    %v321 = vld [vmem:[%s0 + $0x488] sm:$0xf]
    %v322 = vld [vmem:[%s0 + $0x48c] sm:$0xf]
    %v323 = vld [vmem:[%s0 + $0x490] sm:$0xf]
    %v324 = vld [vmem:[%s0 + $0x494] sm:$0xf]
    %v325 = vld [vmem:[%s0 + $0x498] sm:$0xf]
    %v326 = vld [vmem:[%s0 + $0x49c] sm:$0xf]
    %v327 = vld [vmem:[%s0 + $0x4a0] sm:$0xf]
    %v328 = vld [vmem:[%s0 + $0x4a4] sm:$0xf]
    %v329 = vld [vmem:[%s0 + $0x4a8] sm:$0xf]
    %v330 = vld [vmem:[%s0 + $0x4ac] sm:$0xf]
    %v331 = vld [vmem:[%s0 + $0x4b0] sm:$0xf]
    %v332 = vld [vmem:[%s0 + $0x4b4] sm:$0xf]
    %v333 = vld [vmem:[%s0 + $0x4b8] sm:$0xf]
    %v334 = vld [vmem:[%s0 + $0x4bc] sm:$0xf]
    %v335 = vld [vmem:[%s0 + $0x4c0] sm:$0xf]
    %v336 = vld [vmem:[%s0 + $0x4c4] sm:$0xf]
    %v337 = vld [vmem:[%s0 + $0x4c8] sm:$0xf]
    %v338 = vld [vmem:[%s0 + $0x4cc] sm:$0xf]
    %v339 = vld [vmem:[%s0 + $0x4d0] sm:$0xf]
    %v340 = vld [vmem:[%s0 + $0x4d4] sm:$0xf]
    %v341 = vld [vmem:[%s0 + $0x4d8] sm:$0xf]
    %v342 = vld [vmem:[%s0 + $0x4dc] sm:$0xf]
    %v343 = vld [vmem:[%s0 + $0x4e0] sm:$0xf]
    %v344 = vld [vmem:[%s0 + $0x4e4] sm:$0xf]
    %v345 = vld [vmem:[%s0 + $0x4e8] sm:$0xf]
    %v346 = vld [vmem:[%s0 + $0x4ec] sm:$0xf]
    %v347 = vld [vmem:[%s0 + $0x4f0] sm:$0xf]
    %v348 = vld [vmem:[%s0 + $0x4f4] sm:$0xf]
    %v349 = vld [vmem:[%s0 + $0x4f8] sm:$0xf]
    %v350 = vld [vmem:[%s0 + $0x4fc] sm:$0xf]
    %v351 = vld [vmem:[#allocation2] sm:$0xff]
    %v352 = vld [vmem:[#allocation2 + $0x8] sm:$0xff]
    %v353 = vld [vmem:[#allocation2 + $0x10] sm:$0xf]
    %v354 = vunpack.c.l.bf16 %v31
    %v355 = vunpack.c.l.bf16 %v32
    %v356 = vunpack.c.l.bf16 %v33
    %v357 = vunpack.c.l.bf16 %v34
    %v358 = vunpack.c.l.bf16 %v35
    %v359 = vunpack.c.l.bf16 %v36
    %v360 = vunpack.c.l.bf16 %v37
    %v361 = vunpack.c.l.bf16 %v38
    %v362 = vunpack.c.l.bf16 %v39
    %v363 = vunpack.c.l.bf16 %v40
    %v364 = vunpack.c.l.bf16 %v41
    %v365 = vunpack.c.l.bf16 %v42
    %v366 = vunpack.c.l.bf16 %v43
    %v367 = vunpack.c.l.bf16 %v44
    %v368 = vunpack.c.l.bf16 %v45
    %v369 = vunpack.c.l.bf16 %v46
    %v370 = vunpack.c.l.bf16 %v47
    %v371 = vunpack.c.l.bf16 %v48
    %v372 = vunpack.c.l.bf16 %v49
    %v373 = vunpack.c.l.bf16 %v50
    %v374 = vunpack.c.l.bf16 %v51
    %v375 = vunpack.c.l.bf16 %v52
    %v376 = vunpack.c.l.bf16 %v53
    %v377 = vunpack.c.l.bf16 %v54
    %v378 = vunpack.c.l.bf16 %v55
    %v379 = vunpack.c.l.bf16 %v56
    %v380 = vunpack.c.l.bf16 %v57
    %v381 = vunpack.c.l.bf16 %v58
    %v382 = vunpack.c.l.bf16 %v59
    %v383 = vunpack.c.l.bf16 %v60
    %v384 = vunpack.c.l.bf16 %v61
    %v385 = vunpack.c.l.bf16 %v62
    %v386 = vunpack.c.l.bf16 %v63
    %v387 = vunpack.c.l.bf16 %v64
    %v388 = vunpack.c.l.bf16 %v65
    %v389 = vunpack.c.l.bf16 %v66
    %v390 = vunpack.c.l.bf16 %v67
    %v391 = vunpack.c.l.bf16 %v68
    %v392 = vunpack.c.l.bf16 %v69
    %v393 = vunpack.c.l.bf16 %v70
    %v394 = vunpack.c.l.bf16 %v71
    %v395 = vunpack.c.l.bf16 %v72
    %v396 = vunpack.c.l.bf16 %v73
    %v397 = vunpack.c.l.bf16 %v74
    %v398 = vunpack.c.l.bf16 %v75
    %v399 = vunpack.c.l.bf16 %v76
    %v400 = vunpack.c.l.bf16 %v77
    %v401 = vunpack.c.l.bf16 %v78
    %v402 = vunpack.c.l.bf16 %v79
    %v403 = vunpack.c.l.bf16 %v80
    %v404 = vunpack.c.l.bf16 %v81
    %v405 = vunpack.c.l.bf16 %v82
    %v406 = vunpack.c.l.bf16 %v83
    %v407 = vunpack.c.l.bf16 %v84
    %v408 = vunpack.c.l.bf16 %v85
    %v409 = vunpack.c.l.bf16 %v86
    %v410 = vunpack.c.l.bf16 %v87
    %v411 = vunpack.c.l.bf16 %v88
    %v412 = vunpack.c.l.bf16 %v89
    %v413 = vunpack.c.l.bf16 %v90
    %v414 = vunpack.c.l.bf16 %v91
    %v415 = vunpack.c.l.bf16 %v92
    %v416 = vunpack.c.l.bf16 %v93
    %v417 = vunpack.c.l.bf16 %v94
    %v418 = vunpack.c.l.bf16 %v95
    %v419 = vunpack.c.l.bf16 %v96
    %v420 = vunpack.c.l.bf16 %v97
    %v421 = vunpack.c.l.bf16 %v98
    %v422 = vunpack.c.l.bf16 %v99
    %v423 = vunpack.c.l.bf16 %v100
    %v424 = vunpack.c.l.bf16 %v101
    %v425 = vunpack.c.l.bf16 %v102
    %v426 = vunpack.c.l.bf16 %v103
    %v427 = vunpack.c.l.bf16 %v104
    %v428 = vunpack.c.l.bf16 %v105
    %v429 = vunpack.c.l.bf16 %v106
    %v430 = vunpack.c.l.bf16 %v107
    %v431 = vunpack.c.l.bf16 %v108
    %v432 = vunpack.c.l.bf16 %v109
    %v433 = vunpack.c.l.bf16 %v110
    %v434 = vunpack.c.l.bf16 %v111
    %v435 = vunpack.c.l.bf16 %v112
    %v436 = vunpack.c.l.bf16 %v113
    %v437 = vunpack.c.l.bf16 %v114
    %v438 = vunpack.c.l.bf16 %v115
    %v439 = vunpack.c.l.bf16 %v116
    %v440 = vunpack.c.l.bf16 %v117
    %v441 = vunpack.c.l.bf16 %v118
    %v442 = vunpack.c.l.bf16 %v119
    %v443 = vunpack.c.l.bf16 %v120
    %v444 = vunpack.c.l.bf16 %v121
    %v445 = vunpack.c.l.bf16 %v122
    %v446 = vunpack.c.l.bf16 %v123
    %v447 = vunpack.c.l.bf16 %v124
    %v448 = vunpack.c.l.bf16 %v125
    %v449 = vunpack.c.l.bf16 %v126
    %v450 = vunpack.c.l.bf16 %v127
    %v451 = vunpack.c.l.bf16 %v128
    %v452 = vunpack.c.l.bf16 %v129
    %v453 = vunpack.c.l.bf16 %v130
    %v454 = vunpack.c.l.bf16 %v131
    %v455 = vunpack.c.l.bf16 %v132
    %v456 = vunpack.c.l.bf16 %v133
    %v457 = vunpack.c.l.bf16 %v134
    %v458 = vunpack.c.l.bf16 %v135
    %v459 = vunpack.c.l.bf16 %v136
    %v460 = vunpack.c.l.bf16 %v137
    %v461 = vunpack.c.l.bf16 %v138
    %v462 = vunpack.c.l.bf16 %v139
    %v463 = vunpack.c.l.bf16 %v140
    %v464 = vunpack.c.l.bf16 %v141
    %v465 = vunpack.c.l.bf16 %v142
    %v466 = vunpack.c.l.bf16 %v143
    %v467 = vunpack.c.l.bf16 %v144
    %v468 = vunpack.c.l.bf16 %v145
    %v469 = vunpack.c.l.bf16 %v146
    %v470 = vunpack.c.l.bf16 %v147
    %v471 = vunpack.c.l.bf16 %v148
    %v472 = vunpack.c.l.bf16 %v149
    %v473 = vunpack.c.l.bf16 %v150
    %v474 = vunpack.c.l.bf16 %v151
    %v475 = vunpack.c.l.bf16 %v152
    %v476 = vunpack.c.l.bf16 %v153
    %v477 = vunpack.c.l.bf16 %v154
    %v478 = vunpack.c.l.bf16 %v155
    %v479 = vunpack.c.l.bf16 %v156
    %v480 = vunpack.c.l.bf16 %v157
    %v481 = vunpack.c.l.bf16 %v158
    %v482 = vunpack.c.l.bf16 %v159
    %v483 = vunpack.c.l.bf16 %v160
    %v484 = vunpack.c.l.bf16 %v161
    %v485 = vunpack.c.l.bf16 %v162
    %v486 = vunpack.c.l.bf16 %v163
    %v487 = vunpack.c.l.bf16 %v164
    %v488 = vunpack.c.l.bf16 %v165
    %v489 = vunpack.c.l.bf16 %v166
    %v490 = vunpack.c.l.bf16 %v167
    %v491 = vunpack.c.l.bf16 %v168
    %v492 = vunpack.c.l.bf16 %v169
    %v493 = vunpack.c.l.bf16 %v170
    %v494 = vunpack.c.l.bf16 %v171
    %v495 = vunpack.c.l.bf16 %v172
    %v496 = vunpack.c.l.bf16 %v173
    %v497 = vunpack.c.l.bf16 %v174
    %v498 = vunpack.c.l.bf16 %v175
    %v499 = vunpack.c.l.bf16 %v176
    %v500 = vunpack.c.l.bf16 %v177
    %v501 = vunpack.c.l.bf16 %v178
    %v502 = vunpack.c.l.bf16 %v179
    %v503 = vunpack.c.l.bf16 %v180
    %v504 = vunpack.c.l.bf16 %v181
    %v505 = vunpack.c.l.bf16 %v182
    %v506 = vunpack.c.l.bf16 %v183
    %v507 = vunpack.c.l.bf16 %v184
    %v508 = vunpack.c.l.bf16 %v185
    %v509 = vunpack.c.l.bf16 %v186
    %v510 = vunpack.c.l.bf16 %v187
    %v511 = vunpack.c.l.bf16 %v188
    %v512 = vunpack.c.l.bf16 %v189
    %v513 = vunpack.c.l.bf16 %v190
    %v514 = vunpack.c.l.bf16 %v191
    %v515 = vunpack.c.l.bf16 %v192
    %v516 = vunpack.c.l.bf16 %v193
    %v517 = vunpack.c.l.bf16 %v194
    %v518 = vunpack.c.l.bf16 %v195
    %v519 = vunpack.c.l.bf16 %v196
    %v520 = vunpack.c.l.bf16 %v197
    %v521 = vunpack.c.l.bf16 %v198
    %v522 = vunpack.c.l.bf16 %v199
    %v523 = vunpack.c.l.bf16 %v200
    %v524 = vunpack.c.l.bf16 %v201
    %v525 = vunpack.c.l.bf16 %v202
    %v526 = vunpack.c.l.bf16 %v203
    %v527 = vunpack.c.l.bf16 %v204
    %v528 = vunpack.c.l.bf16 %v205
    %v529 = vunpack.c.l.bf16 %v206
    %v530 = vunpack.c.l.bf16 %v207
    %v531 = vunpack.c.l.bf16 %v208
    %v532 = vunpack.c.l.bf16 %v209
    %v533 = vunpack.c.l.bf16 %v210
    %v534 = vunpack.c.l.bf16 %v211
    %v535 = vunpack.c.l.bf16 %v212
    %v536 = vunpack.c.l.bf16 %v213
    %v537 = vunpack.c.l.bf16 %v214
    %v538 = vunpack.c.l.bf16 %v215
    %v539 = vunpack.c.l.bf16 %v216
    %v540 = vunpack.c.l.bf16 %v217
    %v541 = vunpack.c.l.bf16 %v218
    %v542 = vunpack.c.l.bf16 %v219
    %v543 = vunpack.c.l.bf16 %v220
    %v544 = vunpack.c.l.bf16 %v221
    %v545 = vunpack.c.l.bf16 %v222
    %v546 = vunpack.c.l.bf16 %v223
    %v547 = vunpack.c.l.bf16 %v224
    %v548 = vunpack.c.l.bf16 %v225
    %v549 = vunpack.c.l.bf16 %v226
    %v550 = vunpack.c.l.bf16 %v227
    %v551 = vunpack.c.l.bf16 %v228
    %v552 = vunpack.c.l.bf16 %v229
    %v553 = vunpack.c.l.bf16 %v230
    %v554 = vunpack.c.l.bf16 %v231
    %v555 = vunpack.c.l.bf16 %v232
    %v556 = vunpack.c.l.bf16 %v233
    %v557 = vunpack.c.l.bf16 %v234
    %v558 = vunpack.c.l.bf16 %v235
    %v559 = vunpack.c.l.bf16 %v236
    %v560 = vunpack.c.l.bf16 %v237
    %v561 = vunpack.c.l.bf16 %v238
    %v562 = vunpack.c.l.bf16 %v239
    %v563 = vunpack.c.l.bf16 %v240
    %v564 = vunpack.c.l.bf16 %v241
    %v565 = vunpack.c.l.bf16 %v242
    %v566 = vunpack.c.l.bf16 %v243
    %v567 = vunpack.c.l.bf16 %v244
    %v568 = vunpack.c.l.bf16 %v245
    %v569 = vunpack.c.l.bf16 %v246
    %v570 = vunpack.c.l.bf16 %v247
    %v571 = vunpack.c.l.bf16 %v248
    %v572 = vunpack.c.l.bf16 %v249
    %v573 = vunpack.c.l.bf16 %v250
    %v574 = vunpack.c.l.bf16 %v251
    %v575 = vunpack.c.l.bf16 %v252
    %v576 = vunpack.c.l.bf16 %v253
    %v577 = vunpack.c.l.bf16 %v254
    %v578 = vunpack.c.l.bf16 %v255
    %v579 = vunpack.c.l.bf16 %v256
    %v580 = vunpack.c.l.bf16 %v257
    %v581 = vunpack.c.l.bf16 %v258
    %v582 = vunpack.c.l.bf16 %v259
    %v583 = vunpack.c.l.bf16 %v260
    %v584 = vunpack.c.l.bf16 %v261
    %v585 = vunpack.c.l.bf16 %v262
    %v586 = vunpack.c.l.bf16 %v263
    %v587 = vunpack.c.l.bf16 %v264
    %v588 = vunpack.c.l.bf16 %v265
    %v589 = vunpack.c.l.bf16 %v266
    %v590 = vunpack.c.l.bf16 %v267
    %v591 = vunpack.c.l.bf16 %v268
    %v592 = vunpack.c.l.bf16 %v269
    %v593 = vunpack.c.l.bf16 %v270
    %v594 = vunpack.c.l.bf16 %v271
    %v595 = vunpack.c.l.bf16 %v272
    %v596 = vunpack.c.l.bf16 %v273
    %v597 = vunpack.c.l.bf16 %v274
    %v598 = vunpack.c.l.bf16 %v275
    %v599 = vunpack.c.l.bf16 %v276
    %v600 = vunpack.c.l.bf16 %v277
    %v601 = vunpack.c.l.bf16 %v278
    %v602 = vunpack.c.l.bf16 %v279
    %v603 = vunpack.c.l.bf16 %v280
    %v604 = vunpack.c.l.bf16 %v281
    %v605 = vunpack.c.l.bf16 %v282
    %v606 = vunpack.c.l.bf16 %v283
    %v607 = vunpack.c.l.bf16 %v284
    %v608 = vunpack.c.l.bf16 %v285
    %v609 = vunpack.c.l.bf16 %v286
    %v610 = vunpack.c.l.bf16 %v287
    %v611 = vunpack.c.l.bf16 %v288
    %v612 = vunpack.c.l.bf16 %v289
    %v613 = vunpack.c.l.bf16 %v290
    %v614 = vunpack.c.l.bf16 %v291
    %v615 = vunpack.c.l.bf16 %v292
    %v616 = vunpack.c.l.bf16 %v293
    %v617 = vunpack.c.l.bf16 %v294
    %v618 = vunpack.c.l.bf16 %v295
    %v619 = vunpack.c.l.bf16 %v296
    %v620 = vunpack.c.l.bf16 %v297
    %v621 = vunpack.c.l.bf16 %v298
    %v622 = vunpack.c.l.bf16 %v299
    %v623 = vunpack.c.l.bf16 %v300
    %v624 = vunpack.c.l.bf16 %v301
    %v625 = vunpack.c.l.bf16 %v302
    %v626 = vunpack.c.l.bf16 %v303
    %v627 = vunpack.c.l.bf16 %v304
    %v628 = vunpack.c.l.bf16 %v305
    %v629 = vunpack.c.l.bf16 %v306
    %v630 = vunpack.c.l.bf16 %v307
    %v631 = vunpack.c.l.bf16 %v308
    %v632 = vunpack.c.l.bf16 %v309
    %v633 = vunpack.c.l.bf16 %v310
    %v634 = vunpack.c.l.bf16 %v311
    %v635 = vunpack.c.l.bf16 %v312
    %v636 = vunpack.c.l.bf16 %v313
    %v637 = vunpack.c.l.bf16 %v314
    %v638 = vunpack.c.l.bf16 %v315
    %v639 = vunpack.c.l.bf16 %v316
    %v640 = vunpack.c.l.bf16 %v317
    %v641 = vunpack.c.l.bf16 %v318
    %v642 = vunpack.c.l.bf16 %v319
    %v643 = vunpack.c.l.bf16 %v320
    %v644 = vunpack.c.l.bf16 %v321
    %v645 = vunpack.c.l.bf16 %v322
    %v646 = vunpack.c.l.bf16 %v323
    %v647 = vunpack.c.l.bf16 %v324
    %v648 = vunpack.c.l.bf16 %v325
    %v649 = vunpack.c.l.bf16 %v326
    %v650 = vunpack.c.l.bf16 %v327
    %v651 = vunpack.c.l.bf16 %v328
    %v652 = vunpack.c.l.bf16 %v329
    %v653 = vunpack.c.l.bf16 %v330
    %v654 = vunpack.c.l.bf16 %v331
    %v655 = vunpack.c.l.bf16 %v332
    %v656 = vunpack.c.l.bf16 %v333
    %v657 = vunpack.c.l.bf16 %v334
    %v658 = vunpack.c.l.bf16 %v335
    %v659 = vunpack.c.l.bf16 %v336
    %v660 = vunpack.c.l.bf16 %v337
    %v661 = vunpack.c.l.bf16 %v338
    %v662 = vunpack.c.l.bf16 %v339
    %v663 = vunpack.c.l.bf16 %v340
    %v664 = vunpack.c.l.bf16 %v341
    %v665 = vunpack.c.l.bf16 %v342
    %v666 = vunpack.c.l.bf16 %v343
    %v667 = vunpack.c.l.bf16 %v344
    %v668 = vunpack.c.l.bf16 %v345
    %v669 = vunpack.c.l.bf16 %v346
    %v670 = vunpack.c.l.bf16 %v347
    %v671 = vunpack.c.l.bf16 %v348
    %v672 = vunpack.c.l.bf16 %v349
    %v673 = vunpack.c.l.bf16 %v350
    %vm674 = vcmask 130048
    %v675 = vsel %vm674, %v354, 0.0
    %676 = vadd.xlane.f32.xlu0 %v675
    %v677 = vpop.xlane.xlu0 %676
    %v678 = vsel %vm674, %v355, 0.0
    %679 = vadd.xlane.f32.xlu0 %v678
    %v680 = vpop.xlane.xlu0 %679
    %v681 = vsel %vm674, %v356, 0.0
    %682 = vadd.xlane.f32.xlu0 %v681
    %v683 = vpop.xlane.xlu0 %682
    %v684 = vsel %vm674, %v357, 0.0
    %685 = vadd.xlane.f32.xlu0 %v684
    %v686 = vpop.xlane.xlu0 %685
    %v687 = vsel %vm674, %v358, 0.0
    %688 = vadd.xlane.f32.xlu0 %v687
    %v689 = vpop.xlane.xlu0 %688
    %v690 = vsel %vm674, %v359, 0.0
    %691 = vadd.xlane.f32.xlu0 %v690
    %v692 = vpop.xlane.xlu0 %691
    %v693 = vsel %vm674, %v360, 0.0
    %694 = vadd.xlane.f32.xlu0 %v693
    %v695 = vpop.xlane.xlu0 %694
    %v696 = vsel %vm674, %v361, 0.0
    %697 = vadd.xlane.f32.xlu0 %v696
    %v698 = vpop.xlane.xlu0 %697
    %v699 = vsel %vm674, %v362, 0.0
    %700 = vadd.xlane.f32.xlu0 %v699
    %v701 = vpop.xlane.xlu0 %700
    %v702 = vsel %vm674, %v363, 0.0
    %703 = vadd.xlane.f32.xlu0 %v702
    %v704 = vpop.xlane.xlu0 %703
    %v705 = vsel %vm674, %v364, 0.0
    %706 = vadd.xlane.f32.xlu0 %v705
    %v707 = vpop.xlane.xlu0 %706
    %v708 = vsel %vm674, %v365, 0.0
    %709 = vadd.xlane.f32.xlu0 %v708
    %v710 = vpop.xlane.xlu0 %709
    %v711 = vsel %vm674, %v366, 0.0
    %712 = vadd.xlane.f32.xlu0 %v711
    %v713 = vpop.xlane.xlu0 %712
    %v714 = vsel %vm674, %v367, 0.0
    %715 = vadd.xlane.f32.xlu0 %v714
    %v716 = vpop.xlane.xlu0 %715
    %v717 = vsel %vm674, %v368, 0.0
    %718 = vadd.xlane.f32.xlu0 %v717
    %v719 = vpop.xlane.xlu0 %718
    %v720 = vsel %vm674, %v369, 0.0
    %721 = vadd.xlane.f32.xlu0 %v720
    %v722 = vpop.xlane.xlu0 %721
    %v723 = vsel %vm674, %v370, 0.0
    %724 = vadd.xlane.f32.xlu0 %v723
    %v725 = vpop.xlane.xlu0 %724
    %v726 = vsel %vm674, %v371, 0.0
    %727 = vadd.xlane.f32.xlu0 %v726
    %v728 = vpop.xlane.xlu0 %727
    %v729 = vsel %vm674, %v372, 0.0
    %730 = vadd.xlane.f32.xlu0 %v729
    %v731 = vpop.xlane.xlu0 %730
    %v732 = vsel %vm674, %v373, 0.0
    %733 = vadd.xlane.f32.xlu0 %v732
    %v734 = vpop.xlane.xlu0 %733
    %v735 = vsel %vm674, %v374, 0.0
    %736 = vadd.xlane.f32.xlu0 %v735
    %v737 = vpop.xlane.xlu0 %736
    %v738 = vsel %vm674, %v375, 0.0
    %739 = vadd.xlane.f32.xlu0 %v738
    %v740 = vpop.xlane.xlu0 %739
    %v741 = vsel %vm674, %v376, 0.0
    %742 = vadd.xlane.f32.xlu0 %v741
    %v743 = vpop.xlane.xlu0 %742
    %v744 = vsel %vm674, %v377, 0.0
    %745 = vadd.xlane.f32.xlu0 %v744
    %v746 = vpop.xlane.xlu0 %745
    %v747 = vsel %vm674, %v378, 0.0
    %748 = vadd.xlane.f32.xlu0 %v747
    %v749 = vpop.xlane.xlu0 %748
    %v750 = vsel %vm674, %v379, 0.0
    %751 = vadd.xlane.f32.xlu0 %v750
    %v752 = vpop.xlane.xlu0 %751
    %v753 = vsel %vm674, %v380, 0.0
    %754 = vadd.xlane.f32.xlu0 %v753
    %v755 = vpop.xlane.xlu0 %754
    %v756 = vsel %vm674, %v381, 0.0
    %757 = vadd.xlane.f32.xlu0 %v756
    %v758 = vpop.xlane.xlu0 %757
    %v759 = vsel %vm674, %v382, 0.0
    %760 = vadd.xlane.f32.xlu0 %v759
    %v761 = vpop.xlane.xlu0 %760
    %v762 = vsel %vm674, %v383, 0.0
    %763 = vadd.xlane.f32.xlu0 %v762
    %v764 = vpop.xlane.xlu0 %763
    %v765 = vsel %vm674, %v384, 0.0
    %766 = vadd.xlane.f32.xlu0 %v765
    %v767 = vpop.xlane.xlu0 %766
    %v768 = vsel %vm674, %v385, 0.0
    %769 = vadd.xlane.f32.xlu0 %v768
    %v770 = vpop.xlane.xlu0 %769
    %v771 = vsel %vm674, %v386, 0.0
    %772 = vadd.xlane.f32.xlu0 %v771
    %v773 = vpop.xlane.xlu0 %772
    %v774 = vsel %vm674, %v387, 0.0
    %775 = vadd.xlane.f32.xlu0 %v774
    %v776 = vpop.xlane.xlu0 %775
    %v777 = vsel %vm674, %v388, 0.0
    %778 = vadd.xlane.f32.xlu0 %v777
    %v779 = vpop.xlane.xlu0 %778
    %v780 = vsel %vm674, %v389, 0.0
    %781 = vadd.xlane.f32.xlu0 %v780
    %v782 = vpop.xlane.xlu0 %781
    %v783 = vsel %vm674, %v390, 0.0
    %784 = vadd.xlane.f32.xlu0 %v783
    %v785 = vpop.xlane.xlu0 %784
    %v786 = vsel %vm674, %v391, 0.0
    %787 = vadd.xlane.f32.xlu0 %v786
    %v788 = vpop.xlane.xlu0 %787
    %v789 = vsel %vm674, %v392, 0.0
    %790 = vadd.xlane.f32.xlu0 %v789
    %v791 = vpop.xlane.xlu0 %790
    %v792 = vsel %vm674, %v393, 0.0
    %793 = vadd.xlane.f32.xlu0 %v792
    %v794 = vpop.xlane.xlu0 %793
    %v795 = vsel %vm674, %v394, 0.0
    %796 = vadd.xlane.f32.xlu0 %v795
    %v797 = vpop.xlane.xlu0 %796
    %v798 = vsel %vm674, %v395, 0.0
    %799 = vadd.xlane.f32.xlu0 %v798
    %v800 = vpop.xlane.xlu0 %799
    %v801 = vsel %vm674, %v396, 0.0
    %802 = vadd.xlane.f32.xlu0 %v801
    %v803 = vpop.xlane.xlu0 %802
    %v804 = vsel %vm674, %v397, 0.0
    %805 = vadd.xlane.f32.xlu0 %v804
    %v806 = vpop.xlane.xlu0 %805
    %v807 = vsel %vm674, %v398, 0.0
    %808 = vadd.xlane.f32.xlu0 %v807
    %v809 = vpop.xlane.xlu0 %808
    %v810 = vsel %vm674, %v399, 0.0
    %811 = vadd.xlane.f32.xlu0 %v810
    %v812 = vpop.xlane.xlu0 %811
    %v813 = vsel %vm674, %v400, 0.0
    %814 = vadd.xlane.f32.xlu0 %v813
    %v815 = vpop.xlane.xlu0 %814
    %v816 = vsel %vm674, %v401, 0.0
    %817 = vadd.xlane.f32.xlu0 %v816
    %v818 = vpop.xlane.xlu0 %817
    %v819 = vsel %vm674, %v402, 0.0
    %820 = vadd.xlane.f32.xlu0 %v819
    %v821 = vpop.xlane.xlu0 %820
    %v822 = vsel %vm674, %v403, 0.0
    %823 = vadd.xlane.f32.xlu0 %v822
    %v824 = vpop.xlane.xlu0 %823
    %v825 = vsel %vm674, %v404, 0.0
    %826 = vadd.xlane.f32.xlu0 %v825
    %v827 = vpop.xlane.xlu0 %826
    %v828 = vsel %vm674, %v405, 0.0
    %829 = vadd.xlane.f32.xlu0 %v828
    %v830 = vpop.xlane.xlu0 %829
    %v831 = vsel %vm674, %v406, 0.0
    %832 = vadd.xlane.f32.xlu0 %v831
    %v833 = vpop.xlane.xlu0 %832
    %v834 = vsel %vm674, %v407, 0.0
    %835 = vadd.xlane.f32.xlu0 %v834
    %v836 = vpop.xlane.xlu0 %835
    %v837 = vsel %vm674, %v408, 0.0
    %838 = vadd.xlane.f32.xlu0 %v837
    %v839 = vpop.xlane.xlu0 %838
    %v840 = vsel %vm674, %v409, 0.0
    %841 = vadd.xlane.f32.xlu0 %v840
    %v842 = vpop.xlane.xlu0 %841
    %v843 = vsel %vm674, %v410, 0.0
    %844 = vadd.xlane.f32.xlu0 %v843
    %v845 = vpop.xlane.xlu0 %844
    %v846 = vsel %vm674, %v411, 0.0
    %847 = vadd.xlane.f32.xlu0 %v846
    %v848 = vpop.xlane.xlu0 %847
    %v849 = vsel %vm674, %v412, 0.0
    %850 = vadd.xlane.f32.xlu0 %v849
    %v851 = vpop.xlane.xlu0 %850
    %v852 = vsel %vm674, %v413, 0.0
    %853 = vadd.xlane.f32.xlu0 %v852
    %v854 = vpop.xlane.xlu0 %853
    %v855 = vsel %vm674, %v414, 0.0
    %856 = vadd.xlane.f32.xlu0 %v855
    %v857 = vpop.xlane.xlu0 %856
    %v858 = vsel %vm674, %v415, 0.0
    %859 = vadd.xlane.f32.xlu0 %v858
    %v860 = vpop.xlane.xlu0 %859
    %v861 = vsel %vm674, %v416, 0.0
    %862 = vadd.xlane.f32.xlu0 %v861
    %v863 = vpop.xlane.xlu0 %862
    %v864 = vsel %vm674, %v417, 0.0
    %865 = vadd.xlane.f32.xlu0 %v864
    %v866 = vpop.xlane.xlu0 %865
    %v867 = vsel %vm674, %v418, 0.0
    %868 = vadd.xlane.f32.xlu0 %v867
    %v869 = vpop.xlane.xlu0 %868
    %v870 = vsel %vm674, %v419, 0.0
    %871 = vadd.xlane.f32.xlu0 %v870
    %v872 = vpop.xlane.xlu0 %871
    %v873 = vsel %vm674, %v420, 0.0
    %874 = vadd.xlane.f32.xlu0 %v873
    %v875 = vpop.xlane.xlu0 %874
    %v876 = vsel %vm674, %v421, 0.0
    %877 = vadd.xlane.f32.xlu0 %v876
    %v878 = vpop.xlane.xlu0 %877
    %v879 = vsel %vm674, %v422, 0.0
    %880 = vadd.xlane.f32.xlu0 %v879
    %v881 = vpop.xlane.xlu0 %880
    %v882 = vsel %vm674, %v423, 0.0
    %883 = vadd.xlane.f32.xlu0 %v882
    %v884 = vpop.xlane.xlu0 %883
    %v885 = vsel %vm674, %v424, 0.0
    %886 = vadd.xlane.f32.xlu0 %v885
    %v887 = vpop.xlane.xlu0 %886
    %v888 = vsel %vm674, %v425, 0.0
    %889 = vadd.xlane.f32.xlu0 %v888
    %v890 = vpop.xlane.xlu0 %889
    %v891 = vsel %vm674, %v426, 0.0
    %892 = vadd.xlane.f32.xlu0 %v891
    %v893 = vpop.xlane.xlu0 %892
    %v894 = vsel %vm674, %v427, 0.0
    %895 = vadd.xlane.f32.xlu0 %v894
    %v896 = vpop.xlane.xlu0 %895
    %v897 = vsel %vm674, %v428, 0.0
    %898 = vadd.xlane.f32.xlu0 %v897
    %v899 = vpop.xlane.xlu0 %898
    %v900 = vsel %vm674, %v429, 0.0
    %901 = vadd.xlane.f32.xlu0 %v900
    %v902 = vpop.xlane.xlu0 %901
    %v903 = vsel %vm674, %v430, 0.0
    %904 = vadd.xlane.f32.xlu0 %v903
    %v905 = vpop.xlane.xlu0 %904
    %v906 = vsel %vm674, %v431, 0.0
    %907 = vadd.xlane.f32.xlu0 %v906
    %v908 = vpop.xlane.xlu0 %907
    %v909 = vsel %vm674, %v432, 0.0
    %910 = vadd.xlane.f32.xlu0 %v909
    %v911 = vpop.xlane.xlu0 %910
    %v912 = vsel %vm674, %v433, 0.0
    %913 = vadd.xlane.f32.xlu0 %v912
    %v914 = vpop.xlane.xlu0 %913
    %v915 = vsel %vm674, %v434, 0.0
    %916 = vadd.xlane.f32.xlu0 %v915
    %v917 = vpop.xlane.xlu0 %916
    %v918 = vsel %vm674, %v435, 0.0
    %919 = vadd.xlane.f32.xlu0 %v918
    %v920 = vpop.xlane.xlu0 %919
    %v921 = vsel %vm674, %v436, 0.0
    %922 = vadd.xlane.f32.xlu0 %v921
    %v923 = vpop.xlane.xlu0 %922
    %v924 = vsel %vm674, %v437, 0.0
    %925 = vadd.xlane.f32.xlu0 %v924
    %v926 = vpop.xlane.xlu0 %925
    %v927 = vsel %vm674, %v438, 0.0
    %928 = vadd.xlane.f32.xlu0 %v927
    %v929 = vpop.xlane.xlu0 %928
    %v930 = vsel %vm674, %v439, 0.0
    %931 = vadd.xlane.f32.xlu0 %v930
    %v932 = vpop.xlane.xlu0 %931
    %v933 = vsel %vm674, %v440, 0.0
    %934 = vadd.xlane.f32.xlu0 %v933
    %v935 = vpop.xlane.xlu0 %934
    %v936 = vsel %vm674, %v441, 0.0
    %937 = vadd.xlane.f32.xlu0 %v936
    %v938 = vpop.xlane.xlu0 %937
    %v939 = vsel %vm674, %v442, 0.0
    %940 = vadd.xlane.f32.xlu0 %v939
    %v941 = vpop.xlane.xlu0 %940
    %v942 = vsel %vm674, %v443, 0.0
    %943 = vadd.xlane.f32.xlu0 %v942
    %v944 = vpop.xlane.xlu0 %943
    %v945 = vsel %vm674, %v444, 0.0
    %946 = vadd.xlane.f32.xlu0 %v945
    %v947 = vpop.xlane.xlu0 %946
    %v948 = vsel %vm674, %v445, 0.0
    %949 = vadd.xlane.f32.xlu0 %v948
    %v950 = vpop.xlane.xlu0 %949
    %v951 = vsel %vm674, %v446, 0.0
    %952 = vadd.xlane.f32.xlu0 %v951
    %v953 = vpop.xlane.xlu0 %952
    %v954 = vsel %vm674, %v447, 0.0
    %955 = vadd.xlane.f32.xlu0 %v954
    %v956 = vpop.xlane.xlu0 %955
    %v957 = vsel %vm674, %v448, 0.0
    %958 = vadd.xlane.f32.xlu0 %v957
    %v959 = vpop.xlane.xlu0 %958
    %v960 = vsel %vm674, %v449, 0.0
    %961 = vadd.xlane.f32.xlu0 %v960
    %v962 = vpop.xlane.xlu0 %961
    %v963 = vsel %vm674, %v450, 0.0
    %964 = vadd.xlane.f32.xlu0 %v963
    %v965 = vpop.xlane.xlu0 %964
    %v966 = vsel %vm674, %v451, 0.0
    %967 = vadd.xlane.f32.xlu0 %v966
    %v968 = vpop.xlane.xlu0 %967
    %v969 = vsel %vm674, %v452, 0.0
    %970 = vadd.xlane.f32.xlu0 %v969
    %v971 = vpop.xlane.xlu0 %970
    %v972 = vsel %vm674, %v453, 0.0
    %973 = vadd.xlane.f32.xlu0 %v972
    %v974 = vpop.xlane.xlu0 %973
    %v975 = vsel %vm674, %v454, 0.0
    %976 = vadd.xlane.f32.xlu0 %v975
    %v977 = vpop.xlane.xlu0 %976
    %v978 = vsel %vm674, %v455, 0.0
    %979 = vadd.xlane.f32.xlu0 %v978
    %v980 = vpop.xlane.xlu0 %979
    %v981 = vsel %vm674, %v456, 0.0
    %982 = vadd.xlane.f32.xlu0 %v981
    %v983 = vpop.xlane.xlu0 %982
    %v984 = vsel %vm674, %v457, 0.0
    %985 = vadd.xlane.f32.xlu0 %v984
    %v986 = vpop.xlane.xlu0 %985
    %v987 = vsel %vm674, %v458, 0.0
    %988 = vadd.xlane.f32.xlu0 %v987
    %v989 = vpop.xlane.xlu0 %988
    %v990 = vsel %vm674, %v459, 0.0
    %991 = vadd.xlane.f32.xlu0 %v990
    %v992 = vpop.xlane.xlu0 %991
    %v993 = vsel %vm674, %v460, 0.0
    %994 = vadd.xlane.f32.xlu0 %v993
    %v995 = vpop.xlane.xlu0 %994
    %v996 = vsel %vm674, %v461, 0.0
    %997 = vadd.xlane.f32.xlu0 %v996
    %v998 = vpop.xlane.xlu0 %997
    %v999 = vsel %vm674, %v462, 0.0
    %1000 = vadd.xlane.f32.xlu0 %v999
    %v1001 = vpop.xlane.xlu0 %1000
    %v1002 = vsel %vm674, %v463, 0.0
    %1003 = vadd.xlane.f32.xlu0 %v1002
    %v1004 = vpop.xlane.xlu0 %1003
    %v1005 = vsel %vm674, %v464, 0.0
    %1006 = vadd.xlane.f32.xlu0 %v1005
    %v1007 = vpop.xlane.xlu0 %1006
    %v1008 = vsel %vm674, %v465, 0.0
    %1009 = vadd.xlane.f32.xlu0 %v1008
    %v1010 = vpop.xlane.xlu0 %1009
    %v1011 = vsel %vm674, %v466, 0.0
    %1012 = vadd.xlane.f32.xlu0 %v1011
    %v1013 = vpop.xlane.xlu0 %1012
    %v1014 = vsel %vm674, %v467, 0.0
    %1015 = vadd.xlane.f32.xlu0 %v1014
    %v1016 = vpop.xlane.xlu0 %1015
    %v1017 = vsel %vm674, %v468, 0.0
    %1018 = vadd.xlane.f32.xlu0 %v1017
    %v1019 = vpop.xlane.xlu0 %1018
    %v1020 = vsel %vm674, %v469, 0.0
    %1021 = vadd.xlane.f32.xlu0 %v1020
    %v1022 = vpop.xlane.xlu0 %1021
    %v1023 = vsel %vm674, %v470, 0.0
    %1024 = vadd.xlane.f32.xlu0 %v1023
    %v1025 = vpop.xlane.xlu0 %1024
    %v1026 = vsel %vm674, %v471, 0.0
    %1027 = vadd.xlane.f32.xlu0 %v1026
    %v1028 = vpop.xlane.xlu0 %1027
    %v1029 = vsel %vm674, %v472, 0.0
    %1030 = vadd.xlane.f32.xlu0 %v1029
    %v1031 = vpop.xlane.xlu0 %1030
    %v1032 = vsel %vm674, %v473, 0.0
    %1033 = vadd.xlane.f32.xlu0 %v1032
    %v1034 = vpop.xlane.xlu0 %1033
    %v1035 = vsel %vm674, %v474, 0.0
    %1036 = vadd.xlane.f32.xlu0 %v1035
    %v1037 = vpop.xlane.xlu0 %1036
    %v1038 = vsel %vm674, %v475, 0.0
    %1039 = vadd.xlane.f32.xlu0 %v1038
    %v1040 = vpop.xlane.xlu0 %1039
    %v1041 = vsel %vm674, %v476, 0.0
    %1042 = vadd.xlane.f32.xlu0 %v1041
    %v1043 = vpop.xlane.xlu0 %1042
    %v1044 = vsel %vm674, %v477, 0.0
    %1045 = vadd.xlane.f32.xlu0 %v1044
    %v1046 = vpop.xlane.xlu0 %1045
    %v1047 = vsel %vm674, %v478, 0.0
    %1048 = vadd.xlane.f32.xlu0 %v1047
    %v1049 = vpop.xlane.xlu0 %1048
    %v1050 = vsel %vm674, %v479, 0.0
    %1051 = vadd.xlane.f32.xlu0 %v1050
    %v1052 = vpop.xlane.xlu0 %1051
    %v1053 = vsel %vm674, %v480, 0.0
    %1054 = vadd.xlane.f32.xlu0 %v1053
    %v1055 = vpop.xlane.xlu0 %1054
    %v1056 = vsel %vm674, %v481, 0.0
    %1057 = vadd.xlane.f32.xlu0 %v1056
    %v1058 = vpop.xlane.xlu0 %1057
    %v1059 = vsel %vm674, %v482, 0.0
    %1060 = vadd.xlane.f32.xlu0 %v1059
    %v1061 = vpop.xlane.xlu0 %1060
    %v1062 = vsel %vm674, %v483, 0.0
    %1063 = vadd.xlane.f32.xlu0 %v1062
    %v1064 = vpop.xlane.xlu0 %1063
    %v1065 = vsel %vm674, %v484, 0.0
    %1066 = vadd.xlane.f32.xlu0 %v1065
    %v1067 = vpop.xlane.xlu0 %1066
    %v1068 = vsel %vm674, %v485, 0.0
    %1069 = vadd.xlane.f32.xlu0 %v1068
    %v1070 = vpop.xlane.xlu0 %1069
    %v1071 = vsel %vm674, %v486, 0.0
    %1072 = vadd.xlane.f32.xlu0 %v1071
    %v1073 = vpop.xlane.xlu0 %1072
    %v1074 = vsel %vm674, %v487, 0.0
    %1075 = vadd.xlane.f32.xlu0 %v1074
    %v1076 = vpop.xlane.xlu0 %1075
    %v1077 = vsel %vm674, %v488, 0.0
    %1078 = vadd.xlane.f32.xlu0 %v1077
    %v1079 = vpop.xlane.xlu0 %1078
    %v1080 = vsel %vm674, %v489, 0.0
    %1081 = vadd.xlane.f32.xlu0 %v1080
    %v1082 = vpop.xlane.xlu0 %1081
    %v1083 = vsel %vm674, %v490, 0.0
    %1084 = vadd.xlane.f32.xlu0 %v1083
    %v1085 = vpop.xlane.xlu0 %1084
    %v1086 = vsel %vm674, %v491, 0.0
    %1087 = vadd.xlane.f32.xlu0 %v1086
    %v1088 = vpop.xlane.xlu0 %1087
    %v1089 = vsel %vm674, %v492, 0.0
    %1090 = vadd.xlane.f32.xlu0 %v1089
    %v1091 = vpop.xlane.xlu0 %1090
    %v1092 = vsel %vm674, %v493, 0.0
    %1093 = vadd.xlane.f32.xlu0 %v1092
    %v1094 = vpop.xlane.xlu0 %1093
    %v1095 = vsel %vm674, %v494, 0.0
    %1096 = vadd.xlane.f32.xlu0 %v1095
    %v1097 = vpop.xlane.xlu0 %1096
    %v1098 = vsel %vm674, %v495, 0.0
    %1099 = vadd.xlane.f32.xlu0 %v1098
    %v1100 = vpop.xlane.xlu0 %1099
    %v1101 = vsel %vm674, %v496, 0.0
    %1102 = vadd.xlane.f32.xlu0 %v1101
    %v1103 = vpop.xlane.xlu0 %1102
    %v1104 = vsel %vm674, %v497, 0.0
    %1105 = vadd.xlane.f32.xlu0 %v1104
    %v1106 = vpop.xlane.xlu0 %1105
    %v1107 = vsel %vm674, %v498, 0.0
    %1108 = vadd.xlane.f32.xlu0 %v1107
    %v1109 = vpop.xlane.xlu0 %1108
    %v1110 = vsel %vm674, %v499, 0.0
    %1111 = vadd.xlane.f32.xlu0 %v1110
    %v1112 = vpop.xlane.xlu0 %1111
    %v1113 = vsel %vm674, %v500, 0.0
    %1114 = vadd.xlane.f32.xlu0 %v1113
    %v1115 = vpop.xlane.xlu0 %1114
    %v1116 = vsel %vm674, %v501, 0.0
    %1117 = vadd.xlane.f32.xlu0 %v1116
    %v1118 = vpop.xlane.xlu0 %1117
    %v1119 = vsel %vm674, %v502, 0.0
    %1120 = vadd.xlane.f32.xlu0 %v1119
    %v1121 = vpop.xlane.xlu0 %1120
    %v1122 = vsel %vm674, %v503, 0.0
    %1123 = vadd.xlane.f32.xlu0 %v1122
    %v1124 = vpop.xlane.xlu0 %1123
    %v1125 = vsel %vm674, %v504, 0.0
    %1126 = vadd.xlane.f32.xlu0 %v1125
    %v1127 = vpop.xlane.xlu0 %1126
    %v1128 = vsel %vm674, %v505, 0.0
    %1129 = vadd.xlane.f32.xlu0 %v1128
    %v1130 = vpop.xlane.xlu0 %1129
    %v1131 = vsel %vm674, %v506, 0.0
    %1132 = vadd.xlane.f32.xlu0 %v1131
    %v1133 = vpop.xlane.xlu0 %1132
    %v1134 = vsel %vm674, %v507, 0.0
    %1135 = vadd.xlane.f32.xlu0 %v1134
    %v1136 = vpop.xlane.xlu0 %1135
    %v1137 = vsel %vm674, %v508, 0.0
    %1138 = vadd.xlane.f32.xlu0 %v1137
    %v1139 = vpop.xlane.xlu0 %1138
    %v1140 = vsel %vm674, %v509, 0.0
    %1141 = vadd.xlane.f32.xlu0 %v1140
    %v1142 = vpop.xlane.xlu0 %1141
    %v1143 = vsel %vm674, %v510, 0.0
    %1144 = vadd.xlane.f32.xlu0 %v1143
    %v1145 = vpop.xlane.xlu0 %1144
    %v1146 = vsel %vm674, %v511, 0.0
    %1147 = vadd.xlane.f32.xlu0 %v1146
    %v1148 = vpop.xlane.xlu0 %1147
    %v1149 = vsel %vm674, %v512, 0.0
    %1150 = vadd.xlane.f32.xlu0 %v1149
    %v1151 = vpop.xlane.xlu0 %1150
    %v1152 = vsel %vm674, %v513, 0.0
    %1153 = vadd.xlane.f32.xlu0 %v1152
    %v1154 = vpop.xlane.xlu0 %1153
    %v1155 = vsel %vm674, %v514, 0.0
    %1156 = vadd.xlane.f32.xlu0 %v1155
    %v1157 = vpop.xlane.xlu0 %1156
    %v1158 = vsel %vm674, %v515, 0.0
    %1159 = vadd.xlane.f32.xlu0 %v1158
    %v1160 = vpop.xlane.xlu0 %1159
    %v1161 = vsel %vm674, %v516, 0.0
    %1162 = vadd.xlane.f32.xlu0 %v1161
    %v1163 = vpop.xlane.xlu0 %1162
    %v1164 = vsel %vm674, %v517, 0.0
    %1165 = vadd.xlane.f32.xlu0 %v1164
    %v1166 = vpop.xlane.xlu0 %1165
    %v1167 = vsel %vm674, %v518, 0.0
    %1168 = vadd.xlane.f32.xlu0 %v1167
    %v1169 = vpop.xlane.xlu0 %1168
    %v1170 = vsel %vm674, %v519, 0.0
    %1171 = vadd.xlane.f32.xlu0 %v1170
    %v1172 = vpop.xlane.xlu0 %1171
    %v1173 = vsel %vm674, %v520, 0.0
    %1174 = vadd.xlane.f32.xlu0 %v1173
    %v1175 = vpop.xlane.xlu0 %1174
    %v1176 = vsel %vm674, %v521, 0.0
    %1177 = vadd.xlane.f32.xlu0 %v1176
    %v1178 = vpop.xlane.xlu0 %1177
    %v1179 = vsel %vm674, %v522, 0.0
    %1180 = vadd.xlane.f32.xlu0 %v1179
    %v1181 = vpop.xlane.xlu0 %1180
    %v1182 = vsel %vm674, %v523, 0.0
    %1183 = vadd.xlane.f32.xlu0 %v1182
    %v1184 = vpop.xlane.xlu0 %1183
    %v1185 = vsel %vm674, %v524, 0.0
    %1186 = vadd.xlane.f32.xlu0 %v1185
    %v1187 = vpop.xlane.xlu0 %1186
    %v1188 = vsel %vm674, %v525, 0.0
    %1189 = vadd.xlane.f32.xlu0 %v1188
    %v1190 = vpop.xlane.xlu0 %1189
    %v1191 = vsel %vm674, %v526, 0.0
    %1192 = vadd.xlane.f32.xlu0 %v1191
    %v1193 = vpop.xlane.xlu0 %1192
    %v1194 = vsel %vm674, %v527, 0.0
    %1195 = vadd.xlane.f32.xlu0 %v1194
    %v1196 = vpop.xlane.xlu0 %1195
    %v1197 = vsel %vm674, %v528, 0.0
    %1198 = vadd.xlane.f32.xlu0 %v1197
    %v1199 = vpop.xlane.xlu0 %1198
    %v1200 = vsel %vm674, %v529, 0.0
    %1201 = vadd.xlane.f32.xlu0 %v1200
    %v1202 = vpop.xlane.xlu0 %1201
    %v1203 = vsel %vm674, %v530, 0.0
    %1204 = vadd.xlane.f32.xlu0 %v1203
    %v1205 = vpop.xlane.xlu0 %1204
    %v1206 = vsel %vm674, %v531, 0.0
    %1207 = vadd.xlane.f32.xlu0 %v1206
    %v1208 = vpop.xlane.xlu0 %1207
    %v1209 = vsel %vm674, %v532, 0.0
    %1210 = vadd.xlane.f32.xlu0 %v1209
    %v1211 = vpop.xlane.xlu0 %1210
    %v1212 = vsel %vm674, %v533, 0.0
    %1213 = vadd.xlane.f32.xlu0 %v1212
    %v1214 = vpop.xlane.xlu0 %1213
    %v1215 = vsel %vm674, %v534, 0.0
    %1216 = vadd.xlane.f32.xlu0 %v1215
    %v1217 = vpop.xlane.xlu0 %1216
    %v1218 = vsel %vm674, %v535, 0.0
    %1219 = vadd.xlane.f32.xlu0 %v1218
    %v1220 = vpop.xlane.xlu0 %1219
    %v1221 = vsel %vm674, %v536, 0.0
    %1222 = vadd.xlane.f32.xlu0 %v1221
    %v1223 = vpop.xlane.xlu0 %1222
    %v1224 = vsel %vm674, %v537, 0.0
    %1225 = vadd.xlane.f32.xlu0 %v1224
    %v1226 = vpop.xlane.xlu0 %1225
    %v1227 = vsel %vm674, %v538, 0.0
    %1228 = vadd.xlane.f32.xlu0 %v1227
    %v1229 = vpop.xlane.xlu0 %1228
    %v1230 = vsel %vm674, %v539, 0.0
    %1231 = vadd.xlane.f32.xlu0 %v1230
    %v1232 = vpop.xlane.xlu0 %1231
    %v1233 = vsel %vm674, %v540, 0.0
    %1234 = vadd.xlane.f32.xlu0 %v1233
    %v1235 = vpop.xlane.xlu0 %1234
    %v1236 = vsel %vm674, %v541, 0.0
    %1237 = vadd.xlane.f32.xlu0 %v1236
    %v1238 = vpop.xlane.xlu0 %1237
    %v1239 = vsel %vm674, %v542, 0.0
    %1240 = vadd.xlane.f32.xlu0 %v1239
    %v1241 = vpop.xlane.xlu0 %1240
    %v1242 = vsel %vm674, %v543, 0.0
    %1243 = vadd.xlane.f32.xlu0 %v1242
    %v1244 = vpop.xlane.xlu0 %1243
    %v1245 = vsel %vm674, %v544, 0.0
    %1246 = vadd.xlane.f32.xlu0 %v1245
    %v1247 = vpop.xlane.xlu0 %1246
    %v1248 = vsel %vm674, %v545, 0.0
    %1249 = vadd.xlane.f32.xlu0 %v1248
    %v1250 = vpop.xlane.xlu0 %1249
    %v1251 = vsel %vm674, %v546, 0.0
    %1252 = vadd.xlane.f32.xlu0 %v1251
    %v1253 = vpop.xlane.xlu0 %1252
    %v1254 = vsel %vm674, %v547, 0.0
    %1255 = vadd.xlane.f32.xlu0 %v1254
    %v1256 = vpop.xlane.xlu0 %1255
    %v1257 = vsel %vm674, %v548, 0.0
    %1258 = vadd.xlane.f32.xlu0 %v1257
    %v1259 = vpop.xlane.xlu0 %1258
    %v1260 = vsel %vm674, %v549, 0.0
    %1261 = vadd.xlane.f32.xlu0 %v1260
    %v1262 = vpop.xlane.xlu0 %1261
    %v1263 = vsel %vm674, %v550, 0.0
    %1264 = vadd.xlane.f32.xlu0 %v1263
    %v1265 = vpop.xlane.xlu0 %1264
    %v1266 = vsel %vm674, %v551, 0.0
    %1267 = vadd.xlane.f32.xlu0 %v1266
    %v1268 = vpop.xlane.xlu0 %1267
    %v1269 = vsel %vm674, %v552, 0.0
    %1270 = vadd.xlane.f32.xlu0 %v1269
    %v1271 = vpop.xlane.xlu0 %1270
    %v1272 = vsel %vm674, %v553, 0.0
    %1273 = vadd.xlane.f32.xlu0 %v1272
    %v1274 = vpop.xlane.xlu0 %1273
    %v1275 = vsel %vm674, %v554, 0.0
    %1276 = vadd.xlane.f32.xlu0 %v1275
    %v1277 = vpop.xlane.xlu0 %1276
    %v1278 = vsel %vm674, %v555, 0.0
    %1279 = vadd.xlane.f32.xlu0 %v1278
    %v1280 = vpop.xlane.xlu0 %1279
    %v1281 = vsel %vm674, %v556, 0.0
    %1282 = vadd.xlane.f32.xlu0 %v1281
    %v1283 = vpop.xlane.xlu0 %1282
    %v1284 = vsel %vm674, %v557, 0.0
    %1285 = vadd.xlane.f32.xlu0 %v1284
    %v1286 = vpop.xlane.xlu0 %1285
    %v1287 = vsel %vm674, %v558, 0.0
    %1288 = vadd.xlane.f32.xlu0 %v1287
    %v1289 = vpop.xlane.xlu0 %1288
    %v1290 = vsel %vm674, %v559, 0.0
    %1291 = vadd.xlane.f32.xlu0 %v1290
    %v1292 = vpop.xlane.xlu0 %1291
    %v1293 = vsel %vm674, %v560, 0.0
    %1294 = vadd.xlane.f32.xlu0 %v1293
    %v1295 = vpop.xlane.xlu0 %1294
    %v1296 = vsel %vm674, %v561, 0.0
    %1297 = vadd.xlane.f32.xlu0 %v1296
    %v1298 = vpop.xlane.xlu0 %1297
    %v1299 = vsel %vm674, %v562, 0.0
    %1300 = vadd.xlane.f32.xlu0 %v1299
    %v1301 = vpop.xlane.xlu0 %1300
    %v1302 = vsel %vm674, %v563, 0.0
    %1303 = vadd.xlane.f32.xlu0 %v1302
    %v1304 = vpop.xlane.xlu0 %1303
    %v1305 = vsel %vm674, %v564, 0.0
    %1306 = vadd.xlane.f32.xlu0 %v1305
    %v1307 = vpop.xlane.xlu0 %1306
    %v1308 = vsel %vm674, %v565, 0.0
    %1309 = vadd.xlane.f32.xlu0 %v1308
    %v1310 = vpop.xlane.xlu0 %1309
    %v1311 = vsel %vm674, %v566, 0.0
    %1312 = vadd.xlane.f32.xlu0 %v1311
    %v1313 = vpop.xlane.xlu0 %1312
    %v1314 = vsel %vm674, %v567, 0.0
    %1315 = vadd.xlane.f32.xlu0 %v1314
    %v1316 = vpop.xlane.xlu0 %1315
    %v1317 = vsel %vm674, %v568, 0.0
    %1318 = vadd.xlane.f32.xlu0 %v1317
    %v1319 = vpop.xlane.xlu0 %1318
    %v1320 = vsel %vm674, %v569, 0.0
    %1321 = vadd.xlane.f32.xlu0 %v1320
    %v1322 = vpop.xlane.xlu0 %1321
    %v1323 = vsel %vm674, %v570, 0.0
    %1324 = vadd.xlane.f32.xlu0 %v1323
    %v1325 = vpop.xlane.xlu0 %1324
    %v1326 = vsel %vm674, %v571, 0.0
    %1327 = vadd.xlane.f32.xlu0 %v1326
    %v1328 = vpop.xlane.xlu0 %1327
    %v1329 = vsel %vm674, %v572, 0.0
    %1330 = vadd.xlane.f32.xlu0 %v1329
    %v1331 = vpop.xlane.xlu0 %1330
    %v1332 = vsel %vm674, %v573, 0.0
    %1333 = vadd.xlane.f32.xlu0 %v1332
    %v1334 = vpop.xlane.xlu0 %1333
    %v1335 = vsel %vm674, %v574, 0.0
    %1336 = vadd.xlane.f32.xlu0 %v1335
    %v1337 = vpop.xlane.xlu0 %1336
    %v1338 = vsel %vm674, %v575, 0.0
    %1339 = vadd.xlane.f32.xlu0 %v1338
    %v1340 = vpop.xlane.xlu0 %1339
    %v1341 = vsel %vm674, %v576, 0.0
    %1342 = vadd.xlane.f32.xlu0 %v1341
    %v1343 = vpop.xlane.xlu0 %1342
    %v1344 = vsel %vm674, %v577, 0.0
    %1345 = vadd.xlane.f32.xlu0 %v1344
    %v1346 = vpop.xlane.xlu0 %1345
    %v1347 = vsel %vm674, %v578, 0.0
    %1348 = vadd.xlane.f32.xlu0 %v1347
    %v1349 = vpop.xlane.xlu0 %1348
    %v1350 = vsel %vm674, %v579, 0.0
    %1351 = vadd.xlane.f32.xlu0 %v1350
    %v1352 = vpop.xlane.xlu0 %1351
    %v1353 = vsel %vm674, %v580, 0.0
    %1354 = vadd.xlane.f32.xlu0 %v1353
    %v1355 = vpop.xlane.xlu0 %1354
    %v1356 = vsel %vm674, %v581, 0.0
    %1357 = vadd.xlane.f32.xlu0 %v1356
    %v1358 = vpop.xlane.xlu0 %1357
    %v1359 = vsel %vm674, %v582, 0.0
    %1360 = vadd.xlane.f32.xlu0 %v1359
    %v1361 = vpop.xlane.xlu0 %1360
    %v1362 = vsel %vm674, %v583, 0.0
    %1363 = vadd.xlane.f32.xlu0 %v1362
    %v1364 = vpop.xlane.xlu0 %1363
    %v1365 = vsel %vm674, %v584, 0.0
    %1366 = vadd.xlane.f32.xlu0 %v1365
    %v1367 = vpop.xlane.xlu0 %1366
    %v1368 = vsel %vm674, %v585, 0.0
    %1369 = vadd.xlane.f32.xlu0 %v1368
    %v1370 = vpop.xlane.xlu0 %1369
    %v1371 = vsel %vm674, %v586, 0.0
    %1372 = vadd.xlane.f32.xlu0 %v1371
    %v1373 = vpop.xlane.xlu0 %1372
    %v1374 = vsel %vm674, %v587, 0.0
    %1375 = vadd.xlane.f32.xlu0 %v1374
    %v1376 = vpop.xlane.xlu0 %1375
    %v1377 = vsel %vm674, %v588, 0.0
    %1378 = vadd.xlane.f32.xlu0 %v1377
    %v1379 = vpop.xlane.xlu0 %1378
    %v1380 = vsel %vm674, %v589, 0.0
    %1381 = vadd.xlane.f32.xlu0 %v1380
    %v1382 = vpop.xlane.xlu0 %1381
    %v1383 = vsel %vm674, %v590, 0.0
    %1384 = vadd.xlane.f32.xlu0 %v1383
    %v1385 = vpop.xlane.xlu0 %1384
    %v1386 = vsel %vm674, %v591, 0.0
    %1387 = vadd.xlane.f32.xlu0 %v1386
    %v1388 = vpop.xlane.xlu0 %1387
    %v1389 = vsel %vm674, %v592, 0.0
    %1390 = vadd.xlane.f32.xlu0 %v1389
    %v1391 = vpop.xlane.xlu0 %1390
    %v1392 = vsel %vm674, %v593, 0.0
    %1393 = vadd.xlane.f32.xlu0 %v1392
    %v1394 = vpop.xlane.xlu0 %1393
    %v1395 = vsel %vm674, %v594, 0.0
    %1396 = vadd.xlane.f32.xlu0 %v1395
    %v1397 = vpop.xlane.xlu0 %1396
    %v1398 = vsel %vm674, %v595, 0.0
    %1399 = vadd.xlane.f32.xlu0 %v1398
    %v1400 = vpop.xlane.xlu0 %1399
    %v1401 = vsel %vm674, %v596, 0.0
    %1402 = vadd.xlane.f32.xlu0 %v1401
    %v1403 = vpop.xlane.xlu0 %1402
    %v1404 = vsel %vm674, %v597, 0.0
    %1405 = vadd.xlane.f32.xlu0 %v1404
    %v1406 = vpop.xlane.xlu0 %1405
    %v1407 = vsel %vm674, %v598, 0.0
    %1408 = vadd.xlane.f32.xlu0 %v1407
    %v1409 = vpop.xlane.xlu0 %1408
    %v1410 = vsel %vm674, %v599, 0.0
    %1411 = vadd.xlane.f32.xlu0 %v1410
    %v1412 = vpop.xlane.xlu0 %1411
    %v1413 = vsel %vm674, %v600, 0.0
    %1414 = vadd.xlane.f32.xlu0 %v1413
    %v1415 = vpop.xlane.xlu0 %1414
    %v1416 = vsel %vm674, %v601, 0.0
    %1417 = vadd.xlane.f32.xlu0 %v1416
    %v1418 = vpop.xlane.xlu0 %1417
    %v1419 = vsel %vm674, %v602, 0.0
    %1420 = vadd.xlane.f32.xlu0 %v1419
    %v1421 = vpop.xlane.xlu0 %1420
    %v1422 = vsel %vm674, %v603, 0.0
    %1423 = vadd.xlane.f32.xlu0 %v1422
    %v1424 = vpop.xlane.xlu0 %1423
    %v1425 = vsel %vm674, %v604, 0.0
    %1426 = vadd.xlane.f32.xlu0 %v1425
    %v1427 = vpop.xlane.xlu0 %1426
    %v1428 = vsel %vm674, %v605, 0.0
    %1429 = vadd.xlane.f32.xlu0 %v1428
    %v1430 = vpop.xlane.xlu0 %1429
    %v1431 = vsel %vm674, %v606, 0.0
    %1432 = vadd.xlane.f32.xlu0 %v1431
    %v1433 = vpop.xlane.xlu0 %1432
    %v1434 = vsel %vm674, %v607, 0.0
    %1435 = vadd.xlane.f32.xlu0 %v1434
    %v1436 = vpop.xlane.xlu0 %1435
    %v1437 = vsel %vm674, %v608, 0.0
    %1438 = vadd.xlane.f32.xlu0 %v1437
    %v1439 = vpop.xlane.xlu0 %1438
    %v1440 = vsel %vm674, %v609, 0.0
    %1441 = vadd.xlane.f32.xlu0 %v1440
    %v1442 = vpop.xlane.xlu0 %1441
    %v1443 = vsel %vm674, %v610, 0.0
    %1444 = vadd.xlane.f32.xlu0 %v1443
    %v1445 = vpop.xlane.xlu0 %1444
    %v1446 = vsel %vm674, %v611, 0.0
    %1447 = vadd.xlane.f32.xlu0 %v1446
    %v1448 = vpop.xlane.xlu0 %1447
    %v1449 = vsel %vm674, %v612, 0.0
    %1450 = vadd.xlane.f32.xlu0 %v1449
    %v1451 = vpop.xlane.xlu0 %1450
    %v1452 = vsel %vm674, %v613, 0.0
    %1453 = vadd.xlane.f32.xlu0 %v1452
    %v1454 = vpop.xlane.xlu0 %1453
    %v1455 = vsel %vm674, %v614, 0.0
    %1456 = vadd.xlane.f32.xlu0 %v1455
    %v1457 = vpop.xlane.xlu0 %1456
    %v1458 = vsel %vm674, %v615, 0.0
    %1459 = vadd.xlane.f32.xlu0 %v1458
    %v1460 = vpop.xlane.xlu0 %1459
    %v1461 = vsel %vm674, %v616, 0.0
    %1462 = vadd.xlane.f32.xlu0 %v1461
    %v1463 = vpop.xlane.xlu0 %1462
    %v1464 = vsel %vm674, %v617, 0.0
    %1465 = vadd.xlane.f32.xlu0 %v1464
    %v1466 = vpop.xlane.xlu0 %1465
    %v1467 = vsel %vm674, %v618, 0.0
    %1468 = vadd.xlane.f32.xlu0 %v1467
    %v1469 = vpop.xlane.xlu0 %1468
    %v1470 = vsel %vm674, %v619, 0.0
    %1471 = vadd.xlane.f32.xlu0 %v1470
    %v1472 = vpop.xlane.xlu0 %1471
    %v1473 = vsel %vm674, %v620, 0.0
    %1474 = vadd.xlane.f32.xlu0 %v1473
    %v1475 = vpop.xlane.xlu0 %1474
    %v1476 = vsel %vm674, %v621, 0.0
    %1477 = vadd.xlane.f32.xlu0 %v1476
    %v1478 = vpop.xlane.xlu0 %1477
    %v1479 = vsel %vm674, %v622, 0.0
    %1480 = vadd.xlane.f32.xlu0 %v1479
    %v1481 = vpop.xlane.xlu0 %1480
    %v1482 = vsel %vm674, %v623, 0.0
    %1483 = vadd.xlane.f32.xlu0 %v1482
    %v1484 = vpop.xlane.xlu0 %1483
    %v1485 = vsel %vm674, %v624, 0.0
    %1486 = vadd.xlane.f32.xlu0 %v1485
    %v1487 = vpop.xlane.xlu0 %1486
    %v1488 = vsel %vm674, %v625, 0.0
    %1489 = vadd.xlane.f32.xlu0 %v1488
    %v1490 = vpop.xlane.xlu0 %1489
    %v1491 = vsel %vm674, %v626, 0.0
    %1492 = vadd.xlane.f32.xlu0 %v1491
    %v1493 = vpop.xlane.xlu0 %1492
    %v1494 = vsel %vm674, %v627, 0.0
    %1495 = vadd.xlane.f32.xlu0 %v1494
    %v1496 = vpop.xlane.xlu0 %1495
    %v1497 = vsel %vm674, %v628, 0.0
    %1498 = vadd.xlane.f32.xlu0 %v1497
    %v1499 = vpop.xlane.xlu0 %1498
    %v1500 = vsel %vm674, %v629, 0.0
    %1501 = vadd.xlane.f32.xlu0 %v1500
    %v1502 = vpop.xlane.xlu0 %1501
    %v1503 = vsel %vm674, %v630, 0.0
    %1504 = vadd.xlane.f32.xlu0 %v1503
    %v1505 = vpop.xlane.xlu0 %1504
    %v1506 = vsel %vm674, %v631, 0.0
    %1507 = vadd.xlane.f32.xlu0 %v1506
    %v1508 = vpop.xlane.xlu0 %1507
    %v1509 = vsel %vm674, %v632, 0.0
    %1510 = vadd.xlane.f32.xlu0 %v1509
    %v1511 = vpop.xlane.xlu0 %1510
    %v1512 = vsel %vm674, %v633, 0.0
    %1513 = vadd.xlane.f32.xlu0 %v1512
    %v1514 = vpop.xlane.xlu0 %1513
    %v1515 = vsel %vm674, %v634, 0.0
    %1516 = vadd.xlane.f32.xlu0 %v1515
    %v1517 = vpop.xlane.xlu0 %1516
    %v1518 = vsel %vm674, %v635, 0.0
    %1519 = vadd.xlane.f32.xlu0 %v1518
    %v1520 = vpop.xlane.xlu0 %1519
    %v1521 = vsel %vm674, %v636, 0.0
    %1522 = vadd.xlane.f32.xlu0 %v1521
    %v1523 = vpop.xlane.xlu0 %1522
    %v1524 = vsel %vm674, %v637, 0.0
    %1525 = vadd.xlane.f32.xlu0 %v1524
    %v1526 = vpop.xlane.xlu0 %1525
    %v1527 = vsel %vm674, %v638, 0.0
    %1528 = vadd.xlane.f32.xlu0 %v1527
    %v1529 = vpop.xlane.xlu0 %1528
    %v1530 = vsel %vm674, %v639, 0.0
    %1531 = vadd.xlane.f32.xlu0 %v1530
    %v1532 = vpop.xlane.xlu0 %1531
    %v1533 = vsel %vm674, %v640, 0.0
    %1534 = vadd.xlane.f32.xlu0 %v1533
    %v1535 = vpop.xlane.xlu0 %1534
    %v1536 = vsel %vm674, %v641, 0.0
    %1537 = vadd.xlane.f32.xlu0 %v1536
    %v1538 = vpop.xlane.xlu0 %1537
    %v1539 = vsel %vm674, %v642, 0.0
    %1540 = vadd.xlane.f32.xlu0 %v1539
    %v1541 = vpop.xlane.xlu0 %1540
    %v1542 = vsel %vm674, %v643, 0.0
    %1543 = vadd.xlane.f32.xlu0 %v1542
    %v1544 = vpop.xlane.xlu0 %1543
    %v1545 = vsel %vm674, %v644, 0.0
    %1546 = vadd.xlane.f32.xlu0 %v1545
    %v1547 = vpop.xlane.xlu0 %1546
    %v1548 = vsel %vm674, %v645, 0.0
    %1549 = vadd.xlane.f32.xlu0 %v1548
    %v1550 = vpop.xlane.xlu0 %1549
    %v1551 = vsel %vm674, %v646, 0.0
    %1552 = vadd.xlane.f32.xlu0 %v1551
    %v1553 = vpop.xlane.xlu0 %1552
    %v1554 = vsel %vm674, %v647, 0.0
    %1555 = vadd.xlane.f32.xlu0 %v1554
    %v1556 = vpop.xlane.xlu0 %1555
    %v1557 = vsel %vm674, %v648, 0.0
    %1558 = vadd.xlane.f32.xlu0 %v1557
    %v1559 = vpop.xlane.xlu0 %1558
    %v1560 = vsel %vm674, %v649, 0.0
    %1561 = vadd.xlane.f32.xlu0 %v1560
    %v1562 = vpop.xlane.xlu0 %1561
    %v1563 = vsel %vm674, %v650, 0.0
    %1564 = vadd.xlane.f32.xlu0 %v1563
    %v1565 = vpop.xlane.xlu0 %1564
    %v1566 = vsel %vm674, %v651, 0.0
    %1567 = vadd.xlane.f32.xlu0 %v1566
    %v1568 = vpop.xlane.xlu0 %1567
    %v1569 = vsel %vm674, %v652, 0.0
    %1570 = vadd.xlane.f32.xlu0 %v1569
    %v1571 = vpop.xlane.xlu0 %1570
    %v1572 = vsel %vm674, %v653, 0.0
    %1573 = vadd.xlane.f32.xlu0 %v1572
    %v1574 = vpop.xlane.xlu0 %1573
    %v1575 = vsel %vm674, %v654, 0.0
    %1576 = vadd.xlane.f32.xlu0 %v1575
    %v1577 = vpop.xlane.xlu0 %1576
    %v1578 = vsel %vm674, %v655, 0.0
    %1579 = vadd.xlane.f32.xlu0 %v1578
    %v1580 = vpop.xlane.xlu0 %1579
    %v1581 = vsel %vm674, %v656, 0.0
    %1582 = vadd.xlane.f32.xlu0 %v1581
    %v1583 = vpop.xlane.xlu0 %1582
    %v1584 = vsel %vm674, %v657, 0.0
    %1585 = vadd.xlane.f32.xlu0 %v1584
    %v1586 = vpop.xlane.xlu0 %1585
    %v1587 = vsel %vm674, %v658, 0.0
    %1588 = vadd.xlane.f32.xlu0 %v1587
    %v1589 = vpop.xlane.xlu0 %1588
    %v1590 = vsel %vm674, %v659, 0.0
    %1591 = vadd.xlane.f32.xlu0 %v1590
    %v1592 = vpop.xlane.xlu0 %1591
    %v1593 = vsel %vm674, %v660, 0.0
    %1594 = vadd.xlane.f32.xlu0 %v1593
    %v1595 = vpop.xlane.xlu0 %1594
    %v1596 = vsel %vm674, %v661, 0.0
    %1597 = vadd.xlane.f32.xlu0 %v1596
    %v1598 = vpop.xlane.xlu0 %1597
    %v1599 = vsel %vm674, %v662, 0.0
    %1600 = vadd.xlane.f32.xlu0 %v1599
    %v1601 = vpop.xlane.xlu0 %1600
    %v1602 = vsel %vm674, %v663, 0.0
    %1603 = vadd.xlane.f32.xlu0 %v1602
    %v1604 = vpop.xlane.xlu0 %1603
    %v1605 = vsel %vm674, %v664, 0.0
    %1606 = vadd.xlane.f32.xlu0 %v1605
    %v1607 = vpop.xlane.xlu0 %1606
    %v1608 = vsel %vm674, %v665, 0.0
    %1609 = vadd.xlane.f32.xlu0 %v1608
    %v1610 = vpop.xlane.xlu0 %1609
    %v1611 = vsel %vm674, %v666, 0.0
    %1612 = vadd.xlane.f32.xlu0 %v1611
    %v1613 = vpop.xlane.xlu0 %1612
    %v1614 = vsel %vm674, %v667, 0.0
    %1615 = vadd.xlane.f32.xlu0 %v1614
    %v1616 = vpop.xlane.xlu0 %1615
    %v1617 = vsel %vm674, %v668, 0.0
    %1618 = vadd.xlane.f32.xlu0 %v1617
    %v1619 = vpop.xlane.xlu0 %1618
    %v1620 = vsel %vm674, %v669, 0.0
    %1621 = vadd.xlane.f32.xlu0 %v1620
    %v1622 = vpop.xlane.xlu0 %1621
    %v1623 = vsel %vm674, %v670, 0.0
    %1624 = vadd.xlane.f32.xlu0 %v1623
    %v1625 = vpop.xlane.xlu0 %1624
    %v1626 = vsel %vm674, %v671, 0.0
    %1627 = vadd.xlane.f32.xlu0 %v1626
    %v1628 = vpop.xlane.xlu0 %1627
    %v1629 = vsel %vm674, %v672, 0.0
    %1630 = vadd.xlane.f32.xlu0 %v1629
    %v1631 = vpop.xlane.xlu0 %1630
    %v1632 = vsel %vm674, %v673, 0.0
    %1633 = vadd.xlane.f32.xlu0 %v1632
    %v1634 = vpop.xlane.xlu0 %1633
    %v1956 = vunpack.c.l.s4 269488144
    %v1957 = vunpack.c.0.s8 %v1956
    %v1958 = vperm.slane %v677, %v1957
    %v1960 = vunpack.c.l.s4 842150450
    %v1961 = vunpack.c.0.s8 %v1960
    %v1962 = vperm.slane %v677, %v1961
    %v1964 = vunpack.c.l.s4 1414812756
    %v1965 = vunpack.c.0.s8 %v1964
    %v1966 = vperm.slane %v677, %v1965
    %v1968 = vunpack.c.l.s4 1987475062
    %v1969 = vunpack.c.0.s8 %v1968
    %v1970 = vperm.slane %v677, %v1969
    %v1972 = vunpack.c.l.s4 269488144
    %v1973 = vunpack.c.0.s8 %v1972
    %v1974 = vperm.slane %v680, %v1973
    %v1976 = vunpack.c.l.s4 842150450
    %v1977 = vunpack.c.0.s8 %v1976
    %v1978 = vperm.slane %v680, %v1977
    %v1980 = vunpack.c.l.s4 1414812756
    %v1981 = vunpack.c.0.s8 %v1980
    %v1982 = vperm.slane %v680, %v1981
    %v1984 = vunpack.c.l.s4 1987475062
    %v1985 = vunpack.c.0.s8 %v1984
    %v1986 = vperm.slane %v680, %v1985
    %v1988 = vunpack.c.l.s4 269488144
    %v1989 = vunpack.c.0.s8 %v1988
    %v1990 = vperm.slane %v683, %v1989
    %v1992 = vunpack.c.l.s4 842150450
    %v1993 = vunpack.c.0.s8 %v1992
    %v1994 = vperm.slane %v683, %v1993
    %v1996 = vunpack.c.l.s4 1414812756
    %v1997 = vunpack.c.0.s8 %v1996
    %v1998 = vperm.slane %v683, %v1997
    %v2000 = vunpack.c.l.s4 1987475062
    %v2001 = vunpack.c.0.s8 %v2000
    %v2002 = vperm.slane %v683, %v2001
    %v2004 = vunpack.c.l.s4 269488144
    %v2005 = vunpack.c.0.s8 %v2004
    %v2006 = vperm.slane %v686, %v2005
    %v2008 = vunpack.c.l.s4 842150450
    %v2009 = vunpack.c.0.s8 %v2008
    %v2010 = vperm.slane %v686, %v2009
    %v2012 = vunpack.c.l.s4 1414812756
    %v2013 = vunpack.c.0.s8 %v2012
    %v2014 = vperm.slane %v686, %v2013
    %v2016 = vunpack.c.l.s4 1987475062
    %v2017 = vunpack.c.0.s8 %v2016
    %v2018 = vperm.slane %v686, %v2017
    %v2020 = vunpack.c.l.s4 269488144
    %v2021 = vunpack.c.0.s8 %v2020
    %v2022 = vperm.slane %v689, %v2021
    %v2024 = vunpack.c.l.s4 842150450
    %v2025 = vunpack.c.0.s8 %v2024
    %v2026 = vperm.slane %v689, %v2025
    %v2028 = vunpack.c.l.s4 1414812756
    %v2029 = vunpack.c.0.s8 %v2028
    %v2030 = vperm.slane %v689, %v2029
    %v2032 = vunpack.c.l.s4 1987475062
    %v2033 = vunpack.c.0.s8 %v2032
    %v2034 = vperm.slane %v689, %v2033
    %v2036 = vunpack.c.l.s4 269488144
    %v2037 = vunpack.c.0.s8 %v2036
    %v2038 = vperm.slane %v692, %v2037
    %v2040 = vunpack.c.l.s4 842150450
    %v2041 = vunpack.c.0.s8 %v2040
    %v2042 = vperm.slane %v692, %v2041
    %v2044 = vunpack.c.l.s4 1414812756
    %v2045 = vunpack.c.0.s8 %v2044
    %v2046 = vperm.slane %v692, %v2045
    %v2048 = vunpack.c.l.s4 1987475062
    %v2049 = vunpack.c.0.s8 %v2048
    %v2050 = vperm.slane %v692, %v2049
    %v2052 = vunpack.c.l.s4 269488144
    %v2053 = vunpack.c.0.s8 %v2052
    %v2054 = vperm.slane %v695, %v2053
    %v2056 = vunpack.c.l.s4 842150450
    %v2057 = vunpack.c.0.s8 %v2056
    %v2058 = vperm.slane %v695, %v2057
    %v2060 = vunpack.c.l.s4 1414812756
    %v2061 = vunpack.c.0.s8 %v2060
    %v2062 = vperm.slane %v695, %v2061
    %v2064 = vunpack.c.l.s4 1987475062
    %v2065 = vunpack.c.0.s8 %v2064
    %v2066 = vperm.slane %v695, %v2065
    %v2068 = vunpack.c.l.s4 269488144
    %v2069 = vunpack.c.0.s8 %v2068
    %v2070 = vperm.slane %v698, %v2069
    %v2072 = vunpack.c.l.s4 842150450
    %v2073 = vunpack.c.0.s8 %v2072
    %v2074 = vperm.slane %v698, %v2073
    %v2076 = vunpack.c.l.s4 1414812756
    %v2077 = vunpack.c.0.s8 %v2076
    %v2078 = vperm.slane %v698, %v2077
    %v2080 = vunpack.c.l.s4 1987475062
    %v2081 = vunpack.c.0.s8 %v2080
    %v2082 = vperm.slane %v698, %v2081
    %v2084 = vunpack.c.l.s4 269488144
    %v2085 = vunpack.c.0.s8 %v2084
    %v2086 = vperm.slane %v701, %v2085
    %v2088 = vunpack.c.l.s4 842150450
    %v2089 = vunpack.c.0.s8 %v2088
    %v2090 = vperm.slane %v701, %v2089
    %v2092 = vunpack.c.l.s4 1414812756
    %v2093 = vunpack.c.0.s8 %v2092
    %v2094 = vperm.slane %v701, %v2093
    %v2096 = vunpack.c.l.s4 1987475062
    %v2097 = vunpack.c.0.s8 %v2096
    %v2098 = vperm.slane %v701, %v2097
    %v2100 = vunpack.c.l.s4 269488144
    %v2101 = vunpack.c.0.s8 %v2100
    %v2102 = vperm.slane %v704, %v2101
    %v2104 = vunpack.c.l.s4 842150450
    %v2105 = vunpack.c.0.s8 %v2104
    %v2106 = vperm.slane %v704, %v2105
    %v2108 = vunpack.c.l.s4 1414812756
    %v2109 = vunpack.c.0.s8 %v2108
    %v2110 = vperm.slane %v704, %v2109
    %v2112 = vunpack.c.l.s4 1987475062
    %v2113 = vunpack.c.0.s8 %v2112
    %v2114 = vperm.slane %v704, %v2113
    %v2116 = vunpack.c.l.s4 269488144
    %v2117 = vunpack.c.0.s8 %v2116
    %v2118 = vperm.slane %v707, %v2117
    %v2120 = vunpack.c.l.s4 842150450
    %v2121 = vunpack.c.0.s8 %v2120
    %v2122 = vperm.slane %v707, %v2121
    %v2124 = vunpack.c.l.s4 1414812756
    %v2125 = vunpack.c.0.s8 %v2124
    %v2126 = vperm.slane %v707, %v2125
    %v2128 = vunpack.c.l.s4 1987475062
    %v2129 = vunpack.c.0.s8 %v2128
    %v2130 = vperm.slane %v707, %v2129
    %v2132 = vunpack.c.l.s4 269488144
    %v2133 = vunpack.c.0.s8 %v2132
    %v2134 = vperm.slane %v710, %v2133
    %v2136 = vunpack.c.l.s4 842150450
    %v2137 = vunpack.c.0.s8 %v2136
    %v2138 = vperm.slane %v710, %v2137
    %v2140 = vunpack.c.l.s4 1414812756
    %v2141 = vunpack.c.0.s8 %v2140
    %v2142 = vperm.slane %v710, %v2141
    %v2144 = vunpack.c.l.s4 1987475062
    %v2145 = vunpack.c.0.s8 %v2144
    %v2146 = vperm.slane %v710, %v2145
    %v2148 = vunpack.c.l.s4 269488144
    %v2149 = vunpack.c.0.s8 %v2148
    %v2150 = vperm.slane %v713, %v2149
    %v2152 = vunpack.c.l.s4 842150450
    %v2153 = vunpack.c.0.s8 %v2152
    %v2154 = vperm.slane %v713, %v2153
    %v2156 = vunpack.c.l.s4 1414812756
    %v2157 = vunpack.c.0.s8 %v2156
    %v2158 = vperm.slane %v713, %v2157
    %v2160 = vunpack.c.l.s4 1987475062
    %v2161 = vunpack.c.0.s8 %v2160
    %v2162 = vperm.slane %v713, %v2161
    %v2164 = vunpack.c.l.s4 269488144
    %v2165 = vunpack.c.0.s8 %v2164
    %v2166 = vperm.slane %v716, %v2165
    %v2168 = vunpack.c.l.s4 842150450
    %v2169 = vunpack.c.0.s8 %v2168
    %v2170 = vperm.slane %v716, %v2169
    %v2172 = vunpack.c.l.s4 1414812756
    %v2173 = vunpack.c.0.s8 %v2172
    %v2174 = vperm.slane %v716, %v2173
    %v2176 = vunpack.c.l.s4 1987475062
    %v2177 = vunpack.c.0.s8 %v2176
    %v2178 = vperm.slane %v716, %v2177
    %v2180 = vunpack.c.l.s4 269488144
    %v2181 = vunpack.c.0.s8 %v2180
    %v2182 = vperm.slane %v719, %v2181
    %v2184 = vunpack.c.l.s4 842150450
    %v2185 = vunpack.c.0.s8 %v2184
    %v2186 = vperm.slane %v719, %v2185
    %v2188 = vunpack.c.l.s4 1414812756
    %v2189 = vunpack.c.0.s8 %v2188
    %v2190 = vperm.slane %v719, %v2189
    %v2192 = vunpack.c.l.s4 1987475062
    %v2193 = vunpack.c.0.s8 %v2192
    %v2194 = vperm.slane %v719, %v2193
    %v2196 = vunpack.c.l.s4 269488144
    %v2197 = vunpack.c.0.s8 %v2196
    %v2198 = vperm.slane %v722, %v2197
    %v2200 = vunpack.c.l.s4 842150450
    %v2201 = vunpack.c.0.s8 %v2200
    %v2202 = vperm.slane %v722, %v2201
    %v2204 = vunpack.c.l.s4 1414812756
    %v2205 = vunpack.c.0.s8 %v2204
    %v2206 = vperm.slane %v722, %v2205
    %v2208 = vunpack.c.l.s4 1987475062
    %v2209 = vunpack.c.0.s8 %v2208
    %v2210 = vperm.slane %v722, %v2209
    %v2212 = vunpack.c.l.s4 269488144
    %v2213 = vunpack.c.0.s8 %v2212
    %v2214 = vperm.slane %v725, %v2213
    %v2216 = vunpack.c.l.s4 842150450
    %v2217 = vunpack.c.0.s8 %v2216
    %v2218 = vperm.slane %v725, %v2217
    %v2220 = vunpack.c.l.s4 1414812756
    %v2221 = vunpack.c.0.s8 %v2220
    %v2222 = vperm.slane %v725, %v2221
    %v2224 = vunpack.c.l.s4 1987475062
    %v2225 = vunpack.c.0.s8 %v2224
    %v2226 = vperm.slane %v725, %v2225
    %v2228 = vunpack.c.l.s4 269488144
    %v2229 = vunpack.c.0.s8 %v2228
    %v2230 = vperm.slane %v728, %v2229
    %v2232 = vunpack.c.l.s4 842150450
    %v2233 = vunpack.c.0.s8 %v2232
    %v2234 = vperm.slane %v728, %v2233
    %v2236 = vunpack.c.l.s4 1414812756
    %v2237 = vunpack.c.0.s8 %v2236
    %v2238 = vperm.slane %v728, %v2237
    %v2240 = vunpack.c.l.s4 1987475062
    %v2241 = vunpack.c.0.s8 %v2240
    %v2242 = vperm.slane %v728, %v2241
    %v2244 = vunpack.c.l.s4 269488144
    %v2245 = vunpack.c.0.s8 %v2244
    %v2246 = vperm.slane %v731, %v2245
    %v2248 = vunpack.c.l.s4 842150450
    %v2249 = vunpack.c.0.s8 %v2248
    %v2250 = vperm.slane %v731, %v2249
    %v2252 = vunpack.c.l.s4 1414812756
    %v2253 = vunpack.c.0.s8 %v2252
    %v2254 = vperm.slane %v731, %v2253
    %v2256 = vunpack.c.l.s4 1987475062
    %v2257 = vunpack.c.0.s8 %v2256
    %v2258 = vperm.slane %v731, %v2257
    %v2260 = vunpack.c.l.s4 269488144
    %v2261 = vunpack.c.0.s8 %v2260
    %v2262 = vperm.slane %v734, %v2261
    %v2264 = vunpack.c.l.s4 842150450
    %v2265 = vunpack.c.0.s8 %v2264
    %v2266 = vperm.slane %v734, %v2265
    %v2268 = vunpack.c.l.s4 1414812756
    %v2269 = vunpack.c.0.s8 %v2268
    %v2270 = vperm.slane %v734, %v2269
    %v2272 = vunpack.c.l.s4 1987475062
    %v2273 = vunpack.c.0.s8 %v2272
    %v2274 = vperm.slane %v734, %v2273
    %v2276 = vunpack.c.l.s4 269488144
    %v2277 = vunpack.c.0.s8 %v2276
    %v2278 = vperm.slane %v737, %v2277
    %v2280 = vunpack.c.l.s4 842150450
    %v2281 = vunpack.c.0.s8 %v2280
    %v2282 = vperm.slane %v737, %v2281
    %v2284 = vunpack.c.l.s4 1414812756
    %v2285 = vunpack.c.0.s8 %v2284
    %v2286 = vperm.slane %v737, %v2285
    %v2288 = vunpack.c.l.s4 1987475062
    %v2289 = vunpack.c.0.s8 %v2288
    %v2290 = vperm.slane %v737, %v2289
    %v2292 = vunpack.c.l.s4 269488144
    %v2293 = vunpack.c.0.s8 %v2292
    %v2294 = vperm.slane %v740, %v2293
    %v2296 = vunpack.c.l.s4 842150450
    %v2297 = vunpack.c.0.s8 %v2296
    %v2298 = vperm.slane %v740, %v2297
    %v2300 = vunpack.c.l.s4 1414812756
    %v2301 = vunpack.c.0.s8 %v2300
    %v2302 = vperm.slane %v740, %v2301
    %v2304 = vunpack.c.l.s4 1987475062
    %v2305 = vunpack.c.0.s8 %v2304
    %v2306 = vperm.slane %v740, %v2305
    %v2308 = vunpack.c.l.s4 269488144
    %v2309 = vunpack.c.0.s8 %v2308
    %v2310 = vperm.slane %v743, %v2309
    %v2312 = vunpack.c.l.s4 842150450
    %v2313 = vunpack.c.0.s8 %v2312
    %v2314 = vperm.slane %v743, %v2313
    %v2316 = vunpack.c.l.s4 1414812756
    %v2317 = vunpack.c.0.s8 %v2316
    %v2318 = vperm.slane %v743, %v2317
    %v2320 = vunpack.c.l.s4 1987475062
    %v2321 = vunpack.c.0.s8 %v2320
    %v2322 = vperm.slane %v743, %v2321
    %v2324 = vunpack.c.l.s4 269488144
    %v2325 = vunpack.c.0.s8 %v2324
    %v2326 = vperm.slane %v746, %v2325
    %v2328 = vunpack.c.l.s4 842150450
    %v2329 = vunpack.c.0.s8 %v2328
    %v2330 = vperm.slane %v746, %v2329
    %v2332 = vunpack.c.l.s4 1414812756
    %v2333 = vunpack.c.0.s8 %v2332
    %v2334 = vperm.slane %v746, %v2333
    %v2336 = vunpack.c.l.s4 1987475062
    %v2337 = vunpack.c.0.s8 %v2336
    %v2338 = vperm.slane %v746, %v2337
    %v2340 = vunpack.c.l.s4 269488144
    %v2341 = vunpack.c.0.s8 %v2340
    %v2342 = vperm.slane %v749, %v2341
    %v2344 = vunpack.c.l.s4 842150450
    %v2345 = vunpack.c.0.s8 %v2344
    %v2346 = vperm.slane %v749, %v2345
    %v2348 = vunpack.c.l.s4 1414812756
    %v2349 = vunpack.c.0.s8 %v2348
    %v2350 = vperm.slane %v749, %v2349
    %v2352 = vunpack.c.l.s4 1987475062
    %v2353 = vunpack.c.0.s8 %v2352
    %v2354 = vperm.slane %v749, %v2353
    %v2356 = vunpack.c.l.s4 269488144
    %v2357 = vunpack.c.0.s8 %v2356
    %v2358 = vperm.slane %v752, %v2357
    %v2360 = vunpack.c.l.s4 842150450
    %v2361 = vunpack.c.0.s8 %v2360
    %v2362 = vperm.slane %v752, %v2361
    %v2364 = vunpack.c.l.s4 1414812756
    %v2365 = vunpack.c.0.s8 %v2364
    %v2366 = vperm.slane %v752, %v2365
    %v2368 = vunpack.c.l.s4 1987475062
    %v2369 = vunpack.c.0.s8 %v2368
    %v2370 = vperm.slane %v752, %v2369
    %v2372 = vunpack.c.l.s4 269488144
    %v2373 = vunpack.c.0.s8 %v2372
    %v2374 = vperm.slane %v755, %v2373
    %v2376 = vunpack.c.l.s4 842150450
    %v2377 = vunpack.c.0.s8 %v2376
    %v2378 = vperm.slane %v755, %v2377
    %v2380 = vunpack.c.l.s4 1414812756
    %v2381 = vunpack.c.0.s8 %v2380
    %v2382 = vperm.slane %v755, %v2381
    %v2384 = vunpack.c.l.s4 1987475062
    %v2385 = vunpack.c.0.s8 %v2384
    %v2386 = vperm.slane %v755, %v2385
    %v2388 = vunpack.c.l.s4 269488144
    %v2389 = vunpack.c.0.s8 %v2388
    %v2390 = vperm.slane %v758, %v2389
    %v2392 = vunpack.c.l.s4 842150450
    %v2393 = vunpack.c.0.s8 %v2392
    %v2394 = vperm.slane %v758, %v2393
    %v2396 = vunpack.c.l.s4 1414812756
    %v2397 = vunpack.c.0.s8 %v2396
    %v2398 = vperm.slane %v758, %v2397
    %v2400 = vunpack.c.l.s4 1987475062
    %v2401 = vunpack.c.0.s8 %v2400
    %v2402 = vperm.slane %v758, %v2401
    %v2404 = vunpack.c.l.s4 269488144
    %v2405 = vunpack.c.0.s8 %v2404
    %v2406 = vperm.slane %v761, %v2405
    %v2408 = vunpack.c.l.s4 842150450
    %v2409 = vunpack.c.0.s8 %v2408
    %v2410 = vperm.slane %v761, %v2409
    %v2412 = vunpack.c.l.s4 1414812756
    %v2413 = vunpack.c.0.s8 %v2412
    %v2414 = vperm.slane %v761, %v2413
    %v2416 = vunpack.c.l.s4 1987475062
    %v2417 = vunpack.c.0.s8 %v2416
    %v2418 = vperm.slane %v761, %v2417
    %v2420 = vunpack.c.l.s4 269488144
    %v2421 = vunpack.c.0.s8 %v2420
    %v2422 = vperm.slane %v764, %v2421
    %v2424 = vunpack.c.l.s4 842150450
    %v2425 = vunpack.c.0.s8 %v2424
    %v2426 = vperm.slane %v764, %v2425
    %v2428 = vunpack.c.l.s4 1414812756
    %v2429 = vunpack.c.0.s8 %v2428
    %v2430 = vperm.slane %v764, %v2429
    %v2432 = vunpack.c.l.s4 1987475062
    %v2433 = vunpack.c.0.s8 %v2432
    %v2434 = vperm.slane %v764, %v2433
    %v2436 = vunpack.c.l.s4 269488144
    %v2437 = vunpack.c.0.s8 %v2436
    %v2438 = vperm.slane %v767, %v2437
    %v2440 = vunpack.c.l.s4 842150450
    %v2441 = vunpack.c.0.s8 %v2440
    %v2442 = vperm.slane %v767, %v2441
    %v2444 = vunpack.c.l.s4 1414812756
    %v2445 = vunpack.c.0.s8 %v2444
    %v2446 = vperm.slane %v767, %v2445
    %v2448 = vunpack.c.l.s4 1987475062
    %v2449 = vunpack.c.0.s8 %v2448
    %v2450 = vperm.slane %v767, %v2449
    %v2452 = vunpack.c.l.s4 269488144
    %v2453 = vunpack.c.0.s8 %v2452
    %v2454 = vperm.slane %v770, %v2453
    %v2456 = vunpack.c.l.s4 842150450
    %v2457 = vunpack.c.0.s8 %v2456
    %v2458 = vperm.slane %v770, %v2457
    %v2460 = vunpack.c.l.s4 1414812756
    %v2461 = vunpack.c.0.s8 %v2460
    %v2462 = vperm.slane %v770, %v2461
    %v2464 = vunpack.c.l.s4 1987475062
    %v2465 = vunpack.c.0.s8 %v2464
    %v2466 = vperm.slane %v770, %v2465
    %v2468 = vunpack.c.l.s4 269488144
    %v2469 = vunpack.c.0.s8 %v2468
    %v2470 = vperm.slane %v773, %v2469
    %v2472 = vunpack.c.l.s4 842150450
    %v2473 = vunpack.c.0.s8 %v2472
    %v2474 = vperm.slane %v773, %v2473
    %v2476 = vunpack.c.l.s4 1414812756
    %v2477 = vunpack.c.0.s8 %v2476
    %v2478 = vperm.slane %v773, %v2477
    %v2480 = vunpack.c.l.s4 1987475062
    %v2481 = vunpack.c.0.s8 %v2480
    %v2482 = vperm.slane %v773, %v2481
    %v2484 = vunpack.c.l.s4 269488144
    %v2485 = vunpack.c.0.s8 %v2484
    %v2486 = vperm.slane %v776, %v2485
    %v2488 = vunpack.c.l.s4 842150450
    %v2489 = vunpack.c.0.s8 %v2488
    %v2490 = vperm.slane %v776, %v2489
    %v2492 = vunpack.c.l.s4 1414812756
    %v2493 = vunpack.c.0.s8 %v2492
    %v2494 = vperm.slane %v776, %v2493
    %v2496 = vunpack.c.l.s4 1987475062
    %v2497 = vunpack.c.0.s8 %v2496
    %v2498 = vperm.slane %v776, %v2497
    %v2500 = vunpack.c.l.s4 269488144
    %v2501 = vunpack.c.0.s8 %v2500
    %v2502 = vperm.slane %v779, %v2501
    %v2504 = vunpack.c.l.s4 842150450
    %v2505 = vunpack.c.0.s8 %v2504
    %v2506 = vperm.slane %v779, %v2505
    %v2508 = vunpack.c.l.s4 1414812756
    %v2509 = vunpack.c.0.s8 %v2508
    %v2510 = vperm.slane %v779, %v2509
    %v2512 = vunpack.c.l.s4 1987475062
    %v2513 = vunpack.c.0.s8 %v2512
    %v2514 = vperm.slane %v779, %v2513
    %v2516 = vunpack.c.l.s4 269488144
    %v2517 = vunpack.c.0.s8 %v2516
    %v2518 = vperm.slane %v782, %v2517
    %v2520 = vunpack.c.l.s4 842150450
    %v2521 = vunpack.c.0.s8 %v2520
    %v2522 = vperm.slane %v782, %v2521
    %v2524 = vunpack.c.l.s4 1414812756
    %v2525 = vunpack.c.0.s8 %v2524
    %v2526 = vperm.slane %v782, %v2525
    %v2528 = vunpack.c.l.s4 1987475062
    %v2529 = vunpack.c.0.s8 %v2528
    %v2530 = vperm.slane %v782, %v2529
    %v2532 = vunpack.c.l.s4 269488144
    %v2533 = vunpack.c.0.s8 %v2532
    %v2534 = vperm.slane %v785, %v2533
    %v2536 = vunpack.c.l.s4 842150450
    %v2537 = vunpack.c.0.s8 %v2536
    %v2538 = vperm.slane %v785, %v2537
    %v2540 = vunpack.c.l.s4 1414812756
    %v2541 = vunpack.c.0.s8 %v2540
    %v2542 = vperm.slane %v785, %v2541
    %v2544 = vunpack.c.l.s4 1987475062
    %v2545 = vunpack.c.0.s8 %v2544
    %v2546 = vperm.slane %v785, %v2545
    %v2548 = vunpack.c.l.s4 269488144
    %v2549 = vunpack.c.0.s8 %v2548
    %v2550 = vperm.slane %v788, %v2549
    %v2552 = vunpack.c.l.s4 842150450
    %v2553 = vunpack.c.0.s8 %v2552
    %v2554 = vperm.slane %v788, %v2553
    %v2556 = vunpack.c.l.s4 1414812756
    %v2557 = vunpack.c.0.s8 %v2556
    %v2558 = vperm.slane %v788, %v2557
    %v2560 = vunpack.c.l.s4 1987475062
    %v2561 = vunpack.c.0.s8 %v2560
    %v2562 = vperm.slane %v788, %v2561
    %v2564 = vunpack.c.l.s4 269488144
    %v2565 = vunpack.c.0.s8 %v2564
    %v2566 = vperm.slane %v791, %v2565
    %v2568 = vunpack.c.l.s4 842150450
    %v2569 = vunpack.c.0.s8 %v2568
    %v2570 = vperm.slane %v791, %v2569
    %v2572 = vunpack.c.l.s4 1414812756
    %v2573 = vunpack.c.0.s8 %v2572
    %v2574 = vperm.slane %v791, %v2573
    %v2576 = vunpack.c.l.s4 1987475062
    %v2577 = vunpack.c.0.s8 %v2576
    %v2578 = vperm.slane %v791, %v2577
    %v2580 = vunpack.c.l.s4 269488144
    %v2581 = vunpack.c.0.s8 %v2580
    %v2582 = vperm.slane %v794, %v2581
    %v2584 = vunpack.c.l.s4 842150450
    %v2585 = vunpack.c.0.s8 %v2584
    %v2586 = vperm.slane %v794, %v2585
    %v2588 = vunpack.c.l.s4 1414812756
    %v2589 = vunpack.c.0.s8 %v2588
    %v2590 = vperm.slane %v794, %v2589
    %v2592 = vunpack.c.l.s4 1987475062
    %v2593 = vunpack.c.0.s8 %v2592
    %v2594 = vperm.slane %v794, %v2593
    %v2596 = vunpack.c.l.s4 269488144
    %v2597 = vunpack.c.0.s8 %v2596
    %v2598 = vperm.slane %v797, %v2597
    %v2600 = vunpack.c.l.s4 842150450
    %v2601 = vunpack.c.0.s8 %v2600
    %v2602 = vperm.slane %v797, %v2601
    %v2604 = vunpack.c.l.s4 1414812756
    %v2605 = vunpack.c.0.s8 %v2604
    %v2606 = vperm.slane %v797, %v2605
    %v2608 = vunpack.c.l.s4 1987475062
    %v2609 = vunpack.c.0.s8 %v2608
    %v2610 = vperm.slane %v797, %v2609
    %v2612 = vunpack.c.l.s4 269488144
    %v2613 = vunpack.c.0.s8 %v2612
    %v2614 = vperm.slane %v800, %v2613
    %v2616 = vunpack.c.l.s4 842150450
    %v2617 = vunpack.c.0.s8 %v2616
    %v2618 = vperm.slane %v800, %v2617
    %v2620 = vunpack.c.l.s4 1414812756
    %v2621 = vunpack.c.0.s8 %v2620
    %v2622 = vperm.slane %v800, %v2621
    %v2624 = vunpack.c.l.s4 1987475062
    %v2625 = vunpack.c.0.s8 %v2624
    %v2626 = vperm.slane %v800, %v2625
    %v2628 = vunpack.c.l.s4 269488144
    %v2629 = vunpack.c.0.s8 %v2628
    %v2630 = vperm.slane %v803, %v2629
    %v2632 = vunpack.c.l.s4 842150450
    %v2633 = vunpack.c.0.s8 %v2632
    %v2634 = vperm.slane %v803, %v2633
    %v2636 = vunpack.c.l.s4 1414812756
    %v2637 = vunpack.c.0.s8 %v2636
    %v2638 = vperm.slane %v803, %v2637
    %v2640 = vunpack.c.l.s4 1987475062
    %v2641 = vunpack.c.0.s8 %v2640
    %v2642 = vperm.slane %v803, %v2641
    %v2644 = vunpack.c.l.s4 269488144
    %v2645 = vunpack.c.0.s8 %v2644
    %v2646 = vperm.slane %v806, %v2645
    %v2648 = vunpack.c.l.s4 842150450
    %v2649 = vunpack.c.0.s8 %v2648
    %v2650 = vperm.slane %v806, %v2649
    %v2652 = vunpack.c.l.s4 1414812756
    %v2653 = vunpack.c.0.s8 %v2652
    %v2654 = vperm.slane %v806, %v2653
    %v2656 = vunpack.c.l.s4 1987475062
    %v2657 = vunpack.c.0.s8 %v2656
    %v2658 = vperm.slane %v806, %v2657
    %v2660 = vunpack.c.l.s4 269488144
    %v2661 = vunpack.c.0.s8 %v2660
    %v2662 = vperm.slane %v809, %v2661
    %v2664 = vunpack.c.l.s4 842150450
    %v2665 = vunpack.c.0.s8 %v2664
    %v2666 = vperm.slane %v809, %v2665
    %v2668 = vunpack.c.l.s4 1414812756
    %v2669 = vunpack.c.0.s8 %v2668
    %v2670 = vperm.slane %v809, %v2669
    %v2672 = vunpack.c.l.s4 1987475062
    %v2673 = vunpack.c.0.s8 %v2672
    %v2674 = vperm.slane %v809, %v2673
    %v2676 = vunpack.c.l.s4 269488144
    %v2677 = vunpack.c.0.s8 %v2676
    %v2678 = vperm.slane %v812, %v2677
    %v2680 = vunpack.c.l.s4 842150450
    %v2681 = vunpack.c.0.s8 %v2680
    %v2682 = vperm.slane %v812, %v2681
    %v2684 = vunpack.c.l.s4 1414812756
    %v2685 = vunpack.c.0.s8 %v2684
    %v2686 = vperm.slane %v812, %v2685
    %v2688 = vunpack.c.l.s4 1987475062
    %v2689 = vunpack.c.0.s8 %v2688
    %v2690 = vperm.slane %v812, %v2689
    %v2692 = vunpack.c.l.s4 269488144
    %v2693 = vunpack.c.0.s8 %v2692
    %v2694 = vperm.slane %v815, %v2693
    %v2696 = vunpack.c.l.s4 842150450
    %v2697 = vunpack.c.0.s8 %v2696
    %v2698 = vperm.slane %v815, %v2697
    %v2700 = vunpack.c.l.s4 1414812756
    %v2701 = vunpack.c.0.s8 %v2700
    %v2702 = vperm.slane %v815, %v2701
    %v2704 = vunpack.c.l.s4 1987475062
    %v2705 = vunpack.c.0.s8 %v2704
    %v2706 = vperm.slane %v815, %v2705
    %v2708 = vunpack.c.l.s4 269488144
    %v2709 = vunpack.c.0.s8 %v2708
    %v2710 = vperm.slane %v818, %v2709
    %v2712 = vunpack.c.l.s4 842150450
    %v2713 = vunpack.c.0.s8 %v2712
    %v2714 = vperm.slane %v818, %v2713
    %v2716 = vunpack.c.l.s4 1414812756
    %v2717 = vunpack.c.0.s8 %v2716
    %v2718 = vperm.slane %v818, %v2717
    %v2720 = vunpack.c.l.s4 1987475062
    %v2721 = vunpack.c.0.s8 %v2720
    %v2722 = vperm.slane %v818, %v2721
    %v2724 = vunpack.c.l.s4 269488144
    %v2725 = vunpack.c.0.s8 %v2724
    %v2726 = vperm.slane %v821, %v2725
    %v2728 = vunpack.c.l.s4 842150450
    %v2729 = vunpack.c.0.s8 %v2728
    %v2730 = vperm.slane %v821, %v2729
    %v2732 = vunpack.c.l.s4 1414812756
    %v2733 = vunpack.c.0.s8 %v2732
    %v2734 = vperm.slane %v821, %v2733
    %v2736 = vunpack.c.l.s4 1987475062
    %v2737 = vunpack.c.0.s8 %v2736
    %v2738 = vperm.slane %v821, %v2737
    %v2740 = vunpack.c.l.s4 269488144
    %v2741 = vunpack.c.0.s8 %v2740
    %v2742 = vperm.slane %v824, %v2741
    %v2744 = vunpack.c.l.s4 842150450
    %v2745 = vunpack.c.0.s8 %v2744
    %v2746 = vperm.slane %v824, %v2745
    %v2748 = vunpack.c.l.s4 1414812756
    %v2749 = vunpack.c.0.s8 %v2748
    %v2750 = vperm.slane %v824, %v2749
    %v2752 = vunpack.c.l.s4 1987475062
    %v2753 = vunpack.c.0.s8 %v2752
    %v2754 = vperm.slane %v824, %v2753
    %v2756 = vunpack.c.l.s4 269488144
    %v2757 = vunpack.c.0.s8 %v2756
    %v2758 = vperm.slane %v827, %v2757
    %v2760 = vunpack.c.l.s4 842150450
    %v2761 = vunpack.c.0.s8 %v2760
    %v2762 = vperm.slane %v827, %v2761
    %v2764 = vunpack.c.l.s4 1414812756
    %v2765 = vunpack.c.0.s8 %v2764
    %v2766 = vperm.slane %v827, %v2765
    %v2768 = vunpack.c.l.s4 1987475062
    %v2769 = vunpack.c.0.s8 %v2768
    %v2770 = vperm.slane %v827, %v2769
    %v2772 = vunpack.c.l.s4 269488144
    %v2773 = vunpack.c.0.s8 %v2772
    %v2774 = vperm.slane %v830, %v2773
    %v2776 = vunpack.c.l.s4 842150450
    %v2777 = vunpack.c.0.s8 %v2776
    %v2778 = vperm.slane %v830, %v2777
    %v2780 = vunpack.c.l.s4 1414812756
    %v2781 = vunpack.c.0.s8 %v2780
    %v2782 = vperm.slane %v830, %v2781
    %v2784 = vunpack.c.l.s4 1987475062
    %v2785 = vunpack.c.0.s8 %v2784
    %v2786 = vperm.slane %v830, %v2785
    %v2788 = vunpack.c.l.s4 269488144
    %v2789 = vunpack.c.0.s8 %v2788
    %v2790 = vperm.slane %v833, %v2789
    %v2792 = vunpack.c.l.s4 842150450
    %v2793 = vunpack.c.0.s8 %v2792
    %v2794 = vperm.slane %v833, %v2793
    %v2796 = vunpack.c.l.s4 1414812756
    %v2797 = vunpack.c.0.s8 %v2796
    %v2798 = vperm.slane %v833, %v2797
    %v2800 = vunpack.c.l.s4 1987475062
    %v2801 = vunpack.c.0.s8 %v2800
    %v2802 = vperm.slane %v833, %v2801
    %v2804 = vunpack.c.l.s4 269488144
    %v2805 = vunpack.c.0.s8 %v2804
    %v2806 = vperm.slane %v836, %v2805
    %v2808 = vunpack.c.l.s4 842150450
    %v2809 = vunpack.c.0.s8 %v2808
    %v2810 = vperm.slane %v836, %v2809
    %v2812 = vunpack.c.l.s4 1414812756
    %v2813 = vunpack.c.0.s8 %v2812
    %v2814 = vperm.slane %v836, %v2813
    %v2816 = vunpack.c.l.s4 1987475062
    %v2817 = vunpack.c.0.s8 %v2816
    %v2818 = vperm.slane %v836, %v2817
    %v2820 = vunpack.c.l.s4 269488144
    %v2821 = vunpack.c.0.s8 %v2820
    %v2822 = vperm.slane %v839, %v2821
    %v2824 = vunpack.c.l.s4 842150450
    %v2825 = vunpack.c.0.s8 %v2824
    %v2826 = vperm.slane %v839, %v2825
    %v2828 = vunpack.c.l.s4 1414812756
    %v2829 = vunpack.c.0.s8 %v2828
    %v2830 = vperm.slane %v839, %v2829
    %v2832 = vunpack.c.l.s4 1987475062
    %v2833 = vunpack.c.0.s8 %v2832
    %v2834 = vperm.slane %v839, %v2833
    %v2836 = vunpack.c.l.s4 269488144
    %v2837 = vunpack.c.0.s8 %v2836
    %v2838 = vperm.slane %v842, %v2837
    %v2840 = vunpack.c.l.s4 842150450
    %v2841 = vunpack.c.0.s8 %v2840
    %v2842 = vperm.slane %v842, %v2841
    %v2844 = vunpack.c.l.s4 1414812756
    %v2845 = vunpack.c.0.s8 %v2844
    %v2846 = vperm.slane %v842, %v2845
    %v2848 = vunpack.c.l.s4 1987475062
    %v2849 = vunpack.c.0.s8 %v2848
    %v2850 = vperm.slane %v842, %v2849
    %v2852 = vunpack.c.l.s4 269488144
    %v2853 = vunpack.c.0.s8 %v2852
    %v2854 = vperm.slane %v845, %v2853
    %v2856 = vunpack.c.l.s4 842150450
    %v2857 = vunpack.c.0.s8 %v2856
    %v2858 = vperm.slane %v845, %v2857
    %v2860 = vunpack.c.l.s4 1414812756
    %v2861 = vunpack.c.0.s8 %v2860
    %v2862 = vperm.slane %v845, %v2861
    %v2864 = vunpack.c.l.s4 1987475062
    %v2865 = vunpack.c.0.s8 %v2864
    %v2866 = vperm.slane %v845, %v2865
    %v2868 = vunpack.c.l.s4 269488144
    %v2869 = vunpack.c.0.s8 %v2868
    %v2870 = vperm.slane %v848, %v2869
    %v2872 = vunpack.c.l.s4 842150450
    %v2873 = vunpack.c.0.s8 %v2872
    %v2874 = vperm.slane %v848, %v2873
    %v2876 = vunpack.c.l.s4 1414812756
    %v2877 = vunpack.c.0.s8 %v2876
    %v2878 = vperm.slane %v848, %v2877
    %v2880 = vunpack.c.l.s4 1987475062
    %v2881 = vunpack.c.0.s8 %v2880
    %v2882 = vperm.slane %v848, %v2881
    %v2884 = vunpack.c.l.s4 269488144
    %v2885 = vunpack.c.0.s8 %v2884
    %v2886 = vperm.slane %v851, %v2885
    %v2888 = vunpack.c.l.s4 842150450
    %v2889 = vunpack.c.0.s8 %v2888
    %v2890 = vperm.slane %v851, %v2889
    %v2892 = vunpack.c.l.s4 1414812756
    %v2893 = vunpack.c.0.s8 %v2892
    %v2894 = vperm.slane %v851, %v2893
    %v2896 = vunpack.c.l.s4 1987475062
    %v2897 = vunpack.c.0.s8 %v2896
    %v2898 = vperm.slane %v851, %v2897
    %v2900 = vunpack.c.l.s4 269488144
    %v2901 = vunpack.c.0.s8 %v2900
    %v2902 = vperm.slane %v854, %v2901
    %v2904 = vunpack.c.l.s4 842150450
    %v2905 = vunpack.c.0.s8 %v2904
    %v2906 = vperm.slane %v854, %v2905
    %v2908 = vunpack.c.l.s4 1414812756
    %v2909 = vunpack.c.0.s8 %v2908
    %v2910 = vperm.slane %v854, %v2909
    %v2912 = vunpack.c.l.s4 1987475062
    %v2913 = vunpack.c.0.s8 %v2912
    %v2914 = vperm.slane %v854, %v2913
    %v2916 = vunpack.c.l.s4 269488144
    %v2917 = vunpack.c.0.s8 %v2916
    %v2918 = vperm.slane %v857, %v2917
    %v2920 = vunpack.c.l.s4 842150450
    %v2921 = vunpack.c.0.s8 %v2920
    %v2922 = vperm.slane %v857, %v2921
    %v2924 = vunpack.c.l.s4 1414812756
    %v2925 = vunpack.c.0.s8 %v2924
    %v2926 = vperm.slane %v857, %v2925
    %v2928 = vunpack.c.l.s4 1987475062
    %v2929 = vunpack.c.0.s8 %v2928
    %v2930 = vperm.slane %v857, %v2929
    %v2932 = vunpack.c.l.s4 269488144
    %v2933 = vunpack.c.0.s8 %v2932
    %v2934 = vperm.slane %v860, %v2933
    %v2936 = vunpack.c.l.s4 842150450
    %v2937 = vunpack.c.0.s8 %v2936
    %v2938 = vperm.slane %v860, %v2937
    %v2940 = vunpack.c.l.s4 1414812756
    %v2941 = vunpack.c.0.s8 %v2940
    %v2942 = vperm.slane %v860, %v2941
    %v2944 = vunpack.c.l.s4 1987475062
    %v2945 = vunpack.c.0.s8 %v2944
    %v2946 = vperm.slane %v860, %v2945
    %v2948 = vunpack.c.l.s4 269488144
    %v2949 = vunpack.c.0.s8 %v2948
    %v2950 = vperm.slane %v863, %v2949
    %v2952 = vunpack.c.l.s4 842150450
    %v2953 = vunpack.c.0.s8 %v2952
    %v2954 = vperm.slane %v863, %v2953
    %v2956 = vunpack.c.l.s4 1414812756
    %v2957 = vunpack.c.0.s8 %v2956
    %v2958 = vperm.slane %v863, %v2957
    %v2960 = vunpack.c.l.s4 1987475062
    %v2961 = vunpack.c.0.s8 %v2960
    %v2962 = vperm.slane %v863, %v2961
    %v2964 = vunpack.c.l.s4 269488144
    %v2965 = vunpack.c.0.s8 %v2964
    %v2966 = vperm.slane %v866, %v2965
    %v2968 = vunpack.c.l.s4 842150450
    %v2969 = vunpack.c.0.s8 %v2968
    %v2970 = vperm.slane %v866, %v2969
    %v2972 = vunpack.c.l.s4 1414812756
    %v2973 = vunpack.c.0.s8 %v2972
    %v2974 = vperm.slane %v866, %v2973
    %v2976 = vunpack.c.l.s4 1987475062
    %v2977 = vunpack.c.0.s8 %v2976
    %v2978 = vperm.slane %v866, %v2977
    %v2980 = vunpack.c.l.s4 269488144
    %v2981 = vunpack.c.0.s8 %v2980
    %v2982 = vperm.slane %v869, %v2981
    %v2984 = vunpack.c.l.s4 842150450
    %v2985 = vunpack.c.0.s8 %v2984
    %v2986 = vperm.slane %v869, %v2985
    %v2988 = vunpack.c.l.s4 1414812756
    %v2989 = vunpack.c.0.s8 %v2988
    %v2990 = vperm.slane %v869, %v2989
    %v2992 = vunpack.c.l.s4 1987475062
    %v2993 = vunpack.c.0.s8 %v2992
    %v2994 = vperm.slane %v869, %v2993
    %v2996 = vunpack.c.l.s4 269488144
    %v2997 = vunpack.c.0.s8 %v2996
    %v2998 = vperm.slane %v872, %v2997
    %v3000 = vunpack.c.l.s4 842150450
    %v3001 = vunpack.c.0.s8 %v3000
    %v3002 = vperm.slane %v872, %v3001
    %v3004 = vunpack.c.l.s4 1414812756
    %v3005 = vunpack.c.0.s8 %v3004
    %v3006 = vperm.slane %v872, %v3005
    %v3008 = vunpack.c.l.s4 1987475062
    %v3009 = vunpack.c.0.s8 %v3008
    %v3010 = vperm.slane %v872, %v3009
    %v3012 = vunpack.c.l.s4 269488144
    %v3013 = vunpack.c.0.s8 %v3012
    %v3014 = vperm.slane %v875, %v3013
    %v3016 = vunpack.c.l.s4 842150450
    %v3017 = vunpack.c.0.s8 %v3016
    %v3018 = vperm.slane %v875, %v3017
    %v3020 = vunpack.c.l.s4 1414812756
    %v3021 = vunpack.c.0.s8 %v3020
    %v3022 = vperm.slane %v875, %v3021
    %v3024 = vunpack.c.l.s4 1987475062
    %v3025 = vunpack.c.0.s8 %v3024
    %v3026 = vperm.slane %v875, %v3025
    %v3028 = vunpack.c.l.s4 269488144
    %v3029 = vunpack.c.0.s8 %v3028
    %v3030 = vperm.slane %v878, %v3029
    %v3032 = vunpack.c.l.s4 842150450
    %v3033 = vunpack.c.0.s8 %v3032
    %v3034 = vperm.slane %v878, %v3033
    %v3036 = vunpack.c.l.s4 1414812756
    %v3037 = vunpack.c.0.s8 %v3036
    %v3038 = vperm.slane %v878, %v3037
    %v3040 = vunpack.c.l.s4 1987475062
    %v3041 = vunpack.c.0.s8 %v3040
    %v3042 = vperm.slane %v878, %v3041
    %v3044 = vunpack.c.l.s4 269488144
    %v3045 = vunpack.c.0.s8 %v3044
    %v3046 = vperm.slane %v881, %v3045
    %v3048 = vunpack.c.l.s4 842150450
    %v3049 = vunpack.c.0.s8 %v3048
    %v3050 = vperm.slane %v881, %v3049
    %v3052 = vunpack.c.l.s4 1414812756
    %v3053 = vunpack.c.0.s8 %v3052
    %v3054 = vperm.slane %v881, %v3053
    %v3056 = vunpack.c.l.s4 1987475062
    %v3057 = vunpack.c.0.s8 %v3056
    %v3058 = vperm.slane %v881, %v3057
    %v3060 = vunpack.c.l.s4 269488144
    %v3061 = vunpack.c.0.s8 %v3060
    %v3062 = vperm.slane %v884, %v3061
    %v3064 = vunpack.c.l.s4 842150450
    %v3065 = vunpack.c.0.s8 %v3064
    %v3066 = vperm.slane %v884, %v3065
    %v3068 = vunpack.c.l.s4 1414812756
    %v3069 = vunpack.c.0.s8 %v3068
    %v3070 = vperm.slane %v884, %v3069
    %v3072 = vunpack.c.l.s4 1987475062
    %v3073 = vunpack.c.0.s8 %v3072
    %v3074 = vperm.slane %v884, %v3073
    %v3076 = vunpack.c.l.s4 269488144
    %v3077 = vunpack.c.0.s8 %v3076
    %v3078 = vperm.slane %v887, %v3077
    %v3080 = vunpack.c.l.s4 842150450
    %v3081 = vunpack.c.0.s8 %v3080
    %v3082 = vperm.slane %v887, %v3081
    %v3084 = vunpack.c.l.s4 1414812756
    %v3085 = vunpack.c.0.s8 %v3084
    %v3086 = vperm.slane %v887, %v3085
    %v3088 = vunpack.c.l.s4 1987475062
    %v3089 = vunpack.c.0.s8 %v3088
    %v3090 = vperm.slane %v887, %v3089
    %v3092 = vunpack.c.l.s4 269488144
    %v3093 = vunpack.c.0.s8 %v3092
    %v3094 = vperm.slane %v890, %v3093
    %v3096 = vunpack.c.l.s4 842150450
    %v3097 = vunpack.c.0.s8 %v3096
    %v3098 = vperm.slane %v890, %v3097
    %v3100 = vunpack.c.l.s4 1414812756
    %v3101 = vunpack.c.0.s8 %v3100
    %v3102 = vperm.slane %v890, %v3101
    %v3104 = vunpack.c.l.s4 1987475062
    %v3105 = vunpack.c.0.s8 %v3104
    %v3106 = vperm.slane %v890, %v3105
    %v3108 = vunpack.c.l.s4 269488144
    %v3109 = vunpack.c.0.s8 %v3108
    %v3110 = vperm.slane %v893, %v3109
    %v3112 = vunpack.c.l.s4 842150450
    %v3113 = vunpack.c.0.s8 %v3112
    %v3114 = vperm.slane %v893, %v3113
    %v3116 = vunpack.c.l.s4 1414812756
    %v3117 = vunpack.c.0.s8 %v3116
    %v3118 = vperm.slane %v893, %v3117
    %v3120 = vunpack.c.l.s4 1987475062
    %v3121 = vunpack.c.0.s8 %v3120
    %v3122 = vperm.slane %v893, %v3121
    %v3124 = vunpack.c.l.s4 269488144
    %v3125 = vunpack.c.0.s8 %v3124
    %v3126 = vperm.slane %v896, %v3125
    %v3128 = vunpack.c.l.s4 842150450
    %v3129 = vunpack.c.0.s8 %v3128
    %v3130 = vperm.slane %v896, %v3129
    %v3132 = vunpack.c.l.s4 1414812756
    %v3133 = vunpack.c.0.s8 %v3132
    %v3134 = vperm.slane %v896, %v3133
    %v3136 = vunpack.c.l.s4 1987475062
    %v3137 = vunpack.c.0.s8 %v3136
    %v3138 = vperm.slane %v896, %v3137
    %v3140 = vunpack.c.l.s4 269488144
    %v3141 = vunpack.c.0.s8 %v3140
    %v3142 = vperm.slane %v899, %v3141
    %v3144 = vunpack.c.l.s4 842150450
    %v3145 = vunpack.c.0.s8 %v3144
    %v3146 = vperm.slane %v899, %v3145
    %v3148 = vunpack.c.l.s4 1414812756
    %v3149 = vunpack.c.0.s8 %v3148
    %v3150 = vperm.slane %v899, %v3149
    %v3152 = vunpack.c.l.s4 1987475062
    %v3153 = vunpack.c.0.s8 %v3152
    %v3154 = vperm.slane %v899, %v3153
    %v3156 = vunpack.c.l.s4 269488144
    %v3157 = vunpack.c.0.s8 %v3156
    %v3158 = vperm.slane %v902, %v3157
    %v3160 = vunpack.c.l.s4 842150450
    %v3161 = vunpack.c.0.s8 %v3160
    %v3162 = vperm.slane %v902, %v3161
    %v3164 = vunpack.c.l.s4 1414812756
    %v3165 = vunpack.c.0.s8 %v3164
    %v3166 = vperm.slane %v902, %v3165
    %v3168 = vunpack.c.l.s4 1987475062
    %v3169 = vunpack.c.0.s8 %v3168
    %v3170 = vperm.slane %v902, %v3169
    %v3172 = vunpack.c.l.s4 269488144
    %v3173 = vunpack.c.0.s8 %v3172
    %v3174 = vperm.slane %v905, %v3173
    %v3176 = vunpack.c.l.s4 842150450
    %v3177 = vunpack.c.0.s8 %v3176
    %v3178 = vperm.slane %v905, %v3177
    %v3180 = vunpack.c.l.s4 1414812756
    %v3181 = vunpack.c.0.s8 %v3180
    %v3182 = vperm.slane %v905, %v3181
    %v3184 = vunpack.c.l.s4 1987475062
    %v3185 = vunpack.c.0.s8 %v3184
    %v3186 = vperm.slane %v905, %v3185
    %v3188 = vunpack.c.l.s4 269488144
    %v3189 = vunpack.c.0.s8 %v3188
    %v3190 = vperm.slane %v908, %v3189
    %v3192 = vunpack.c.l.s4 842150450
    %v3193 = vunpack.c.0.s8 %v3192
    %v3194 = vperm.slane %v908, %v3193
    %v3196 = vunpack.c.l.s4 1414812756
    %v3197 = vunpack.c.0.s8 %v3196
    %v3198 = vperm.slane %v908, %v3197
    %v3200 = vunpack.c.l.s4 1987475062
    %v3201 = vunpack.c.0.s8 %v3200
    %v3202 = vperm.slane %v908, %v3201
    %v3204 = vunpack.c.l.s4 269488144
    %v3205 = vunpack.c.0.s8 %v3204
    %v3206 = vperm.slane %v911, %v3205
    %v3208 = vunpack.c.l.s4 842150450
    %v3209 = vunpack.c.0.s8 %v3208
    %v3210 = vperm.slane %v911, %v3209
    %v3212 = vunpack.c.l.s4 1414812756
    %v3213 = vunpack.c.0.s8 %v3212
    %v3214 = vperm.slane %v911, %v3213
    %v3216 = vunpack.c.l.s4 1987475062
    %v3217 = vunpack.c.0.s8 %v3216
    %v3218 = vperm.slane %v911, %v3217
    %v3220 = vunpack.c.l.s4 269488144
    %v3221 = vunpack.c.0.s8 %v3220
    %v3222 = vperm.slane %v914, %v3221
    %v3224 = vunpack.c.l.s4 842150450
    %v3225 = vunpack.c.0.s8 %v3224
    %v3226 = vperm.slane %v914, %v3225
    %v3228 = vunpack.c.l.s4 1414812756
    %v3229 = vunpack.c.0.s8 %v3228
    %v3230 = vperm.slane %v914, %v3229
    %v3232 = vunpack.c.l.s4 1987475062
    %v3233 = vunpack.c.0.s8 %v3232
    %v3234 = vperm.slane %v914, %v3233
    %v3236 = vunpack.c.l.s4 269488144
    %v3237 = vunpack.c.0.s8 %v3236
    %v3238 = vperm.slane %v917, %v3237
    %v3240 = vunpack.c.l.s4 842150450
    %v3241 = vunpack.c.0.s8 %v3240
    %v3242 = vperm.slane %v917, %v3241
    %v3244 = vunpack.c.l.s4 1414812756
    %v3245 = vunpack.c.0.s8 %v3244
    %v3246 = vperm.slane %v917, %v3245
    %v3248 = vunpack.c.l.s4 1987475062
    %v3249 = vunpack.c.0.s8 %v3248
    %v3250 = vperm.slane %v917, %v3249
    %v3252 = vunpack.c.l.s4 269488144
    %v3253 = vunpack.c.0.s8 %v3252
    %v3254 = vperm.slane %v920, %v3253
    %v3256 = vunpack.c.l.s4 842150450
    %v3257 = vunpack.c.0.s8 %v3256
    %v3258 = vperm.slane %v920, %v3257
    %v3260 = vunpack.c.l.s4 1414812756
    %v3261 = vunpack.c.0.s8 %v3260
    %v3262 = vperm.slane %v920, %v3261
    %v3264 = vunpack.c.l.s4 1987475062
    %v3265 = vunpack.c.0.s8 %v3264
    %v3266 = vperm.slane %v920, %v3265
    %v3268 = vunpack.c.l.s4 269488144
    %v3269 = vunpack.c.0.s8 %v3268
    %v3270 = vperm.slane %v923, %v3269
    %v3272 = vunpack.c.l.s4 842150450
    %v3273 = vunpack.c.0.s8 %v3272
    %v3274 = vperm.slane %v923, %v3273
    %v3276 = vunpack.c.l.s4 1414812756
    %v3277 = vunpack.c.0.s8 %v3276
    %v3278 = vperm.slane %v923, %v3277
    %v3280 = vunpack.c.l.s4 1987475062
    %v3281 = vunpack.c.0.s8 %v3280
    %v3282 = vperm.slane %v923, %v3281
    %v3284 = vunpack.c.l.s4 269488144
    %v3285 = vunpack.c.0.s8 %v3284
    %v3286 = vperm.slane %v926, %v3285
    %v3288 = vunpack.c.l.s4 842150450
    %v3289 = vunpack.c.0.s8 %v3288
    %v3290 = vperm.slane %v926, %v3289
    %v3292 = vunpack.c.l.s4 1414812756
    %v3293 = vunpack.c.0.s8 %v3292
    %v3294 = vperm.slane %v926, %v3293
    %v3296 = vunpack.c.l.s4 1987475062
    %v3297 = vunpack.c.0.s8 %v3296
    %v3298 = vperm.slane %v926, %v3297
    %v3300 = vunpack.c.l.s4 269488144
    %v3301 = vunpack.c.0.s8 %v3300
    %v3302 = vperm.slane %v929, %v3301
    %v3304 = vunpack.c.l.s4 842150450
    %v3305 = vunpack.c.0.s8 %v3304
    %v3306 = vperm.slane %v929, %v3305
    %v3308 = vunpack.c.l.s4 1414812756
    %v3309 = vunpack.c.0.s8 %v3308
    %v3310 = vperm.slane %v929, %v3309
    %v3312 = vunpack.c.l.s4 1987475062
    %v3313 = vunpack.c.0.s8 %v3312
    %v3314 = vperm.slane %v929, %v3313
    %v3316 = vunpack.c.l.s4 269488144
    %v3317 = vunpack.c.0.s8 %v3316
    %v3318 = vperm.slane %v932, %v3317
    %v3320 = vunpack.c.l.s4 842150450
    %v3321 = vunpack.c.0.s8 %v3320
    %v3322 = vperm.slane %v932, %v3321
    %v3324 = vunpack.c.l.s4 1414812756
    %v3325 = vunpack.c.0.s8 %v3324
    %v3326 = vperm.slane %v932, %v3325
    %v3328 = vunpack.c.l.s4 1987475062
    %v3329 = vunpack.c.0.s8 %v3328
    %v3330 = vperm.slane %v932, %v3329
    %v3332 = vunpack.c.l.s4 269488144
    %v3333 = vunpack.c.0.s8 %v3332
    %v3334 = vperm.slane %v935, %v3333
    %v3336 = vunpack.c.l.s4 842150450
    %v3337 = vunpack.c.0.s8 %v3336
    %v3338 = vperm.slane %v935, %v3337
    %v3340 = vunpack.c.l.s4 1414812756
    %v3341 = vunpack.c.0.s8 %v3340
    %v3342 = vperm.slane %v935, %v3341
    %v3344 = vunpack.c.l.s4 1987475062
    %v3345 = vunpack.c.0.s8 %v3344
    %v3346 = vperm.slane %v935, %v3345
    %v3348 = vunpack.c.l.s4 269488144
    %v3349 = vunpack.c.0.s8 %v3348
    %v3350 = vperm.slane %v938, %v3349
    %v3352 = vunpack.c.l.s4 842150450
    %v3353 = vunpack.c.0.s8 %v3352
    %v3354 = vperm.slane %v938, %v3353
    %v3356 = vunpack.c.l.s4 1414812756
    %v3357 = vunpack.c.0.s8 %v3356
    %v3358 = vperm.slane %v938, %v3357
    %v3360 = vunpack.c.l.s4 1987475062
    %v3361 = vunpack.c.0.s8 %v3360
    %v3362 = vperm.slane %v938, %v3361
    %v3364 = vunpack.c.l.s4 269488144
    %v3365 = vunpack.c.0.s8 %v3364
    %v3366 = vperm.slane %v941, %v3365
    %v3368 = vunpack.c.l.s4 842150450
    %v3369 = vunpack.c.0.s8 %v3368
    %v3370 = vperm.slane %v941, %v3369
    %v3372 = vunpack.c.l.s4 1414812756
    %v3373 = vunpack.c.0.s8 %v3372
    %v3374 = vperm.slane %v941, %v3373
    %v3376 = vunpack.c.l.s4 1987475062
    %v3377 = vunpack.c.0.s8 %v3376
    %v3378 = vperm.slane %v941, %v3377
    %v3380 = vunpack.c.l.s4 269488144
    %v3381 = vunpack.c.0.s8 %v3380
    %v3382 = vperm.slane %v944, %v3381
    %v3384 = vunpack.c.l.s4 842150450
    %v3385 = vunpack.c.0.s8 %v3384
    %v3386 = vperm.slane %v944, %v3385
    %v3388 = vunpack.c.l.s4 1414812756
    %v3389 = vunpack.c.0.s8 %v3388
    %v3390 = vperm.slane %v944, %v3389
    %v3392 = vunpack.c.l.s4 1987475062
    %v3393 = vunpack.c.0.s8 %v3392
    %v3394 = vperm.slane %v944, %v3393
    %v3396 = vunpack.c.l.s4 269488144
    %v3397 = vunpack.c.0.s8 %v3396
    %v3398 = vperm.slane %v947, %v3397
    %v3400 = vunpack.c.l.s4 842150450
    %v3401 = vunpack.c.0.s8 %v3400
    %v3402 = vperm.slane %v947, %v3401
    %v3404 = vunpack.c.l.s4 1414812756
    %v3405 = vunpack.c.0.s8 %v3404
    %v3406 = vperm.slane %v947, %v3405
    %v3408 = vunpack.c.l.s4 1987475062
    %v3409 = vunpack.c.0.s8 %v3408
    %v3410 = vperm.slane %v947, %v3409
    %v3412 = vunpack.c.l.s4 269488144
    %v3413 = vunpack.c.0.s8 %v3412
    %v3414 = vperm.slane %v950, %v3413
    %v3416 = vunpack.c.l.s4 842150450
    %v3417 = vunpack.c.0.s8 %v3416
    %v3418 = vperm.slane %v950, %v3417
    %v3420 = vunpack.c.l.s4 1414812756
    %v3421 = vunpack.c.0.s8 %v3420
    %v3422 = vperm.slane %v950, %v3421
    %v3424 = vunpack.c.l.s4 1987475062
    %v3425 = vunpack.c.0.s8 %v3424
    %v3426 = vperm.slane %v950, %v3425
    %v3428 = vunpack.c.l.s4 269488144
    %v3429 = vunpack.c.0.s8 %v3428
    %v3430 = vperm.slane %v953, %v3429
    %v3432 = vunpack.c.l.s4 842150450
    %v3433 = vunpack.c.0.s8 %v3432
    %v3434 = vperm.slane %v953, %v3433
    %v3436 = vunpack.c.l.s4 1414812756
    %v3437 = vunpack.c.0.s8 %v3436
    %v3438 = vperm.slane %v953, %v3437
    %v3440 = vunpack.c.l.s4 1987475062
    %v3441 = vunpack.c.0.s8 %v3440
    %v3442 = vperm.slane %v953, %v3441
    %v3444 = vunpack.c.l.s4 269488144
    %v3445 = vunpack.c.0.s8 %v3444
    %v3446 = vperm.slane %v956, %v3445
    %v3448 = vunpack.c.l.s4 842150450
    %v3449 = vunpack.c.0.s8 %v3448
    %v3450 = vperm.slane %v956, %v3449
    %v3452 = vunpack.c.l.s4 1414812756
    %v3453 = vunpack.c.0.s8 %v3452
    %v3454 = vperm.slane %v956, %v3453
    %v3456 = vunpack.c.l.s4 1987475062
    %v3457 = vunpack.c.0.s8 %v3456
    %v3458 = vperm.slane %v956, %v3457
    %v3460 = vunpack.c.l.s4 269488144
    %v3461 = vunpack.c.0.s8 %v3460
    %v3462 = vperm.slane %v959, %v3461
    %v3464 = vunpack.c.l.s4 842150450
    %v3465 = vunpack.c.0.s8 %v3464
    %v3466 = vperm.slane %v959, %v3465
    %v3468 = vunpack.c.l.s4 1414812756
    %v3469 = vunpack.c.0.s8 %v3468
    %v3470 = vperm.slane %v959, %v3469
    %v3472 = vunpack.c.l.s4 1987475062
    %v3473 = vunpack.c.0.s8 %v3472
    %v3474 = vperm.slane %v959, %v3473
    %v3476 = vunpack.c.l.s4 269488144
    %v3477 = vunpack.c.0.s8 %v3476
    %v3478 = vperm.slane %v962, %v3477
    %v3480 = vunpack.c.l.s4 842150450
    %v3481 = vunpack.c.0.s8 %v3480
    %v3482 = vperm.slane %v962, %v3481
    %v3484 = vunpack.c.l.s4 1414812756
    %v3485 = vunpack.c.0.s8 %v3484
    %v3486 = vperm.slane %v962, %v3485
    %v3488 = vunpack.c.l.s4 1987475062
    %v3489 = vunpack.c.0.s8 %v3488
    %v3490 = vperm.slane %v962, %v3489
    %v3492 = vunpack.c.l.s4 269488144
    %v3493 = vunpack.c.0.s8 %v3492
    %v3494 = vperm.slane %v965, %v3493
    %v3496 = vunpack.c.l.s4 842150450
    %v3497 = vunpack.c.0.s8 %v3496
    %v3498 = vperm.slane %v965, %v3497
    %v3500 = vunpack.c.l.s4 1414812756
    %v3501 = vunpack.c.0.s8 %v3500
    %v3502 = vperm.slane %v965, %v3501
    %v3504 = vunpack.c.l.s4 1987475062
    %v3505 = vunpack.c.0.s8 %v3504
    %v3506 = vperm.slane %v965, %v3505
    %v3508 = vunpack.c.l.s4 269488144
    %v3509 = vunpack.c.0.s8 %v3508
    %v3510 = vperm.slane %v968, %v3509
    %v3512 = vunpack.c.l.s4 842150450
    %v3513 = vunpack.c.0.s8 %v3512
    %v3514 = vperm.slane %v968, %v3513
    %v3516 = vunpack.c.l.s4 1414812756
    %v3517 = vunpack.c.0.s8 %v3516
    %v3518 = vperm.slane %v968, %v3517
    %v3520 = vunpack.c.l.s4 1987475062
    %v3521 = vunpack.c.0.s8 %v3520
    %v3522 = vperm.slane %v968, %v3521
    %v3524 = vunpack.c.l.s4 269488144
    %v3525 = vunpack.c.0.s8 %v3524
    %v3526 = vperm.slane %v971, %v3525
    %v3528 = vunpack.c.l.s4 842150450
    %v3529 = vunpack.c.0.s8 %v3528
    %v3530 = vperm.slane %v971, %v3529
    %v3532 = vunpack.c.l.s4 1414812756
    %v3533 = vunpack.c.0.s8 %v3532
    %v3534 = vperm.slane %v971, %v3533
    %v3536 = vunpack.c.l.s4 1987475062
    %v3537 = vunpack.c.0.s8 %v3536
    %v3538 = vperm.slane %v971, %v3537
    %v3540 = vunpack.c.l.s4 269488144
    %v3541 = vunpack.c.0.s8 %v3540
    %v3542 = vperm.slane %v974, %v3541
    %v3544 = vunpack.c.l.s4 842150450
    %v3545 = vunpack.c.0.s8 %v3544
    %v3546 = vperm.slane %v974, %v3545
    %v3548 = vunpack.c.l.s4 1414812756
    %v3549 = vunpack.c.0.s8 %v3548
    %v3550 = vperm.slane %v974, %v3549
    %v3552 = vunpack.c.l.s4 1987475062
    %v3553 = vunpack.c.0.s8 %v3552
    %v3554 = vperm.slane %v974, %v3553
    %v3556 = vunpack.c.l.s4 269488144
    %v3557 = vunpack.c.0.s8 %v3556
    %v3558 = vperm.slane %v977, %v3557
    %v3560 = vunpack.c.l.s4 842150450
    %v3561 = vunpack.c.0.s8 %v3560
    %v3562 = vperm.slane %v977, %v3561
    %v3564 = vunpack.c.l.s4 1414812756
    %v3565 = vunpack.c.0.s8 %v3564
    %v3566 = vperm.slane %v977, %v3565
    %v3568 = vunpack.c.l.s4 1987475062
    %v3569 = vunpack.c.0.s8 %v3568
    %v3570 = vperm.slane %v977, %v3569
    %v3572 = vunpack.c.l.s4 269488144
    %v3573 = vunpack.c.0.s8 %v3572
    %v3574 = vperm.slane %v980, %v3573
    %v3576 = vunpack.c.l.s4 842150450
    %v3577 = vunpack.c.0.s8 %v3576
    %v3578 = vperm.slane %v980, %v3577
    %v3580 = vunpack.c.l.s4 1414812756
    %v3581 = vunpack.c.0.s8 %v3580
    %v3582 = vperm.slane %v980, %v3581
    %v3584 = vunpack.c.l.s4 1987475062
    %v3585 = vunpack.c.0.s8 %v3584
    %v3586 = vperm.slane %v980, %v3585
    %v3588 = vunpack.c.l.s4 269488144
    %v3589 = vunpack.c.0.s8 %v3588
    %v3590 = vperm.slane %v983, %v3589
    %v3592 = vunpack.c.l.s4 842150450
    %v3593 = vunpack.c.0.s8 %v3592
    %v3594 = vperm.slane %v983, %v3593
    %v3596 = vunpack.c.l.s4 1414812756
    %v3597 = vunpack.c.0.s8 %v3596
    %v3598 = vperm.slane %v983, %v3597
    %v3600 = vunpack.c.l.s4 1987475062
    %v3601 = vunpack.c.0.s8 %v3600
    %v3602 = vperm.slane %v983, %v3601
    %v3604 = vunpack.c.l.s4 269488144
    %v3605 = vunpack.c.0.s8 %v3604
    %v3606 = vperm.slane %v986, %v3605
    %v3608 = vunpack.c.l.s4 842150450
    %v3609 = vunpack.c.0.s8 %v3608
    %v3610 = vperm.slane %v986, %v3609
    %v3612 = vunpack.c.l.s4 1414812756
    %v3613 = vunpack.c.0.s8 %v3612
    %v3614 = vperm.slane %v986, %v3613
    %v3616 = vunpack.c.l.s4 1987475062
    %v3617 = vunpack.c.0.s8 %v3616
    %v3618 = vperm.slane %v986, %v3617
    %v3620 = vunpack.c.l.s4 269488144
    %v3621 = vunpack.c.0.s8 %v3620
    %v3622 = vperm.slane %v989, %v3621
    %v3624 = vunpack.c.l.s4 842150450
    %v3625 = vunpack.c.0.s8 %v3624
    %v3626 = vperm.slane %v989, %v3625
    %v3628 = vunpack.c.l.s4 1414812756
    %v3629 = vunpack.c.0.s8 %v3628
    %v3630 = vperm.slane %v989, %v3629
    %v3632 = vunpack.c.l.s4 1987475062
    %v3633 = vunpack.c.0.s8 %v3632
    %v3634 = vperm.slane %v989, %v3633
    %v3636 = vunpack.c.l.s4 269488144
    %v3637 = vunpack.c.0.s8 %v3636
    %v3638 = vperm.slane %v992, %v3637
    %v3640 = vunpack.c.l.s4 842150450
    %v3641 = vunpack.c.0.s8 %v3640
    %v3642 = vperm.slane %v992, %v3641
    %v3644 = vunpack.c.l.s4 1414812756
    %v3645 = vunpack.c.0.s8 %v3644
    %v3646 = vperm.slane %v992, %v3645
    %v3648 = vunpack.c.l.s4 1987475062
    %v3649 = vunpack.c.0.s8 %v3648
    %v3650 = vperm.slane %v992, %v3649
    %v3652 = vunpack.c.l.s4 269488144
    %v3653 = vunpack.c.0.s8 %v3652
    %v3654 = vperm.slane %v995, %v3653
    %v3656 = vunpack.c.l.s4 842150450
    %v3657 = vunpack.c.0.s8 %v3656
    %v3658 = vperm.slane %v995, %v3657
    %v3660 = vunpack.c.l.s4 1414812756
    %v3661 = vunpack.c.0.s8 %v3660
    %v3662 = vperm.slane %v995, %v3661
    %v3664 = vunpack.c.l.s4 1987475062
    %v3665 = vunpack.c.0.s8 %v3664
    %v3666 = vperm.slane %v995, %v3665
    %v3668 = vunpack.c.l.s4 269488144
    %v3669 = vunpack.c.0.s8 %v3668
    %v3670 = vperm.slane %v998, %v3669
    %v3672 = vunpack.c.l.s4 842150450
    %v3673 = vunpack.c.0.s8 %v3672
    %v3674 = vperm.slane %v998, %v3673
    %v3676 = vunpack.c.l.s4 1414812756
    %v3677 = vunpack.c.0.s8 %v3676
    %v3678 = vperm.slane %v998, %v3677
    %v3680 = vunpack.c.l.s4 1987475062
    %v3681 = vunpack.c.0.s8 %v3680
    %v3682 = vperm.slane %v998, %v3681
    %v3684 = vunpack.c.l.s4 269488144
    %v3685 = vunpack.c.0.s8 %v3684
    %v3686 = vperm.slane %v1001, %v3685
    %v3688 = vunpack.c.l.s4 842150450
    %v3689 = vunpack.c.0.s8 %v3688
    %v3690 = vperm.slane %v1001, %v3689
    %v3692 = vunpack.c.l.s4 1414812756
    %v3693 = vunpack.c.0.s8 %v3692
    %v3694 = vperm.slane %v1001, %v3693
    %v3696 = vunpack.c.l.s4 1987475062
    %v3697 = vunpack.c.0.s8 %v3696
    %v3698 = vperm.slane %v1001, %v3697
    %v3700 = vunpack.c.l.s4 269488144
    %v3701 = vunpack.c.0.s8 %v3700
    %v3702 = vperm.slane %v1004, %v3701
    %v3704 = vunpack.c.l.s4 842150450
    %v3705 = vunpack.c.0.s8 %v3704
    %v3706 = vperm.slane %v1004, %v3705
    %v3708 = vunpack.c.l.s4 1414812756
    %v3709 = vunpack.c.0.s8 %v3708
    %v3710 = vperm.slane %v1004, %v3709
    %v3712 = vunpack.c.l.s4 1987475062
    %v3713 = vunpack.c.0.s8 %v3712
    %v3714 = vperm.slane %v1004, %v3713
    %v3716 = vunpack.c.l.s4 269488144
    %v3717 = vunpack.c.0.s8 %v3716
    %v3718 = vperm.slane %v1007, %v3717
    %v3720 = vunpack.c.l.s4 842150450
    %v3721 = vunpack.c.0.s8 %v3720
    %v3722 = vperm.slane %v1007, %v3721
    %v3724 = vunpack.c.l.s4 1414812756
    %v3725 = vunpack.c.0.s8 %v3724
    %v3726 = vperm.slane %v1007, %v3725
    %v3728 = vunpack.c.l.s4 1987475062
    %v3729 = vunpack.c.0.s8 %v3728
    %v3730 = vperm.slane %v1007, %v3729
    %v3732 = vunpack.c.l.s4 269488144
    %v3733 = vunpack.c.0.s8 %v3732
    %v3734 = vperm.slane %v1010, %v3733
    %v3736 = vunpack.c.l.s4 842150450
    %v3737 = vunpack.c.0.s8 %v3736
    %v3738 = vperm.slane %v1010, %v3737
    %v3740 = vunpack.c.l.s4 1414812756
    %v3741 = vunpack.c.0.s8 %v3740
    %v3742 = vperm.slane %v1010, %v3741
    %v3744 = vunpack.c.l.s4 1987475062
    %v3745 = vunpack.c.0.s8 %v3744
    %v3746 = vperm.slane %v1010, %v3745
    %v3748 = vunpack.c.l.s4 269488144
    %v3749 = vunpack.c.0.s8 %v3748
    %v3750 = vperm.slane %v1013, %v3749
    %v3752 = vunpack.c.l.s4 842150450
    %v3753 = vunpack.c.0.s8 %v3752
    %v3754 = vperm.slane %v1013, %v3753
    %v3756 = vunpack.c.l.s4 1414812756
    %v3757 = vunpack.c.0.s8 %v3756
    %v3758 = vperm.slane %v1013, %v3757
    %v3760 = vunpack.c.l.s4 1987475062
    %v3761 = vunpack.c.0.s8 %v3760
    %v3762 = vperm.slane %v1013, %v3761
    %v3764 = vunpack.c.l.s4 269488144
    %v3765 = vunpack.c.0.s8 %v3764
    %v3766 = vperm.slane %v1016, %v3765
    %v3768 = vunpack.c.l.s4 842150450
    %v3769 = vunpack.c.0.s8 %v3768
    %v3770 = vperm.slane %v1016, %v3769
    %v3772 = vunpack.c.l.s4 1414812756
    %v3773 = vunpack.c.0.s8 %v3772
    %v3774 = vperm.slane %v1016, %v3773
    %v3776 = vunpack.c.l.s4 1987475062
    %v3777 = vunpack.c.0.s8 %v3776
    %v3778 = vperm.slane %v1016, %v3777
    %v3780 = vunpack.c.l.s4 269488144
    %v3781 = vunpack.c.0.s8 %v3780
    %v3782 = vperm.slane %v1019, %v3781
    %v3784 = vunpack.c.l.s4 842150450
    %v3785 = vunpack.c.0.s8 %v3784
    %v3786 = vperm.slane %v1019, %v3785
    %v3788 = vunpack.c.l.s4 1414812756
    %v3789 = vunpack.c.0.s8 %v3788
    %v3790 = vperm.slane %v1019, %v3789
    %v3792 = vunpack.c.l.s4 1987475062
    %v3793 = vunpack.c.0.s8 %v3792
    %v3794 = vperm.slane %v1019, %v3793
    %v3796 = vunpack.c.l.s4 269488144
    %v3797 = vunpack.c.0.s8 %v3796
    %v3798 = vperm.slane %v1022, %v3797
    %v3800 = vunpack.c.l.s4 842150450
    %v3801 = vunpack.c.0.s8 %v3800
    %v3802 = vperm.slane %v1022, %v3801
    %v3804 = vunpack.c.l.s4 1414812756
    %v3805 = vunpack.c.0.s8 %v3804
    %v3806 = vperm.slane %v1022, %v3805
    %v3808 = vunpack.c.l.s4 1987475062
    %v3809 = vunpack.c.0.s8 %v3808
    %v3810 = vperm.slane %v1022, %v3809
    %v3812 = vunpack.c.l.s4 269488144
    %v3813 = vunpack.c.0.s8 %v3812
    %v3814 = vperm.slane %v1025, %v3813
    %v3816 = vunpack.c.l.s4 842150450
    %v3817 = vunpack.c.0.s8 %v3816
    %v3818 = vperm.slane %v1025, %v3817
    %v3820 = vunpack.c.l.s4 1414812756
    %v3821 = vunpack.c.0.s8 %v3820
    %v3822 = vperm.slane %v1025, %v3821
    %v3824 = vunpack.c.l.s4 1987475062
    %v3825 = vunpack.c.0.s8 %v3824
    %v3826 = vperm.slane %v1025, %v3825
    %v3828 = vunpack.c.l.s4 269488144
    %v3829 = vunpack.c.0.s8 %v3828
    %v3830 = vperm.slane %v1028, %v3829
    %v3832 = vunpack.c.l.s4 842150450
    %v3833 = vunpack.c.0.s8 %v3832
    %v3834 = vperm.slane %v1028, %v3833
    %v3836 = vunpack.c.l.s4 1414812756
    %v3837 = vunpack.c.0.s8 %v3836
    %v3838 = vperm.slane %v1028, %v3837
    %v3840 = vunpack.c.l.s4 1987475062
    %v3841 = vunpack.c.0.s8 %v3840
    %v3842 = vperm.slane %v1028, %v3841
    %v3844 = vunpack.c.l.s4 269488144
    %v3845 = vunpack.c.0.s8 %v3844
    %v3846 = vperm.slane %v1031, %v3845
    %v3848 = vunpack.c.l.s4 842150450
    %v3849 = vunpack.c.0.s8 %v3848
    %v3850 = vperm.slane %v1031, %v3849
    %v3852 = vunpack.c.l.s4 1414812756
    %v3853 = vunpack.c.0.s8 %v3852
    %v3854 = vperm.slane %v1031, %v3853
    %v3856 = vunpack.c.l.s4 1987475062
    %v3857 = vunpack.c.0.s8 %v3856
    %v3858 = vperm.slane %v1031, %v3857
    %v3860 = vunpack.c.l.s4 269488144
    %v3861 = vunpack.c.0.s8 %v3860
    %v3862 = vperm.slane %v1034, %v3861
    %v3864 = vunpack.c.l.s4 842150450
    %v3865 = vunpack.c.0.s8 %v3864
    %v3866 = vperm.slane %v1034, %v3865
    %v3868 = vunpack.c.l.s4 1414812756
    %v3869 = vunpack.c.0.s8 %v3868
    %v3870 = vperm.slane %v1034, %v3869
    %v3872 = vunpack.c.l.s4 1987475062
    %v3873 = vunpack.c.0.s8 %v3872
    %v3874 = vperm.slane %v1034, %v3873
    %v3876 = vunpack.c.l.s4 269488144
    %v3877 = vunpack.c.0.s8 %v3876
    %v3878 = vperm.slane %v1037, %v3877
    %v3880 = vunpack.c.l.s4 842150450
    %v3881 = vunpack.c.0.s8 %v3880
    %v3882 = vperm.slane %v1037, %v3881
    %v3884 = vunpack.c.l.s4 1414812756
    %v3885 = vunpack.c.0.s8 %v3884
    %v3886 = vperm.slane %v1037, %v3885
    %v3888 = vunpack.c.l.s4 1987475062
    %v3889 = vunpack.c.0.s8 %v3888
    %v3890 = vperm.slane %v1037, %v3889
    %v3892 = vunpack.c.l.s4 269488144
    %v3893 = vunpack.c.0.s8 %v3892
    %v3894 = vperm.slane %v1040, %v3893
    %v3896 = vunpack.c.l.s4 842150450
    %v3897 = vunpack.c.0.s8 %v3896
    %v3898 = vperm.slane %v1040, %v3897
    %v3900 = vunpack.c.l.s4 1414812756
    %v3901 = vunpack.c.0.s8 %v3900
    %v3902 = vperm.slane %v1040, %v3901
    %v3904 = vunpack.c.l.s4 1987475062
    %v3905 = vunpack.c.0.s8 %v3904
    %v3906 = vperm.slane %v1040, %v3905
    %v3908 = vunpack.c.l.s4 269488144
    %v3909 = vunpack.c.0.s8 %v3908
    %v3910 = vperm.slane %v1043, %v3909
    %v3912 = vunpack.c.l.s4 842150450
    %v3913 = vunpack.c.0.s8 %v3912
    %v3914 = vperm.slane %v1043, %v3913
    %v3916 = vunpack.c.l.s4 1414812756
    %v3917 = vunpack.c.0.s8 %v3916
    %v3918 = vperm.slane %v1043, %v3917
    %v3920 = vunpack.c.l.s4 1987475062
    %v3921 = vunpack.c.0.s8 %v3920
    %v3922 = vperm.slane %v1043, %v3921
    %v3924 = vunpack.c.l.s4 269488144
    %v3925 = vunpack.c.0.s8 %v3924
    %v3926 = vperm.slane %v1046, %v3925
    %v3928 = vunpack.c.l.s4 842150450
    %v3929 = vunpack.c.0.s8 %v3928
    %v3930 = vperm.slane %v1046, %v3929
    %v3932 = vunpack.c.l.s4 1414812756
    %v3933 = vunpack.c.0.s8 %v3932
    %v3934 = vperm.slane %v1046, %v3933
    %v3936 = vunpack.c.l.s4 1987475062
    %v3937 = vunpack.c.0.s8 %v3936
    %v3938 = vperm.slane %v1046, %v3937
    %v3940 = vunpack.c.l.s4 269488144
    %v3941 = vunpack.c.0.s8 %v3940
    %v3942 = vperm.slane %v1049, %v3941
    %v3944 = vunpack.c.l.s4 842150450
    %v3945 = vunpack.c.0.s8 %v3944
    %v3946 = vperm.slane %v1049, %v3945
    %v3948 = vunpack.c.l.s4 1414812756
    %v3949 = vunpack.c.0.s8 %v3948
    %v3950 = vperm.slane %v1049, %v3949
    %v3952 = vunpack.c.l.s4 1987475062
    %v3953 = vunpack.c.0.s8 %v3952
    %v3954 = vperm.slane %v1049, %v3953
    %v3956 = vunpack.c.l.s4 269488144
    %v3957 = vunpack.c.0.s8 %v3956
    %v3958 = vperm.slane %v1052, %v3957
    %v3960 = vunpack.c.l.s4 842150450
    %v3961 = vunpack.c.0.s8 %v3960
    %v3962 = vperm.slane %v1052, %v3961
    %v3964 = vunpack.c.l.s4 1414812756
    %v3965 = vunpack.c.0.s8 %v3964
    %v3966 = vperm.slane %v1052, %v3965
    %v3968 = vunpack.c.l.s4 1987475062
    %v3969 = vunpack.c.0.s8 %v3968
    %v3970 = vperm.slane %v1052, %v3969
    %v3972 = vunpack.c.l.s4 269488144
    %v3973 = vunpack.c.0.s8 %v3972
    %v3974 = vperm.slane %v1055, %v3973
    %v3976 = vunpack.c.l.s4 842150450
    %v3977 = vunpack.c.0.s8 %v3976
    %v3978 = vperm.slane %v1055, %v3977
    %v3980 = vunpack.c.l.s4 1414812756
    %v3981 = vunpack.c.0.s8 %v3980
    %v3982 = vperm.slane %v1055, %v3981
    %v3984 = vunpack.c.l.s4 1987475062
    %v3985 = vunpack.c.0.s8 %v3984
    %v3986 = vperm.slane %v1055, %v3985
    %v3988 = vunpack.c.l.s4 269488144
    %v3989 = vunpack.c.0.s8 %v3988
    %v3990 = vperm.slane %v1058, %v3989
    %v3992 = vunpack.c.l.s4 842150450
    %v3993 = vunpack.c.0.s8 %v3992
    %v3994 = vperm.slane %v1058, %v3993
    %v3996 = vunpack.c.l.s4 1414812756
    %v3997 = vunpack.c.0.s8 %v3996
    %v3998 = vperm.slane %v1058, %v3997
    %v4000 = vunpack.c.l.s4 1987475062
    %v4001 = vunpack.c.0.s8 %v4000
    %v4002 = vperm.slane %v1058, %v4001
    %v4004 = vunpack.c.l.s4 269488144
    %v4005 = vunpack.c.0.s8 %v4004
    %v4006 = vperm.slane %v1061, %v4005
    %v4008 = vunpack.c.l.s4 842150450
    %v4009 = vunpack.c.0.s8 %v4008
    %v4010 = vperm.slane %v1061, %v4009
    %v4012 = vunpack.c.l.s4 1414812756
    %v4013 = vunpack.c.0.s8 %v4012
    %v4014 = vperm.slane %v1061, %v4013
    %v4016 = vunpack.c.l.s4 1987475062
    %v4017 = vunpack.c.0.s8 %v4016
    %v4018 = vperm.slane %v1061, %v4017
    %v4020 = vunpack.c.l.s4 269488144
    %v4021 = vunpack.c.0.s8 %v4020
    %v4022 = vperm.slane %v1064, %v4021
    %v4024 = vunpack.c.l.s4 842150450
    %v4025 = vunpack.c.0.s8 %v4024
    %v4026 = vperm.slane %v1064, %v4025
    %v4028 = vunpack.c.l.s4 1414812756
    %v4029 = vunpack.c.0.s8 %v4028
    %v4030 = vperm.slane %v1064, %v4029
    %v4032 = vunpack.c.l.s4 1987475062
    %v4033 = vunpack.c.0.s8 %v4032
    %v4034 = vperm.slane %v1064, %v4033
    %v4036 = vunpack.c.l.s4 269488144
    %v4037 = vunpack.c.0.s8 %v4036
    %v4038 = vperm.slane %v1067, %v4037
    %v4040 = vunpack.c.l.s4 842150450
    %v4041 = vunpack.c.0.s8 %v4040
    %v4042 = vperm.slane %v1067, %v4041
    %v4044 = vunpack.c.l.s4 1414812756
    %v4045 = vunpack.c.0.s8 %v4044
    %v4046 = vperm.slane %v1067, %v4045
    %v4048 = vunpack.c.l.s4 1987475062
    %v4049 = vunpack.c.0.s8 %v4048
    %v4050 = vperm.slane %v1067, %v4049
    %v4052 = vunpack.c.l.s4 269488144
    %v4053 = vunpack.c.0.s8 %v4052
    %v4054 = vperm.slane %v1070, %v4053
    %v4056 = vunpack.c.l.s4 842150450
    %v4057 = vunpack.c.0.s8 %v4056
    %v4058 = vperm.slane %v1070, %v4057
    %v4060 = vunpack.c.l.s4 1414812756
    %v4061 = vunpack.c.0.s8 %v4060
    %v4062 = vperm.slane %v1070, %v4061
    %v4064 = vunpack.c.l.s4 1987475062
    %v4065 = vunpack.c.0.s8 %v4064
    %v4066 = vperm.slane %v1070, %v4065
    %v4068 = vunpack.c.l.s4 269488144
    %v4069 = vunpack.c.0.s8 %v4068
    %v4070 = vperm.slane %v1073, %v4069
    %v4072 = vunpack.c.l.s4 842150450
    %v4073 = vunpack.c.0.s8 %v4072
    %v4074 = vperm.slane %v1073, %v4073
    %v4076 = vunpack.c.l.s4 1414812756
    %v4077 = vunpack.c.0.s8 %v4076
    %v4078 = vperm.slane %v1073, %v4077
    %v4080 = vunpack.c.l.s4 1987475062
    %v4081 = vunpack.c.0.s8 %v4080
    %v4082 = vperm.slane %v1073, %v4081
    %v4084 = vunpack.c.l.s4 269488144
    %v4085 = vunpack.c.0.s8 %v4084
    %v4086 = vperm.slane %v1076, %v4085
    %v4088 = vunpack.c.l.s4 842150450
    %v4089 = vunpack.c.0.s8 %v4088
    %v4090 = vperm.slane %v1076, %v4089
    %v4092 = vunpack.c.l.s4 1414812756
    %v4093 = vunpack.c.0.s8 %v4092
    %v4094 = vperm.slane %v1076, %v4093
    %v4096 = vunpack.c.l.s4 1987475062
    %v4097 = vunpack.c.0.s8 %v4096
    %v4098 = vperm.slane %v1076, %v4097
    %v4100 = vunpack.c.l.s4 269488144
    %v4101 = vunpack.c.0.s8 %v4100
    %v4102 = vperm.slane %v1079, %v4101
    %v4104 = vunpack.c.l.s4 842150450
    %v4105 = vunpack.c.0.s8 %v4104
    %v4106 = vperm.slane %v1079, %v4105
    %v4108 = vunpack.c.l.s4 1414812756
    %v4109 = vunpack.c.0.s8 %v4108
    %v4110 = vperm.slane %v1079, %v4109
    %v4112 = vunpack.c.l.s4 1987475062
    %v4113 = vunpack.c.0.s8 %v4112
    %v4114 = vperm.slane %v1079, %v4113
    %v4116 = vunpack.c.l.s4 269488144
    %v4117 = vunpack.c.0.s8 %v4116
    %v4118 = vperm.slane %v1082, %v4117
    %v4120 = vunpack.c.l.s4 842150450
    %v4121 = vunpack.c.0.s8 %v4120
    %v4122 = vperm.slane %v1082, %v4121
    %v4124 = vunpack.c.l.s4 1414812756
    %v4125 = vunpack.c.0.s8 %v4124
    %v4126 = vperm.slane %v1082, %v4125
    %v4128 = vunpack.c.l.s4 1987475062
    %v4129 = vunpack.c.0.s8 %v4128
    %v4130 = vperm.slane %v1082, %v4129
    %v4132 = vunpack.c.l.s4 269488144
    %v4133 = vunpack.c.0.s8 %v4132
    %v4134 = vperm.slane %v1085, %v4133
    %v4136 = vunpack.c.l.s4 842150450
    %v4137 = vunpack.c.0.s8 %v4136
    %v4138 = vperm.slane %v1085, %v4137
    %v4140 = vunpack.c.l.s4 1414812756
    %v4141 = vunpack.c.0.s8 %v4140
    %v4142 = vperm.slane %v1085, %v4141
    %v4144 = vunpack.c.l.s4 1987475062
    %v4145 = vunpack.c.0.s8 %v4144
    %v4146 = vperm.slane %v1085, %v4145
    %v4148 = vunpack.c.l.s4 269488144
    %v4149 = vunpack.c.0.s8 %v4148
    %v4150 = vperm.slane %v1088, %v4149
    %v4152 = vunpack.c.l.s4 842150450
    %v4153 = vunpack.c.0.s8 %v4152
    %v4154 = vperm.slane %v1088, %v4153
    %v4156 = vunpack.c.l.s4 1414812756
    %v4157 = vunpack.c.0.s8 %v4156
    %v4158 = vperm.slane %v1088, %v4157
    %v4160 = vunpack.c.l.s4 1987475062
    %v4161 = vunpack.c.0.s8 %v4160
    %v4162 = vperm.slane %v1088, %v4161
    %v4164 = vunpack.c.l.s4 269488144
    %v4165 = vunpack.c.0.s8 %v4164
    %v4166 = vperm.slane %v1091, %v4165
    %v4168 = vunpack.c.l.s4 842150450
    %v4169 = vunpack.c.0.s8 %v4168
    %v4170 = vperm.slane %v1091, %v4169
    %v4172 = vunpack.c.l.s4 1414812756
    %v4173 = vunpack.c.0.s8 %v4172
    %v4174 = vperm.slane %v1091, %v4173
    %v4176 = vunpack.c.l.s4 1987475062
    %v4177 = vunpack.c.0.s8 %v4176
    %v4178 = vperm.slane %v1091, %v4177
    %v4180 = vunpack.c.l.s4 269488144
    %v4181 = vunpack.c.0.s8 %v4180
    %v4182 = vperm.slane %v1094, %v4181
    %v4184 = vunpack.c.l.s4 842150450
    %v4185 = vunpack.c.0.s8 %v4184
    %v4186 = vperm.slane %v1094, %v4185
    %v4188 = vunpack.c.l.s4 1414812756
    %v4189 = vunpack.c.0.s8 %v4188
    %v4190 = vperm.slane %v1094, %v4189
    %v4192 = vunpack.c.l.s4 1987475062
    %v4193 = vunpack.c.0.s8 %v4192
    %v4194 = vperm.slane %v1094, %v4193
    %v4196 = vunpack.c.l.s4 269488144
    %v4197 = vunpack.c.0.s8 %v4196
    %v4198 = vperm.slane %v1097, %v4197
    %v4200 = vunpack.c.l.s4 842150450
    %v4201 = vunpack.c.0.s8 %v4200
    %v4202 = vperm.slane %v1097, %v4201
    %v4204 = vunpack.c.l.s4 1414812756
    %v4205 = vunpack.c.0.s8 %v4204
    %v4206 = vperm.slane %v1097, %v4205
    %v4208 = vunpack.c.l.s4 1987475062
    %v4209 = vunpack.c.0.s8 %v4208
    %v4210 = vperm.slane %v1097, %v4209
    %v4212 = vunpack.c.l.s4 269488144
    %v4213 = vunpack.c.0.s8 %v4212
    %v4214 = vperm.slane %v1100, %v4213
    %v4216 = vunpack.c.l.s4 842150450
    %v4217 = vunpack.c.0.s8 %v4216
    %v4218 = vperm.slane %v1100, %v4217
    %v4220 = vunpack.c.l.s4 1414812756
    %v4221 = vunpack.c.0.s8 %v4220
    %v4222 = vperm.slane %v1100, %v4221
    %v4224 = vunpack.c.l.s4 1987475062
    %v4225 = vunpack.c.0.s8 %v4224
    %v4226 = vperm.slane %v1100, %v4225
    %v4228 = vunpack.c.l.s4 269488144
    %v4229 = vunpack.c.0.s8 %v4228
    %v4230 = vperm.slane %v1103, %v4229
    %v4232 = vunpack.c.l.s4 842150450
    %v4233 = vunpack.c.0.s8 %v4232
    %v4234 = vperm.slane %v1103, %v4233
    %v4236 = vunpack.c.l.s4 1414812756
    %v4237 = vunpack.c.0.s8 %v4236
    %v4238 = vperm.slane %v1103, %v4237
    %v4240 = vunpack.c.l.s4 1987475062
    %v4241 = vunpack.c.0.s8 %v4240
    %v4242 = vperm.slane %v1103, %v4241
    %v4244 = vunpack.c.l.s4 269488144
    %v4245 = vunpack.c.0.s8 %v4244
    %v4246 = vperm.slane %v1106, %v4245
    %v4248 = vunpack.c.l.s4 842150450
    %v4249 = vunpack.c.0.s8 %v4248
    %v4250 = vperm.slane %v1106, %v4249
    %v4252 = vunpack.c.l.s4 1414812756
    %v4253 = vunpack.c.0.s8 %v4252
    %v4254 = vperm.slane %v1106, %v4253
    %v4256 = vunpack.c.l.s4 1987475062
    %v4257 = vunpack.c.0.s8 %v4256
    %v4258 = vperm.slane %v1106, %v4257
    %v4260 = vunpack.c.l.s4 269488144
    %v4261 = vunpack.c.0.s8 %v4260
    %v4262 = vperm.slane %v1109, %v4261
    %v4264 = vunpack.c.l.s4 842150450
    %v4265 = vunpack.c.0.s8 %v4264
    %v4266 = vperm.slane %v1109, %v4265
    %v4268 = vunpack.c.l.s4 1414812756
    %v4269 = vunpack.c.0.s8 %v4268
    %v4270 = vperm.slane %v1109, %v4269
    %v4272 = vunpack.c.l.s4 1987475062
    %v4273 = vunpack.c.0.s8 %v4272
    %v4274 = vperm.slane %v1109, %v4273
    %v4276 = vunpack.c.l.s4 269488144
    %v4277 = vunpack.c.0.s8 %v4276
    %v4278 = vperm.slane %v1112, %v4277
    %v4280 = vunpack.c.l.s4 842150450
    %v4281 = vunpack.c.0.s8 %v4280
    %v4282 = vperm.slane %v1112, %v4281
    %v4284 = vunpack.c.l.s4 1414812756
    %v4285 = vunpack.c.0.s8 %v4284
    %v4286 = vperm.slane %v1112, %v4285
    %v4288 = vunpack.c.l.s4 1987475062
    %v4289 = vunpack.c.0.s8 %v4288
    %v4290 = vperm.slane %v1112, %v4289
    %v4292 = vunpack.c.l.s4 269488144
    %v4293 = vunpack.c.0.s8 %v4292
    %v4294 = vperm.slane %v1115, %v4293
    %v4296 = vunpack.c.l.s4 842150450
    %v4297 = vunpack.c.0.s8 %v4296
    %v4298 = vperm.slane %v1115, %v4297
    %v4300 = vunpack.c.l.s4 1414812756
    %v4301 = vunpack.c.0.s8 %v4300
    %v4302 = vperm.slane %v1115, %v4301
    %v4304 = vunpack.c.l.s4 1987475062
    %v4305 = vunpack.c.0.s8 %v4304
    %v4306 = vperm.slane %v1115, %v4305
    %v4308 = vunpack.c.l.s4 269488144
    %v4309 = vunpack.c.0.s8 %v4308
    %v4310 = vperm.slane %v1118, %v4309
    %v4312 = vunpack.c.l.s4 842150450
    %v4313 = vunpack.c.0.s8 %v4312
    %v4314 = vperm.slane %v1118, %v4313
    %v4316 = vunpack.c.l.s4 1414812756
    %v4317 = vunpack.c.0.s8 %v4316
    %v4318 = vperm.slane %v1118, %v4317
    %v4320 = vunpack.c.l.s4 1987475062
    %v4321 = vunpack.c.0.s8 %v4320
    %v4322 = vperm.slane %v1118, %v4321
    %v4324 = vunpack.c.l.s4 269488144
    %v4325 = vunpack.c.0.s8 %v4324
    %v4326 = vperm.slane %v1121, %v4325
    %v4328 = vunpack.c.l.s4 842150450
    %v4329 = vunpack.c.0.s8 %v4328
    %v4330 = vperm.slane %v1121, %v4329
    %v4332 = vunpack.c.l.s4 1414812756
    %v4333 = vunpack.c.0.s8 %v4332
    %v4334 = vperm.slane %v1121, %v4333
    %v4336 = vunpack.c.l.s4 1987475062
    %v4337 = vunpack.c.0.s8 %v4336
    %v4338 = vperm.slane %v1121, %v4337
    %v4340 = vunpack.c.l.s4 269488144
    %v4341 = vunpack.c.0.s8 %v4340
    %v4342 = vperm.slane %v1124, %v4341
    %v4344 = vunpack.c.l.s4 842150450
    %v4345 = vunpack.c.0.s8 %v4344
    %v4346 = vperm.slane %v1124, %v4345
    %v4348 = vunpack.c.l.s4 1414812756
    %v4349 = vunpack.c.0.s8 %v4348
    %v4350 = vperm.slane %v1124, %v4349
    %v4352 = vunpack.c.l.s4 1987475062
    %v4353 = vunpack.c.0.s8 %v4352
    %v4354 = vperm.slane %v1124, %v4353
    %v4356 = vunpack.c.l.s4 269488144
    %v4357 = vunpack.c.0.s8 %v4356
    %v4358 = vperm.slane %v1127, %v4357
    %v4360 = vunpack.c.l.s4 842150450
    %v4361 = vunpack.c.0.s8 %v4360
    %v4362 = vperm.slane %v1127, %v4361
    %v4364 = vunpack.c.l.s4 1414812756
    %v4365 = vunpack.c.0.s8 %v4364
    %v4366 = vperm.slane %v1127, %v4365
    %v4368 = vunpack.c.l.s4 1987475062
    %v4369 = vunpack.c.0.s8 %v4368
    %v4370 = vperm.slane %v1127, %v4369
    %v4372 = vunpack.c.l.s4 269488144
    %v4373 = vunpack.c.0.s8 %v4372
    %v4374 = vperm.slane %v1130, %v4373
    %v4376 = vunpack.c.l.s4 842150450
    %v4377 = vunpack.c.0.s8 %v4376
    %v4378 = vperm.slane %v1130, %v4377
    %v4380 = vunpack.c.l.s4 1414812756
    %v4381 = vunpack.c.0.s8 %v4380
    %v4382 = vperm.slane %v1130, %v4381
    %v4384 = vunpack.c.l.s4 1987475062
    %v4385 = vunpack.c.0.s8 %v4384
    %v4386 = vperm.slane %v1130, %v4385
    %v4388 = vunpack.c.l.s4 269488144
    %v4389 = vunpack.c.0.s8 %v4388
    %v4390 = vperm.slane %v1133, %v4389
    %v4392 = vunpack.c.l.s4 842150450
    %v4393 = vunpack.c.0.s8 %v4392
    %v4394 = vperm.slane %v1133, %v4393
    %v4396 = vunpack.c.l.s4 1414812756
    %v4397 = vunpack.c.0.s8 %v4396
    %v4398 = vperm.slane %v1133, %v4397
    %v4400 = vunpack.c.l.s4 1987475062
    %v4401 = vunpack.c.0.s8 %v4400
    %v4402 = vperm.slane %v1133, %v4401
    %v4404 = vunpack.c.l.s4 269488144
    %v4405 = vunpack.c.0.s8 %v4404
    %v4406 = vperm.slane %v1136, %v4405
    %v4408 = vunpack.c.l.s4 842150450
    %v4409 = vunpack.c.0.s8 %v4408
    %v4410 = vperm.slane %v1136, %v4409
    %v4412 = vunpack.c.l.s4 1414812756
    %v4413 = vunpack.c.0.s8 %v4412
    %v4414 = vperm.slane %v1136, %v4413
    %v4416 = vunpack.c.l.s4 1987475062
    %v4417 = vunpack.c.0.s8 %v4416
    %v4418 = vperm.slane %v1136, %v4417
    %v4420 = vunpack.c.l.s4 269488144
    %v4421 = vunpack.c.0.s8 %v4420
    %v4422 = vperm.slane %v1139, %v4421
    %v4424 = vunpack.c.l.s4 842150450
    %v4425 = vunpack.c.0.s8 %v4424
    %v4426 = vperm.slane %v1139, %v4425
    %v4428 = vunpack.c.l.s4 1414812756
    %v4429 = vunpack.c.0.s8 %v4428
    %v4430 = vperm.slane %v1139, %v4429
    %v4432 = vunpack.c.l.s4 1987475062
    %v4433 = vunpack.c.0.s8 %v4432
    %v4434 = vperm.slane %v1139, %v4433
    %v4436 = vunpack.c.l.s4 269488144
    %v4437 = vunpack.c.0.s8 %v4436
    %v4438 = vperm.slane %v1142, %v4437
    %v4440 = vunpack.c.l.s4 842150450
    %v4441 = vunpack.c.0.s8 %v4440
    %v4442 = vperm.slane %v1142, %v4441
    %v4444 = vunpack.c.l.s4 1414812756
    %v4445 = vunpack.c.0.s8 %v4444
    %v4446 = vperm.slane %v1142, %v4445
    %v4448 = vunpack.c.l.s4 1987475062
    %v4449 = vunpack.c.0.s8 %v4448
    %v4450 = vperm.slane %v1142, %v4449
    %v4452 = vunpack.c.l.s4 269488144
    %v4453 = vunpack.c.0.s8 %v4452
    %v4454 = vperm.slane %v1145, %v4453
    %v4456 = vunpack.c.l.s4 842150450
    %v4457 = vunpack.c.0.s8 %v4456
    %v4458 = vperm.slane %v1145, %v4457
    %v4460 = vunpack.c.l.s4 1414812756
    %v4461 = vunpack.c.0.s8 %v4460
    %v4462 = vperm.slane %v1145, %v4461
    %v4464 = vunpack.c.l.s4 1987475062
    %v4465 = vunpack.c.0.s8 %v4464
    %v4466 = vperm.slane %v1145, %v4465
    %v4468 = vunpack.c.l.s4 269488144
    %v4469 = vunpack.c.0.s8 %v4468
    %v4470 = vperm.slane %v1148, %v4469
    %v4472 = vunpack.c.l.s4 842150450
    %v4473 = vunpack.c.0.s8 %v4472
    %v4474 = vperm.slane %v1148, %v4473
    %v4476 = vunpack.c.l.s4 1414812756
    %v4477 = vunpack.c.0.s8 %v4476
    %v4478 = vperm.slane %v1148, %v4477
    %v4480 = vunpack.c.l.s4 1987475062
    %v4481 = vunpack.c.0.s8 %v4480
    %v4482 = vperm.slane %v1148, %v4481
    %v4484 = vunpack.c.l.s4 269488144
    %v4485 = vunpack.c.0.s8 %v4484
    %v4486 = vperm.slane %v1151, %v4485
    %v4488 = vunpack.c.l.s4 842150450
    %v4489 = vunpack.c.0.s8 %v4488
    %v4490 = vperm.slane %v1151, %v4489
    %v4492 = vunpack.c.l.s4 1414812756
    %v4493 = vunpack.c.0.s8 %v4492
    %v4494 = vperm.slane %v1151, %v4493
    %v4496 = vunpack.c.l.s4 1987475062
    %v4497 = vunpack.c.0.s8 %v4496
    %v4498 = vperm.slane %v1151, %v4497
    %v4500 = vunpack.c.l.s4 269488144
    %v4501 = vunpack.c.0.s8 %v4500
    %v4502 = vperm.slane %v1154, %v4501
    %v4504 = vunpack.c.l.s4 842150450
    %v4505 = vunpack.c.0.s8 %v4504
    %v4506 = vperm.slane %v1154, %v4505
    %v4508 = vunpack.c.l.s4 1414812756
    %v4509 = vunpack.c.0.s8 %v4508
    %v4510 = vperm.slane %v1154, %v4509
    %v4512 = vunpack.c.l.s4 1987475062
    %v4513 = vunpack.c.0.s8 %v4512
    %v4514 = vperm.slane %v1154, %v4513
    %v4516 = vunpack.c.l.s4 269488144
    %v4517 = vunpack.c.0.s8 %v4516
    %v4518 = vperm.slane %v1157, %v4517
    %v4520 = vunpack.c.l.s4 842150450
    %v4521 = vunpack.c.0.s8 %v4520
    %v4522 = vperm.slane %v1157, %v4521
    %v4524 = vunpack.c.l.s4 1414812756
    %v4525 = vunpack.c.0.s8 %v4524
    %v4526 = vperm.slane %v1157, %v4525
    %v4528 = vunpack.c.l.s4 1987475062
    %v4529 = vunpack.c.0.s8 %v4528
    %v4530 = vperm.slane %v1157, %v4529
    %v4532 = vunpack.c.l.s4 269488144
    %v4533 = vunpack.c.0.s8 %v4532
    %v4534 = vperm.slane %v1160, %v4533
    %v4536 = vunpack.c.l.s4 842150450
    %v4537 = vunpack.c.0.s8 %v4536
    %v4538 = vperm.slane %v1160, %v4537
    %v4540 = vunpack.c.l.s4 1414812756
    %v4541 = vunpack.c.0.s8 %v4540
    %v4542 = vperm.slane %v1160, %v4541
    %v4544 = vunpack.c.l.s4 1987475062
    %v4545 = vunpack.c.0.s8 %v4544
    %v4546 = vperm.slane %v1160, %v4545
    %v4548 = vunpack.c.l.s4 269488144
    %v4549 = vunpack.c.0.s8 %v4548
    %v4550 = vperm.slane %v1163, %v4549
    %v4552 = vunpack.c.l.s4 842150450
    %v4553 = vunpack.c.0.s8 %v4552
    %v4554 = vperm.slane %v1163, %v4553
    %v4556 = vunpack.c.l.s4 1414812756
    %v4557 = vunpack.c.0.s8 %v4556
    %v4558 = vperm.slane %v1163, %v4557
    %v4560 = vunpack.c.l.s4 1987475062
    %v4561 = vunpack.c.0.s8 %v4560
    %v4562 = vperm.slane %v1163, %v4561
    %v4564 = vunpack.c.l.s4 269488144
    %v4565 = vunpack.c.0.s8 %v4564
    %v4566 = vperm.slane %v1166, %v4565
    %v4568 = vunpack.c.l.s4 842150450
    %v4569 = vunpack.c.0.s8 %v4568
    %v4570 = vperm.slane %v1166, %v4569
    %v4572 = vunpack.c.l.s4 1414812756
    %v4573 = vunpack.c.0.s8 %v4572
    %v4574 = vperm.slane %v1166, %v4573
    %v4576 = vunpack.c.l.s4 1987475062
    %v4577 = vunpack.c.0.s8 %v4576
    %v4578 = vperm.slane %v1166, %v4577
    %v4580 = vunpack.c.l.s4 269488144
    %v4581 = vunpack.c.0.s8 %v4580
    %v4582 = vperm.slane %v1169, %v4581
    %v4584 = vunpack.c.l.s4 842150450
    %v4585 = vunpack.c.0.s8 %v4584
    %v4586 = vperm.slane %v1169, %v4585
    %v4588 = vunpack.c.l.s4 1414812756
    %v4589 = vunpack.c.0.s8 %v4588
    %v4590 = vperm.slane %v1169, %v4589
    %v4592 = vunpack.c.l.s4 1987475062
    %v4593 = vunpack.c.0.s8 %v4592
    %v4594 = vperm.slane %v1169, %v4593
    %v4596 = vunpack.c.l.s4 269488144
    %v4597 = vunpack.c.0.s8 %v4596
    %v4598 = vperm.slane %v1172, %v4597
    %v4600 = vunpack.c.l.s4 842150450
    %v4601 = vunpack.c.0.s8 %v4600
    %v4602 = vperm.slane %v1172, %v4601
    %v4604 = vunpack.c.l.s4 1414812756
    %v4605 = vunpack.c.0.s8 %v4604
    %v4606 = vperm.slane %v1172, %v4605
    %v4608 = vunpack.c.l.s4 1987475062
    %v4609 = vunpack.c.0.s8 %v4608
    %v4610 = vperm.slane %v1172, %v4609
    %v4612 = vunpack.c.l.s4 269488144
    %v4613 = vunpack.c.0.s8 %v4612
    %v4614 = vperm.slane %v1175, %v4613
    %v4616 = vunpack.c.l.s4 842150450
    %v4617 = vunpack.c.0.s8 %v4616
    %v4618 = vperm.slane %v1175, %v4617
    %v4620 = vunpack.c.l.s4 1414812756
    %v4621 = vunpack.c.0.s8 %v4620
    %v4622 = vperm.slane %v1175, %v4621
    %v4624 = vunpack.c.l.s4 1987475062
    %v4625 = vunpack.c.0.s8 %v4624
    %v4626 = vperm.slane %v1175, %v4625
    %v4628 = vunpack.c.l.s4 269488144
    %v4629 = vunpack.c.0.s8 %v4628
    %v4630 = vperm.slane %v1178, %v4629
    %v4632 = vunpack.c.l.s4 842150450
    %v4633 = vunpack.c.0.s8 %v4632
    %v4634 = vperm.slane %v1178, %v4633
    %v4636 = vunpack.c.l.s4 1414812756
    %v4637 = vunpack.c.0.s8 %v4636
    %v4638 = vperm.slane %v1178, %v4637
    %v4640 = vunpack.c.l.s4 1987475062
    %v4641 = vunpack.c.0.s8 %v4640
    %v4642 = vperm.slane %v1178, %v4641
    %v4644 = vunpack.c.l.s4 269488144
    %v4645 = vunpack.c.0.s8 %v4644
    %v4646 = vperm.slane %v1181, %v4645
    %v4648 = vunpack.c.l.s4 842150450
    %v4649 = vunpack.c.0.s8 %v4648
    %v4650 = vperm.slane %v1181, %v4649
    %v4652 = vunpack.c.l.s4 1414812756
    %v4653 = vunpack.c.0.s8 %v4652
    %v4654 = vperm.slane %v1181, %v4653
    %v4656 = vunpack.c.l.s4 1987475062
    %v4657 = vunpack.c.0.s8 %v4656
    %v4658 = vperm.slane %v1181, %v4657
    %v4660 = vunpack.c.l.s4 269488144
    %v4661 = vunpack.c.0.s8 %v4660
    %v4662 = vperm.slane %v1184, %v4661
    %v4664 = vunpack.c.l.s4 842150450
    %v4665 = vunpack.c.0.s8 %v4664
    %v4666 = vperm.slane %v1184, %v4665
    %v4668 = vunpack.c.l.s4 1414812756
    %v4669 = vunpack.c.0.s8 %v4668
    %v4670 = vperm.slane %v1184, %v4669
    %v4672 = vunpack.c.l.s4 1987475062
    %v4673 = vunpack.c.0.s8 %v4672
    %v4674 = vperm.slane %v1184, %v4673
    %v4676 = vunpack.c.l.s4 269488144
    %v4677 = vunpack.c.0.s8 %v4676
    %v4678 = vperm.slane %v1187, %v4677
    %v4680 = vunpack.c.l.s4 842150450
    %v4681 = vunpack.c.0.s8 %v4680
    %v4682 = vperm.slane %v1187, %v4681
    %v4684 = vunpack.c.l.s4 1414812756
    %v4685 = vunpack.c.0.s8 %v4684
    %v4686 = vperm.slane %v1187, %v4685
    %v4688 = vunpack.c.l.s4 1987475062
    %v4689 = vunpack.c.0.s8 %v4688
    %v4690 = vperm.slane %v1187, %v4689
    %v4692 = vunpack.c.l.s4 269488144
    %v4693 = vunpack.c.0.s8 %v4692
    %v4694 = vperm.slane %v1190, %v4693
    %v4696 = vunpack.c.l.s4 842150450
    %v4697 = vunpack.c.0.s8 %v4696
    %v4698 = vperm.slane %v1190, %v4697
    %v4700 = vunpack.c.l.s4 1414812756
    %v4701 = vunpack.c.0.s8 %v4700
    %v4702 = vperm.slane %v1190, %v4701
    %v4704 = vunpack.c.l.s4 1987475062
    %v4705 = vunpack.c.0.s8 %v4704
    %v4706 = vperm.slane %v1190, %v4705
    %v4708 = vunpack.c.l.s4 269488144
    %v4709 = vunpack.c.0.s8 %v4708
    %v4710 = vperm.slane %v1193, %v4709
    %v4712 = vunpack.c.l.s4 842150450
    %v4713 = vunpack.c.0.s8 %v4712
    %v4714 = vperm.slane %v1193, %v4713
    %v4716 = vunpack.c.l.s4 1414812756
    %v4717 = vunpack.c.0.s8 %v4716
    %v4718 = vperm.slane %v1193, %v4717
    %v4720 = vunpack.c.l.s4 1987475062
    %v4721 = vunpack.c.0.s8 %v4720
    %v4722 = vperm.slane %v1193, %v4721
    %v4724 = vunpack.c.l.s4 269488144
    %v4725 = vunpack.c.0.s8 %v4724
    %v4726 = vperm.slane %v1196, %v4725
    %v4728 = vunpack.c.l.s4 842150450
    %v4729 = vunpack.c.0.s8 %v4728
    %v4730 = vperm.slane %v1196, %v4729
    %v4732 = vunpack.c.l.s4 1414812756
    %v4733 = vunpack.c.0.s8 %v4732
    %v4734 = vperm.slane %v1196, %v4733
    %v4736 = vunpack.c.l.s4 1987475062
    %v4737 = vunpack.c.0.s8 %v4736
    %v4738 = vperm.slane %v1196, %v4737
    %v4740 = vunpack.c.l.s4 269488144
    %v4741 = vunpack.c.0.s8 %v4740
    %v4742 = vperm.slane %v1199, %v4741
    %v4744 = vunpack.c.l.s4 842150450
    %v4745 = vunpack.c.0.s8 %v4744
    %v4746 = vperm.slane %v1199, %v4745
    %v4748 = vunpack.c.l.s4 1414812756
    %v4749 = vunpack.c.0.s8 %v4748
    %v4750 = vperm.slane %v1199, %v4749
    %v4752 = vunpack.c.l.s4 1987475062
    %v4753 = vunpack.c.0.s8 %v4752
    %v4754 = vperm.slane %v1199, %v4753
    %v4756 = vunpack.c.l.s4 269488144
    %v4757 = vunpack.c.0.s8 %v4756
    %v4758 = vperm.slane %v1202, %v4757
    %v4760 = vunpack.c.l.s4 842150450
    %v4761 = vunpack.c.0.s8 %v4760
    %v4762 = vperm.slane %v1202, %v4761
    %v4764 = vunpack.c.l.s4 1414812756
    %v4765 = vunpack.c.0.s8 %v4764
    %v4766 = vperm.slane %v1202, %v4765
    %v4768 = vunpack.c.l.s4 1987475062
    %v4769 = vunpack.c.0.s8 %v4768
    %v4770 = vperm.slane %v1202, %v4769
    %v4772 = vunpack.c.l.s4 269488144
    %v4773 = vunpack.c.0.s8 %v4772
    %v4774 = vperm.slane %v1205, %v4773
    %v4776 = vunpack.c.l.s4 842150450
    %v4777 = vunpack.c.0.s8 %v4776
    %v4778 = vperm.slane %v1205, %v4777
    %v4780 = vunpack.c.l.s4 1414812756
    %v4781 = vunpack.c.0.s8 %v4780
    %v4782 = vperm.slane %v1205, %v4781
    %v4784 = vunpack.c.l.s4 1987475062
    %v4785 = vunpack.c.0.s8 %v4784
    %v4786 = vperm.slane %v1205, %v4785
    %v4788 = vunpack.c.l.s4 269488144
    %v4789 = vunpack.c.0.s8 %v4788
    %v4790 = vperm.slane %v1208, %v4789
    %v4792 = vunpack.c.l.s4 842150450
    %v4793 = vunpack.c.0.s8 %v4792
    %v4794 = vperm.slane %v1208, %v4793
    %v4796 = vunpack.c.l.s4 1414812756
    %v4797 = vunpack.c.0.s8 %v4796
    %v4798 = vperm.slane %v1208, %v4797
    %v4800 = vunpack.c.l.s4 1987475062
    %v4801 = vunpack.c.0.s8 %v4800
    %v4802 = vperm.slane %v1208, %v4801
    %v4804 = vunpack.c.l.s4 269488144
    %v4805 = vunpack.c.0.s8 %v4804
    %v4806 = vperm.slane %v1211, %v4805
    %v4808 = vunpack.c.l.s4 842150450
    %v4809 = vunpack.c.0.s8 %v4808
    %v4810 = vperm.slane %v1211, %v4809
    %v4812 = vunpack.c.l.s4 1414812756
    %v4813 = vunpack.c.0.s8 %v4812
    %v4814 = vperm.slane %v1211, %v4813
    %v4816 = vunpack.c.l.s4 1987475062
    %v4817 = vunpack.c.0.s8 %v4816
    %v4818 = vperm.slane %v1211, %v4817
    %v4820 = vunpack.c.l.s4 269488144
    %v4821 = vunpack.c.0.s8 %v4820
    %v4822 = vperm.slane %v1214, %v4821
    %v4824 = vunpack.c.l.s4 842150450
    %v4825 = vunpack.c.0.s8 %v4824
    %v4826 = vperm.slane %v1214, %v4825
    %v4828 = vunpack.c.l.s4 1414812756
    %v4829 = vunpack.c.0.s8 %v4828
    %v4830 = vperm.slane %v1214, %v4829
    %v4832 = vunpack.c.l.s4 1987475062
    %v4833 = vunpack.c.0.s8 %v4832
    %v4834 = vperm.slane %v1214, %v4833
    %v4836 = vunpack.c.l.s4 269488144
    %v4837 = vunpack.c.0.s8 %v4836
    %v4838 = vperm.slane %v1217, %v4837
    %v4840 = vunpack.c.l.s4 842150450
    %v4841 = vunpack.c.0.s8 %v4840
    %v4842 = vperm.slane %v1217, %v4841
    %v4844 = vunpack.c.l.s4 1414812756
    %v4845 = vunpack.c.0.s8 %v4844
    %v4846 = vperm.slane %v1217, %v4845
    %v4848 = vunpack.c.l.s4 1987475062
    %v4849 = vunpack.c.0.s8 %v4848
    %v4850 = vperm.slane %v1217, %v4849
    %v4852 = vunpack.c.l.s4 269488144
    %v4853 = vunpack.c.0.s8 %v4852
    %v4854 = vperm.slane %v1220, %v4853
    %v4856 = vunpack.c.l.s4 842150450
    %v4857 = vunpack.c.0.s8 %v4856
    %v4858 = vperm.slane %v1220, %v4857
    %v4860 = vunpack.c.l.s4 1414812756
    %v4861 = vunpack.c.0.s8 %v4860
    %v4862 = vperm.slane %v1220, %v4861
    %v4864 = vunpack.c.l.s4 1987475062
    %v4865 = vunpack.c.0.s8 %v4864
    %v4866 = vperm.slane %v1220, %v4865
    %v4868 = vunpack.c.l.s4 269488144
    %v4869 = vunpack.c.0.s8 %v4868
    %v4870 = vperm.slane %v1223, %v4869
    %v4872 = vunpack.c.l.s4 842150450
    %v4873 = vunpack.c.0.s8 %v4872
    %v4874 = vperm.slane %v1223, %v4873
    %v4876 = vunpack.c.l.s4 1414812756
    %v4877 = vunpack.c.0.s8 %v4876
    %v4878 = vperm.slane %v1223, %v4877
    %v4880 = vunpack.c.l.s4 1987475062
    %v4881 = vunpack.c.0.s8 %v4880
    %v4882 = vperm.slane %v1223, %v4881
    %v4884 = vunpack.c.l.s4 269488144
    %v4885 = vunpack.c.0.s8 %v4884
    %v4886 = vperm.slane %v1226, %v4885
    %v4888 = vunpack.c.l.s4 842150450
    %v4889 = vunpack.c.0.s8 %v4888
    %v4890 = vperm.slane %v1226, %v4889
    %v4892 = vunpack.c.l.s4 1414812756
    %v4893 = vunpack.c.0.s8 %v4892
    %v4894 = vperm.slane %v1226, %v4893
    %v4896 = vunpack.c.l.s4 1987475062
    %v4897 = vunpack.c.0.s8 %v4896
    %v4898 = vperm.slane %v1226, %v4897
    %v4900 = vunpack.c.l.s4 269488144
    %v4901 = vunpack.c.0.s8 %v4900
    %v4902 = vperm.slane %v1229, %v4901
    %v4904 = vunpack.c.l.s4 842150450
    %v4905 = vunpack.c.0.s8 %v4904
    %v4906 = vperm.slane %v1229, %v4905
    %v4908 = vunpack.c.l.s4 1414812756
    %v4909 = vunpack.c.0.s8 %v4908
    %v4910 = vperm.slane %v1229, %v4909
    %v4912 = vunpack.c.l.s4 1987475062
    %v4913 = vunpack.c.0.s8 %v4912
    %v4914 = vperm.slane %v1229, %v4913
    %v4916 = vunpack.c.l.s4 269488144
    %v4917 = vunpack.c.0.s8 %v4916
    %v4918 = vperm.slane %v1232, %v4917
    %v4920 = vunpack.c.l.s4 842150450
    %v4921 = vunpack.c.0.s8 %v4920
    %v4922 = vperm.slane %v1232, %v4921
    %v4924 = vunpack.c.l.s4 1414812756
    %v4925 = vunpack.c.0.s8 %v4924
    %v4926 = vperm.slane %v1232, %v4925
    %v4928 = vunpack.c.l.s4 1987475062
    %v4929 = vunpack.c.0.s8 %v4928
    %v4930 = vperm.slane %v1232, %v4929
    %v4932 = vunpack.c.l.s4 269488144
    %v4933 = vunpack.c.0.s8 %v4932
    %v4934 = vperm.slane %v1235, %v4933
    %v4936 = vunpack.c.l.s4 842150450
    %v4937 = vunpack.c.0.s8 %v4936
    %v4938 = vperm.slane %v1235, %v4937
    %v4940 = vunpack.c.l.s4 1414812756
    %v4941 = vunpack.c.0.s8 %v4940
    %v4942 = vperm.slane %v1235, %v4941
    %v4944 = vunpack.c.l.s4 1987475062
    %v4945 = vunpack.c.0.s8 %v4944
    %v4946 = vperm.slane %v1235, %v4945
    %v4948 = vunpack.c.l.s4 269488144
    %v4949 = vunpack.c.0.s8 %v4948
    %v4950 = vperm.slane %v1238, %v4949
    %v4952 = vunpack.c.l.s4 842150450
    %v4953 = vunpack.c.0.s8 %v4952
    %v4954 = vperm.slane %v1238, %v4953
    %v4956 = vunpack.c.l.s4 1414812756
    %v4957 = vunpack.c.0.s8 %v4956
    %v4958 = vperm.slane %v1238, %v4957
    %v4960 = vunpack.c.l.s4 1987475062
    %v4961 = vunpack.c.0.s8 %v4960
    %v4962 = vperm.slane %v1238, %v4961
    %v4964 = vunpack.c.l.s4 269488144
    %v4965 = vunpack.c.0.s8 %v4964
    %v4966 = vperm.slane %v1241, %v4965
    %v4968 = vunpack.c.l.s4 842150450
    %v4969 = vunpack.c.0.s8 %v4968
    %v4970 = vperm.slane %v1241, %v4969
    %v4972 = vunpack.c.l.s4 1414812756
    %v4973 = vunpack.c.0.s8 %v4972
    %v4974 = vperm.slane %v1241, %v4973
    %v4976 = vunpack.c.l.s4 1987475062
    %v4977 = vunpack.c.0.s8 %v4976
    %v4978 = vperm.slane %v1241, %v4977
    %v4980 = vunpack.c.l.s4 269488144
    %v4981 = vunpack.c.0.s8 %v4980
    %v4982 = vperm.slane %v1244, %v4981
    %v4984 = vunpack.c.l.s4 842150450
    %v4985 = vunpack.c.0.s8 %v4984
    %v4986 = vperm.slane %v1244, %v4985
    %v4988 = vunpack.c.l.s4 1414812756
    %v4989 = vunpack.c.0.s8 %v4988
    %v4990 = vperm.slane %v1244, %v4989
    %v4992 = vunpack.c.l.s4 1987475062
    %v4993 = vunpack.c.0.s8 %v4992
    %v4994 = vperm.slane %v1244, %v4993
    %v4996 = vunpack.c.l.s4 269488144
    %v4997 = vunpack.c.0.s8 %v4996
    %v4998 = vperm.slane %v1247, %v4997
    %v5000 = vunpack.c.l.s4 842150450
    %v5001 = vunpack.c.0.s8 %v5000
    %v5002 = vperm.slane %v1247, %v5001
    %v5004 = vunpack.c.l.s4 1414812756
    %v5005 = vunpack.c.0.s8 %v5004
    %v5006 = vperm.slane %v1247, %v5005
    %v5008 = vunpack.c.l.s4 1987475062
    %v5009 = vunpack.c.0.s8 %v5008
    %v5010 = vperm.slane %v1247, %v5009
    %v5012 = vunpack.c.l.s4 269488144
    %v5013 = vunpack.c.0.s8 %v5012
    %v5014 = vperm.slane %v1250, %v5013
    %v5016 = vunpack.c.l.s4 842150450
    %v5017 = vunpack.c.0.s8 %v5016
    %v5018 = vperm.slane %v1250, %v5017
    %v5020 = vunpack.c.l.s4 1414812756
    %v5021 = vunpack.c.0.s8 %v5020
    %v5022 = vperm.slane %v1250, %v5021
    %v5024 = vunpack.c.l.s4 1987475062
    %v5025 = vunpack.c.0.s8 %v5024
    %v5026 = vperm.slane %v1250, %v5025
    %v5028 = vunpack.c.l.s4 269488144
    %v5029 = vunpack.c.0.s8 %v5028
    %v5030 = vperm.slane %v1253, %v5029
    %v5032 = vunpack.c.l.s4 842150450
    %v5033 = vunpack.c.0.s8 %v5032
    %v5034 = vperm.slane %v1253, %v5033
    %v5036 = vunpack.c.l.s4 1414812756
    %v5037 = vunpack.c.0.s8 %v5036
    %v5038 = vperm.slane %v1253, %v5037
    %v5040 = vunpack.c.l.s4 1987475062
    %v5041 = vunpack.c.0.s8 %v5040
    %v5042 = vperm.slane %v1253, %v5041
    %v5044 = vunpack.c.l.s4 269488144
    %v5045 = vunpack.c.0.s8 %v5044
    %v5046 = vperm.slane %v1256, %v5045
    %v5048 = vunpack.c.l.s4 842150450
    %v5049 = vunpack.c.0.s8 %v5048
    %v5050 = vperm.slane %v1256, %v5049
    %v5052 = vunpack.c.l.s4 1414812756
    %v5053 = vunpack.c.0.s8 %v5052
    %v5054 = vperm.slane %v1256, %v5053
    %v5056 = vunpack.c.l.s4 1987475062
    %v5057 = vunpack.c.0.s8 %v5056
    %v5058 = vperm.slane %v1256, %v5057
    %v5060 = vunpack.c.l.s4 269488144
    %v5061 = vunpack.c.0.s8 %v5060
    %v5062 = vperm.slane %v1259, %v5061
    %v5064 = vunpack.c.l.s4 842150450
    %v5065 = vunpack.c.0.s8 %v5064
    %v5066 = vperm.slane %v1259, %v5065
    %v5068 = vunpack.c.l.s4 1414812756
    %v5069 = vunpack.c.0.s8 %v5068
    %v5070 = vperm.slane %v1259, %v5069
    %v5072 = vunpack.c.l.s4 1987475062
    %v5073 = vunpack.c.0.s8 %v5072
    %v5074 = vperm.slane %v1259, %v5073
    %v5076 = vunpack.c.l.s4 269488144
    %v5077 = vunpack.c.0.s8 %v5076
    %v5078 = vperm.slane %v1262, %v5077
    %v5080 = vunpack.c.l.s4 842150450
    %v5081 = vunpack.c.0.s8 %v5080
    %v5082 = vperm.slane %v1262, %v5081
    %v5084 = vunpack.c.l.s4 1414812756
    %v5085 = vunpack.c.0.s8 %v5084
    %v5086 = vperm.slane %v1262, %v5085
    %v5088 = vunpack.c.l.s4 1987475062
    %v5089 = vunpack.c.0.s8 %v5088
    %v5090 = vperm.slane %v1262, %v5089
    %v5092 = vunpack.c.l.s4 269488144
    %v5093 = vunpack.c.0.s8 %v5092
    %v5094 = vperm.slane %v1265, %v5093
    %v5096 = vunpack.c.l.s4 842150450
    %v5097 = vunpack.c.0.s8 %v5096
    %v5098 = vperm.slane %v1265, %v5097
    %v5100 = vunpack.c.l.s4 1414812756
    %v5101 = vunpack.c.0.s8 %v5100
    %v5102 = vperm.slane %v1265, %v5101
    %v5104 = vunpack.c.l.s4 1987475062
    %v5105 = vunpack.c.0.s8 %v5104
    %v5106 = vperm.slane %v1265, %v5105
    %v5108 = vunpack.c.l.s4 269488144
    %v5109 = vunpack.c.0.s8 %v5108
    %v5110 = vperm.slane %v1268, %v5109
    %v5112 = vunpack.c.l.s4 842150450
    %v5113 = vunpack.c.0.s8 %v5112
    %v5114 = vperm.slane %v1268, %v5113
    %v5116 = vunpack.c.l.s4 1414812756
    %v5117 = vunpack.c.0.s8 %v5116
    %v5118 = vperm.slane %v1268, %v5117
    %v5120 = vunpack.c.l.s4 1987475062
    %v5121 = vunpack.c.0.s8 %v5120
    %v5122 = vperm.slane %v1268, %v5121
    %v5124 = vunpack.c.l.s4 269488144
    %v5125 = vunpack.c.0.s8 %v5124
    %v5126 = vperm.slane %v1271, %v5125
    %v5128 = vunpack.c.l.s4 842150450
    %v5129 = vunpack.c.0.s8 %v5128
    %v5130 = vperm.slane %v1271, %v5129
    %v5132 = vunpack.c.l.s4 1414812756
    %v5133 = vunpack.c.0.s8 %v5132
    %v5134 = vperm.slane %v1271, %v5133
    %v5136 = vunpack.c.l.s4 1987475062
    %v5137 = vunpack.c.0.s8 %v5136
    %v5138 = vperm.slane %v1271, %v5137
    %v5140 = vunpack.c.l.s4 269488144
    %v5141 = vunpack.c.0.s8 %v5140
    %v5142 = vperm.slane %v1274, %v5141
    %v5144 = vunpack.c.l.s4 842150450
    %v5145 = vunpack.c.0.s8 %v5144
    %v5146 = vperm.slane %v1274, %v5145
    %v5148 = vunpack.c.l.s4 1414812756
    %v5149 = vunpack.c.0.s8 %v5148
    %v5150 = vperm.slane %v1274, %v5149
    %v5152 = vunpack.c.l.s4 1987475062
    %v5153 = vunpack.c.0.s8 %v5152
    %v5154 = vperm.slane %v1274, %v5153
    %v5156 = vunpack.c.l.s4 269488144
    %v5157 = vunpack.c.0.s8 %v5156
    %v5158 = vperm.slane %v1277, %v5157
    %v5160 = vunpack.c.l.s4 842150450
    %v5161 = vunpack.c.0.s8 %v5160
    %v5162 = vperm.slane %v1277, %v5161
    %v5164 = vunpack.c.l.s4 1414812756
    %v5165 = vunpack.c.0.s8 %v5164
    %v5166 = vperm.slane %v1277, %v5165
    %v5168 = vunpack.c.l.s4 1987475062
    %v5169 = vunpack.c.0.s8 %v5168
    %v5170 = vperm.slane %v1277, %v5169
    %v5172 = vunpack.c.l.s4 269488144
    %v5173 = vunpack.c.0.s8 %v5172
    %v5174 = vperm.slane %v1280, %v5173
    %v5176 = vunpack.c.l.s4 842150450
    %v5177 = vunpack.c.0.s8 %v5176
    %v5178 = vperm.slane %v1280, %v5177
    %v5180 = vunpack.c.l.s4 1414812756
    %v5181 = vunpack.c.0.s8 %v5180
    %v5182 = vperm.slane %v1280, %v5181
    %v5184 = vunpack.c.l.s4 1987475062
    %v5185 = vunpack.c.0.s8 %v5184
    %v5186 = vperm.slane %v1280, %v5185
    %v5188 = vunpack.c.l.s4 269488144
    %v5189 = vunpack.c.0.s8 %v5188
    %v5190 = vperm.slane %v1283, %v5189
    %v5192 = vunpack.c.l.s4 842150450
    %v5193 = vunpack.c.0.s8 %v5192
    %v5194 = vperm.slane %v1283, %v5193
    %v5196 = vunpack.c.l.s4 1414812756
    %v5197 = vunpack.c.0.s8 %v5196
    %v5198 = vperm.slane %v1283, %v5197
    %v5200 = vunpack.c.l.s4 1987475062
    %v5201 = vunpack.c.0.s8 %v5200
    %v5202 = vperm.slane %v1283, %v5201
    %v5204 = vunpack.c.l.s4 269488144
    %v5205 = vunpack.c.0.s8 %v5204
    %v5206 = vperm.slane %v1286, %v5205
    %v5208 = vunpack.c.l.s4 842150450
    %v5209 = vunpack.c.0.s8 %v5208
    %v5210 = vperm.slane %v1286, %v5209
    %v5212 = vunpack.c.l.s4 1414812756
    %v5213 = vunpack.c.0.s8 %v5212
    %v5214 = vperm.slane %v1286, %v5213
    %v5216 = vunpack.c.l.s4 1987475062
    %v5217 = vunpack.c.0.s8 %v5216
    %v5218 = vperm.slane %v1286, %v5217
    %v5220 = vunpack.c.l.s4 269488144
    %v5221 = vunpack.c.0.s8 %v5220
    %v5222 = vperm.slane %v1289, %v5221
    %v5224 = vunpack.c.l.s4 842150450
    %v5225 = vunpack.c.0.s8 %v5224
    %v5226 = vperm.slane %v1289, %v5225
    %v5228 = vunpack.c.l.s4 1414812756
    %v5229 = vunpack.c.0.s8 %v5228
    %v5230 = vperm.slane %v1289, %v5229
    %v5232 = vunpack.c.l.s4 1987475062
    %v5233 = vunpack.c.0.s8 %v5232
    %v5234 = vperm.slane %v1289, %v5233
    %v5236 = vunpack.c.l.s4 269488144
    %v5237 = vunpack.c.0.s8 %v5236
    %v5238 = vperm.slane %v1292, %v5237
    %v5240 = vunpack.c.l.s4 842150450
    %v5241 = vunpack.c.0.s8 %v5240
    %v5242 = vperm.slane %v1292, %v5241
    %v5244 = vunpack.c.l.s4 1414812756
    %v5245 = vunpack.c.0.s8 %v5244
    %v5246 = vperm.slane %v1292, %v5245
    %v5248 = vunpack.c.l.s4 1987475062
    %v5249 = vunpack.c.0.s8 %v5248
    %v5250 = vperm.slane %v1292, %v5249
    %v5252 = vunpack.c.l.s4 269488144
    %v5253 = vunpack.c.0.s8 %v5252
    %v5254 = vperm.slane %v1295, %v5253
    %v5256 = vunpack.c.l.s4 842150450
    %v5257 = vunpack.c.0.s8 %v5256
    %v5258 = vperm.slane %v1295, %v5257
    %v5260 = vunpack.c.l.s4 1414812756
    %v5261 = vunpack.c.0.s8 %v5260
    %v5262 = vperm.slane %v1295, %v5261
    %v5264 = vunpack.c.l.s4 1987475062
    %v5265 = vunpack.c.0.s8 %v5264
    %v5266 = vperm.slane %v1295, %v5265
    %v5268 = vunpack.c.l.s4 269488144
    %v5269 = vunpack.c.0.s8 %v5268
    %v5270 = vperm.slane %v1298, %v5269
    %v5272 = vunpack.c.l.s4 842150450
    %v5273 = vunpack.c.0.s8 %v5272
    %v5274 = vperm.slane %v1298, %v5273
    %v5276 = vunpack.c.l.s4 1414812756
    %v5277 = vunpack.c.0.s8 %v5276
    %v5278 = vperm.slane %v1298, %v5277
    %v5280 = vunpack.c.l.s4 1987475062
    %v5281 = vunpack.c.0.s8 %v5280
    %v5282 = vperm.slane %v1298, %v5281
    %v5284 = vunpack.c.l.s4 269488144
    %v5285 = vunpack.c.0.s8 %v5284
    %v5286 = vperm.slane %v1301, %v5285
    %v5288 = vunpack.c.l.s4 842150450
    %v5289 = vunpack.c.0.s8 %v5288
    %v5290 = vperm.slane %v1301, %v5289
    %v5292 = vunpack.c.l.s4 1414812756
    %v5293 = vunpack.c.0.s8 %v5292
    %v5294 = vperm.slane %v1301, %v5293
    %v5296 = vunpack.c.l.s4 1987475062
    %v5297 = vunpack.c.0.s8 %v5296
    %v5298 = vperm.slane %v1301, %v5297
    %v5300 = vunpack.c.l.s4 269488144
    %v5301 = vunpack.c.0.s8 %v5300
    %v5302 = vperm.slane %v1304, %v5301
    %v5304 = vunpack.c.l.s4 842150450
    %v5305 = vunpack.c.0.s8 %v5304
    %v5306 = vperm.slane %v1304, %v5305
    %v5308 = vunpack.c.l.s4 1414812756
    %v5309 = vunpack.c.0.s8 %v5308
    %v5310 = vperm.slane %v1304, %v5309
    %v5312 = vunpack.c.l.s4 1987475062
    %v5313 = vunpack.c.0.s8 %v5312
    %v5314 = vperm.slane %v1304, %v5313
    %v5316 = vunpack.c.l.s4 269488144
    %v5317 = vunpack.c.0.s8 %v5316
    %v5318 = vperm.slane %v1307, %v5317
    %v5320 = vunpack.c.l.s4 842150450
    %v5321 = vunpack.c.0.s8 %v5320
    %v5322 = vperm.slane %v1307, %v5321
    %v5324 = vunpack.c.l.s4 1414812756
    %v5325 = vunpack.c.0.s8 %v5324
    %v5326 = vperm.slane %v1307, %v5325
    %v5328 = vunpack.c.l.s4 1987475062
    %v5329 = vunpack.c.0.s8 %v5328
    %v5330 = vperm.slane %v1307, %v5329
    %v5332 = vunpack.c.l.s4 269488144
    %v5333 = vunpack.c.0.s8 %v5332
    %v5334 = vperm.slane %v1310, %v5333
    %v5336 = vunpack.c.l.s4 842150450
    %v5337 = vunpack.c.0.s8 %v5336
    %v5338 = vperm.slane %v1310, %v5337
    %v5340 = vunpack.c.l.s4 1414812756
    %v5341 = vunpack.c.0.s8 %v5340
    %v5342 = vperm.slane %v1310, %v5341
    %v5344 = vunpack.c.l.s4 1987475062
    %v5345 = vunpack.c.0.s8 %v5344
    %v5346 = vperm.slane %v1310, %v5345
    %v5348 = vunpack.c.l.s4 269488144
    %v5349 = vunpack.c.0.s8 %v5348
    %v5350 = vperm.slane %v1313, %v5349
    %v5352 = vunpack.c.l.s4 842150450
    %v5353 = vunpack.c.0.s8 %v5352
    %v5354 = vperm.slane %v1313, %v5353
    %v5356 = vunpack.c.l.s4 1414812756
    %v5357 = vunpack.c.0.s8 %v5356
    %v5358 = vperm.slane %v1313, %v5357
    %v5360 = vunpack.c.l.s4 1987475062
    %v5361 = vunpack.c.0.s8 %v5360
    %v5362 = vperm.slane %v1313, %v5361
    %v5364 = vunpack.c.l.s4 269488144
    %v5365 = vunpack.c.0.s8 %v5364
    %v5366 = vperm.slane %v1316, %v5365
    %v5368 = vunpack.c.l.s4 842150450
    %v5369 = vunpack.c.0.s8 %v5368
    %v5370 = vperm.slane %v1316, %v5369
    %v5372 = vunpack.c.l.s4 1414812756
    %v5373 = vunpack.c.0.s8 %v5372
    %v5374 = vperm.slane %v1316, %v5373
    %v5376 = vunpack.c.l.s4 1987475062
    %v5377 = vunpack.c.0.s8 %v5376
    %v5378 = vperm.slane %v1316, %v5377
    %v5380 = vunpack.c.l.s4 269488144
    %v5381 = vunpack.c.0.s8 %v5380
    %v5382 = vperm.slane %v1319, %v5381
    %v5384 = vunpack.c.l.s4 842150450
    %v5385 = vunpack.c.0.s8 %v5384
    %v5386 = vperm.slane %v1319, %v5385
    %v5388 = vunpack.c.l.s4 1414812756
    %v5389 = vunpack.c.0.s8 %v5388
    %v5390 = vperm.slane %v1319, %v5389
    %v5392 = vunpack.c.l.s4 1987475062
    %v5393 = vunpack.c.0.s8 %v5392
    %v5394 = vperm.slane %v1319, %v5393
    %v5396 = vunpack.c.l.s4 269488144
    %v5397 = vunpack.c.0.s8 %v5396
    %v5398 = vperm.slane %v1322, %v5397
    %v5400 = vunpack.c.l.s4 842150450
    %v5401 = vunpack.c.0.s8 %v5400
    %v5402 = vperm.slane %v1322, %v5401
    %v5404 = vunpack.c.l.s4 1414812756
    %v5405 = vunpack.c.0.s8 %v5404
    %v5406 = vperm.slane %v1322, %v5405
    %v5408 = vunpack.c.l.s4 1987475062
    %v5409 = vunpack.c.0.s8 %v5408
    %v5410 = vperm.slane %v1322, %v5409
    %v5412 = vunpack.c.l.s4 269488144
    %v5413 = vunpack.c.0.s8 %v5412
    %v5414 = vperm.slane %v1325, %v5413
    %v5416 = vunpack.c.l.s4 842150450
    %v5417 = vunpack.c.0.s8 %v5416
    %v5418 = vperm.slane %v1325, %v5417
    %v5420 = vunpack.c.l.s4 1414812756
    %v5421 = vunpack.c.0.s8 %v5420
    %v5422 = vperm.slane %v1325, %v5421
    %v5424 = vunpack.c.l.s4 1987475062
    %v5425 = vunpack.c.0.s8 %v5424
    %v5426 = vperm.slane %v1325, %v5425
    %v5428 = vunpack.c.l.s4 269488144
    %v5429 = vunpack.c.0.s8 %v5428
    %v5430 = vperm.slane %v1328, %v5429
    %v5432 = vunpack.c.l.s4 842150450
    %v5433 = vunpack.c.0.s8 %v5432
    %v5434 = vperm.slane %v1328, %v5433
    %v5436 = vunpack.c.l.s4 1414812756
    %v5437 = vunpack.c.0.s8 %v5436
    %v5438 = vperm.slane %v1328, %v5437
    %v5440 = vunpack.c.l.s4 1987475062
    %v5441 = vunpack.c.0.s8 %v5440
    %v5442 = vperm.slane %v1328, %v5441
    %v5444 = vunpack.c.l.s4 269488144
    %v5445 = vunpack.c.0.s8 %v5444
    %v5446 = vperm.slane %v1331, %v5445
    %v5448 = vunpack.c.l.s4 842150450
    %v5449 = vunpack.c.0.s8 %v5448
    %v5450 = vperm.slane %v1331, %v5449
    %v5452 = vunpack.c.l.s4 1414812756
    %v5453 = vunpack.c.0.s8 %v5452
    %v5454 = vperm.slane %v1331, %v5453
    %v5456 = vunpack.c.l.s4 1987475062
    %v5457 = vunpack.c.0.s8 %v5456
    %v5458 = vperm.slane %v1331, %v5457
    %v5460 = vunpack.c.l.s4 269488144
    %v5461 = vunpack.c.0.s8 %v5460
    %v5462 = vperm.slane %v1334, %v5461
    %v5464 = vunpack.c.l.s4 842150450
    %v5465 = vunpack.c.0.s8 %v5464
    %v5466 = vperm.slane %v1334, %v5465
    %v5468 = vunpack.c.l.s4 1414812756
    %v5469 = vunpack.c.0.s8 %v5468
    %v5470 = vperm.slane %v1334, %v5469
    %v5472 = vunpack.c.l.s4 1987475062
    %v5473 = vunpack.c.0.s8 %v5472
    %v5474 = vperm.slane %v1334, %v5473
    %v5476 = vunpack.c.l.s4 269488144
    %v5477 = vunpack.c.0.s8 %v5476
    %v5478 = vperm.slane %v1337, %v5477
    %v5480 = vunpack.c.l.s4 842150450
    %v5481 = vunpack.c.0.s8 %v5480
    %v5482 = vperm.slane %v1337, %v5481
    %v5484 = vunpack.c.l.s4 1414812756
    %v5485 = vunpack.c.0.s8 %v5484
    %v5486 = vperm.slane %v1337, %v5485
    %v5488 = vunpack.c.l.s4 1987475062
    %v5489 = vunpack.c.0.s8 %v5488
    %v5490 = vperm.slane %v1337, %v5489
    %v5492 = vunpack.c.l.s4 269488144
    %v5493 = vunpack.c.0.s8 %v5492
    %v5494 = vperm.slane %v1340, %v5493
    %v5496 = vunpack.c.l.s4 842150450
    %v5497 = vunpack.c.0.s8 %v5496
    %v5498 = vperm.slane %v1340, %v5497
    %v5500 = vunpack.c.l.s4 1414812756
    %v5501 = vunpack.c.0.s8 %v5500
    %v5502 = vperm.slane %v1340, %v5501
    %v5504 = vunpack.c.l.s4 1987475062
    %v5505 = vunpack.c.0.s8 %v5504
    %v5506 = vperm.slane %v1340, %v5505
    %v5508 = vunpack.c.l.s4 269488144
    %v5509 = vunpack.c.0.s8 %v5508
    %v5510 = vperm.slane %v1343, %v5509
    %v5512 = vunpack.c.l.s4 842150450
    %v5513 = vunpack.c.0.s8 %v5512
    %v5514 = vperm.slane %v1343, %v5513
    %v5516 = vunpack.c.l.s4 1414812756
    %v5517 = vunpack.c.0.s8 %v5516
    %v5518 = vperm.slane %v1343, %v5517
    %v5520 = vunpack.c.l.s4 1987475062
    %v5521 = vunpack.c.0.s8 %v5520
    %v5522 = vperm.slane %v1343, %v5521
    %v5524 = vunpack.c.l.s4 269488144
    %v5525 = vunpack.c.0.s8 %v5524
    %v5526 = vperm.slane %v1346, %v5525
    %v5528 = vunpack.c.l.s4 842150450
    %v5529 = vunpack.c.0.s8 %v5528
    %v5530 = vperm.slane %v1346, %v5529
    %v5532 = vunpack.c.l.s4 1414812756
    %v5533 = vunpack.c.0.s8 %v5532
    %v5534 = vperm.slane %v1346, %v5533
    %v5536 = vunpack.c.l.s4 1987475062
    %v5537 = vunpack.c.0.s8 %v5536
    %v5538 = vperm.slane %v1346, %v5537
    %v5540 = vunpack.c.l.s4 269488144
    %v5541 = vunpack.c.0.s8 %v5540
    %v5542 = vperm.slane %v1349, %v5541
    %v5544 = vunpack.c.l.s4 842150450
    %v5545 = vunpack.c.0.s8 %v5544
    %v5546 = vperm.slane %v1349, %v5545
    %v5548 = vunpack.c.l.s4 1414812756
    %v5549 = vunpack.c.0.s8 %v5548
    %v5550 = vperm.slane %v1349, %v5549
    %v5552 = vunpack.c.l.s4 1987475062
    %v5553 = vunpack.c.0.s8 %v5552
    %v5554 = vperm.slane %v1349, %v5553
    %v5556 = vunpack.c.l.s4 269488144
    %v5557 = vunpack.c.0.s8 %v5556
    %v5558 = vperm.slane %v1352, %v5557
    %v5560 = vunpack.c.l.s4 842150450
    %v5561 = vunpack.c.0.s8 %v5560
    %v5562 = vperm.slane %v1352, %v5561
    %v5564 = vunpack.c.l.s4 1414812756
    %v5565 = vunpack.c.0.s8 %v5564
    %v5566 = vperm.slane %v1352, %v5565
    %v5568 = vunpack.c.l.s4 1987475062
    %v5569 = vunpack.c.0.s8 %v5568
    %v5570 = vperm.slane %v1352, %v5569
    %v5572 = vunpack.c.l.s4 269488144
    %v5573 = vunpack.c.0.s8 %v5572
    %v5574 = vperm.slane %v1355, %v5573
    %v5576 = vunpack.c.l.s4 842150450
    %v5577 = vunpack.c.0.s8 %v5576
    %v5578 = vperm.slane %v1355, %v5577
    %v5580 = vunpack.c.l.s4 1414812756
    %v5581 = vunpack.c.0.s8 %v5580
    %v5582 = vperm.slane %v1355, %v5581
    %v5584 = vunpack.c.l.s4 1987475062
    %v5585 = vunpack.c.0.s8 %v5584
    %v5586 = vperm.slane %v1355, %v5585
    %v5588 = vunpack.c.l.s4 269488144
    %v5589 = vunpack.c.0.s8 %v5588
    %v5590 = vperm.slane %v1358, %v5589
    %v5592 = vunpack.c.l.s4 842150450
    %v5593 = vunpack.c.0.s8 %v5592
    %v5594 = vperm.slane %v1358, %v5593
    %v5596 = vunpack.c.l.s4 1414812756
    %v5597 = vunpack.c.0.s8 %v5596
    %v5598 = vperm.slane %v1358, %v5597
    %v5600 = vunpack.c.l.s4 1987475062
    %v5601 = vunpack.c.0.s8 %v5600
    %v5602 = vperm.slane %v1358, %v5601
    %v5604 = vunpack.c.l.s4 269488144
    %v5605 = vunpack.c.0.s8 %v5604
    %v5606 = vperm.slane %v1361, %v5605
    %v5608 = vunpack.c.l.s4 842150450
    %v5609 = vunpack.c.0.s8 %v5608
    %v5610 = vperm.slane %v1361, %v5609
    %v5612 = vunpack.c.l.s4 1414812756
    %v5613 = vunpack.c.0.s8 %v5612
    %v5614 = vperm.slane %v1361, %v5613
    %v5616 = vunpack.c.l.s4 1987475062
    %v5617 = vunpack.c.0.s8 %v5616
    %v5618 = vperm.slane %v1361, %v5617
    %v5620 = vunpack.c.l.s4 269488144
    %v5621 = vunpack.c.0.s8 %v5620
    %v5622 = vperm.slane %v1364, %v5621
    %v5624 = vunpack.c.l.s4 842150450
    %v5625 = vunpack.c.0.s8 %v5624
    %v5626 = vperm.slane %v1364, %v5625
    %v5628 = vunpack.c.l.s4 1414812756
    %v5629 = vunpack.c.0.s8 %v5628
    %v5630 = vperm.slane %v1364, %v5629
    %v5632 = vunpack.c.l.s4 1987475062
    %v5633 = vunpack.c.0.s8 %v5632
    %v5634 = vperm.slane %v1364, %v5633
    %v5636 = vunpack.c.l.s4 269488144
    %v5637 = vunpack.c.0.s8 %v5636
    %v5638 = vperm.slane %v1367, %v5637
    %v5640 = vunpack.c.l.s4 842150450
    %v5641 = vunpack.c.0.s8 %v5640
    %v5642 = vperm.slane %v1367, %v5641
    %v5644 = vunpack.c.l.s4 1414812756
    %v5645 = vunpack.c.0.s8 %v5644
    %v5646 = vperm.slane %v1367, %v5645
    %v5648 = vunpack.c.l.s4 1987475062
    %v5649 = vunpack.c.0.s8 %v5648
    %v5650 = vperm.slane %v1367, %v5649
    %v5652 = vunpack.c.l.s4 269488144
    %v5653 = vunpack.c.0.s8 %v5652
    %v5654 = vperm.slane %v1370, %v5653
    %v5656 = vunpack.c.l.s4 842150450
    %v5657 = vunpack.c.0.s8 %v5656
    %v5658 = vperm.slane %v1370, %v5657
    %v5660 = vunpack.c.l.s4 1414812756
    %v5661 = vunpack.c.0.s8 %v5660
    %v5662 = vperm.slane %v1370, %v5661
    %v5664 = vunpack.c.l.s4 1987475062
    %v5665 = vunpack.c.0.s8 %v5664
    %v5666 = vperm.slane %v1370, %v5665
    %v5668 = vunpack.c.l.s4 269488144
    %v5669 = vunpack.c.0.s8 %v5668
    %v5670 = vperm.slane %v1373, %v5669
    %v5672 = vunpack.c.l.s4 842150450
    %v5673 = vunpack.c.0.s8 %v5672
    %v5674 = vperm.slane %v1373, %v5673
    %v5676 = vunpack.c.l.s4 1414812756
    %v5677 = vunpack.c.0.s8 %v5676
    %v5678 = vperm.slane %v1373, %v5677
    %v5680 = vunpack.c.l.s4 1987475062
    %v5681 = vunpack.c.0.s8 %v5680
    %v5682 = vperm.slane %v1373, %v5681
    %v5684 = vunpack.c.l.s4 269488144
    %v5685 = vunpack.c.0.s8 %v5684
    %v5686 = vperm.slane %v1376, %v5685
    %v5688 = vunpack.c.l.s4 842150450
    %v5689 = vunpack.c.0.s8 %v5688
    %v5690 = vperm.slane %v1376, %v5689
    %v5692 = vunpack.c.l.s4 1414812756
    %v5693 = vunpack.c.0.s8 %v5692
    %v5694 = vperm.slane %v1376, %v5693
    %v5696 = vunpack.c.l.s4 1987475062
    %v5697 = vunpack.c.0.s8 %v5696
    %v5698 = vperm.slane %v1376, %v5697
    %v5700 = vunpack.c.l.s4 269488144
    %v5701 = vunpack.c.0.s8 %v5700
    %v5702 = vperm.slane %v1379, %v5701
    %v5704 = vunpack.c.l.s4 842150450
    %v5705 = vunpack.c.0.s8 %v5704
    %v5706 = vperm.slane %v1379, %v5705
    %v5708 = vunpack.c.l.s4 1414812756
    %v5709 = vunpack.c.0.s8 %v5708
    %v5710 = vperm.slane %v1379, %v5709
    %v5712 = vunpack.c.l.s4 1987475062
    %v5713 = vunpack.c.0.s8 %v5712
    %v5714 = vperm.slane %v1379, %v5713
    %v5716 = vunpack.c.l.s4 269488144
    %v5717 = vunpack.c.0.s8 %v5716
    %v5718 = vperm.slane %v1382, %v5717
    %v5720 = vunpack.c.l.s4 842150450
    %v5721 = vunpack.c.0.s8 %v5720
    %v5722 = vperm.slane %v1382, %v5721
    %v5724 = vunpack.c.l.s4 1414812756
    %v5725 = vunpack.c.0.s8 %v5724
    %v5726 = vperm.slane %v1382, %v5725
    %v5728 = vunpack.c.l.s4 1987475062
    %v5729 = vunpack.c.0.s8 %v5728
    %v5730 = vperm.slane %v1382, %v5729
    %v5732 = vunpack.c.l.s4 269488144
    %v5733 = vunpack.c.0.s8 %v5732
    %v5734 = vperm.slane %v1385, %v5733
    %v5736 = vunpack.c.l.s4 842150450
    %v5737 = vunpack.c.0.s8 %v5736
    %v5738 = vperm.slane %v1385, %v5737
    %v5740 = vunpack.c.l.s4 1414812756
    %v5741 = vunpack.c.0.s8 %v5740
    %v5742 = vperm.slane %v1385, %v5741
    %v5744 = vunpack.c.l.s4 1987475062
    %v5745 = vunpack.c.0.s8 %v5744
    %v5746 = vperm.slane %v1385, %v5745
    %v5748 = vunpack.c.l.s4 269488144
    %v5749 = vunpack.c.0.s8 %v5748
    %v5750 = vperm.slane %v1388, %v5749
    %v5752 = vunpack.c.l.s4 842150450
    %v5753 = vunpack.c.0.s8 %v5752
    %v5754 = vperm.slane %v1388, %v5753
    %v5756 = vunpack.c.l.s4 1414812756
    %v5757 = vunpack.c.0.s8 %v5756
    %v5758 = vperm.slane %v1388, %v5757
    %v5760 = vunpack.c.l.s4 1987475062
    %v5761 = vunpack.c.0.s8 %v5760
    %v5762 = vperm.slane %v1388, %v5761
    %v5764 = vunpack.c.l.s4 269488144
    %v5765 = vunpack.c.0.s8 %v5764
    %v5766 = vperm.slane %v1391, %v5765
    %v5768 = vunpack.c.l.s4 842150450
    %v5769 = vunpack.c.0.s8 %v5768
    %v5770 = vperm.slane %v1391, %v5769
    %v5772 = vunpack.c.l.s4 1414812756
    %v5773 = vunpack.c.0.s8 %v5772
    %v5774 = vperm.slane %v1391, %v5773
    %v5776 = vunpack.c.l.s4 1987475062
    %v5777 = vunpack.c.0.s8 %v5776
    %v5778 = vperm.slane %v1391, %v5777
    %v5780 = vunpack.c.l.s4 269488144
    %v5781 = vunpack.c.0.s8 %v5780
    %v5782 = vperm.slane %v1394, %v5781
    %v5784 = vunpack.c.l.s4 842150450
    %v5785 = vunpack.c.0.s8 %v5784
    %v5786 = vperm.slane %v1394, %v5785
    %v5788 = vunpack.c.l.s4 1414812756
    %v5789 = vunpack.c.0.s8 %v5788
    %v5790 = vperm.slane %v1394, %v5789
    %v5792 = vunpack.c.l.s4 1987475062
    %v5793 = vunpack.c.0.s8 %v5792
    %v5794 = vperm.slane %v1394, %v5793
    %v5796 = vunpack.c.l.s4 269488144
    %v5797 = vunpack.c.0.s8 %v5796
    %v5798 = vperm.slane %v1397, %v5797
    %v5800 = vunpack.c.l.s4 842150450
    %v5801 = vunpack.c.0.s8 %v5800
    %v5802 = vperm.slane %v1397, %v5801
    %v5804 = vunpack.c.l.s4 1414812756
    %v5805 = vunpack.c.0.s8 %v5804
    %v5806 = vperm.slane %v1397, %v5805
    %v5808 = vunpack.c.l.s4 1987475062
    %v5809 = vunpack.c.0.s8 %v5808
    %v5810 = vperm.slane %v1397, %v5809
    %v5812 = vunpack.c.l.s4 269488144
    %v5813 = vunpack.c.0.s8 %v5812
    %v5814 = vperm.slane %v1400, %v5813
    %v5816 = vunpack.c.l.s4 842150450
    %v5817 = vunpack.c.0.s8 %v5816
    %v5818 = vperm.slane %v1400, %v5817
    %v5820 = vunpack.c.l.s4 1414812756
    %v5821 = vunpack.c.0.s8 %v5820
    %v5822 = vperm.slane %v1400, %v5821
    %v5824 = vunpack.c.l.s4 1987475062
    %v5825 = vunpack.c.0.s8 %v5824
    %v5826 = vperm.slane %v1400, %v5825
    %v5828 = vunpack.c.l.s4 269488144
    %v5829 = vunpack.c.0.s8 %v5828
    %v5830 = vperm.slane %v1403, %v5829
    %v5832 = vunpack.c.l.s4 842150450
    %v5833 = vunpack.c.0.s8 %v5832
    %v5834 = vperm.slane %v1403, %v5833
    %v5836 = vunpack.c.l.s4 1414812756
    %v5837 = vunpack.c.0.s8 %v5836
    %v5838 = vperm.slane %v1403, %v5837
    %v5840 = vunpack.c.l.s4 1987475062
    %v5841 = vunpack.c.0.s8 %v5840
    %v5842 = vperm.slane %v1403, %v5841
    %v5844 = vunpack.c.l.s4 269488144
    %v5845 = vunpack.c.0.s8 %v5844
    %v5846 = vperm.slane %v1406, %v5845
    %v5848 = vunpack.c.l.s4 842150450
    %v5849 = vunpack.c.0.s8 %v5848
    %v5850 = vperm.slane %v1406, %v5849
    %v5852 = vunpack.c.l.s4 1414812756
    %v5853 = vunpack.c.0.s8 %v5852
    %v5854 = vperm.slane %v1406, %v5853
    %v5856 = vunpack.c.l.s4 1987475062
    %v5857 = vunpack.c.0.s8 %v5856
    %v5858 = vperm.slane %v1406, %v5857
    %v5860 = vunpack.c.l.s4 269488144
    %v5861 = vunpack.c.0.s8 %v5860
    %v5862 = vperm.slane %v1409, %v5861
    %v5864 = vunpack.c.l.s4 842150450
    %v5865 = vunpack.c.0.s8 %v5864
    %v5866 = vperm.slane %v1409, %v5865
    %v5868 = vunpack.c.l.s4 1414812756
    %v5869 = vunpack.c.0.s8 %v5868
    %v5870 = vperm.slane %v1409, %v5869
    %v5872 = vunpack.c.l.s4 1987475062
    %v5873 = vunpack.c.0.s8 %v5872
    %v5874 = vperm.slane %v1409, %v5873
    %v5876 = vunpack.c.l.s4 269488144
    %v5877 = vunpack.c.0.s8 %v5876
    %v5878 = vperm.slane %v1412, %v5877
    %v5880 = vunpack.c.l.s4 842150450
    %v5881 = vunpack.c.0.s8 %v5880
    %v5882 = vperm.slane %v1412, %v5881
    %v5884 = vunpack.c.l.s4 1414812756
    %v5885 = vunpack.c.0.s8 %v5884
    %v5886 = vperm.slane %v1412, %v5885
    %v5888 = vunpack.c.l.s4 1987475062
    %v5889 = vunpack.c.0.s8 %v5888
    %v5890 = vperm.slane %v1412, %v5889
    %v5892 = vunpack.c.l.s4 269488144
    %v5893 = vunpack.c.0.s8 %v5892
    %v5894 = vperm.slane %v1415, %v5893
    %v5896 = vunpack.c.l.s4 842150450
    %v5897 = vunpack.c.0.s8 %v5896
    %v5898 = vperm.slane %v1415, %v5897
    %v5900 = vunpack.c.l.s4 1414812756
    %v5901 = vunpack.c.0.s8 %v5900
    %v5902 = vperm.slane %v1415, %v5901
    %v5904 = vunpack.c.l.s4 1987475062
    %v5905 = vunpack.c.0.s8 %v5904
    %v5906 = vperm.slane %v1415, %v5905
    %v5908 = vunpack.c.l.s4 269488144
    %v5909 = vunpack.c.0.s8 %v5908
    %v5910 = vperm.slane %v1418, %v5909
    %v5912 = vunpack.c.l.s4 842150450
    %v5913 = vunpack.c.0.s8 %v5912
    %v5914 = vperm.slane %v1418, %v5913
    %v5916 = vunpack.c.l.s4 1414812756
    %v5917 = vunpack.c.0.s8 %v5916
    %v5918 = vperm.slane %v1418, %v5917
    %v5920 = vunpack.c.l.s4 1987475062
    %v5921 = vunpack.c.0.s8 %v5920
    %v5922 = vperm.slane %v1418, %v5921
    %v5924 = vunpack.c.l.s4 269488144
    %v5925 = vunpack.c.0.s8 %v5924
    %v5926 = vperm.slane %v1421, %v5925
    %v5928 = vunpack.c.l.s4 842150450
    %v5929 = vunpack.c.0.s8 %v5928
    %v5930 = vperm.slane %v1421, %v5929
    %v5932 = vunpack.c.l.s4 1414812756
    %v5933 = vunpack.c.0.s8 %v5932
    %v5934 = vperm.slane %v1421, %v5933
    %v5936 = vunpack.c.l.s4 1987475062
    %v5937 = vunpack.c.0.s8 %v5936
    %v5938 = vperm.slane %v1421, %v5937
    %v5940 = vunpack.c.l.s4 269488144
    %v5941 = vunpack.c.0.s8 %v5940
    %v5942 = vperm.slane %v1424, %v5941
    %v5944 = vunpack.c.l.s4 842150450
    %v5945 = vunpack.c.0.s8 %v5944
    %v5946 = vperm.slane %v1424, %v5945
    %v5948 = vunpack.c.l.s4 1414812756
    %v5949 = vunpack.c.0.s8 %v5948
    %v5950 = vperm.slane %v1424, %v5949
    %v5952 = vunpack.c.l.s4 1987475062
    %v5953 = vunpack.c.0.s8 %v5952
    %v5954 = vperm.slane %v1424, %v5953
    %v5956 = vunpack.c.l.s4 269488144
    %v5957 = vunpack.c.0.s8 %v5956
    %v5958 = vperm.slane %v1427, %v5957
    %v5960 = vunpack.c.l.s4 842150450
    %v5961 = vunpack.c.0.s8 %v5960
    %v5962 = vperm.slane %v1427, %v5961
    %v5964 = vunpack.c.l.s4 1414812756
    %v5965 = vunpack.c.0.s8 %v5964
    %v5966 = vperm.slane %v1427, %v5965
    %v5968 = vunpack.c.l.s4 1987475062
    %v5969 = vunpack.c.0.s8 %v5968
    %v5970 = vperm.slane %v1427, %v5969
    %v5972 = vunpack.c.l.s4 269488144
    %v5973 = vunpack.c.0.s8 %v5972
    %v5974 = vperm.slane %v1430, %v5973
    %v5976 = vunpack.c.l.s4 842150450
    %v5977 = vunpack.c.0.s8 %v5976
    %v5978 = vperm.slane %v1430, %v5977
    %v5980 = vunpack.c.l.s4 1414812756
    %v5981 = vunpack.c.0.s8 %v5980
    %v5982 = vperm.slane %v1430, %v5981
    %v5984 = vunpack.c.l.s4 1987475062
    %v5985 = vunpack.c.0.s8 %v5984
    %v5986 = vperm.slane %v1430, %v5985
    %v5988 = vunpack.c.l.s4 269488144
    %v5989 = vunpack.c.0.s8 %v5988
    %v5990 = vperm.slane %v1433, %v5989
    %v5992 = vunpack.c.l.s4 842150450
    %v5993 = vunpack.c.0.s8 %v5992
    %v5994 = vperm.slane %v1433, %v5993
    %v5996 = vunpack.c.l.s4 1414812756
    %v5997 = vunpack.c.0.s8 %v5996
    %v5998 = vperm.slane %v1433, %v5997
    %v6000 = vunpack.c.l.s4 1987475062
    %v6001 = vunpack.c.0.s8 %v6000
    %v6002 = vperm.slane %v1433, %v6001
    %v6004 = vunpack.c.l.s4 269488144
    %v6005 = vunpack.c.0.s8 %v6004
    %v6006 = vperm.slane %v1436, %v6005
    %v6008 = vunpack.c.l.s4 842150450
    %v6009 = vunpack.c.0.s8 %v6008
    %v6010 = vperm.slane %v1436, %v6009
    %v6012 = vunpack.c.l.s4 1414812756
    %v6013 = vunpack.c.0.s8 %v6012
    %v6014 = vperm.slane %v1436, %v6013
    %v6016 = vunpack.c.l.s4 1987475062
    %v6017 = vunpack.c.0.s8 %v6016
    %v6018 = vperm.slane %v1436, %v6017
    %v6020 = vunpack.c.l.s4 269488144
    %v6021 = vunpack.c.0.s8 %v6020
    %v6022 = vperm.slane %v1439, %v6021
    %v6024 = vunpack.c.l.s4 842150450
    %v6025 = vunpack.c.0.s8 %v6024
    %v6026 = vperm.slane %v1439, %v6025
    %v6028 = vunpack.c.l.s4 1414812756
    %v6029 = vunpack.c.0.s8 %v6028
    %v6030 = vperm.slane %v1439, %v6029
    %v6032 = vunpack.c.l.s4 1987475062
    %v6033 = vunpack.c.0.s8 %v6032
    %v6034 = vperm.slane %v1439, %v6033
    %v6036 = vunpack.c.l.s4 269488144
    %v6037 = vunpack.c.0.s8 %v6036
    %v6038 = vperm.slane %v1442, %v6037
    %v6040 = vunpack.c.l.s4 842150450
    %v6041 = vunpack.c.0.s8 %v6040
    %v6042 = vperm.slane %v1442, %v6041
    %v6044 = vunpack.c.l.s4 1414812756
    %v6045 = vunpack.c.0.s8 %v6044
    %v6046 = vperm.slane %v1442, %v6045
    %v6048 = vunpack.c.l.s4 1987475062
    %v6049 = vunpack.c.0.s8 %v6048
    %v6050 = vperm.slane %v1442, %v6049
    %v6052 = vunpack.c.l.s4 269488144
    %v6053 = vunpack.c.0.s8 %v6052
    %v6054 = vperm.slane %v1445, %v6053
    %v6056 = vunpack.c.l.s4 842150450
    %v6057 = vunpack.c.0.s8 %v6056
    %v6058 = vperm.slane %v1445, %v6057
    %v6060 = vunpack.c.l.s4 1414812756
    %v6061 = vunpack.c.0.s8 %v6060
    %v6062 = vperm.slane %v1445, %v6061
    %v6064 = vunpack.c.l.s4 1987475062
    %v6065 = vunpack.c.0.s8 %v6064
    %v6066 = vperm.slane %v1445, %v6065
    %v6068 = vunpack.c.l.s4 269488144
    %v6069 = vunpack.c.0.s8 %v6068
    %v6070 = vperm.slane %v1448, %v6069
    %v6072 = vunpack.c.l.s4 842150450
    %v6073 = vunpack.c.0.s8 %v6072
    %v6074 = vperm.slane %v1448, %v6073
    %v6076 = vunpack.c.l.s4 1414812756
    %v6077 = vunpack.c.0.s8 %v6076
    %v6078 = vperm.slane %v1448, %v6077
    %v6080 = vunpack.c.l.s4 1987475062
    %v6081 = vunpack.c.0.s8 %v6080
    %v6082 = vperm.slane %v1448, %v6081
    %v6084 = vunpack.c.l.s4 269488144
    %v6085 = vunpack.c.0.s8 %v6084
    %v6086 = vperm.slane %v1451, %v6085
    %v6088 = vunpack.c.l.s4 842150450
    %v6089 = vunpack.c.0.s8 %v6088
    %v6090 = vperm.slane %v1451, %v6089
    %v6092 = vunpack.c.l.s4 1414812756
    %v6093 = vunpack.c.0.s8 %v6092
    %v6094 = vperm.slane %v1451, %v6093
    %v6096 = vunpack.c.l.s4 1987475062
    %v6097 = vunpack.c.0.s8 %v6096
    %v6098 = vperm.slane %v1451, %v6097
    %v6100 = vunpack.c.l.s4 269488144
    %v6101 = vunpack.c.0.s8 %v6100
    %v6102 = vperm.slane %v1454, %v6101
    %v6104 = vunpack.c.l.s4 842150450
    %v6105 = vunpack.c.0.s8 %v6104
    %v6106 = vperm.slane %v1454, %v6105
    %v6108 = vunpack.c.l.s4 1414812756
    %v6109 = vunpack.c.0.s8 %v6108
    %v6110 = vperm.slane %v1454, %v6109
    %v6112 = vunpack.c.l.s4 1987475062
    %v6113 = vunpack.c.0.s8 %v6112
    %v6114 = vperm.slane %v1454, %v6113
    %v6116 = vunpack.c.l.s4 269488144
    %v6117 = vunpack.c.0.s8 %v6116
    %v6118 = vperm.slane %v1457, %v6117
    %v6120 = vunpack.c.l.s4 842150450
    %v6121 = vunpack.c.0.s8 %v6120
    %v6122 = vperm.slane %v1457, %v6121
    %v6124 = vunpack.c.l.s4 1414812756
    %v6125 = vunpack.c.0.s8 %v6124
    %v6126 = vperm.slane %v1457, %v6125
    %v6128 = vunpack.c.l.s4 1987475062
    %v6129 = vunpack.c.0.s8 %v6128
    %v6130 = vperm.slane %v1457, %v6129
    %v6132 = vunpack.c.l.s4 269488144
    %v6133 = vunpack.c.0.s8 %v6132
    %v6134 = vperm.slane %v1460, %v6133
    %v6136 = vunpack.c.l.s4 842150450
    %v6137 = vunpack.c.0.s8 %v6136
    %v6138 = vperm.slane %v1460, %v6137
    %v6140 = vunpack.c.l.s4 1414812756
    %v6141 = vunpack.c.0.s8 %v6140
    %v6142 = vperm.slane %v1460, %v6141
    %v6144 = vunpack.c.l.s4 1987475062
    %v6145 = vunpack.c.0.s8 %v6144
    %v6146 = vperm.slane %v1460, %v6145
    %v6148 = vunpack.c.l.s4 269488144
    %v6149 = vunpack.c.0.s8 %v6148
    %v6150 = vperm.slane %v1463, %v6149
    %v6152 = vunpack.c.l.s4 842150450
    %v6153 = vunpack.c.0.s8 %v6152
    %v6154 = vperm.slane %v1463, %v6153
    %v6156 = vunpack.c.l.s4 1414812756
    %v6157 = vunpack.c.0.s8 %v6156
    %v6158 = vperm.slane %v1463, %v6157
    %v6160 = vunpack.c.l.s4 1987475062
    %v6161 = vunpack.c.0.s8 %v6160
    %v6162 = vperm.slane %v1463, %v6161
    %v6164 = vunpack.c.l.s4 269488144
    %v6165 = vunpack.c.0.s8 %v6164
    %v6166 = vperm.slane %v1466, %v6165
    %v6168 = vunpack.c.l.s4 842150450
    %v6169 = vunpack.c.0.s8 %v6168
    %v6170 = vperm.slane %v1466, %v6169
    %v6172 = vunpack.c.l.s4 1414812756
    %v6173 = vunpack.c.0.s8 %v6172
    %v6174 = vperm.slane %v1466, %v6173
    %v6176 = vunpack.c.l.s4 1987475062
    %v6177 = vunpack.c.0.s8 %v6176
    %v6178 = vperm.slane %v1466, %v6177
    %v6180 = vunpack.c.l.s4 269488144
    %v6181 = vunpack.c.0.s8 %v6180
    %v6182 = vperm.slane %v1469, %v6181
    %v6184 = vunpack.c.l.s4 842150450
    %v6185 = vunpack.c.0.s8 %v6184
    %v6186 = vperm.slane %v1469, %v6185
    %v6188 = vunpack.c.l.s4 1414812756
    %v6189 = vunpack.c.0.s8 %v6188
    %v6190 = vperm.slane %v1469, %v6189
    %v6192 = vunpack.c.l.s4 1987475062
    %v6193 = vunpack.c.0.s8 %v6192
    %v6194 = vperm.slane %v1469, %v6193
    %v6196 = vunpack.c.l.s4 269488144
    %v6197 = vunpack.c.0.s8 %v6196
    %v6198 = vperm.slane %v1472, %v6197
    %v6200 = vunpack.c.l.s4 842150450
    %v6201 = vunpack.c.0.s8 %v6200
    %v6202 = vperm.slane %v1472, %v6201
    %v6204 = vunpack.c.l.s4 1414812756
    %v6205 = vunpack.c.0.s8 %v6204
    %v6206 = vperm.slane %v1472, %v6205
    %v6208 = vunpack.c.l.s4 1987475062
    %v6209 = vunpack.c.0.s8 %v6208
    %v6210 = vperm.slane %v1472, %v6209
    %v6212 = vunpack.c.l.s4 269488144
    %v6213 = vunpack.c.0.s8 %v6212
    %v6214 = vperm.slane %v1475, %v6213
    %v6216 = vunpack.c.l.s4 842150450
    %v6217 = vunpack.c.0.s8 %v6216
    %v6218 = vperm.slane %v1475, %v6217
    %v6220 = vunpack.c.l.s4 1414812756
    %v6221 = vunpack.c.0.s8 %v6220
    %v6222 = vperm.slane %v1475, %v6221
    %v6224 = vunpack.c.l.s4 1987475062
    %v6225 = vunpack.c.0.s8 %v6224
    %v6226 = vperm.slane %v1475, %v6225
    %v6228 = vunpack.c.l.s4 269488144
    %v6229 = vunpack.c.0.s8 %v6228
    %v6230 = vperm.slane %v1478, %v6229
    %v6232 = vunpack.c.l.s4 842150450
    %v6233 = vunpack.c.0.s8 %v6232
    %v6234 = vperm.slane %v1478, %v6233
    %v6236 = vunpack.c.l.s4 1414812756
    %v6237 = vunpack.c.0.s8 %v6236
    %v6238 = vperm.slane %v1478, %v6237
    %v6240 = vunpack.c.l.s4 1987475062
    %v6241 = vunpack.c.0.s8 %v6240
    %v6242 = vperm.slane %v1478, %v6241
    %v6244 = vunpack.c.l.s4 269488144
    %v6245 = vunpack.c.0.s8 %v6244
    %v6246 = vperm.slane %v1481, %v6245
    %v6248 = vunpack.c.l.s4 842150450
    %v6249 = vunpack.c.0.s8 %v6248
    %v6250 = vperm.slane %v1481, %v6249
    %v6252 = vunpack.c.l.s4 1414812756
    %v6253 = vunpack.c.0.s8 %v6252
    %v6254 = vperm.slane %v1481, %v6253
    %v6256 = vunpack.c.l.s4 1987475062
    %v6257 = vunpack.c.0.s8 %v6256
    %v6258 = vperm.slane %v1481, %v6257
    %v6260 = vunpack.c.l.s4 269488144
    %v6261 = vunpack.c.0.s8 %v6260
    %v6262 = vperm.slane %v1484, %v6261
    %v6264 = vunpack.c.l.s4 842150450
    %v6265 = vunpack.c.0.s8 %v6264
    %v6266 = vperm.slane %v1484, %v6265
    %v6268 = vunpack.c.l.s4 1414812756
    %v6269 = vunpack.c.0.s8 %v6268
    %v6270 = vperm.slane %v1484, %v6269
    %v6272 = vunpack.c.l.s4 1987475062
    %v6273 = vunpack.c.0.s8 %v6272
    %v6274 = vperm.slane %v1484, %v6273
    %v6276 = vunpack.c.l.s4 269488144
    %v6277 = vunpack.c.0.s8 %v6276
    %v6278 = vperm.slane %v1487, %v6277
    %v6280 = vunpack.c.l.s4 842150450
    %v6281 = vunpack.c.0.s8 %v6280
    %v6282 = vperm.slane %v1487, %v6281
    %v6284 = vunpack.c.l.s4 1414812756
    %v6285 = vunpack.c.0.s8 %v6284
    %v6286 = vperm.slane %v1487, %v6285
    %v6288 = vunpack.c.l.s4 1987475062
    %v6289 = vunpack.c.0.s8 %v6288
    %v6290 = vperm.slane %v1487, %v6289
    %v6292 = vunpack.c.l.s4 269488144
    %v6293 = vunpack.c.0.s8 %v6292
    %v6294 = vperm.slane %v1490, %v6293
    %v6296 = vunpack.c.l.s4 842150450
    %v6297 = vunpack.c.0.s8 %v6296
    %v6298 = vperm.slane %v1490, %v6297
    %v6300 = vunpack.c.l.s4 1414812756
    %v6301 = vunpack.c.0.s8 %v6300
    %v6302 = vperm.slane %v1490, %v6301
    %v6304 = vunpack.c.l.s4 1987475062
    %v6305 = vunpack.c.0.s8 %v6304
    %v6306 = vperm.slane %v1490, %v6305
    %v6308 = vunpack.c.l.s4 269488144
    %v6309 = vunpack.c.0.s8 %v6308
    %v6310 = vperm.slane %v1493, %v6309
    %v6312 = vunpack.c.l.s4 842150450
    %v6313 = vunpack.c.0.s8 %v6312
    %v6314 = vperm.slane %v1493, %v6313
    %v6316 = vunpack.c.l.s4 1414812756
    %v6317 = vunpack.c.0.s8 %v6316
    %v6318 = vperm.slane %v1493, %v6317
    %v6320 = vunpack.c.l.s4 1987475062
    %v6321 = vunpack.c.0.s8 %v6320
    %v6322 = vperm.slane %v1493, %v6321
    %v6324 = vunpack.c.l.s4 269488144
    %v6325 = vunpack.c.0.s8 %v6324
    %v6326 = vperm.slane %v1496, %v6325
    %v6328 = vunpack.c.l.s4 842150450
    %v6329 = vunpack.c.0.s8 %v6328
    %v6330 = vperm.slane %v1496, %v6329
    %v6332 = vunpack.c.l.s4 1414812756
    %v6333 = vunpack.c.0.s8 %v6332
    %v6334 = vperm.slane %v1496, %v6333
    %v6336 = vunpack.c.l.s4 1987475062
    %v6337 = vunpack.c.0.s8 %v6336
    %v6338 = vperm.slane %v1496, %v6337
    %v6340 = vunpack.c.l.s4 269488144
    %v6341 = vunpack.c.0.s8 %v6340
    %v6342 = vperm.slane %v1499, %v6341
    %v6344 = vunpack.c.l.s4 842150450
    %v6345 = vunpack.c.0.s8 %v6344
    %v6346 = vperm.slane %v1499, %v6345
    %v6348 = vunpack.c.l.s4 1414812756
    %v6349 = vunpack.c.0.s8 %v6348
    %v6350 = vperm.slane %v1499, %v6349
    %v6352 = vunpack.c.l.s4 1987475062
    %v6353 = vunpack.c.0.s8 %v6352
    %v6354 = vperm.slane %v1499, %v6353
    %v6356 = vunpack.c.l.s4 269488144
    %v6357 = vunpack.c.0.s8 %v6356
    %v6358 = vperm.slane %v1502, %v6357
    %v6360 = vunpack.c.l.s4 842150450
    %v6361 = vunpack.c.0.s8 %v6360
    %v6362 = vperm.slane %v1502, %v6361
    %v6364 = vunpack.c.l.s4 1414812756
    %v6365 = vunpack.c.0.s8 %v6364
    %v6366 = vperm.slane %v1502, %v6365
    %v6368 = vunpack.c.l.s4 1987475062
    %v6369 = vunpack.c.0.s8 %v6368
    %v6370 = vperm.slane %v1502, %v6369
    %v6372 = vunpack.c.l.s4 269488144
    %v6373 = vunpack.c.0.s8 %v6372
    %v6374 = vperm.slane %v1505, %v6373
    %v6376 = vunpack.c.l.s4 842150450
    %v6377 = vunpack.c.0.s8 %v6376
    %v6378 = vperm.slane %v1505, %v6377
    %v6380 = vunpack.c.l.s4 1414812756
    %v6381 = vunpack.c.0.s8 %v6380
    %v6382 = vperm.slane %v1505, %v6381
    %v6384 = vunpack.c.l.s4 1987475062
    %v6385 = vunpack.c.0.s8 %v6384
    %v6386 = vperm.slane %v1505, %v6385
    %v6388 = vunpack.c.l.s4 269488144
    %v6389 = vunpack.c.0.s8 %v6388
    %v6390 = vperm.slane %v1508, %v6389
    %v6392 = vunpack.c.l.s4 842150450
    %v6393 = vunpack.c.0.s8 %v6392
    %v6394 = vperm.slane %v1508, %v6393
    %v6396 = vunpack.c.l.s4 1414812756
    %v6397 = vunpack.c.0.s8 %v6396
    %v6398 = vperm.slane %v1508, %v6397
    %v6400 = vunpack.c.l.s4 1987475062
    %v6401 = vunpack.c.0.s8 %v6400
    %v6402 = vperm.slane %v1508, %v6401
    %v6404 = vunpack.c.l.s4 269488144
    %v6405 = vunpack.c.0.s8 %v6404
    %v6406 = vperm.slane %v1511, %v6405
    %v6408 = vunpack.c.l.s4 842150450
    %v6409 = vunpack.c.0.s8 %v6408
    %v6410 = vperm.slane %v1511, %v6409
    %v6412 = vunpack.c.l.s4 1414812756
    %v6413 = vunpack.c.0.s8 %v6412
    %v6414 = vperm.slane %v1511, %v6413
    %v6416 = vunpack.c.l.s4 1987475062
    %v6417 = vunpack.c.0.s8 %v6416
    %v6418 = vperm.slane %v1511, %v6417
    %v6420 = vunpack.c.l.s4 269488144
    %v6421 = vunpack.c.0.s8 %v6420
    %v6422 = vperm.slane %v1514, %v6421
    %v6424 = vunpack.c.l.s4 842150450
    %v6425 = vunpack.c.0.s8 %v6424
    %v6426 = vperm.slane %v1514, %v6425
    %v6428 = vunpack.c.l.s4 1414812756
    %v6429 = vunpack.c.0.s8 %v6428
    %v6430 = vperm.slane %v1514, %v6429
    %v6432 = vunpack.c.l.s4 1987475062
    %v6433 = vunpack.c.0.s8 %v6432
    %v6434 = vperm.slane %v1514, %v6433
    %v6436 = vunpack.c.l.s4 269488144
    %v6437 = vunpack.c.0.s8 %v6436
    %v6438 = vperm.slane %v1517, %v6437
    %v6440 = vunpack.c.l.s4 842150450
    %v6441 = vunpack.c.0.s8 %v6440
    %v6442 = vperm.slane %v1517, %v6441
    %v6444 = vunpack.c.l.s4 1414812756
    %v6445 = vunpack.c.0.s8 %v6444
    %v6446 = vperm.slane %v1517, %v6445
    %v6448 = vunpack.c.l.s4 1987475062
    %v6449 = vunpack.c.0.s8 %v6448
    %v6450 = vperm.slane %v1517, %v6449
    %v6452 = vunpack.c.l.s4 269488144
    %v6453 = vunpack.c.0.s8 %v6452
    %v6454 = vperm.slane %v1520, %v6453
    %v6456 = vunpack.c.l.s4 842150450
    %v6457 = vunpack.c.0.s8 %v6456
    %v6458 = vperm.slane %v1520, %v6457
    %v6460 = vunpack.c.l.s4 1414812756
    %v6461 = vunpack.c.0.s8 %v6460
    %v6462 = vperm.slane %v1520, %v6461
    %v6464 = vunpack.c.l.s4 1987475062
    %v6465 = vunpack.c.0.s8 %v6464
    %v6466 = vperm.slane %v1520, %v6465
    %v6468 = vunpack.c.l.s4 269488144
    %v6469 = vunpack.c.0.s8 %v6468
    %v6470 = vperm.slane %v1523, %v6469
    %v6472 = vunpack.c.l.s4 842150450
    %v6473 = vunpack.c.0.s8 %v6472
    %v6474 = vperm.slane %v1523, %v6473
    %v6476 = vunpack.c.l.s4 1414812756
    %v6477 = vunpack.c.0.s8 %v6476
    %v6478 = vperm.slane %v1523, %v6477
    %v6480 = vunpack.c.l.s4 1987475062
    %v6481 = vunpack.c.0.s8 %v6480
    %v6482 = vperm.slane %v1523, %v6481
    %v6484 = vunpack.c.l.s4 269488144
    %v6485 = vunpack.c.0.s8 %v6484
    %v6486 = vperm.slane %v1526, %v6485
    %v6488 = vunpack.c.l.s4 842150450
    %v6489 = vunpack.c.0.s8 %v6488
    %v6490 = vperm.slane %v1526, %v6489
    %v6492 = vunpack.c.l.s4 1414812756
    %v6493 = vunpack.c.0.s8 %v6492
    %v6494 = vperm.slane %v1526, %v6493
    %v6496 = vunpack.c.l.s4 1987475062
    %v6497 = vunpack.c.0.s8 %v6496
    %v6498 = vperm.slane %v1526, %v6497
    %v6500 = vunpack.c.l.s4 269488144
    %v6501 = vunpack.c.0.s8 %v6500
    %v6502 = vperm.slane %v1529, %v6501
    %v6504 = vunpack.c.l.s4 842150450
    %v6505 = vunpack.c.0.s8 %v6504
    %v6506 = vperm.slane %v1529, %v6505
    %v6508 = vunpack.c.l.s4 1414812756
    %v6509 = vunpack.c.0.s8 %v6508
    %v6510 = vperm.slane %v1529, %v6509
    %v6512 = vunpack.c.l.s4 1987475062
    %v6513 = vunpack.c.0.s8 %v6512
    %v6514 = vperm.slane %v1529, %v6513
    %v6516 = vunpack.c.l.s4 269488144
    %v6517 = vunpack.c.0.s8 %v6516
    %v6518 = vperm.slane %v1532, %v6517
    %v6520 = vunpack.c.l.s4 842150450
    %v6521 = vunpack.c.0.s8 %v6520
    %v6522 = vperm.slane %v1532, %v6521
    %v6524 = vunpack.c.l.s4 1414812756
    %v6525 = vunpack.c.0.s8 %v6524
    %v6526 = vperm.slane %v1532, %v6525
    %v6528 = vunpack.c.l.s4 1987475062
    %v6529 = vunpack.c.0.s8 %v6528
    %v6530 = vperm.slane %v1532, %v6529
    %v6532 = vunpack.c.l.s4 269488144
    %v6533 = vunpack.c.0.s8 %v6532
    %v6534 = vperm.slane %v1535, %v6533
    %v6536 = vunpack.c.l.s4 842150450
    %v6537 = vunpack.c.0.s8 %v6536
    %v6538 = vperm.slane %v1535, %v6537
    %v6540 = vunpack.c.l.s4 1414812756
    %v6541 = vunpack.c.0.s8 %v6540
    %v6542 = vperm.slane %v1535, %v6541
    %v6544 = vunpack.c.l.s4 1987475062
    %v6545 = vunpack.c.0.s8 %v6544
    %v6546 = vperm.slane %v1535, %v6545
    %v6548 = vunpack.c.l.s4 269488144
    %v6549 = vunpack.c.0.s8 %v6548
    %v6550 = vperm.slane %v1538, %v6549
    %v6552 = vunpack.c.l.s4 842150450
    %v6553 = vunpack.c.0.s8 %v6552
    %v6554 = vperm.slane %v1538, %v6553
    %v6556 = vunpack.c.l.s4 1414812756
    %v6557 = vunpack.c.0.s8 %v6556
    %v6558 = vperm.slane %v1538, %v6557
    %v6560 = vunpack.c.l.s4 1987475062
    %v6561 = vunpack.c.0.s8 %v6560
    %v6562 = vperm.slane %v1538, %v6561
    %v6564 = vunpack.c.l.s4 269488144
    %v6565 = vunpack.c.0.s8 %v6564
    %v6566 = vperm.slane %v1541, %v6565
    %v6568 = vunpack.c.l.s4 842150450
    %v6569 = vunpack.c.0.s8 %v6568
    %v6570 = vperm.slane %v1541, %v6569
    %v6572 = vunpack.c.l.s4 1414812756
    %v6573 = vunpack.c.0.s8 %v6572
    %v6574 = vperm.slane %v1541, %v6573
    %v6576 = vunpack.c.l.s4 1987475062
    %v6577 = vunpack.c.0.s8 %v6576
    %v6578 = vperm.slane %v1541, %v6577
    %v6580 = vunpack.c.l.s4 269488144
    %v6581 = vunpack.c.0.s8 %v6580
    %v6582 = vperm.slane %v1544, %v6581
    %v6584 = vunpack.c.l.s4 842150450
    %v6585 = vunpack.c.0.s8 %v6584
    %v6586 = vperm.slane %v1544, %v6585
    %v6588 = vunpack.c.l.s4 1414812756
    %v6589 = vunpack.c.0.s8 %v6588
    %v6590 = vperm.slane %v1544, %v6589
    %v6592 = vunpack.c.l.s4 1987475062
    %v6593 = vunpack.c.0.s8 %v6592
    %v6594 = vperm.slane %v1544, %v6593
    %v6596 = vunpack.c.l.s4 269488144
    %v6597 = vunpack.c.0.s8 %v6596
    %v6598 = vperm.slane %v1547, %v6597
    %v6600 = vunpack.c.l.s4 842150450
    %v6601 = vunpack.c.0.s8 %v6600
    %v6602 = vperm.slane %v1547, %v6601
    %v6604 = vunpack.c.l.s4 1414812756
    %v6605 = vunpack.c.0.s8 %v6604
    %v6606 = vperm.slane %v1547, %v6605
    %v6608 = vunpack.c.l.s4 1987475062
    %v6609 = vunpack.c.0.s8 %v6608
    %v6610 = vperm.slane %v1547, %v6609
    %v6612 = vunpack.c.l.s4 269488144
    %v6613 = vunpack.c.0.s8 %v6612
    %v6614 = vperm.slane %v1550, %v6613
    %v6616 = vunpack.c.l.s4 842150450
    %v6617 = vunpack.c.0.s8 %v6616
    %v6618 = vperm.slane %v1550, %v6617
    %v6620 = vunpack.c.l.s4 1414812756
    %v6621 = vunpack.c.0.s8 %v6620
    %v6622 = vperm.slane %v1550, %v6621
    %v6624 = vunpack.c.l.s4 1987475062
    %v6625 = vunpack.c.0.s8 %v6624
    %v6626 = vperm.slane %v1550, %v6625
    %v6628 = vunpack.c.l.s4 269488144
    %v6629 = vunpack.c.0.s8 %v6628
    %v6630 = vperm.slane %v1553, %v6629
    %v6632 = vunpack.c.l.s4 842150450
    %v6633 = vunpack.c.0.s8 %v6632
    %v6634 = vperm.slane %v1553, %v6633
    %v6636 = vunpack.c.l.s4 1414812756
    %v6637 = vunpack.c.0.s8 %v6636
    %v6638 = vperm.slane %v1553, %v6637
    %v6640 = vunpack.c.l.s4 1987475062
    %v6641 = vunpack.c.0.s8 %v6640
    %v6642 = vperm.slane %v1553, %v6641
    %v6644 = vunpack.c.l.s4 269488144
    %v6645 = vunpack.c.0.s8 %v6644
    %v6646 = vperm.slane %v1556, %v6645
    %v6648 = vunpack.c.l.s4 842150450
    %v6649 = vunpack.c.0.s8 %v6648
    %v6650 = vperm.slane %v1556, %v6649
    %v6652 = vunpack.c.l.s4 1414812756
    %v6653 = vunpack.c.0.s8 %v6652
    %v6654 = vperm.slane %v1556, %v6653
    %v6656 = vunpack.c.l.s4 1987475062
    %v6657 = vunpack.c.0.s8 %v6656
    %v6658 = vperm.slane %v1556, %v6657
    %v6660 = vunpack.c.l.s4 269488144
    %v6661 = vunpack.c.0.s8 %v6660
    %v6662 = vperm.slane %v1559, %v6661
    %v6664 = vunpack.c.l.s4 842150450
    %v6665 = vunpack.c.0.s8 %v6664
    %v6666 = vperm.slane %v1559, %v6665
    %v6668 = vunpack.c.l.s4 1414812756
    %v6669 = vunpack.c.0.s8 %v6668
    %v6670 = vperm.slane %v1559, %v6669
    %v6672 = vunpack.c.l.s4 1987475062
    %v6673 = vunpack.c.0.s8 %v6672
    %v6674 = vperm.slane %v1559, %v6673
    %v6676 = vunpack.c.l.s4 269488144
    %v6677 = vunpack.c.0.s8 %v6676
    %v6678 = vperm.slane %v1562, %v6677
    %v6680 = vunpack.c.l.s4 842150450
    %v6681 = vunpack.c.0.s8 %v6680
    %v6682 = vperm.slane %v1562, %v6681
    %v6684 = vunpack.c.l.s4 1414812756
    %v6685 = vunpack.c.0.s8 %v6684
    %v6686 = vperm.slane %v1562, %v6685
    %v6688 = vunpack.c.l.s4 1987475062
    %v6689 = vunpack.c.0.s8 %v6688
    %v6690 = vperm.slane %v1562, %v6689
    %v6692 = vunpack.c.l.s4 269488144
    %v6693 = vunpack.c.0.s8 %v6692
    %v6694 = vperm.slane %v1565, %v6693
    %v6696 = vunpack.c.l.s4 842150450
    %v6697 = vunpack.c.0.s8 %v6696
    %v6698 = vperm.slane %v1565, %v6697
    %v6700 = vunpack.c.l.s4 1414812756
    %v6701 = vunpack.c.0.s8 %v6700
    %v6702 = vperm.slane %v1565, %v6701
    %v6704 = vunpack.c.l.s4 1987475062
    %v6705 = vunpack.c.0.s8 %v6704
    %v6706 = vperm.slane %v1565, %v6705
    %v6708 = vunpack.c.l.s4 269488144
    %v6709 = vunpack.c.0.s8 %v6708
    %v6710 = vperm.slane %v1568, %v6709
    %v6712 = vunpack.c.l.s4 842150450
    %v6713 = vunpack.c.0.s8 %v6712
    %v6714 = vperm.slane %v1568, %v6713
    %v6716 = vunpack.c.l.s4 1414812756
    %v6717 = vunpack.c.0.s8 %v6716
    %v6718 = vperm.slane %v1568, %v6717
    %v6720 = vunpack.c.l.s4 1987475062
    %v6721 = vunpack.c.0.s8 %v6720
    %v6722 = vperm.slane %v1568, %v6721
    %v6724 = vunpack.c.l.s4 269488144
    %v6725 = vunpack.c.0.s8 %v6724
    %v6726 = vperm.slane %v1571, %v6725
    %v6728 = vunpack.c.l.s4 842150450
    %v6729 = vunpack.c.0.s8 %v6728
    %v6730 = vperm.slane %v1571, %v6729
    %v6732 = vunpack.c.l.s4 1414812756
    %v6733 = vunpack.c.0.s8 %v6732
    %v6734 = vperm.slane %v1571, %v6733
    %v6736 = vunpack.c.l.s4 1987475062
    %v6737 = vunpack.c.0.s8 %v6736
    %v6738 = vperm.slane %v1571, %v6737
    %v6740 = vunpack.c.l.s4 269488144
    %v6741 = vunpack.c.0.s8 %v6740
    %v6742 = vperm.slane %v1574, %v6741
    %v6744 = vunpack.c.l.s4 842150450
    %v6745 = vunpack.c.0.s8 %v6744
    %v6746 = vperm.slane %v1574, %v6745
    %v6748 = vunpack.c.l.s4 1414812756
    %v6749 = vunpack.c.0.s8 %v6748
    %v6750 = vperm.slane %v1574, %v6749
    %v6752 = vunpack.c.l.s4 1987475062
    %v6753 = vunpack.c.0.s8 %v6752
    %v6754 = vperm.slane %v1574, %v6753
    %v6756 = vunpack.c.l.s4 269488144
    %v6757 = vunpack.c.0.s8 %v6756
    %v6758 = vperm.slane %v1577, %v6757
    %v6760 = vunpack.c.l.s4 842150450
    %v6761 = vunpack.c.0.s8 %v6760
    %v6762 = vperm.slane %v1577, %v6761
    %v6764 = vunpack.c.l.s4 1414812756
    %v6765 = vunpack.c.0.s8 %v6764
    %v6766 = vperm.slane %v1577, %v6765
    %v6768 = vunpack.c.l.s4 1987475062
    %v6769 = vunpack.c.0.s8 %v6768
    %v6770 = vperm.slane %v1577, %v6769
    %v6772 = vunpack.c.l.s4 269488144
    %v6773 = vunpack.c.0.s8 %v6772
    %v6774 = vperm.slane %v1580, %v6773
    %v6776 = vunpack.c.l.s4 842150450
    %v6777 = vunpack.c.0.s8 %v6776
    %v6778 = vperm.slane %v1580, %v6777
    %v6780 = vunpack.c.l.s4 1414812756
    %v6781 = vunpack.c.0.s8 %v6780
    %v6782 = vperm.slane %v1580, %v6781
    %v6784 = vunpack.c.l.s4 1987475062
    %v6785 = vunpack.c.0.s8 %v6784
    %v6786 = vperm.slane %v1580, %v6785
    %v6788 = vunpack.c.l.s4 269488144
    %v6789 = vunpack.c.0.s8 %v6788
    %v6790 = vperm.slane %v1583, %v6789
    %v6792 = vunpack.c.l.s4 842150450
    %v6793 = vunpack.c.0.s8 %v6792
    %v6794 = vperm.slane %v1583, %v6793
    %v6796 = vunpack.c.l.s4 1414812756
    %v6797 = vunpack.c.0.s8 %v6796
    %v6798 = vperm.slane %v1583, %v6797
    %v6800 = vunpack.c.l.s4 1987475062
    %v6801 = vunpack.c.0.s8 %v6800
    %v6802 = vperm.slane %v1583, %v6801
    %v6804 = vunpack.c.l.s4 269488144
    %v6805 = vunpack.c.0.s8 %v6804
    %v6806 = vperm.slane %v1586, %v6805
    %v6808 = vunpack.c.l.s4 842150450
    %v6809 = vunpack.c.0.s8 %v6808
    %v6810 = vperm.slane %v1586, %v6809
    %v6812 = vunpack.c.l.s4 1414812756
    %v6813 = vunpack.c.0.s8 %v6812
    %v6814 = vperm.slane %v1586, %v6813
    %v6816 = vunpack.c.l.s4 1987475062
    %v6817 = vunpack.c.0.s8 %v6816
    %v6818 = vperm.slane %v1586, %v6817
    %v6820 = vunpack.c.l.s4 269488144
    %v6821 = vunpack.c.0.s8 %v6820
    %v6822 = vperm.slane %v1589, %v6821
    %v6824 = vunpack.c.l.s4 842150450
    %v6825 = vunpack.c.0.s8 %v6824
    %v6826 = vperm.slane %v1589, %v6825
    %v6828 = vunpack.c.l.s4 1414812756
    %v6829 = vunpack.c.0.s8 %v6828
    %v6830 = vperm.slane %v1589, %v6829
    %v6832 = vunpack.c.l.s4 1987475062
    %v6833 = vunpack.c.0.s8 %v6832
    %v6834 = vperm.slane %v1589, %v6833
    %v6836 = vunpack.c.l.s4 269488144
    %v6837 = vunpack.c.0.s8 %v6836
    %v6838 = vperm.slane %v1592, %v6837
    %v6840 = vunpack.c.l.s4 842150450
    %v6841 = vunpack.c.0.s8 %v6840
    %v6842 = vperm.slane %v1592, %v6841
    %v6844 = vunpack.c.l.s4 1414812756
    %v6845 = vunpack.c.0.s8 %v6844
    %v6846 = vperm.slane %v1592, %v6845
    %v6848 = vunpack.c.l.s4 1987475062
    %v6849 = vunpack.c.0.s8 %v6848
    %v6850 = vperm.slane %v1592, %v6849
    %v6852 = vunpack.c.l.s4 269488144
    %v6853 = vunpack.c.0.s8 %v6852
    %v6854 = vperm.slane %v1595, %v6853
    %v6856 = vunpack.c.l.s4 842150450
    %v6857 = vunpack.c.0.s8 %v6856
    %v6858 = vperm.slane %v1595, %v6857
    %v6860 = vunpack.c.l.s4 1414812756
    %v6861 = vunpack.c.0.s8 %v6860
    %v6862 = vperm.slane %v1595, %v6861
    %v6864 = vunpack.c.l.s4 1987475062
    %v6865 = vunpack.c.0.s8 %v6864
    %v6866 = vperm.slane %v1595, %v6865
    %v6868 = vunpack.c.l.s4 269488144
    %v6869 = vunpack.c.0.s8 %v6868
    %v6870 = vperm.slane %v1598, %v6869
    %v6872 = vunpack.c.l.s4 842150450
    %v6873 = vunpack.c.0.s8 %v6872
    %v6874 = vperm.slane %v1598, %v6873
    %v6876 = vunpack.c.l.s4 1414812756
    %v6877 = vunpack.c.0.s8 %v6876
    %v6878 = vperm.slane %v1598, %v6877
    %v6880 = vunpack.c.l.s4 1987475062
    %v6881 = vunpack.c.0.s8 %v6880
    %v6882 = vperm.slane %v1598, %v6881
    %v6884 = vunpack.c.l.s4 269488144
    %v6885 = vunpack.c.0.s8 %v6884
    %v6886 = vperm.slane %v1601, %v6885
    %v6888 = vunpack.c.l.s4 842150450
    %v6889 = vunpack.c.0.s8 %v6888
    %v6890 = vperm.slane %v1601, %v6889
    %v6892 = vunpack.c.l.s4 1414812756
    %v6893 = vunpack.c.0.s8 %v6892
    %v6894 = vperm.slane %v1601, %v6893
    %v6896 = vunpack.c.l.s4 1987475062
    %v6897 = vunpack.c.0.s8 %v6896
    %v6898 = vperm.slane %v1601, %v6897
    %v6900 = vunpack.c.l.s4 269488144
    %v6901 = vunpack.c.0.s8 %v6900
    %v6902 = vperm.slane %v1604, %v6901
    %v6904 = vunpack.c.l.s4 842150450
    %v6905 = vunpack.c.0.s8 %v6904
    %v6906 = vperm.slane %v1604, %v6905
    %v6908 = vunpack.c.l.s4 1414812756
    %v6909 = vunpack.c.0.s8 %v6908
    %v6910 = vperm.slane %v1604, %v6909
    %v6912 = vunpack.c.l.s4 1987475062
    %v6913 = vunpack.c.0.s8 %v6912
    %v6914 = vperm.slane %v1604, %v6913
    %v6916 = vunpack.c.l.s4 269488144
    %v6917 = vunpack.c.0.s8 %v6916
    %v6918 = vperm.slane %v1607, %v6917
    %v6920 = vunpack.c.l.s4 842150450
    %v6921 = vunpack.c.0.s8 %v6920
    %v6922 = vperm.slane %v1607, %v6921
    %v6924 = vunpack.c.l.s4 1414812756
    %v6925 = vunpack.c.0.s8 %v6924
    %v6926 = vperm.slane %v1607, %v6925
    %v6928 = vunpack.c.l.s4 1987475062
    %v6929 = vunpack.c.0.s8 %v6928
    %v6930 = vperm.slane %v1607, %v6929
    %v6932 = vunpack.c.l.s4 269488144
    %v6933 = vunpack.c.0.s8 %v6932
    %v6934 = vperm.slane %v1610, %v6933
    %v6936 = vunpack.c.l.s4 842150450
    %v6937 = vunpack.c.0.s8 %v6936
    %v6938 = vperm.slane %v1610, %v6937
    %v6940 = vunpack.c.l.s4 1414812756
    %v6941 = vunpack.c.0.s8 %v6940
    %v6942 = vperm.slane %v1610, %v6941
    %v6944 = vunpack.c.l.s4 1987475062
    %v6945 = vunpack.c.0.s8 %v6944
    %v6946 = vperm.slane %v1610, %v6945
    %v6948 = vunpack.c.l.s4 269488144
    %v6949 = vunpack.c.0.s8 %v6948
    %v6950 = vperm.slane %v1613, %v6949
    %v6952 = vunpack.c.l.s4 842150450
    %v6953 = vunpack.c.0.s8 %v6952
    %v6954 = vperm.slane %v1613, %v6953
    %v6956 = vunpack.c.l.s4 1414812756
    %v6957 = vunpack.c.0.s8 %v6956
    %v6958 = vperm.slane %v1613, %v6957
    %v6960 = vunpack.c.l.s4 1987475062
    %v6961 = vunpack.c.0.s8 %v6960
    %v6962 = vperm.slane %v1613, %v6961
    %v6964 = vunpack.c.l.s4 269488144
    %v6965 = vunpack.c.0.s8 %v6964
    %v6966 = vperm.slane %v1616, %v6965
    %v6968 = vunpack.c.l.s4 842150450
    %v6969 = vunpack.c.0.s8 %v6968
    %v6970 = vperm.slane %v1616, %v6969
    %v6972 = vunpack.c.l.s4 1414812756
    %v6973 = vunpack.c.0.s8 %v6972
    %v6974 = vperm.slane %v1616, %v6973
    %v6976 = vunpack.c.l.s4 1987475062
    %v6977 = vunpack.c.0.s8 %v6976
    %v6978 = vperm.slane %v1616, %v6977
    %v6980 = vunpack.c.l.s4 269488144
    %v6981 = vunpack.c.0.s8 %v6980
    %v6982 = vperm.slane %v1619, %v6981
    %v6984 = vunpack.c.l.s4 842150450
    %v6985 = vunpack.c.0.s8 %v6984
    %v6986 = vperm.slane %v1619, %v6985
    %v6988 = vunpack.c.l.s4 1414812756
    %v6989 = vunpack.c.0.s8 %v6988
    %v6990 = vperm.slane %v1619, %v6989
    %v6992 = vunpack.c.l.s4 1987475062
    %v6993 = vunpack.c.0.s8 %v6992
    %v6994 = vperm.slane %v1619, %v6993
    %v6996 = vunpack.c.l.s4 269488144
    %v6997 = vunpack.c.0.s8 %v6996
    %v6998 = vperm.slane %v1622, %v6997
    %v7000 = vunpack.c.l.s4 842150450
    %v7001 = vunpack.c.0.s8 %v7000
    %v7002 = vperm.slane %v1622, %v7001
    %v7004 = vunpack.c.l.s4 1414812756
    %v7005 = vunpack.c.0.s8 %v7004
    %v7006 = vperm.slane %v1622, %v7005
    %v7008 = vunpack.c.l.s4 1987475062
    %v7009 = vunpack.c.0.s8 %v7008
    %v7010 = vperm.slane %v1622, %v7009
    %v7012 = vunpack.c.l.s4 269488144
    %v7013 = vunpack.c.0.s8 %v7012
    %v7014 = vperm.slane %v1625, %v7013
    %v7016 = vunpack.c.l.s4 842150450
    %v7017 = vunpack.c.0.s8 %v7016
    %v7018 = vperm.slane %v1625, %v7017
    %v7020 = vunpack.c.l.s4 1414812756
    %v7021 = vunpack.c.0.s8 %v7020
    %v7022 = vperm.slane %v1625, %v7021
    %v7024 = vunpack.c.l.s4 1987475062
    %v7025 = vunpack.c.0.s8 %v7024
    %v7026 = vperm.slane %v1625, %v7025
    %v7028 = vunpack.c.l.s4 269488144
    %v7029 = vunpack.c.0.s8 %v7028
    %v7030 = vperm.slane %v1628, %v7029
    %v7032 = vunpack.c.l.s4 842150450
    %v7033 = vunpack.c.0.s8 %v7032
    %v7034 = vperm.slane %v1628, %v7033
    %v7036 = vunpack.c.l.s4 1414812756
    %v7037 = vunpack.c.0.s8 %v7036
    %v7038 = vperm.slane %v1628, %v7037
    %v7040 = vunpack.c.l.s4 1987475062
    %v7041 = vunpack.c.0.s8 %v7040
    %v7042 = vperm.slane %v1628, %v7041
    %v7044 = vunpack.c.l.s4 269488144
    %v7045 = vunpack.c.0.s8 %v7044
    %v7046 = vperm.slane %v1631, %v7045
    %v7048 = vunpack.c.l.s4 842150450
    %v7049 = vunpack.c.0.s8 %v7048
    %v7050 = vperm.slane %v1631, %v7049
    %v7052 = vunpack.c.l.s4 1414812756
    %v7053 = vunpack.c.0.s8 %v7052
    %v7054 = vperm.slane %v1631, %v7053
    %v7056 = vunpack.c.l.s4 1987475062
    %v7057 = vunpack.c.0.s8 %v7056
    %v7058 = vperm.slane %v1631, %v7057
    %v7060 = vunpack.c.l.s4 269488144
    %v7061 = vunpack.c.0.s8 %v7060
    %v7062 = vperm.slane %v1634, %v7061
    %v7064 = vunpack.c.l.s4 842150450
    %v7065 = vunpack.c.0.s8 %v7064
    %v7066 = vperm.slane %v1634, %v7065
    %v7068 = vunpack.c.l.s4 1414812756
    %v7069 = vunpack.c.0.s8 %v7068
    %v7070 = vperm.slane %v1634, %v7069
    %v7072 = vunpack.c.l.s4 1987475062
    %v7073 = vunpack.c.0.s8 %v7072
    %v7074 = vperm.slane %v1634, %v7073
    %7075 = vst [vmem:[#allocation1] ss:$4 sm:$0xff] %v1958
    %s7076 = scalar_lea.vmem [#allocation1], 1
    %7077 = vst [vmem:[%s7076] ss:$4 sm:$0xff] %v1962
    %s7078 = scalar_lea.vmem [#allocation1], 2
    %7079 = vst [vmem:[%s7078] ss:$4 sm:$0xff] %v1966
    %s7080 = scalar_lea.vmem [#allocation1], 3
    %7081 = vst [vmem:[%s7080] ss:$4 sm:$0xff] %v1970
    %s7082 = scalar_lea.vmem [#allocation1], 32
    %7083 = vst [vmem:[%s7082] ss:$4 sm:$0xff] %v1974
    %s7084 = scalar_lea.vmem [#allocation1], 33
    %7085 = vst [vmem:[%s7084] ss:$4 sm:$0xff] %v1978
    %s7086 = scalar_lea.vmem [#allocation1], 34
    %7087 = vst [vmem:[%s7086] ss:$4 sm:$0xff] %v1982
    %s7088 = scalar_lea.vmem [#allocation1], 35
    %7089 = vst [vmem:[%s7088] ss:$4 sm:$0xff] %v1986
    %v7090 = vld.sshfl [vmem:[#allocation1] sm:$0xff pattern:$0x73625140]
    %v7091 = vld.sshfl [vmem:[#allocation1 + $0x20] sm:$0xff pattern:$0x73625140]
    %7092 = vst [vmem:[#allocation1] ss:$4 sm:$0xff] %v1990
    %7093 = vst [vmem:[%s7076] ss:$4 sm:$0xff] %v1994
    %7094 = vst [vmem:[%s7078] ss:$4 sm:$0xff] %v1998
    %7095 = vst [vmem:[%s7080] ss:$4 sm:$0xff] %v2002
    %7096 = vst [vmem:[%s7082] ss:$4 sm:$0xff] %v2006
    %7097 = vst [vmem:[%s7084] ss:$4 sm:$0xff] %v2010
    %7098 = vst [vmem:[%s7086] ss:$4 sm:$0xff] %v2014
    %7099 = vst [vmem:[%s7088] ss:$4 sm:$0xff] %v2018
    %v7100 = vld.sshfl [vmem:[#allocation1] sm:$0xff pattern:$0x73625140]
    %v7101 = vld.sshfl [vmem:[#allocation1 + $0x20] sm:$0xff pattern:$0x73625140]
    %7102 = vst [vmem:[#allocation1] ss:$4 sm:$0xff] %v2022
    %7103 = vst [vmem:[%s7076] ss:$4 sm:$0xff] %v2026
    %7104 = vst [vmem:[%s7078] ss:$4 sm:$0xff] %v2030
    %7105 = vst [vmem:[%s7080] ss:$4 sm:$0xff] %v2034
    %7106 = vst [vmem:[%s7082] ss:$4 sm:$0xff] %v2038
    %7107 = vst [vmem:[%s7084] ss:$4 sm:$0xff] %v2042
    %7108 = vst [vmem:[%s7086] ss:$4 sm:$0xff] %v2046
    %7109 = vst [vmem:[%s7088] ss:$4 sm:$0xff] %v2050
    %v7110 = vld.sshfl [vmem:[#allocation1] sm:$0xff pattern:$0x73625140]
    %v7111 = vld.sshfl [vmem:[#allocation1 + $0x20] sm:$0xff pattern:$0x73625140]
    %7112 = vst [vmem:[#allocation1] ss:$4 sm:$0xff] %v2054
    %7113 = vst [vmem:[%s7076] ss:$4 sm:$0xff] %v2058
    %7114 = vst [vmem:[%s7078] ss:$4 sm:$0xff] %v2062
    %7115 = vst [vmem:[%s7080] ss:$4 sm:$0xff] %v2066
    %7116 = vst [vmem:[%s7082] ss:$4 sm:$0xff] %v2070
    %7117 = vst [vmem:[%s7084] ss:$4 sm:$0xff] %v2074
    %7118 = vst [vmem:[%s7086] ss:$4 sm:$0xff] %v2078
    %7119 = vst [vmem:[%s7088] ss:$4 sm:$0xff] %v2082
    %v7120 = vld.sshfl [vmem:[#allocation1] sm:$0xff pattern:$0x73625140]
    %v7121 = vld.sshfl [vmem:[#allocation1 + $0x20] sm:$0xff pattern:$0x73625140]
    %7122 = vst [vmem:[#allocation1] ss:$4 sm:$0xff] %v2086
    %7123 = vst [vmem:[%s7076] ss:$4 sm:$0xff] %v2090
    %7124 = vst [vmem:[%s7078] ss:$4 sm:$0xff] %v2094
    %7125 = vst [vmem:[%s7080] ss:$4 sm:$0xff] %v2098
    %7126 = vst [vmem:[%s7082] ss:$4 sm:$0xff] %v2102
    %7127 = vst [vmem:[%s7084] ss:$4 sm:$0xff] %v2106
    %7128 = vst [vmem:[%s7086] ss:$4 sm:$0xff] %v2110
    %7129 = vst [vmem:[%s7088] ss:$4 sm:$0xff] %v2114
    %v7130 = vld.sshfl [vmem:[#allocation1] sm:$0xff pattern:$0x73625140]
    %v7131 = vld.sshfl [vmem:[#allocation1 + $0x20] sm:$0xff pattern:$0x73625140]
    %7132 = vst [vmem:[#allocation1] ss:$4 sm:$0xff] %v2118
    %7133 = vst [vmem:[%s7076] ss:$4 sm:$0xff] %v2122
    %7134 = vst [vmem:[%s7078] ss:$4 sm:$0xff] %v2126
    %7135 = vst [vmem:[%s7080] ss:$4 sm:$0xff] %v2130
    %7136 = vst [vmem:[%s7082] ss:$4 sm:$0xff] %v2134
    %7137 = vst [vmem:[%s7084] ss:$4 sm:$0xff] %v2138
    %7138 = vst [vmem:[%s7086] ss:$4 sm:$0xff] %v2142
    %7139 = vst [vmem:[%s7088] ss:$4 sm:$0xff] %v2146
    %v7140 = vld.sshfl [vmem:[#allocation1] sm:$0xff pattern:$0x73625140]
    %v7141 = vld.sshfl [vmem:[#allocation1 + $0x20] sm:$0xff pattern:$0x73625140]
    %7142 = vst [vmem:[#allocation1] ss:$4 sm:$0xff] %v2150
    %7143 = vst [vmem:[%s7076] ss:$4 sm:$0xff] %v2154
    %7144 = vst [vmem:[%s7078] ss:$4 sm:$0xff] %v2158
    %7145 = vst [vmem:[%s7080] ss:$4 sm:$0xff] %v2162
    %7146 = vst [vmem:[%s7082] ss:$4 sm:$0xff] %v2166
    %7147 = vst [vmem:[%s7084] ss:$4 sm:$0xff] %v2170
    %7148 = vst [vmem:[%s7086] ss:$4 sm:$0xff] %v2174
    %7149 = vst [vmem:[%s7088] ss:$4 sm:$0xff] %v2178
    %v7150 = vld.sshfl [vmem:[#allocation1] sm:$0xff pattern:$0x73625140]
    %v7151 = vld.sshfl [vmem:[#allocation1 + $0x20] sm:$0xff pattern:$0x73625140]
    %7152 = vst [vmem:[#allocation1] ss:$4 sm:$0xff] %v2182
    %7153 = vst [vmem:[%s7076] ss:$4 sm:$0xff] %v2186
    %7154 = vst [vmem:[%s7078] ss:$4 sm:$0xff] %v2190
    %7155 = vst [vmem:[%s7080] ss:$4 sm:$0xff] %v2194
    %7156 = vst [vmem:[%s7082] ss:$4 sm:$0xff] %v2198
    %7157 = vst [vmem:[%s7084] ss:$4 sm:$0xff] %v2202
    %7158 = vst [vmem:[%s7086] ss:$4 sm:$0xff] %v2206
    %7159 = vst [vmem:[%s7088] ss:$4 sm:$0xff] %v2210
    %v7160 = vld.sshfl [vmem:[#allocation1] sm:$0xff pattern:$0x73625140]
    %v7161 = vld.sshfl [vmem:[#allocation1 + $0x20] sm:$0xff pattern:$0x73625140]
    %7162 = vst [vmem:[#allocation1] ss:$4 sm:$0xff] %v2214
    %7163 = vst [vmem:[%s7076] ss:$4 sm:$0xff] %v2218
    %7164 = vst [vmem:[%s7078] ss:$4 sm:$0xff] %v2222
    %7165 = vst [vmem:[%s7080] ss:$4 sm:$0xff] %v2226
    %7166 = vst [vmem:[%s7082] ss:$4 sm:$0xff] %v2230
    %7167 = vst [vmem:[%s7084] ss:$4 sm:$0xff] %v2234
    %7168 = vst [vmem:[%s7086] ss:$4 sm:$0xff] %v2238
    %7169 = vst [vmem:[%s7088] ss:$4 sm:$0xff] %v2242
    %v7170 = vld.sshfl [vmem:[#allocation1] sm:$0xff pattern:$0x73625140]
    %v7171 = vld.sshfl [vmem:[#allocation1 + $0x20] sm:$0xff pattern:$0x73625140]
    %7172 = vst [vmem:[#allocation1] ss:$4 sm:$0xff] %v2246
    %7173 = vst [vmem:[%s7076] ss:$4 sm:$0xff] %v2250
    %7174 = vst [vmem:[%s7078] ss:$4 sm:$0xff] %v2254
    %7175 = vst [vmem:[%s7080] ss:$4 sm:$0xff] %v2258
    %7176 = vst [vmem:[%s7082] ss:$4 sm:$0xff] %v2262
    %7177 = vst [vmem:[%s7084] ss:$4 sm:$0xff] %v2266
    %7178 = vst [vmem:[%s7086] ss:$4 sm:$0xff] %v2270
    %7179 = vst [vmem:[%s7088] ss:$4 sm:$0xff] %v2274
    %v7180 = vld.sshfl [vmem:[#allocation1] sm:$0xff pattern:$0x73625140]
    %v7181 = vld.sshfl [vmem:[#allocation1 + $0x20] sm:$0xff pattern:$0x73625140]
    %7182 = vst [vmem:[#allocation1] ss:$4 sm:$0xff] %v2278
    %7183 = vst [vmem:[%s7076] ss:$4 sm:$0xff] %v2282
    %7184 = vst [vmem:[%s7078] ss:$4 sm:$0xff] %v2286
    %7185 = vst [vmem:[%s7080] ss:$4 sm:$0xff] %v2290
    %7186 = vst [vmem:[%s7082] ss:$4 sm:$0xff] %v2294
    %7187 = vst [vmem:[%s7084] ss:$4 sm:$0xff] %v2298
    %7188 = vst [vmem:[%s7086] ss:$4 sm:$0xff] %v2302
    %7189 = vst [vmem:[%s7088] ss:$4 sm:$0xff] %v2306
    %v7190 = vld.sshfl [vmem:[#allocation1] sm:$0xff pattern:$0x73625140]
    %v7191 = vld.sshfl [vmem:[#allocation1 + $0x20] sm:$0xff pattern:$0x73625140]
    %7192 = vst [vmem:[#allocation1] ss:$4 sm:$0xff] %v2310
    %7193 = vst [vmem:[%s7076] ss:$4 sm:$0xff] %v2314
    %7194 = vst [vmem:[%s7078] ss:$4 sm:$0xff] %v2318
    %7195 = vst [vmem:[%s7080] ss:$4 sm:$0xff] %v2322
    %7196 = vst [vmem:[%s7082] ss:$4 sm:$0xff] %v2326
    %7197 = vst [vmem:[%s7084] ss:$4 sm:$0xff] %v2330
    %7198 = vst [vmem:[%s7086] ss:$4 sm:$0xff] %v2334
    %7199 = vst [vmem:[%s7088] ss:$4 sm:$0xff] %v2338
    %v7200 = vld.sshfl [vmem:[#allocation1] sm:$0xff pattern:$0x73625140]
    %v7201 = vld.sshfl [vmem:[#allocation1 + $0x20] sm:$0xff pattern:$0x73625140]
    %7202 = vst [vmem:[#allocation1] ss:$4 sm:$0xff] %v2342
    %7203 = vst [vmem:[%s7076] ss:$4 sm:$0xff] %v2346
    %7204 = vst [vmem:[%s7078] ss:$4 sm:$0xff] %v2350
    %7205 = vst [vmem:[%s7080] ss:$4 sm:$0xff] %v2354
    %7206 = vst [vmem:[%s7082] ss:$4 sm:$0xff] %v2358
    %7207 = vst [vmem:[%s7084] ss:$4 sm:$0xff] %v2362
    %7208 = vst [vmem:[%s7086] ss:$4 sm:$0xff] %v2366
    %7209 = vst [vmem:[%s7088] ss:$4 sm:$0xff] %v2370
    %v7210 = vld.sshfl [vmem:[#allocation1] sm:$0xff pattern:$0x73625140]
    %v7211 = vld.sshfl [vmem:[#allocation1 + $0x20] sm:$0xff pattern:$0x73625140]
    %7212 = vst [vmem:[#allocation1] ss:$4 sm:$0xff] %v2374
    %7213 = vst [vmem:[%s7076] ss:$4 sm:$0xff] %v2378
    %7214 = vst [vmem:[%s7078] ss:$4 sm:$0xff] %v2382
    %7215 = vst [vmem:[%s7080] ss:$4 sm:$0xff] %v2386
    %7216 = vst [vmem:[%s7082] ss:$4 sm:$0xff] %v2390
    %7217 = vst [vmem:[%s7084] ss:$4 sm:$0xff] %v2394
    %7218 = vst [vmem:[%s7086] ss:$4 sm:$0xff] %v2398
    %7219 = vst [vmem:[%s7088] ss:$4 sm:$0xff] %v2402
    %v7220 = vld.sshfl [vmem:[#allocation1] sm:$0xff pattern:$0x73625140]
    %v7221 = vld.sshfl [vmem:[#allocation1 + $0x20] sm:$0xff pattern:$0x73625140]
    %7222 = vst [vmem:[#allocation1] ss:$4 sm:$0xff] %v2406
    %7223 = vst [vmem:[%s7076] ss:$4 sm:$0xff] %v2410
    %7224 = vst [vmem:[%s7078] ss:$4 sm:$0xff] %v2414
    %7225 = vst [vmem:[%s7080] ss:$4 sm:$0xff] %v2418
    %7226 = vst [vmem:[%s7082] ss:$4 sm:$0xff] %v2422
    %7227 = vst [vmem:[%s7084] ss:$4 sm:$0xff] %v2426
    %7228 = vst [vmem:[%s7086] ss:$4 sm:$0xff] %v2430
    %7229 = vst [vmem:[%s7088] ss:$4 sm:$0xff] %v2434
    %v7230 = vld.sshfl [vmem:[#allocation1] sm:$0xff pattern:$0x73625140]
    %v7231 = vld.sshfl [vmem:[#allocation1 + $0x20] sm:$0xff pattern:$0x73625140]
    %7232 = vst [vmem:[#allocation1] ss:$4 sm:$0xff] %v2438
    %7233 = vst [vmem:[%s7076] ss:$4 sm:$0xff] %v2442
    %7234 = vst [vmem:[%s7078] ss:$4 sm:$0xff] %v2446
    %7235 = vst [vmem:[%s7080] ss:$4 sm:$0xff] %v2450
    %7236 = vst [vmem:[%s7082] ss:$4 sm:$0xff] %v2454
    %7237 = vst [vmem:[%s7084] ss:$4 sm:$0xff] %v2458
    %7238 = vst [vmem:[%s7086] ss:$4 sm:$0xff] %v2462
    %7239 = vst [vmem:[%s7088] ss:$4 sm:$0xff] %v2466
    %v7240 = vld.sshfl [vmem:[#allocation1] sm:$0xff pattern:$0x73625140]
    %v7241 = vld.sshfl [vmem:[#allocation1 + $0x20] sm:$0xff pattern:$0x73625140]
    %7242 = vst [vmem:[#allocation1] ss:$4 sm:$0xff] %v2470
    %7243 = vst [vmem:[%s7076] ss:$4 sm:$0xff] %v2474
    %7244 = vst [vmem:[%s7078] ss:$4 sm:$0xff] %v2478
    %7245 = vst [vmem:[%s7080] ss:$4 sm:$0xff] %v2482
    %7246 = vst [vmem:[%s7082] ss:$4 sm:$0xff] %v2486
    %7247 = vst [vmem:[%s7084] ss:$4 sm:$0xff] %v2490
    %7248 = vst [vmem:[%s7086] ss:$4 sm:$0xff] %v2494
    %7249 = vst [vmem:[%s7088] ss:$4 sm:$0xff] %v2498
    %v7250 = vld.sshfl [vmem:[#allocation1] sm:$0xff pattern:$0x73625140]
    %v7251 = vld.sshfl [vmem:[#allocation1 + $0x20] sm:$0xff pattern:$0x73625140]
    %7252 = vst [vmem:[#allocation1] ss:$4 sm:$0xff] %v2502
    %7253 = vst [vmem:[%s7076] ss:$4 sm:$0xff] %v2506
    %7254 = vst [vmem:[%s7078] ss:$4 sm:$0xff] %v2510
    %7255 = vst [vmem:[%s7080] ss:$4 sm:$0xff] %v2514
    %7256 = vst [vmem:[%s7082] ss:$4 sm:$0xff] %v2518
    %7257 = vst [vmem:[%s7084] ss:$4 sm:$0xff] %v2522
    %7258 = vst [vmem:[%s7086] ss:$4 sm:$0xff] %v2526
    %7259 = vst [vmem:[%s7088] ss:$4 sm:$0xff] %v2530
    %v7260 = vld.sshfl [vmem:[#allocation1] sm:$0xff pattern:$0x73625140]
    %v7261 = vld.sshfl [vmem:[#allocation1 + $0x20] sm:$0xff pattern:$0x73625140]
    %7262 = vst [vmem:[#allocation1] ss:$4 sm:$0xff] %v2534
    %7263 = vst [vmem:[%s7076] ss:$4 sm:$0xff] %v2538
    %7264 = vst [vmem:[%s7078] ss:$4 sm:$0xff] %v2542
    %7265 = vst [vmem:[%s7080] ss:$4 sm:$0xff] %v2546
    %7266 = vst [vmem:[%s7082] ss:$4 sm:$0xff] %v2550
    %7267 = vst [vmem:[%s7084] ss:$4 sm:$0xff] %v2554
    %7268 = vst [vmem:[%s7086] ss:$4 sm:$0xff] %v2558
    %7269 = vst [vmem:[%s7088] ss:$4 sm:$0xff] %v2562
    %v7270 = vld.sshfl [vmem:[#allocation1] sm:$0xff pattern:$0x73625140]
    %v7271 = vld.sshfl [vmem:[#allocation1 + $0x20] sm:$0xff pattern:$0x73625140]
    %7272 = vst [vmem:[#allocation1] ss:$4 sm:$0xff] %v2566
    %7273 = vst [vmem:[%s7076] ss:$4 sm:$0xff] %v2570
    %7274 = vst [vmem:[%s7078] ss:$4 sm:$0xff] %v2574
    %7275 = vst [vmem:[%s7080] ss:$4 sm:$0xff] %v2578
    %7276 = vst [vmem:[%s7082] ss:$4 sm:$0xff] %v2582
    %7277 = vst [vmem:[%s7084] ss:$4 sm:$0xff] %v2586
    %7278 = vst [vmem:[%s7086] ss:$4 sm:$0xff] %v2590
    %7279 = vst [vmem:[%s7088] ss:$4 sm:$0xff] %v2594
    %v7280 = vld.sshfl [vmem:[#allocation1] sm:$0xff pattern:$0x73625140]
    %v7281 = vld.sshfl [vmem:[#allocation1 + $0x20] sm:$0xff pattern:$0x73625140]
    %7282 = vst [vmem:[#allocation1] ss:$4 sm:$0xff] %v2598
    %7283 = vst [vmem:[%s7076] ss:$4 sm:$0xff] %v2602
    %7284 = vst [vmem:[%s7078] ss:$4 sm:$0xff] %v2606
    %7285 = vst [vmem:[%s7080] ss:$4 sm:$0xff] %v2610
    %7286 = vst [vmem:[%s7082] ss:$4 sm:$0xff] %v2614
    %7287 = vst [vmem:[%s7084] ss:$4 sm:$0xff] %v2618
    %7288 = vst [vmem:[%s7086] ss:$4 sm:$0xff] %v2622
    %7289 = vst [vmem:[%s7088] ss:$4 sm:$0xff] %v2626
    %v7290 = vld.sshfl [vmem:[#allocation1] sm:$0xff pattern:$0x73625140]
    %v7291 = vld.sshfl [vmem:[#allocation1 + $0x20] sm:$0xff pattern:$0x73625140]
    %7292 = vst [vmem:[#allocation1] ss:$4 sm:$0xff] %v2630
    %7293 = vst [vmem:[%s7076] ss:$4 sm:$0xff] %v2634
    %7294 = vst [vmem:[%s7078] ss:$4 sm:$0xff] %v2638
    %7295 = vst [vmem:[%s7080] ss:$4 sm:$0xff] %v2642
    %7296 = vst [vmem:[%s7082] ss:$4 sm:$0xff] %v2646
    %7297 = vst [vmem:[%s7084] ss:$4 sm:$0xff] %v2650
    %7298 = vst [vmem:[%s7086] ss:$4 sm:$0xff] %v2654
    %7299 = vst [vmem:[%s7088] ss:$4 sm:$0xff] %v2658
    %v7300 = vld.sshfl [vmem:[#allocation1] sm:$0xff pattern:$0x73625140]
    %v7301 = vld.sshfl [vmem:[#allocation1 + $0x20] sm:$0xff pattern:$0x73625140]
    %7302 = vst [vmem:[#allocation1] ss:$4 sm:$0xff] %v2662
    %7303 = vst [vmem:[%s7076] ss:$4 sm:$0xff] %v2666
    %7304 = vst [vmem:[%s7078] ss:$4 sm:$0xff] %v2670
    %7305 = vst [vmem:[%s7080] ss:$4 sm:$0xff] %v2674
    %7306 = vst [vmem:[%s7082] ss:$4 sm:$0xff] %v2678
    %7307 = vst [vmem:[%s7084] ss:$4 sm:$0xff] %v2682
    %7308 = vst [vmem:[%s7086] ss:$4 sm:$0xff] %v2686
    %7309 = vst [vmem:[%s7088] ss:$4 sm:$0xff] %v2690
    %v7310 = vld.sshfl [vmem:[#allocation1] sm:$0xff pattern:$0x73625140]
    %v7311 = vld.sshfl [vmem:[#allocation1 + $0x20] sm:$0xff pattern:$0x73625140]
    %7312 = vst [vmem:[#allocation1] ss:$4 sm:$0xff] %v2694
    %7313 = vst [vmem:[%s7076] ss:$4 sm:$0xff] %v2698
    %7314 = vst [vmem:[%s7078] ss:$4 sm:$0xff] %v2702
    %7315 = vst [vmem:[%s7080] ss:$4 sm:$0xff] %v2706
    %7316 = vst [vmem:[%s7082] ss:$4 sm:$0xff] %v2710
    %7317 = vst [vmem:[%s7084] ss:$4 sm:$0xff] %v2714
    %7318 = vst [vmem:[%s7086] ss:$4 sm:$0xff] %v2718
    %7319 = vst [vmem:[%s7088] ss:$4 sm:$0xff] %v2722
    %v7320 = vld.sshfl [vmem:[#allocation1] sm:$0xff pattern:$0x73625140]
    %v7321 = vld.sshfl [vmem:[#allocation1 + $0x20] sm:$0xff pattern:$0x73625140]
    %7322 = vst [vmem:[#allocation1] ss:$4 sm:$0xff] %v2726
    %7323 = vst [vmem:[%s7076] ss:$4 sm:$0xff] %v2730
    %7324 = vst [vmem:[%s7078] ss:$4 sm:$0xff] %v2734
    %7325 = vst [vmem:[%s7080] ss:$4 sm:$0xff] %v2738
    %7326 = vst [vmem:[%s7082] ss:$4 sm:$0xff] %v2742
    %7327 = vst [vmem:[%s7084] ss:$4 sm:$0xff] %v2746
    %7328 = vst [vmem:[%s7086] ss:$4 sm:$0xff] %v2750
    %7329 = vst [vmem:[%s7088] ss:$4 sm:$0xff] %v2754
    %v7330 = vld.sshfl [vmem:[#allocation1] sm:$0xff pattern:$0x73625140]
    %v7331 = vld.sshfl [vmem:[#allocation1 + $0x20] sm:$0xff pattern:$0x73625140]
    %7332 = vst [vmem:[#allocation1] ss:$4 sm:$0xff] %v2758
    %7333 = vst [vmem:[%s7076] ss:$4 sm:$0xff] %v2762
    %7334 = vst [vmem:[%s7078] ss:$4 sm:$0xff] %v2766
    %7335 = vst [vmem:[%s7080] ss:$4 sm:$0xff] %v2770
    %7336 = vst [vmem:[%s7082] ss:$4 sm:$0xff] %v2774
    %7337 = vst [vmem:[%s7084] ss:$4 sm:$0xff] %v2778
    %7338 = vst [vmem:[%s7086] ss:$4 sm:$0xff] %v2782
    %7339 = vst [vmem:[%s7088] ss:$4 sm:$0xff] %v2786
    %v7340 = vld.sshfl [vmem:[#allocation1] sm:$0xff pattern:$0x73625140]
    %v7341 = vld.sshfl [vmem:[#allocation1 + $0x20] sm:$0xff pattern:$0x73625140]
    %7342 = vst [vmem:[#allocation1] ss:$4 sm:$0xff] %v2790
    %7343 = vst [vmem:[%s7076] ss:$4 sm:$0xff] %v2794
    %7344 = vst [vmem:[%s7078] ss:$4 sm:$0xff] %v2798
    %7345 = vst [vmem:[%s7080] ss:$4 sm:$0xff] %v2802
    %7346 = vst [vmem:[%s7082] ss:$4 sm:$0xff] %v2806
    %7347 = vst [vmem:[%s7084] ss:$4 sm:$0xff] %v2810
    %7348 = vst [vmem:[%s7086] ss:$4 sm:$0xff] %v2814
    %7349 = vst [vmem:[%s7088] ss:$4 sm:$0xff] %v2818
    %v7350 = vld.sshfl [vmem:[#allocation1] sm:$0xff pattern:$0x73625140]
    %v7351 = vld.sshfl [vmem:[#allocation1 + $0x20] sm:$0xff pattern:$0x73625140]
    %7352 = vst [vmem:[#allocation1] ss:$4 sm:$0xff] %v2822
    %7353 = vst [vmem:[%s7076] ss:$4 sm:$0xff] %v2826
    %7354 = vst [vmem:[%s7078] ss:$4 sm:$0xff] %v2830
    %7355 = vst [vmem:[%s7080] ss:$4 sm:$0xff] %v2834
    %7356 = vst [vmem:[%s7082] ss:$4 sm:$0xff] %v2838
    %7357 = vst [vmem:[%s7084] ss:$4 sm:$0xff] %v2842
    %7358 = vst [vmem:[%s7086] ss:$4 sm:$0xff] %v2846
    %7359 = vst [vmem:[%s7088] ss:$4 sm:$0xff] %v2850
    %v7360 = vld.sshfl [vmem:[#allocation1] sm:$0xff pattern:$0x73625140]
    %v7361 = vld.sshfl [vmem:[#allocation1 + $0x20] sm:$0xff pattern:$0x73625140]
    %7362 = vst [vmem:[#allocation1] ss:$4 sm:$0xff] %v2854
    %7363 = vst [vmem:[%s7076] ss:$4 sm:$0xff] %v2858
    %7364 = vst [vmem:[%s7078] ss:$4 sm:$0xff] %v2862
    %7365 = vst [vmem:[%s7080] ss:$4 sm:$0xff] %v2866
    %7366 = vst [vmem:[%s7082] ss:$4 sm:$0xff] %v2870
    %7367 = vst [vmem:[%s7084] ss:$4 sm:$0xff] %v2874
    %7368 = vst [vmem:[%s7086] ss:$4 sm:$0xff] %v2878
    %7369 = vst [vmem:[%s7088] ss:$4 sm:$0xff] %v2882
    %v7370 = vld.sshfl [vmem:[#allocation1] sm:$0xff pattern:$0x73625140]
    %v7371 = vld.sshfl [vmem:[#allocation1 + $0x20] sm:$0xff pattern:$0x73625140]
    %7372 = vst [vmem:[#allocation1] ss:$4 sm:$0xff] %v2886
    %7373 = vst [vmem:[%s7076] ss:$4 sm:$0xff] %v2890
    %7374 = vst [vmem:[%s7078] ss:$4 sm:$0xff] %v2894
    %7375 = vst [vmem:[%s7080] ss:$4 sm:$0xff] %v2898
    %7376 = vst [vmem:[%s7082] ss:$4 sm:$0xff] %v2902
    %7377 = vst [vmem:[%s7084] ss:$4 sm:$0xff] %v2906
    %7378 = vst [vmem:[%s7086] ss:$4 sm:$0xff] %v2910
    %7379 = vst [vmem:[%s7088] ss:$4 sm:$0xff] %v2914
    %v7380 = vld.sshfl [vmem:[#allocation1] sm:$0xff pattern:$0x73625140]
    %v7381 = vld.sshfl [vmem:[#allocation1 + $0x20] sm:$0xff pattern:$0x73625140]
    %7382 = vst [vmem:[#allocation1] ss:$4 sm:$0xff] %v2918
    %7383 = vst [vmem:[%s7076] ss:$4 sm:$0xff] %v2922
    %7384 = vst [vmem:[%s7078] ss:$4 sm:$0xff] %v2926
    %7385 = vst [vmem:[%s7080] ss:$4 sm:$0xff] %v2930
    %7386 = vst [vmem:[%s7082] ss:$4 sm:$0xff] %v2934
    %7387 = vst [vmem:[%s7084] ss:$4 sm:$0xff] %v2938
    %7388 = vst [vmem:[%s7086] ss:$4 sm:$0xff] %v2942
    %7389 = vst [vmem:[%s7088] ss:$4 sm:$0xff] %v2946
    %v7390 = vld.sshfl [vmem:[#allocation1] sm:$0xff pattern:$0x73625140]
    %v7391 = vld.sshfl [vmem:[#allocation1 + $0x20] sm:$0xff pattern:$0x73625140]
    %7392 = vst [vmem:[#allocation1] ss:$4 sm:$0xff] %v2950
    %7393 = vst [vmem:[%s7076] ss:$4 sm:$0xff] %v2954
    %7394 = vst [vmem:[%s7078] ss:$4 sm:$0xff] %v2958
    %7395 = vst [vmem:[%s7080] ss:$4 sm:$0xff] %v2962
    %7396 = vst [vmem:[%s7082] ss:$4 sm:$0xff] %v2966
    %7397 = vst [vmem:[%s7084] ss:$4 sm:$0xff] %v2970
    %7398 = vst [vmem:[%s7086] ss:$4 sm:$0xff] %v2974
    %7399 = vst [vmem:[%s7088] ss:$4 sm:$0xff] %v2978
    %v7400 = vld.sshfl [vmem:[#allocation1] sm:$0xff pattern:$0x73625140]
    %v7401 = vld.sshfl [vmem:[#allocation1 + $0x20] sm:$0xff pattern:$0x73625140]
    %7402 = vst [vmem:[#allocation1] ss:$4 sm:$0xff] %v2982
    %7403 = vst [vmem:[%s7076] ss:$4 sm:$0xff] %v2986
    %7404 = vst [vmem:[%s7078] ss:$4 sm:$0xff] %v2990
    %7405 = vst [vmem:[%s7080] ss:$4 sm:$0xff] %v2994
    %7406 = vst [vmem:[%s7082] ss:$4 sm:$0xff] %v2998
    %7407 = vst [vmem:[%s7084] ss:$4 sm:$0xff] %v3002
    %7408 = vst [vmem:[%s7086] ss:$4 sm:$0xff] %v3006
    %7409 = vst [vmem:[%s7088] ss:$4 sm:$0xff] %v3010
    %v7410 = vld.sshfl [vmem:[#allocation1] sm:$0xff pattern:$0x73625140]
    %v7411 = vld.sshfl [vmem:[#allocation1 + $0x20] sm:$0xff pattern:$0x73625140]
    %7412 = vst [vmem:[#allocation1] ss:$4 sm:$0xff] %v3014
    %7413 = vst [vmem:[%s7076] ss:$4 sm:$0xff] %v3018
    %7414 = vst [vmem:[%s7078] ss:$4 sm:$0xff] %v3022
    %7415 = vst [vmem:[%s7080] ss:$4 sm:$0xff] %v3026
    %7416 = vst [vmem:[%s7082] ss:$4 sm:$0xff] %v3030
    %7417 = vst [vmem:[%s7084] ss:$4 sm:$0xff] %v3034
    %7418 = vst [vmem:[%s7086] ss:$4 sm:$0xff] %v3038
    %7419 = vst [vmem:[%s7088] ss:$4 sm:$0xff] %v3042
    %v7420 = vld.sshfl [vmem:[#allocation1] sm:$0xff pattern:$0x73625140]
    %v7421 = vld.sshfl [vmem:[#allocation1 + $0x20] sm:$0xff pattern:$0x73625140]
    %7422 = vst [vmem:[#allocation1] ss:$4 sm:$0xff] %v3046
    %7423 = vst [vmem:[%s7076] ss:$4 sm:$0xff] %v3050
    %7424 = vst [vmem:[%s7078] ss:$4 sm:$0xff] %v3054
    %7425 = vst [vmem:[%s7080] ss:$4 sm:$0xff] %v3058
    %7426 = vst [vmem:[%s7082] ss:$4 sm:$0xff] %v3062
    %7427 = vst [vmem:[%s7084] ss:$4 sm:$0xff] %v3066
    %7428 = vst [vmem:[%s7086] ss:$4 sm:$0xff] %v3070
    %7429 = vst [vmem:[%s7088] ss:$4 sm:$0xff] %v3074
    %v7430 = vld.sshfl [vmem:[#allocation1] sm:$0xff pattern:$0x73625140]
    %v7431 = vld.sshfl [vmem:[#allocation1 + $0x20] sm:$0xff pattern:$0x73625140]
    %7432 = vst [vmem:[#allocation1] ss:$4 sm:$0xff] %v3078
    %7433 = vst [vmem:[%s7076] ss:$4 sm:$0xff] %v3082
    %7434 = vst [vmem:[%s7078] ss:$4 sm:$0xff] %v3086
    %7435 = vst [vmem:[%s7080] ss:$4 sm:$0xff] %v3090
    %7436 = vst [vmem:[%s7082] ss:$4 sm:$0xff] %v3094
    %7437 = vst [vmem:[%s7084] ss:$4 sm:$0xff] %v3098
    %7438 = vst [vmem:[%s7086] ss:$4 sm:$0xff] %v3102
    %7439 = vst [vmem:[%s7088] ss:$4 sm:$0xff] %v3106
    %v7440 = vld.sshfl [vmem:[#allocation1] sm:$0xff pattern:$0x73625140]
    %v7441 = vld.sshfl [vmem:[#allocation1 + $0x20] sm:$0xff pattern:$0x73625140]
    %7442 = vst [vmem:[#allocation1] ss:$4 sm:$0xff] %v3110
    %7443 = vst [vmem:[%s7076] ss:$4 sm:$0xff] %v3114
    %7444 = vst [vmem:[%s7078] ss:$4 sm:$0xff] %v3118
    %7445 = vst [vmem:[%s7080] ss:$4 sm:$0xff] %v3122
    %7446 = vst [vmem:[%s7082] ss:$4 sm:$0xff] %v3126
    %7447 = vst [vmem:[%s7084] ss:$4 sm:$0xff] %v3130
    %7448 = vst [vmem:[%s7086] ss:$4 sm:$0xff] %v3134
    %7449 = vst [vmem:[%s7088] ss:$4 sm:$0xff] %v3138
    %v7450 = vld.sshfl [vmem:[#allocation1] sm:$0xff pattern:$0x73625140]
    %v7451 = vld.sshfl [vmem:[#allocation1 + $0x20] sm:$0xff pattern:$0x73625140]
    %7452 = vst [vmem:[#allocation1] ss:$4 sm:$0xff] %v3142
    %7453 = vst [vmem:[%s7076] ss:$4 sm:$0xff] %v3146
    %7454 = vst [vmem:[%s7078] ss:$4 sm:$0xff] %v3150
    %7455 = vst [vmem:[%s7080] ss:$4 sm:$0xff] %v3154
    %7456 = vst [vmem:[%s7082] ss:$4 sm:$0xff] %v3158
    %7457 = vst [vmem:[%s7084] ss:$4 sm:$0xff] %v3162
    %7458 = vst [vmem:[%s7086] ss:$4 sm:$0xff] %v3166
    %7459 = vst [vmem:[%s7088] ss:$4 sm:$0xff] %v3170
    %v7460 = vld.sshfl [vmem:[#allocation1] sm:$0xff pattern:$0x73625140]
    %v7461 = vld.sshfl [vmem:[#allocation1 + $0x20] sm:$0xff pattern:$0x73625140]
    %7462 = vst [vmem:[#allocation1] ss:$4 sm:$0xff] %v3174
    %7463 = vst [vmem:[%s7076] ss:$4 sm:$0xff] %v3178
    %7464 = vst [vmem:[%s7078] ss:$4 sm:$0xff] %v3182
    %7465 = vst [vmem:[%s7080] ss:$4 sm:$0xff] %v3186
    %7466 = vst [vmem:[%s7082] ss:$4 sm:$0xff] %v3190
    %7467 = vst [vmem:[%s7084] ss:$4 sm:$0xff] %v3194
    %7468 = vst [vmem:[%s7086] ss:$4 sm:$0xff] %v3198
    %7469 = vst [vmem:[%s7088] ss:$4 sm:$0xff] %v3202
    %v7470 = vld.sshfl [vmem:[#allocation1] sm:$0xff pattern:$0x73625140]
    %v7471 = vld.sshfl [vmem:[#allocation1 + $0x20] sm:$0xff pattern:$0x73625140]
    %7472 = vst [vmem:[#allocation1] ss:$4 sm:$0xff] %v3206
    %7473 = vst [vmem:[%s7076] ss:$4 sm:$0xff] %v3210
    %7474 = vst [vmem:[%s7078] ss:$4 sm:$0xff] %v3214
    %7475 = vst [vmem:[%s7080] ss:$4 sm:$0xff] %v3218
    %7476 = vst [vmem:[%s7082] ss:$4 sm:$0xff] %v3222
    %7477 = vst [vmem:[%s7084] ss:$4 sm:$0xff] %v3226
    %7478 = vst [vmem:[%s7086] ss:$4 sm:$0xff] %v3230
    %7479 = vst [vmem:[%s7088] ss:$4 sm:$0xff] %v3234
    %v7480 = vld.sshfl [vmem:[#allocation1] sm:$0xff pattern:$0x73625140]
    %v7481 = vld.sshfl [vmem:[#allocation1 + $0x20] sm:$0xff pattern:$0x73625140]
    %7482 = vst [vmem:[#allocation1] ss:$4 sm:$0xff] %v3238
    %7483 = vst [vmem:[%s7076] ss:$4 sm:$0xff] %v3242
    %7484 = vst [vmem:[%s7078] ss:$4 sm:$0xff] %v3246
    %7485 = vst [vmem:[%s7080] ss:$4 sm:$0xff] %v3250
    %7486 = vst [vmem:[%s7082] ss:$4 sm:$0xff] %v3254
    %7487 = vst [vmem:[%s7084] ss:$4 sm:$0xff] %v3258
    %7488 = vst [vmem:[%s7086] ss:$4 sm:$0xff] %v3262
    %7489 = vst [vmem:[%s7088] ss:$4 sm:$0xff] %v3266
    %v7490 = vld.sshfl [vmem:[#allocation1] sm:$0xff pattern:$0x73625140]
    %v7491 = vld.sshfl [vmem:[#allocation1 + $0x20] sm:$0xff pattern:$0x73625140]
    %7492 = vst [vmem:[#allocation1] ss:$4 sm:$0xff] %v3270
    %7493 = vst [vmem:[%s7076] ss:$4 sm:$0xff] %v3274
    %7494 = vst [vmem:[%s7078] ss:$4 sm:$0xff] %v3278
    %7495 = vst [vmem:[%s7080] ss:$4 sm:$0xff] %v3282
    %7496 = vst [vmem:[%s7082] ss:$4 sm:$0xff] %v3286
    %7497 = vst [vmem:[%s7084] ss:$4 sm:$0xff] %v3290
    %7498 = vst [vmem:[%s7086] ss:$4 sm:$0xff] %v3294
    %7499 = vst [vmem:[%s7088] ss:$4 sm:$0xff] %v3298
    %v7500 = vld.sshfl [vmem:[#allocation1] sm:$0xff pattern:$0x73625140]
    %v7501 = vld.sshfl [vmem:[#allocation1 + $0x20] sm:$0xff pattern:$0x73625140]
    %7502 = vst [vmem:[#allocation1] ss:$4 sm:$0xff] %v3302
    %7503 = vst [vmem:[%s7076] ss:$4 sm:$0xff] %v3306
    %7504 = vst [vmem:[%s7078] ss:$4 sm:$0xff] %v3310
    %7505 = vst [vmem:[%s7080] ss:$4 sm:$0xff] %v3314
    %7506 = vst [vmem:[%s7082] ss:$4 sm:$0xff] %v3318
    %7507 = vst [vmem:[%s7084] ss:$4 sm:$0xff] %v3322
    %7508 = vst [vmem:[%s7086] ss:$4 sm:$0xff] %v3326
    %7509 = vst [vmem:[%s7088] ss:$4 sm:$0xff] %v3330
    %v7510 = vld.sshfl [vmem:[#allocation1] sm:$0xff pattern:$0x73625140]
    %v7511 = vld.sshfl [vmem:[#allocation1 + $0x20] sm:$0xff pattern:$0x73625140]
    %7512 = vst [vmem:[#allocation1] ss:$4 sm:$0xff] %v3334
    %7513 = vst [vmem:[%s7076] ss:$4 sm:$0xff] %v3338
    %7514 = vst [vmem:[%s7078] ss:$4 sm:$0xff] %v3342
    %7515 = vst [vmem:[%s7080] ss:$4 sm:$0xff] %v3346
    %7516 = vst [vmem:[%s7082] ss:$4 sm:$0xff] %v3350
    %7517 = vst [vmem:[%s7084] ss:$4 sm:$0xff] %v3354
    %7518 = vst [vmem:[%s7086] ss:$4 sm:$0xff] %v3358
    %7519 = vst [vmem:[%s7088] ss:$4 sm:$0xff] %v3362
    %v7520 = vld.sshfl [vmem:[#allocation1] sm:$0xff pattern:$0x73625140]
    %v7521 = vld.sshfl [vmem:[#allocation1 + $0x20] sm:$0xff pattern:$0x73625140]
    %7522 = vst [vmem:[#allocation1] ss:$4 sm:$0xff] %v3366
    %7523 = vst [vmem:[%s7076] ss:$4 sm:$0xff] %v3370
    %7524 = vst [vmem:[%s7078] ss:$4 sm:$0xff] %v3374
    %7525 = vst [vmem:[%s7080] ss:$4 sm:$0xff] %v3378
    %7526 = vst [vmem:[%s7082] ss:$4 sm:$0xff] %v3382
    %7527 = vst [vmem:[%s7084] ss:$4 sm:$0xff] %v3386
    %7528 = vst [vmem:[%s7086] ss:$4 sm:$0xff] %v3390
    %7529 = vst [vmem:[%s7088] ss:$4 sm:$0xff] %v3394
    %v7530 = vld.sshfl [vmem:[#allocation1] sm:$0xff pattern:$0x73625140]
    %v7531 = vld.sshfl [vmem:[#allocation1 + $0x20] sm:$0xff pattern:$0x73625140]
    %7532 = vst [vmem:[#allocation1] ss:$4 sm:$0xff] %v3398
    %7533 = vst [vmem:[%s7076] ss:$4 sm:$0xff] %v3402
    %7534 = vst [vmem:[%s7078] ss:$4 sm:$0xff] %v3406
    %7535 = vst [vmem:[%s7080] ss:$4 sm:$0xff] %v3410
    %7536 = vst [vmem:[%s7082] ss:$4 sm:$0xff] %v3414
    %7537 = vst [vmem:[%s7084] ss:$4 sm:$0xff] %v3418
    %7538 = vst [vmem:[%s7086] ss:$4 sm:$0xff] %v3422
    %7539 = vst [vmem:[%s7088] ss:$4 sm:$0xff] %v3426
    %v7540 = vld.sshfl [vmem:[#allocation1] sm:$0xff pattern:$0x73625140]
    %v7541 = vld.sshfl [vmem:[#allocation1 + $0x20] sm:$0xff pattern:$0x73625140]
    %7542 = vst [vmem:[#allocation1] ss:$4 sm:$0xff] %v3430
    %7543 = vst [vmem:[%s7076] ss:$4 sm:$0xff] %v3434
    %7544 = vst [vmem:[%s7078] ss:$4 sm:$0xff] %v3438
    %7545 = vst [vmem:[%s7080] ss:$4 sm:$0xff] %v3442
    %7546 = vst [vmem:[%s7082] ss:$4 sm:$0xff] %v3446
    %7547 = vst [vmem:[%s7084] ss:$4 sm:$0xff] %v3450
    %7548 = vst [vmem:[%s7086] ss:$4 sm:$0xff] %v3454
    %7549 = vst [vmem:[%s7088] ss:$4 sm:$0xff] %v3458
    %v7550 = vld.sshfl [vmem:[#allocation1] sm:$0xff pattern:$0x73625140]
    %v7551 = vld.sshfl [vmem:[#allocation1 + $0x20] sm:$0xff pattern:$0x73625140]
    %7552 = vst [vmem:[#allocation1] ss:$4 sm:$0xff] %v3462
    %7553 = vst [vmem:[%s7076] ss:$4 sm:$0xff] %v3466
    %7554 = vst [vmem:[%s7078] ss:$4 sm:$0xff] %v3470
    %7555 = vst [vmem:[%s7080] ss:$4 sm:$0xff] %v3474
    %7556 = vst [vmem:[%s7082] ss:$4 sm:$0xff] %v3478
    %7557 = vst [vmem:[%s7084] ss:$4 sm:$0xff] %v3482
    %7558 = vst [vmem:[%s7086] ss:$4 sm:$0xff] %v3486
    %7559 = vst [vmem:[%s7088] ss:$4 sm:$0xff] %v3490
    %v7560 = vld.sshfl [vmem:[#allocation1] sm:$0xff pattern:$0x73625140]
    %v7561 = vld.sshfl [vmem:[#allocation1 + $0x20] sm:$0xff pattern:$0x73625140]
    %7562 = vst [vmem:[#allocation1] ss:$4 sm:$0xff] %v3494
    %7563 = vst [vmem:[%s7076] ss:$4 sm:$0xff] %v3498
    %7564 = vst [vmem:[%s7078] ss:$4 sm:$0xff] %v3502
    %7565 = vst [vmem:[%s7080] ss:$4 sm:$0xff] %v3506
    %7566 = vst [vmem:[%s7082] ss:$4 sm:$0xff] %v3510
    %7567 = vst [vmem:[%s7084] ss:$4 sm:$0xff] %v3514
    %7568 = vst [vmem:[%s7086] ss:$4 sm:$0xff] %v3518
    %7569 = vst [vmem:[%s7088] ss:$4 sm:$0xff] %v3522
    %v7570 = vld.sshfl [vmem:[#allocation1] sm:$0xff pattern:$0x73625140]
    %v7571 = vld.sshfl [vmem:[#allocation1 + $0x20] sm:$0xff pattern:$0x73625140]
    %7572 = vst [vmem:[#allocation1] ss:$4 sm:$0xff] %v3526
    %7573 = vst [vmem:[%s7076] ss:$4 sm:$0xff] %v3530
    %7574 = vst [vmem:[%s7078] ss:$4 sm:$0xff] %v3534
    %7575 = vst [vmem:[%s7080] ss:$4 sm:$0xff] %v3538
    %7576 = vst [vmem:[%s7082] ss:$4 sm:$0xff] %v3542
    %7577 = vst [vmem:[%s7084] ss:$4 sm:$0xff] %v3546
    %7578 = vst [vmem:[%s7086] ss:$4 sm:$0xff] %v3550
    %7579 = vst [vmem:[%s7088] ss:$4 sm:$0xff] %v3554
    %v7580 = vld.sshfl [vmem:[#allocation1] sm:$0xff pattern:$0x73625140]
    %v7581 = vld.sshfl [vmem:[#allocation1 + $0x20] sm:$0xff pattern:$0x73625140]
    %7582 = vst [vmem:[#allocation1] ss:$4 sm:$0xff] %v3558
    %7583 = vst [vmem:[%s7076] ss:$4 sm:$0xff] %v3562
    %7584 = vst [vmem:[%s7078] ss:$4 sm:$0xff] %v3566
    %7585 = vst [vmem:[%s7080] ss:$4 sm:$0xff] %v3570
    %7586 = vst [vmem:[%s7082] ss:$4 sm:$0xff] %v3574
    %7587 = vst [vmem:[%s7084] ss:$4 sm:$0xff] %v3578
    %7588 = vst [vmem:[%s7086] ss:$4 sm:$0xff] %v3582
    %7589 = vst [vmem:[%s7088] ss:$4 sm:$0xff] %v3586
    %v7590 = vld.sshfl [vmem:[#allocation1] sm:$0xff pattern:$0x73625140]
    %v7591 = vld.sshfl [vmem:[#allocation1 + $0x20] sm:$0xff pattern:$0x73625140]
    %7592 = vst [vmem:[#allocation1] ss:$4 sm:$0xff] %v3590
    %7593 = vst [vmem:[%s7076] ss:$4 sm:$0xff] %v3594
    %7594 = vst [vmem:[%s7078] ss:$4 sm:$0xff] %v3598
    %7595 = vst [vmem:[%s7080] ss:$4 sm:$0xff] %v3602
    %7596 = vst [vmem:[%s7082] ss:$4 sm:$0xff] %v3606
    %7597 = vst [vmem:[%s7084] ss:$4 sm:$0xff] %v3610
    %7598 = vst [vmem:[%s7086] ss:$4 sm:$0xff] %v3614
    %7599 = vst [vmem:[%s7088] ss:$4 sm:$0xff] %v3618
    %v7600 = vld.sshfl [vmem:[#allocation1] sm:$0xff pattern:$0x73625140]
    %v7601 = vld.sshfl [vmem:[#allocation1 + $0x20] sm:$0xff pattern:$0x73625140]
    %7602 = vst [vmem:[#allocation1] ss:$4 sm:$0xff] %v3622
    %7603 = vst [vmem:[%s7076] ss:$4 sm:$0xff] %v3626
    %7604 = vst [vmem:[%s7078] ss:$4 sm:$0xff] %v3630
    %7605 = vst [vmem:[%s7080] ss:$4 sm:$0xff] %v3634
    %7606 = vst [vmem:[%s7082] ss:$4 sm:$0xff] %v3638
    %7607 = vst [vmem:[%s7084] ss:$4 sm:$0xff] %v3642
    %7608 = vst [vmem:[%s7086] ss:$4 sm:$0xff] %v3646
    %7609 = vst [vmem:[%s7088] ss:$4 sm:$0xff] %v3650
    %v7610 = vld.sshfl [vmem:[#allocation1] sm:$0xff pattern:$0x73625140]
    %v7611 = vld.sshfl [vmem:[#allocation1 + $0x20] sm:$0xff pattern:$0x73625140]
    %7612 = vst [vmem:[#allocation1] ss:$4 sm:$0xff] %v3654
    %7613 = vst [vmem:[%s7076] ss:$4 sm:$0xff] %v3658
    %7614 = vst [vmem:[%s7078] ss:$4 sm:$0xff] %v3662
    %7615 = vst [vmem:[%s7080] ss:$4 sm:$0xff] %v3666
    %7616 = vst [vmem:[%s7082] ss:$4 sm:$0xff] %v3670
    %7617 = vst [vmem:[%s7084] ss:$4 sm:$0xff] %v3674
    %7618 = vst [vmem:[%s7086] ss:$4 sm:$0xff] %v3678
    %7619 = vst [vmem:[%s7088] ss:$4 sm:$0xff] %v3682
    %v7620 = vld.sshfl [vmem:[#allocation1] sm:$0xff pattern:$0x73625140]
    %v7621 = vld.sshfl [vmem:[#allocation1 + $0x20] sm:$0xff pattern:$0x73625140]
    %7622 = vst [vmem:[#allocation1] ss:$4 sm:$0xff] %v3686
    %7623 = vst [vmem:[%s7076] ss:$4 sm:$0xff] %v3690
    %7624 = vst [vmem:[%s7078] ss:$4 sm:$0xff] %v3694
    %7625 = vst [vmem:[%s7080] ss:$4 sm:$0xff] %v3698
    %7626 = vst [vmem:[%s7082] ss:$4 sm:$0xff] %v3702
    %7627 = vst [vmem:[%s7084] ss:$4 sm:$0xff] %v3706
    %7628 = vst [vmem:[%s7086] ss:$4 sm:$0xff] %v3710
    %7629 = vst [vmem:[%s7088] ss:$4 sm:$0xff] %v3714
    %v7630 = vld.sshfl [vmem:[#allocation1] sm:$0xff pattern:$0x73625140]
    %v7631 = vld.sshfl [vmem:[#allocation1 + $0x20] sm:$0xff pattern:$0x73625140]
    %7632 = vst [vmem:[#allocation1] ss:$4 sm:$0xff] %v3718
    %7633 = vst [vmem:[%s7076] ss:$4 sm:$0xff] %v3722
    %7634 = vst [vmem:[%s7078] ss:$4 sm:$0xff] %v3726
    %7635 = vst [vmem:[%s7080] ss:$4 sm:$0xff] %v3730
    %7636 = vst [vmem:[%s7082] ss:$4 sm:$0xff] %v3734
    %7637 = vst [vmem:[%s7084] ss:$4 sm:$0xff] %v3738
    %7638 = vst [vmem:[%s7086] ss:$4 sm:$0xff] %v3742
    %7639 = vst [vmem:[%s7088] ss:$4 sm:$0xff] %v3746
    %v7640 = vld.sshfl [vmem:[#allocation1] sm:$0xff pattern:$0x73625140]
    %v7641 = vld.sshfl [vmem:[#allocation1 + $0x20] sm:$0xff pattern:$0x73625140]
    %7642 = vst [vmem:[#allocation1] ss:$4 sm:$0xff] %v3750
    %7643 = vst [vmem:[%s7076] ss:$4 sm:$0xff] %v3754
    %7644 = vst [vmem:[%s7078] ss:$4 sm:$0xff] %v3758
    %7645 = vst [vmem:[%s7080] ss:$4 sm:$0xff] %v3762
    %7646 = vst [vmem:[%s7082] ss:$4 sm:$0xff] %v3766
    %7647 = vst [vmem:[%s7084] ss:$4 sm:$0xff] %v3770
    %7648 = vst [vmem:[%s7086] ss:$4 sm:$0xff] %v3774
    %7649 = vst [vmem:[%s7088] ss:$4 sm:$0xff] %v3778
    %v7650 = vld.sshfl [vmem:[#allocation1] sm:$0xff pattern:$0x73625140]
    %v7651 = vld.sshfl [vmem:[#allocation1 + $0x20] sm:$0xff pattern:$0x73625140]
    %7652 = vst [vmem:[#allocation1] ss:$4 sm:$0xff] %v3782
    %7653 = vst [vmem:[%s7076] ss:$4 sm:$0xff] %v3786
    %7654 = vst [vmem:[%s7078] ss:$4 sm:$0xff] %v3790
    %7655 = vst [vmem:[%s7080] ss:$4 sm:$0xff] %v3794
    %7656 = vst [vmem:[%s7082] ss:$4 sm:$0xff] %v3798
    %7657 = vst [vmem:[%s7084] ss:$4 sm:$0xff] %v3802
    %7658 = vst [vmem:[%s7086] ss:$4 sm:$0xff] %v3806
    %7659 = vst [vmem:[%s7088] ss:$4 sm:$0xff] %v3810
    %v7660 = vld.sshfl [vmem:[#allocation1] sm:$0xff pattern:$0x73625140]
    %v7661 = vld.sshfl [vmem:[#allocation1 + $0x20] sm:$0xff pattern:$0x73625140]
    %7662 = vst [vmem:[#allocation1] ss:$4 sm:$0xff] %v3814
    %7663 = vst [vmem:[%s7076] ss:$4 sm:$0xff] %v3818
    %7664 = vst [vmem:[%s7078] ss:$4 sm:$0xff] %v3822
    %7665 = vst [vmem:[%s7080] ss:$4 sm:$0xff] %v3826
    %7666 = vst [vmem:[%s7082] ss:$4 sm:$0xff] %v3830
    %7667 = vst [vmem:[%s7084] ss:$4 sm:$0xff] %v3834
    %7668 = vst [vmem:[%s7086] ss:$4 sm:$0xff] %v3838
    %7669 = vst [vmem:[%s7088] ss:$4 sm:$0xff] %v3842
    %v7670 = vld.sshfl [vmem:[#allocation1] sm:$0xff pattern:$0x73625140]
    %v7671 = vld.sshfl [vmem:[#allocation1 + $0x20] sm:$0xff pattern:$0x73625140]
    %7672 = vst [vmem:[#allocation1] ss:$4 sm:$0xff] %v3846
    %7673 = vst [vmem:[%s7076] ss:$4 sm:$0xff] %v3850
    %7674 = vst [vmem:[%s7078] ss:$4 sm:$0xff] %v3854
    %7675 = vst [vmem:[%s7080] ss:$4 sm:$0xff] %v3858
    %7676 = vst [vmem:[%s7082] ss:$4 sm:$0xff] %v3862
    %7677 = vst [vmem:[%s7084] ss:$4 sm:$0xff] %v3866
    %7678 = vst [vmem:[%s7086] ss:$4 sm:$0xff] %v3870
    %7679 = vst [vmem:[%s7088] ss:$4 sm:$0xff] %v3874
    %v7680 = vld.sshfl [vmem:[#allocation1] sm:$0xff pattern:$0x73625140]
    %v7681 = vld.sshfl [vmem:[#allocation1 + $0x20] sm:$0xff pattern:$0x73625140]
    %7682 = vst [vmem:[#allocation1] ss:$4 sm:$0xff] %v3878
    %7683 = vst [vmem:[%s7076] ss:$4 sm:$0xff] %v3882
    %7684 = vst [vmem:[%s7078] ss:$4 sm:$0xff] %v3886
    %7685 = vst [vmem:[%s7080] ss:$4 sm:$0xff] %v3890
    %7686 = vst [vmem:[%s7082] ss:$4 sm:$0xff] %v3894
    %7687 = vst [vmem:[%s7084] ss:$4 sm:$0xff] %v3898
    %7688 = vst [vmem:[%s7086] ss:$4 sm:$0xff] %v3902
    %7689 = vst [vmem:[%s7088] ss:$4 sm:$0xff] %v3906
    %v7690 = vld.sshfl [vmem:[#allocation1] sm:$0xff pattern:$0x73625140]
    %v7691 = vld.sshfl [vmem:[#allocation1 + $0x20] sm:$0xff pattern:$0x73625140]
    %7692 = vst [vmem:[#allocation1] ss:$4 sm:$0xff] %v3910
    %7693 = vst [vmem:[%s7076] ss:$4 sm:$0xff] %v3914
    %7694 = vst [vmem:[%s7078] ss:$4 sm:$0xff] %v3918
    %7695 = vst [vmem:[%s7080] ss:$4 sm:$0xff] %v3922
    %7696 = vst [vmem:[%s7082] ss:$4 sm:$0xff] %v3926
    %7697 = vst [vmem:[%s7084] ss:$4 sm:$0xff] %v3930
    %7698 = vst [vmem:[%s7086] ss:$4 sm:$0xff] %v3934
    %7699 = vst [vmem:[%s7088] ss:$4 sm:$0xff] %v3938
    %v7700 = vld.sshfl [vmem:[#allocation1] sm:$0xff pattern:$0x73625140]
    %v7701 = vld.sshfl [vmem:[#allocation1 + $0x20] sm:$0xff pattern:$0x73625140]
    %7702 = vst [vmem:[#allocation1] ss:$4 sm:$0xff] %v3942
    %7703 = vst [vmem:[%s7076] ss:$4 sm:$0xff] %v3946
    %7704 = vst [vmem:[%s7078] ss:$4 sm:$0xff] %v3950
    %7705 = vst [vmem:[%s7080] ss:$4 sm:$0xff] %v3954
    %7706 = vst [vmem:[%s7082] ss:$4 sm:$0xff] %v3958
    %7707 = vst [vmem:[%s7084] ss:$4 sm:$0xff] %v3962
    %7708 = vst [vmem:[%s7086] ss:$4 sm:$0xff] %v3966
    %7709 = vst [vmem:[%s7088] ss:$4 sm:$0xff] %v3970
    %v7710 = vld.sshfl [vmem:[#allocation1] sm:$0xff pattern:$0x73625140]
    %v7711 = vld.sshfl [vmem:[#allocation1 + $0x20] sm:$0xff pattern:$0x73625140]
    %7712 = vst [vmem:[#allocation1] ss:$4 sm:$0xff] %v3974
    %7713 = vst [vmem:[%s7076] ss:$4 sm:$0xff] %v3978
    %7714 = vst [vmem:[%s7078] ss:$4 sm:$0xff] %v3982
    %7715 = vst [vmem:[%s7080] ss:$4 sm:$0xff] %v3986
    %7716 = vst [vmem:[%s7082] ss:$4 sm:$0xff] %v3990
    %7717 = vst [vmem:[%s7084] ss:$4 sm:$0xff] %v3994
    %7718 = vst [vmem:[%s7086] ss:$4 sm:$0xff] %v3998
    %7719 = vst [vmem:[%s7088] ss:$4 sm:$0xff] %v4002
    %v7720 = vld.sshfl [vmem:[#allocation1] sm:$0xff pattern:$0x73625140]
    %v7721 = vld.sshfl [vmem:[#allocation1 + $0x20] sm:$0xff pattern:$0x73625140]
    %7722 = vst [vmem:[#allocation1] ss:$4 sm:$0xff] %v4006
    %7723 = vst [vmem:[%s7076] ss:$4 sm:$0xff] %v4010
    %7724 = vst [vmem:[%s7078] ss:$4 sm:$0xff] %v4014
    %7725 = vst [vmem:[%s7080] ss:$4 sm:$0xff] %v4018
    %7726 = vst [vmem:[%s7082] ss:$4 sm:$0xff] %v4022
    %7727 = vst [vmem:[%s7084] ss:$4 sm:$0xff] %v4026
    %7728 = vst [vmem:[%s7086] ss:$4 sm:$0xff] %v4030
    %7729 = vst [vmem:[%s7088] ss:$4 sm:$0xff] %v4034
    %v7730 = vld.sshfl [vmem:[#allocation1] sm:$0xff pattern:$0x73625140]
    %v7731 = vld.sshfl [vmem:[#allocation1 + $0x20] sm:$0xff pattern:$0x73625140]
    %7732 = vst [vmem:[#allocation1] ss:$4 sm:$0xff] %v4038
    %7733 = vst [vmem:[%s7076] ss:$4 sm:$0xff] %v4042
    %7734 = vst [vmem:[%s7078] ss:$4 sm:$0xff] %v4046
    %7735 = vst [vmem:[%s7080] ss:$4 sm:$0xff] %v4050
    %7736 = vst [vmem:[%s7082] ss:$4 sm:$0xff] %v4054
    %7737 = vst [vmem:[%s7084] ss:$4 sm:$0xff] %v4058
    %7738 = vst [vmem:[%s7086] ss:$4 sm:$0xff] %v4062
    %7739 = vst [vmem:[%s7088] ss:$4 sm:$0xff] %v4066
    %v7740 = vld.sshfl [vmem:[#allocation1] sm:$0xff pattern:$0x73625140]
    %v7741 = vld.sshfl [vmem:[#allocation1 + $0x20] sm:$0xff pattern:$0x73625140]
    %7742 = vst [vmem:[#allocation1] ss:$4 sm:$0xff] %v4070
    %7743 = vst [vmem:[%s7076] ss:$4 sm:$0xff] %v4074
    %7744 = vst [vmem:[%s7078] ss:$4 sm:$0xff] %v4078
    %7745 = vst [vmem:[%s7080] ss:$4 sm:$0xff] %v4082
    %7746 = vst [vmem:[%s7082] ss:$4 sm:$0xff] %v4086
    %7747 = vst [vmem:[%s7084] ss:$4 sm:$0xff] %v4090
    %7748 = vst [vmem:[%s7086] ss:$4 sm:$0xff] %v4094
    %7749 = vst [vmem:[%s7088] ss:$4 sm:$0xff] %v4098
    %v7750 = vld.sshfl [vmem:[#allocation1] sm:$0xff pattern:$0x73625140]
    %v7751 = vld.sshfl [vmem:[#allocation1 + $0x20] sm:$0xff pattern:$0x73625140]
    %7752 = vst [vmem:[#allocation1] ss:$4 sm:$0xff] %v4102
    %7753 = vst [vmem:[%s7076] ss:$4 sm:$0xff] %v4106
    %7754 = vst [vmem:[%s7078] ss:$4 sm:$0xff] %v4110
    %7755 = vst [vmem:[%s7080] ss:$4 sm:$0xff] %v4114
    %7756 = vst [vmem:[%s7082] ss:$4 sm:$0xff] %v4118
    %7757 = vst [vmem:[%s7084] ss:$4 sm:$0xff] %v4122
    %7758 = vst [vmem:[%s7086] ss:$4 sm:$0xff] %v4126
    %7759 = vst [vmem:[%s7088] ss:$4 sm:$0xff] %v4130
    %v7760 = vld.sshfl [vmem:[#allocation1] sm:$0xff pattern:$0x73625140]
    %v7761 = vld.sshfl [vmem:[#allocation1 + $0x20] sm:$0xff pattern:$0x73625140]
    %7762 = vst [vmem:[#allocation1] ss:$4 sm:$0xff] %v4134
    %7763 = vst [vmem:[%s7076] ss:$4 sm:$0xff] %v4138
    %7764 = vst [vmem:[%s7078] ss:$4 sm:$0xff] %v4142
    %7765 = vst [vmem:[%s7080] ss:$4 sm:$0xff] %v4146
    %7766 = vst [vmem:[%s7082] ss:$4 sm:$0xff] %v4150
    %7767 = vst [vmem:[%s7084] ss:$4 sm:$0xff] %v4154
    %7768 = vst [vmem:[%s7086] ss:$4 sm:$0xff] %v4158
    %7769 = vst [vmem:[%s7088] ss:$4 sm:$0xff] %v4162
    %v7770 = vld.sshfl [vmem:[#allocation1] sm:$0xff pattern:$0x73625140]
    %v7771 = vld.sshfl [vmem:[#allocation1 + $0x20] sm:$0xff pattern:$0x73625140]
    %7772 = vst [vmem:[#allocation1] ss:$4 sm:$0xff] %v4166
    %7773 = vst [vmem:[%s7076] ss:$4 sm:$0xff] %v4170
    %7774 = vst [vmem:[%s7078] ss:$4 sm:$0xff] %v4174
    %7775 = vst [vmem:[%s7080] ss:$4 sm:$0xff] %v4178
    %7776 = vst [vmem:[%s7082] ss:$4 sm:$0xff] %v4182
    %7777 = vst [vmem:[%s7084] ss:$4 sm:$0xff] %v4186
    %7778 = vst [vmem:[%s7086] ss:$4 sm:$0xff] %v4190
    %7779 = vst [vmem:[%s7088] ss:$4 sm:$0xff] %v4194
    %v7780 = vld.sshfl [vmem:[#allocation1] sm:$0xff pattern:$0x73625140]
    %v7781 = vld.sshfl [vmem:[#allocation1 + $0x20] sm:$0xff pattern:$0x73625140]
    %7782 = vst [vmem:[#allocation1] ss:$4 sm:$0xff] %v4198
    %7783 = vst [vmem:[%s7076] ss:$4 sm:$0xff] %v4202
    %7784 = vst [vmem:[%s7078] ss:$4 sm:$0xff] %v4206
    %7785 = vst [vmem:[%s7080] ss:$4 sm:$0xff] %v4210
    %7786 = vst [vmem:[%s7082] ss:$4 sm:$0xff] %v4214
    %7787 = vst [vmem:[%s7084] ss:$4 sm:$0xff] %v4218
    %7788 = vst [vmem:[%s7086] ss:$4 sm:$0xff] %v4222
    %7789 = vst [vmem:[%s7088] ss:$4 sm:$0xff] %v4226
    %v7790 = vld.sshfl [vmem:[#allocation1] sm:$0xff pattern:$0x73625140]
    %v7791 = vld.sshfl [vmem:[#allocation1 + $0x20] sm:$0xff pattern:$0x73625140]
    %7792 = vst [vmem:[#allocation1] ss:$4 sm:$0xff] %v4230
    %7793 = vst [vmem:[%s7076] ss:$4 sm:$0xff] %v4234
    %7794 = vst [vmem:[%s7078] ss:$4 sm:$0xff] %v4238
    %7795 = vst [vmem:[%s7080] ss:$4 sm:$0xff] %v4242
    %7796 = vst [vmem:[%s7082] ss:$4 sm:$0xff] %v4246
    %7797 = vst [vmem:[%s7084] ss:$4 sm:$0xff] %v4250
    %7798 = vst [vmem:[%s7086] ss:$4 sm:$0xff] %v4254
    %7799 = vst [vmem:[%s7088] ss:$4 sm:$0xff] %v4258
    %v7800 = vld.sshfl [vmem:[#allocation1] sm:$0xff pattern:$0x73625140]
    %v7801 = vld.sshfl [vmem:[#allocation1 + $0x20] sm:$0xff pattern:$0x73625140]
    %7802 = vst [vmem:[#allocation1] ss:$4 sm:$0xff] %v4262
    %7803 = vst [vmem:[%s7076] ss:$4 sm:$0xff] %v4266
    %7804 = vst [vmem:[%s7078] ss:$4 sm:$0xff] %v4270
    %7805 = vst [vmem:[%s7080] ss:$4 sm:$0xff] %v4274
    %7806 = vst [vmem:[%s7082] ss:$4 sm:$0xff] %v4278
    %7807 = vst [vmem:[%s7084] ss:$4 sm:$0xff] %v4282
    %7808 = vst [vmem:[%s7086] ss:$4 sm:$0xff] %v4286
    %7809 = vst [vmem:[%s7088] ss:$4 sm:$0xff] %v4290
    %v7810 = vld.sshfl [vmem:[#allocation1] sm:$0xff pattern:$0x73625140]
    %v7811 = vld.sshfl [vmem:[#allocation1 + $0x20] sm:$0xff pattern:$0x73625140]
    %7812 = vst [vmem:[#allocation1] ss:$4 sm:$0xff] %v4294
    %7813 = vst [vmem:[%s7076] ss:$4 sm:$0xff] %v4298
    %7814 = vst [vmem:[%s7078] ss:$4 sm:$0xff] %v4302
    %7815 = vst [vmem:[%s7080] ss:$4 sm:$0xff] %v4306
    %7816 = vst [vmem:[%s7082] ss:$4 sm:$0xff] %v4310
    %7817 = vst [vmem:[%s7084] ss:$4 sm:$0xff] %v4314
    %7818 = vst [vmem:[%s7086] ss:$4 sm:$0xff] %v4318
    %7819 = vst [vmem:[%s7088] ss:$4 sm:$0xff] %v4322
    %v7820 = vld.sshfl [vmem:[#allocation1] sm:$0xff pattern:$0x73625140]
    %v7821 = vld.sshfl [vmem:[#allocation1 + $0x20] sm:$0xff pattern:$0x73625140]
    %7822 = vst [vmem:[#allocation1] ss:$4 sm:$0xff] %v4326
    %7823 = vst [vmem:[%s7076] ss:$4 sm:$0xff] %v4330
    %7824 = vst [vmem:[%s7078] ss:$4 sm:$0xff] %v4334
    %7825 = vst [vmem:[%s7080] ss:$4 sm:$0xff] %v4338
    %7826 = vst [vmem:[%s7082] ss:$4 sm:$0xff] %v4342
    %7827 = vst [vmem:[%s7084] ss:$4 sm:$0xff] %v4346
    %7828 = vst [vmem:[%s7086] ss:$4 sm:$0xff] %v4350
    %7829 = vst [vmem:[%s7088] ss:$4 sm:$0xff] %v4354
    %v7830 = vld.sshfl [vmem:[#allocation1] sm:$0xff pattern:$0x73625140]
    %v7831 = vld.sshfl [vmem:[#allocation1 + $0x20] sm:$0xff pattern:$0x73625140]
    %7832 = vst [vmem:[#allocation1] ss:$4 sm:$0xff] %v4358
    %7833 = vst [vmem:[%s7076] ss:$4 sm:$0xff] %v4362
    %7834 = vst [vmem:[%s7078] ss:$4 sm:$0xff] %v4366
    %7835 = vst [vmem:[%s7080] ss:$4 sm:$0xff] %v4370
    %7836 = vst [vmem:[%s7082] ss:$4 sm:$0xff] %v4374
    %7837 = vst [vmem:[%s7084] ss:$4 sm:$0xff] %v4378
    %7838 = vst [vmem:[%s7086] ss:$4 sm:$0xff] %v4382
    %7839 = vst [vmem:[%s7088] ss:$4 sm:$0xff] %v4386
    %v7840 = vld.sshfl [vmem:[#allocation1] sm:$0xff pattern:$0x73625140]
    %v7841 = vld.sshfl [vmem:[#allocation1 + $0x20] sm:$0xff pattern:$0x73625140]
    %7842 = vst [vmem:[#allocation1] ss:$4 sm:$0xff] %v4390
    %7843 = vst [vmem:[%s7076] ss:$4 sm:$0xff] %v4394
    %7844 = vst [vmem:[%s7078] ss:$4 sm:$0xff] %v4398
    %7845 = vst [vmem:[%s7080] ss:$4 sm:$0xff] %v4402
    %7846 = vst [vmem:[%s7082] ss:$4 sm:$0xff] %v4406
    %7847 = vst [vmem:[%s7084] ss:$4 sm:$0xff] %v4410
    %7848 = vst [vmem:[%s7086] ss:$4 sm:$0xff] %v4414
    %7849 = vst [vmem:[%s7088] ss:$4 sm:$0xff] %v4418
    %v7850 = vld.sshfl [vmem:[#allocation1] sm:$0xff pattern:$0x73625140]
    %v7851 = vld.sshfl [vmem:[#allocation1 + $0x20] sm:$0xff pattern:$0x73625140]
    %7852 = vst [vmem:[#allocation1] ss:$4 sm:$0xff] %v4422
    %7853 = vst [vmem:[%s7076] ss:$4 sm:$0xff] %v4426
    %7854 = vst [vmem:[%s7078] ss:$4 sm:$0xff] %v4430
    %7855 = vst [vmem:[%s7080] ss:$4 sm:$0xff] %v4434
    %7856 = vst [vmem:[%s7082] ss:$4 sm:$0xff] %v4438
    %7857 = vst [vmem:[%s7084] ss:$4 sm:$0xff] %v4442
    %7858 = vst [vmem:[%s7086] ss:$4 sm:$0xff] %v4446
    %7859 = vst [vmem:[%s7088] ss:$4 sm:$0xff] %v4450
    %v7860 = vld.sshfl [vmem:[#allocation1] sm:$0xff pattern:$0x73625140]
    %v7861 = vld.sshfl [vmem:[#allocation1 + $0x20] sm:$0xff pattern:$0x73625140]
    %7862 = vst [vmem:[#allocation1] ss:$4 sm:$0xff] %v4454
    %7863 = vst [vmem:[%s7076] ss:$4 sm:$0xff] %v4458
    %7864 = vst [vmem:[%s7078] ss:$4 sm:$0xff] %v4462
    %7865 = vst [vmem:[%s7080] ss:$4 sm:$0xff] %v4466
    %7866 = vst [vmem:[%s7082] ss:$4 sm:$0xff] %v4470
    %7867 = vst [vmem:[%s7084] ss:$4 sm:$0xff] %v4474
    %7868 = vst [vmem:[%s7086] ss:$4 sm:$0xff] %v4478
    %7869 = vst [vmem:[%s7088] ss:$4 sm:$0xff] %v4482
    %v7870 = vld.sshfl [vmem:[#allocation1] sm:$0xff pattern:$0x73625140]
    %v7871 = vld.sshfl [vmem:[#allocation1 + $0x20] sm:$0xff pattern:$0x73625140]
    %7872 = vst [vmem:[#allocation1] ss:$4 sm:$0xff] %v4486
    %7873 = vst [vmem:[%s7076] ss:$4 sm:$0xff] %v4490
    %7874 = vst [vmem:[%s7078] ss:$4 sm:$0xff] %v4494
    %7875 = vst [vmem:[%s7080] ss:$4 sm:$0xff] %v4498
    %7876 = vst [vmem:[%s7082] ss:$4 sm:$0xff] %v4502
    %7877 = vst [vmem:[%s7084] ss:$4 sm:$0xff] %v4506
    %7878 = vst [vmem:[%s7086] ss:$4 sm:$0xff] %v4510
    %7879 = vst [vmem:[%s7088] ss:$4 sm:$0xff] %v4514
    %v7880 = vld.sshfl [vmem:[#allocation1] sm:$0xff pattern:$0x73625140]
    %v7881 = vld.sshfl [vmem:[#allocation1 + $0x20] sm:$0xff pattern:$0x73625140]
    %7882 = vst [vmem:[#allocation1] ss:$4 sm:$0xff] %v4518
    %7883 = vst [vmem:[%s7076] ss:$4 sm:$0xff] %v4522
    %7884 = vst [vmem:[%s7078] ss:$4 sm:$0xff] %v4526
    %7885 = vst [vmem:[%s7080] ss:$4 sm:$0xff] %v4530
    %7886 = vst [vmem:[%s7082] ss:$4 sm:$0xff] %v4534
    %7887 = vst [vmem:[%s7084] ss:$4 sm:$0xff] %v4538
    %7888 = vst [vmem:[%s7086] ss:$4 sm:$0xff] %v4542
    %7889 = vst [vmem:[%s7088] ss:$4 sm:$0xff] %v4546
    %v7890 = vld.sshfl [vmem:[#allocation1] sm:$0xff pattern:$0x73625140]
    %v7891 = vld.sshfl [vmem:[#allocation1 + $0x20] sm:$0xff pattern:$0x73625140]
    %7892 = vst [vmem:[#allocation1] ss:$4 sm:$0xff] %v4550
    %7893 = vst [vmem:[%s7076] ss:$4 sm:$0xff] %v4554
    %7894 = vst [vmem:[%s7078] ss:$4 sm:$0xff] %v4558
    %7895 = vst [vmem:[%s7080] ss:$4 sm:$0xff] %v4562
    %7896 = vst [vmem:[%s7082] ss:$4 sm:$0xff] %v4566
    %7897 = vst [vmem:[%s7084] ss:$4 sm:$0xff] %v4570
    %7898 = vst [vmem:[%s7086] ss:$4 sm:$0xff] %v4574
    %7899 = vst [vmem:[%s7088] ss:$4 sm:$0xff] %v4578
    %v7900 = vld.sshfl [vmem:[#allocation1] sm:$0xff pattern:$0x73625140]
    %v7901 = vld.sshfl [vmem:[#allocation1 + $0x20] sm:$0xff pattern:$0x73625140]
    %7902 = vst [vmem:[#allocation1] ss:$4 sm:$0xff] %v4582
    %7903 = vst [vmem:[%s7076] ss:$4 sm:$0xff] %v4586
    %7904 = vst [vmem:[%s7078] ss:$4 sm:$0xff] %v4590
    %7905 = vst [vmem:[%s7080] ss:$4 sm:$0xff] %v4594
    %7906 = vst [vmem:[%s7082] ss:$4 sm:$0xff] %v4598
    %7907 = vst [vmem:[%s7084] ss:$4 sm:$0xff] %v4602
    %7908 = vst [vmem:[%s7086] ss:$4 sm:$0xff] %v4606
    %7909 = vst [vmem:[%s7088] ss:$4 sm:$0xff] %v4610
    %v7910 = vld.sshfl [vmem:[#allocation1] sm:$0xff pattern:$0x73625140]
    %v7911 = vld.sshfl [vmem:[#allocation1 + $0x20] sm:$0xff pattern:$0x73625140]
    %7912 = vst [vmem:[#allocation1] ss:$4 sm:$0xff] %v4614
    %7913 = vst [vmem:[%s7076] ss:$4 sm:$0xff] %v4618
    %7914 = vst [vmem:[%s7078] ss:$4 sm:$0xff] %v4622
    %7915 = vst [vmem:[%s7080] ss:$4 sm:$0xff] %v4626
    %7916 = vst [vmem:[%s7082] ss:$4 sm:$0xff] %v4630
    %7917 = vst [vmem:[%s7084] ss:$4 sm:$0xff] %v4634
    %7918 = vst [vmem:[%s7086] ss:$4 sm:$0xff] %v4638
    %7919 = vst [vmem:[%s7088] ss:$4 sm:$0xff] %v4642
    %v7920 = vld.sshfl [vmem:[#allocation1] sm:$0xff pattern:$0x73625140]
    %v7921 = vld.sshfl [vmem:[#allocation1 + $0x20] sm:$0xff pattern:$0x73625140]
    %7922 = vst [vmem:[#allocation1] ss:$4 sm:$0xff] %v4646
    %7923 = vst [vmem:[%s7076] ss:$4 sm:$0xff] %v4650
    %7924 = vst [vmem:[%s7078] ss:$4 sm:$0xff] %v4654
    %7925 = vst [vmem:[%s7080] ss:$4 sm:$0xff] %v4658
    %7926 = vst [vmem:[%s7082] ss:$4 sm:$0xff] %v4662
    %7927 = vst [vmem:[%s7084] ss:$4 sm:$0xff] %v4666
    %7928 = vst [vmem:[%s7086] ss:$4 sm:$0xff] %v4670
    %7929 = vst [vmem:[%s7088] ss:$4 sm:$0xff] %v4674
    %v7930 = vld.sshfl [vmem:[#allocation1] sm:$0xff pattern:$0x73625140]
    %v7931 = vld.sshfl [vmem:[#allocation1 + $0x20] sm:$0xff pattern:$0x73625140]
    %7932 = vst [vmem:[#allocation1] ss:$4 sm:$0xff] %v4678
    %7933 = vst [vmem:[%s7076] ss:$4 sm:$0xff] %v4682
    %7934 = vst [vmem:[%s7078] ss:$4 sm:$0xff] %v4686
    %7935 = vst [vmem:[%s7080] ss:$4 sm:$0xff] %v4690
    %7936 = vst [vmem:[%s7082] ss:$4 sm:$0xff] %v4694
    %7937 = vst [vmem:[%s7084] ss:$4 sm:$0xff] %v4698
    %7938 = vst [vmem:[%s7086] ss:$4 sm:$0xff] %v4702
    %7939 = vst [vmem:[%s7088] ss:$4 sm:$0xff] %v4706
    %v7940 = vld.sshfl [vmem:[#allocation1] sm:$0xff pattern:$0x73625140]
    %v7941 = vld.sshfl [vmem:[#allocation1 + $0x20] sm:$0xff pattern:$0x73625140]
    %7942 = vst [vmem:[#allocation1] ss:$4 sm:$0xff] %v4710
    %7943 = vst [vmem:[%s7076] ss:$4 sm:$0xff] %v4714
    %7944 = vst [vmem:[%s7078] ss:$4 sm:$0xff] %v4718
    %7945 = vst [vmem:[%s7080] ss:$4 sm:$0xff] %v4722
    %7946 = vst [vmem:[%s7082] ss:$4 sm:$0xff] %v4726
    %7947 = vst [vmem:[%s7084] ss:$4 sm:$0xff] %v4730
    %7948 = vst [vmem:[%s7086] ss:$4 sm:$0xff] %v4734
    %7949 = vst [vmem:[%s7088] ss:$4 sm:$0xff] %v4738
    %v7950 = vld.sshfl [vmem:[#allocation1] sm:$0xff pattern:$0x73625140]
    %v7951 = vld.sshfl [vmem:[#allocation1 + $0x20] sm:$0xff pattern:$0x73625140]
    %7952 = vst [vmem:[#allocation1] ss:$4 sm:$0xff] %v4742
    %7953 = vst [vmem:[%s7076] ss:$4 sm:$0xff] %v4746
    %7954 = vst [vmem:[%s7078] ss:$4 sm:$0xff] %v4750
    %7955 = vst [vmem:[%s7080] ss:$4 sm:$0xff] %v4754
    %7956 = vst [vmem:[%s7082] ss:$4 sm:$0xff] %v4758
    %7957 = vst [vmem:[%s7084] ss:$4 sm:$0xff] %v4762
    %7958 = vst [vmem:[%s7086] ss:$4 sm:$0xff] %v4766
    %7959 = vst [vmem:[%s7088] ss:$4 sm:$0xff] %v4770
    %v7960 = vld.sshfl [vmem:[#allocation1] sm:$0xff pattern:$0x73625140]
    %v7961 = vld.sshfl [vmem:[#allocation1 + $0x20] sm:$0xff pattern:$0x73625140]
    %7962 = vst [vmem:[#allocation1] ss:$4 sm:$0xff] %v4774
    %7963 = vst [vmem:[%s7076] ss:$4 sm:$0xff] %v4778
    %7964 = vst [vmem:[%s7078] ss:$4 sm:$0xff] %v4782
    %7965 = vst [vmem:[%s7080] ss:$4 sm:$0xff] %v4786
    %7966 = vst [vmem:[%s7082] ss:$4 sm:$0xff] %v4790
    %7967 = vst [vmem:[%s7084] ss:$4 sm:$0xff] %v4794
    %7968 = vst [vmem:[%s7086] ss:$4 sm:$0xff] %v4798
    %7969 = vst [vmem:[%s7088] ss:$4 sm:$0xff] %v4802
    %v7970 = vld.sshfl [vmem:[#allocation1] sm:$0xff pattern:$0x73625140]
    %v7971 = vld.sshfl [vmem:[#allocation1 + $0x20] sm:$0xff pattern:$0x73625140]
    %7972 = vst [vmem:[#allocation1] ss:$4 sm:$0xff] %v4806
    %7973 = vst [vmem:[%s7076] ss:$4 sm:$0xff] %v4810
    %7974 = vst [vmem:[%s7078] ss:$4 sm:$0xff] %v4814
    %7975 = vst [vmem:[%s7080] ss:$4 sm:$0xff] %v4818
    %7976 = vst [vmem:[%s7082] ss:$4 sm:$0xff] %v4822
    %7977 = vst [vmem:[%s7084] ss:$4 sm:$0xff] %v4826
    %7978 = vst [vmem:[%s7086] ss:$4 sm:$0xff] %v4830
    %7979 = vst [vmem:[%s7088] ss:$4 sm:$0xff] %v4834
    %v7980 = vld.sshfl [vmem:[#allocation1] sm:$0xff pattern:$0x73625140]
    %v7981 = vld.sshfl [vmem:[#allocation1 + $0x20] sm:$0xff pattern:$0x73625140]
    %7982 = vst [vmem:[#allocation1] ss:$4 sm:$0xff] %v4838
    %7983 = vst [vmem:[%s7076] ss:$4 sm:$0xff] %v4842
    %7984 = vst [vmem:[%s7078] ss:$4 sm:$0xff] %v4846
    %7985 = vst [vmem:[%s7080] ss:$4 sm:$0xff] %v4850
    %7986 = vst [vmem:[%s7082] ss:$4 sm:$0xff] %v4854
    %7987 = vst [vmem:[%s7084] ss:$4 sm:$0xff] %v4858
    %7988 = vst [vmem:[%s7086] ss:$4 sm:$0xff] %v4862
    %7989 = vst [vmem:[%s7088] ss:$4 sm:$0xff] %v4866
    %v7990 = vld.sshfl [vmem:[#allocation1] sm:$0xff pattern:$0x73625140]
    %v7991 = vld.sshfl [vmem:[#allocation1 + $0x20] sm:$0xff pattern:$0x73625140]
    %7992 = vst [vmem:[#allocation1] ss:$4 sm:$0xff] %v4870
    %7993 = vst [vmem:[%s7076] ss:$4 sm:$0xff] %v4874
    %7994 = vst [vmem:[%s7078] ss:$4 sm:$0xff] %v4878
    %7995 = vst [vmem:[%s7080] ss:$4 sm:$0xff] %v4882
    %7996 = vst [vmem:[%s7082] ss:$4 sm:$0xff] %v4886
    %7997 = vst [vmem:[%s7084] ss:$4 sm:$0xff] %v4890
    %7998 = vst [vmem:[%s7086] ss:$4 sm:$0xff] %v4894
    %7999 = vst [vmem:[%s7088] ss:$4 sm:$0xff] %v4898
    %v8000 = vld.sshfl [vmem:[#allocation1] sm:$0xff pattern:$0x73625140]
    %v8001 = vld.sshfl [vmem:[#allocation1 + $0x20] sm:$0xff pattern:$0x73625140]
    %8002 = vst [vmem:[#allocation1] ss:$4 sm:$0xff] %v4902
    %8003 = vst [vmem:[%s7076] ss:$4 sm:$0xff] %v4906
    %8004 = vst [vmem:[%s7078] ss:$4 sm:$0xff] %v4910
    %8005 = vst [vmem:[%s7080] ss:$4 sm:$0xff] %v4914
    %8006 = vst [vmem:[%s7082] ss:$4 sm:$0xff] %v4918
    %8007 = vst [vmem:[%s7084] ss:$4 sm:$0xff] %v4922
    %8008 = vst [vmem:[%s7086] ss:$4 sm:$0xff] %v4926
    %8009 = vst [vmem:[%s7088] ss:$4 sm:$0xff] %v4930
    %v8010 = vld.sshfl [vmem:[#allocation1] sm:$0xff pattern:$0x73625140]
    %v8011 = vld.sshfl [vmem:[#allocation1 + $0x20] sm:$0xff pattern:$0x73625140]
    %8012 = vst [vmem:[#allocation1] ss:$4 sm:$0xff] %v4934
    %8013 = vst [vmem:[%s7076] ss:$4 sm:$0xff] %v4938
    %8014 = vst [vmem:[%s7078] ss:$4 sm:$0xff] %v4942
    %8015 = vst [vmem:[%s7080] ss:$4 sm:$0xff] %v4946
    %8016 = vst [vmem:[%s7082] ss:$4 sm:$0xff] %v4950
    %8017 = vst [vmem:[%s7084] ss:$4 sm:$0xff] %v4954
    %8018 = vst [vmem:[%s7086] ss:$4 sm:$0xff] %v4958
    %8019 = vst [vmem:[%s7088] ss:$4 sm:$0xff] %v4962
    %v8020 = vld.sshfl [vmem:[#allocation1] sm:$0xff pattern:$0x73625140]
    %v8021 = vld.sshfl [vmem:[#allocation1 + $0x20] sm:$0xff pattern:$0x73625140]
    %8022 = vst [vmem:[#allocation1] ss:$4 sm:$0xff] %v4966
    %8023 = vst [vmem:[%s7076] ss:$4 sm:$0xff] %v4970
    %8024 = vst [vmem:[%s7078] ss:$4 sm:$0xff] %v4974
    %8025 = vst [vmem:[%s7080] ss:$4 sm:$0xff] %v4978
    %8026 = vst [vmem:[%s7082] ss:$4 sm:$0xff] %v4982
    %8027 = vst [vmem:[%s7084] ss:$4 sm:$0xff] %v4986
    %8028 = vst [vmem:[%s7086] ss:$4 sm:$0xff] %v4990
    %8029 = vst [vmem:[%s7088] ss:$4 sm:$0xff] %v4994
    %v8030 = vld.sshfl [vmem:[#allocation1] sm:$0xff pattern:$0x73625140]
    %v8031 = vld.sshfl [vmem:[#allocation1 + $0x20] sm:$0xff pattern:$0x73625140]
    %8032 = vst [vmem:[#allocation1] ss:$4 sm:$0xff] %v4998
    %8033 = vst [vmem:[%s7076] ss:$4 sm:$0xff] %v5002
    %8034 = vst [vmem:[%s7078] ss:$4 sm:$0xff] %v5006
    %8035 = vst [vmem:[%s7080] ss:$4 sm:$0xff] %v5010
    %8036 = vst [vmem:[%s7082] ss:$4 sm:$0xff] %v5014
    %8037 = vst [vmem:[%s7084] ss:$4 sm:$0xff] %v5018
    %8038 = vst [vmem:[%s7086] ss:$4 sm:$0xff] %v5022
    %8039 = vst [vmem:[%s7088] ss:$4 sm:$0xff] %v5026
    %v8040 = vld.sshfl [vmem:[#allocation1] sm:$0xff pattern:$0x73625140]
    %v8041 = vld.sshfl [vmem:[#allocation1 + $0x20] sm:$0xff pattern:$0x73625140]
    %8042 = vst [vmem:[#allocation1] ss:$4 sm:$0xff] %v5030
    %8043 = vst [vmem:[%s7076] ss:$4 sm:$0xff] %v5034
    %8044 = vst [vmem:[%s7078] ss:$4 sm:$0xff] %v5038
    %8045 = vst [vmem:[%s7080] ss:$4 sm:$0xff] %v5042
    %8046 = vst [vmem:[%s7082] ss:$4 sm:$0xff] %v5046
    %8047 = vst [vmem:[%s7084] ss:$4 sm:$0xff] %v5050
    %8048 = vst [vmem:[%s7086] ss:$4 sm:$0xff] %v5054
    %8049 = vst [vmem:[%s7088] ss:$4 sm:$0xff] %v5058
    %v8050 = vld.sshfl [vmem:[#allocation1] sm:$0xff pattern:$0x73625140]
    %v8051 = vld.sshfl [vmem:[#allocation1 + $0x20] sm:$0xff pattern:$0x73625140]
    %8052 = vst [vmem:[#allocation1] ss:$4 sm:$0xff] %v5062
    %8053 = vst [vmem:[%s7076] ss:$4 sm:$0xff] %v5066
    %8054 = vst [vmem:[%s7078] ss:$4 sm:$0xff] %v5070
    %8055 = vst [vmem:[%s7080] ss:$4 sm:$0xff] %v5074
    %8056 = vst [vmem:[%s7082] ss:$4 sm:$0xff] %v5078
    %8057 = vst [vmem:[%s7084] ss:$4 sm:$0xff] %v5082
    %8058 = vst [vmem:[%s7086] ss:$4 sm:$0xff] %v5086
    %8059 = vst [vmem:[%s7088] ss:$4 sm:$0xff] %v5090
    %v8060 = vld.sshfl [vmem:[#allocation1] sm:$0xff pattern:$0x73625140]
    %v8061 = vld.sshfl [vmem:[#allocation1 + $0x20] sm:$0xff pattern:$0x73625140]
    %8062 = vst [vmem:[#allocation1] ss:$4 sm:$0xff] %v5094
    %8063 = vst [vmem:[%s7076] ss:$4 sm:$0xff] %v5098
    %8064 = vst [vmem:[%s7078] ss:$4 sm:$0xff] %v5102
    %8065 = vst [vmem:[%s7080] ss:$4 sm:$0xff] %v5106
    %8066 = vst [vmem:[%s7082] ss:$4 sm:$0xff] %v5110
    %8067 = vst [vmem:[%s7084] ss:$4 sm:$0xff] %v5114
    %8068 = vst [vmem:[%s7086] ss:$4 sm:$0xff] %v5118
    %8069 = vst [vmem:[%s7088] ss:$4 sm:$0xff] %v5122
    %v8070 = vld.sshfl [vmem:[#allocation1] sm:$0xff pattern:$0x73625140]
    %v8071 = vld.sshfl [vmem:[#allocation1 + $0x20] sm:$0xff pattern:$0x73625140]
    %8072 = vst [vmem:[#allocation1] ss:$4 sm:$0xff] %v5126
    %8073 = vst [vmem:[%s7076] ss:$4 sm:$0xff] %v5130
    %8074 = vst [vmem:[%s7078] ss:$4 sm:$0xff] %v5134
    %8075 = vst [vmem:[%s7080] ss:$4 sm:$0xff] %v5138
    %8076 = vst [vmem:[%s7082] ss:$4 sm:$0xff] %v5142
    %8077 = vst [vmem:[%s7084] ss:$4 sm:$0xff] %v5146
    %8078 = vst [vmem:[%s7086] ss:$4 sm:$0xff] %v5150
    %8079 = vst [vmem:[%s7088] ss:$4 sm:$0xff] %v5154
    %v8080 = vld.sshfl [vmem:[#allocation1] sm:$0xff pattern:$0x73625140]
    %v8081 = vld.sshfl [vmem:[#allocation1 + $0x20] sm:$0xff pattern:$0x73625140]
    %8082 = vst [vmem:[#allocation1] ss:$4 sm:$0xff] %v5158
    %8083 = vst [vmem:[%s7076] ss:$4 sm:$0xff] %v5162
    %8084 = vst [vmem:[%s7078] ss:$4 sm:$0xff] %v5166
    %8085 = vst [vmem:[%s7080] ss:$4 sm:$0xff] %v5170
    %8086 = vst [vmem:[%s7082] ss:$4 sm:$0xff] %v5174
    %8087 = vst [vmem:[%s7084] ss:$4 sm:$0xff] %v5178
    %8088 = vst [vmem:[%s7086] ss:$4 sm:$0xff] %v5182
    %8089 = vst [vmem:[%s7088] ss:$4 sm:$0xff] %v5186
    %v8090 = vld.sshfl [vmem:[#allocation1] sm:$0xff pattern:$0x73625140]
    %v8091 = vld.sshfl [vmem:[#allocation1 + $0x20] sm:$0xff pattern:$0x73625140]
    %8092 = vst [vmem:[#allocation1] ss:$4 sm:$0xff] %v5190
    %8093 = vst [vmem:[%s7076] ss:$4 sm:$0xff] %v5194
    %8094 = vst [vmem:[%s7078] ss:$4 sm:$0xff] %v5198
    %8095 = vst [vmem:[%s7080] ss:$4 sm:$0xff] %v5202
    %8096 = vst [vmem:[%s7082] ss:$4 sm:$0xff] %v5206
    %8097 = vst [vmem:[%s7084] ss:$4 sm:$0xff] %v5210
    %8098 = vst [vmem:[%s7086] ss:$4 sm:$0xff] %v5214
    %8099 = vst [vmem:[%s7088] ss:$4 sm:$0xff] %v5218
    %v8100 = vld.sshfl [vmem:[#allocation1] sm:$0xff pattern:$0x73625140]
    %v8101 = vld.sshfl [vmem:[#allocation1 + $0x20] sm:$0xff pattern:$0x73625140]
    %8102 = vst [vmem:[#allocation1] ss:$4 sm:$0xff] %v5222
    %8103 = vst [vmem:[%s7076] ss:$4 sm:$0xff] %v5226
    %8104 = vst [vmem:[%s7078] ss:$4 sm:$0xff] %v5230
    %8105 = vst [vmem:[%s7080] ss:$4 sm:$0xff] %v5234
    %8106 = vst [vmem:[%s7082] ss:$4 sm:$0xff] %v5238
    %8107 = vst [vmem:[%s7084] ss:$4 sm:$0xff] %v5242
    %8108 = vst [vmem:[%s7086] ss:$4 sm:$0xff] %v5246
    %8109 = vst [vmem:[%s7088] ss:$4 sm:$0xff] %v5250
    %v8110 = vld.sshfl [vmem:[#allocation1] sm:$0xff pattern:$0x73625140]
    %v8111 = vld.sshfl [vmem:[#allocation1 + $0x20] sm:$0xff pattern:$0x73625140]
    %8112 = vst [vmem:[#allocation1] ss:$4 sm:$0xff] %v5254
    %8113 = vst [vmem:[%s7076] ss:$4 sm:$0xff] %v5258
    %8114 = vst [vmem:[%s7078] ss:$4 sm:$0xff] %v5262
    %8115 = vst [vmem:[%s7080] ss:$4 sm:$0xff] %v5266
    %8116 = vst [vmem:[%s7082] ss:$4 sm:$0xff] %v5270
    %8117 = vst [vmem:[%s7084] ss:$4 sm:$0xff] %v5274
    %8118 = vst [vmem:[%s7086] ss:$4 sm:$0xff] %v5278
    %8119 = vst [vmem:[%s7088] ss:$4 sm:$0xff] %v5282
    %v8120 = vld.sshfl [vmem:[#allocation1] sm:$0xff pattern:$0x73625140]
    %v8121 = vld.sshfl [vmem:[#allocation1 + $0x20] sm:$0xff pattern:$0x73625140]
    %8122 = vst [vmem:[#allocation1] ss:$4 sm:$0xff] %v5286
    %8123 = vst [vmem:[%s7076] ss:$4 sm:$0xff] %v5290
    %8124 = vst [vmem:[%s7078] ss:$4 sm:$0xff] %v5294
    %8125 = vst [vmem:[%s7080] ss:$4 sm:$0xff] %v5298
    %8126 = vst [vmem:[%s7082] ss:$4 sm:$0xff] %v5302
    %8127 = vst [vmem:[%s7084] ss:$4 sm:$0xff] %v5306
    %8128 = vst [vmem:[%s7086] ss:$4 sm:$0xff] %v5310
    %8129 = vst [vmem:[%s7088] ss:$4 sm:$0xff] %v5314
    %v8130 = vld.sshfl [vmem:[#allocation1] sm:$0xff pattern:$0x73625140]
    %v8131 = vld.sshfl [vmem:[#allocation1 + $0x20] sm:$0xff pattern:$0x73625140]
    %8132 = vst [vmem:[#allocation1] ss:$4 sm:$0xff] %v5318
    %8133 = vst [vmem:[%s7076] ss:$4 sm:$0xff] %v5322
    %8134 = vst [vmem:[%s7078] ss:$4 sm:$0xff] %v5326
    %8135 = vst [vmem:[%s7080] ss:$4 sm:$0xff] %v5330
    %8136 = vst [vmem:[%s7082] ss:$4 sm:$0xff] %v5334
    %8137 = vst [vmem:[%s7084] ss:$4 sm:$0xff] %v5338
    %8138 = vst [vmem:[%s7086] ss:$4 sm:$0xff] %v5342
    %8139 = vst [vmem:[%s7088] ss:$4 sm:$0xff] %v5346
    %v8140 = vld.sshfl [vmem:[#allocation1] sm:$0xff pattern:$0x73625140]
    %v8141 = vld.sshfl [vmem:[#allocation1 + $0x20] sm:$0xff pattern:$0x73625140]
    %8142 = vst [vmem:[#allocation1] ss:$4 sm:$0xff] %v5350
    %8143 = vst [vmem:[%s7076] ss:$4 sm:$0xff] %v5354
    %8144 = vst [vmem:[%s7078] ss:$4 sm:$0xff] %v5358
    %8145 = vst [vmem:[%s7080] ss:$4 sm:$0xff] %v5362
    %8146 = vst [vmem:[%s7082] ss:$4 sm:$0xff] %v5366
    %8147 = vst [vmem:[%s7084] ss:$4 sm:$0xff] %v5370
    %8148 = vst [vmem:[%s7086] ss:$4 sm:$0xff] %v5374
    %8149 = vst [vmem:[%s7088] ss:$4 sm:$0xff] %v5378
    %v8150 = vld.sshfl [vmem:[#allocation1] sm:$0xff pattern:$0x73625140]
    %v8151 = vld.sshfl [vmem:[#allocation1 + $0x20] sm:$0xff pattern:$0x73625140]
    %8152 = vst [vmem:[#allocation1] ss:$4 sm:$0xff] %v5382
    %8153 = vst [vmem:[%s7076] ss:$4 sm:$0xff] %v5386
    %8154 = vst [vmem:[%s7078] ss:$4 sm:$0xff] %v5390
    %8155 = vst [vmem:[%s7080] ss:$4 sm:$0xff] %v5394
    %8156 = vst [vmem:[%s7082] ss:$4 sm:$0xff] %v5398
    %8157 = vst [vmem:[%s7084] ss:$4 sm:$0xff] %v5402
    %8158 = vst [vmem:[%s7086] ss:$4 sm:$0xff] %v5406
    %8159 = vst [vmem:[%s7088] ss:$4 sm:$0xff] %v5410
    %v8160 = vld.sshfl [vmem:[#allocation1] sm:$0xff pattern:$0x73625140]
    %v8161 = vld.sshfl [vmem:[#allocation1 + $0x20] sm:$0xff pattern:$0x73625140]
    %8162 = vst [vmem:[#allocation1] ss:$4 sm:$0xff] %v5414
    %8163 = vst [vmem:[%s7076] ss:$4 sm:$0xff] %v5418
    %8164 = vst [vmem:[%s7078] ss:$4 sm:$0xff] %v5422
    %8165 = vst [vmem:[%s7080] ss:$4 sm:$0xff] %v5426
    %8166 = vst [vmem:[%s7082] ss:$4 sm:$0xff] %v5430
    %8167 = vst [vmem:[%s7084] ss:$4 sm:$0xff] %v5434
    %8168 = vst [vmem:[%s7086] ss:$4 sm:$0xff] %v5438
    %8169 = vst [vmem:[%s7088] ss:$4 sm:$0xff] %v5442
    %v8170 = vld.sshfl [vmem:[#allocation1] sm:$0xff pattern:$0x73625140]
    %v8171 = vld.sshfl [vmem:[#allocation1 + $0x20] sm:$0xff pattern:$0x73625140]
    %8172 = vst [vmem:[#allocation1] ss:$4 sm:$0xff] %v5446
    %8173 = vst [vmem:[%s7076] ss:$4 sm:$0xff] %v5450
    %8174 = vst [vmem:[%s7078] ss:$4 sm:$0xff] %v5454
    %8175 = vst [vmem:[%s7080] ss:$4 sm:$0xff] %v5458
    %8176 = vst [vmem:[%s7082] ss:$4 sm:$0xff] %v5462
    %8177 = vst [vmem:[%s7084] ss:$4 sm:$0xff] %v5466
    %8178 = vst [vmem:[%s7086] ss:$4 sm:$0xff] %v5470
    %8179 = vst [vmem:[%s7088] ss:$4 sm:$0xff] %v5474
    %v8180 = vld.sshfl [vmem:[#allocation1] sm:$0xff pattern:$0x73625140]
    %v8181 = vld.sshfl [vmem:[#allocation1 + $0x20] sm:$0xff pattern:$0x73625140]
    %8182 = vst [vmem:[#allocation1] ss:$4 sm:$0xff] %v5478
    %8183 = vst [vmem:[%s7076] ss:$4 sm:$0xff] %v5482
    %8184 = vst [vmem:[%s7078] ss:$4 sm:$0xff] %v5486
    %8185 = vst [vmem:[%s7080] ss:$4 sm:$0xff] %v5490
    %8186 = vst [vmem:[%s7082] ss:$4 sm:$0xff] %v5494
    %8187 = vst [vmem:[%s7084] ss:$4 sm:$0xff] %v5498
    %8188 = vst [vmem:[%s7086] ss:$4 sm:$0xff] %v5502
    %8189 = vst [vmem:[%s7088] ss:$4 sm:$0xff] %v5506
    %v8190 = vld.sshfl [vmem:[#allocation1] sm:$0xff pattern:$0x73625140]
    %v8191 = vld.sshfl [vmem:[#allocation1 + $0x20] sm:$0xff pattern:$0x73625140]
    %8192 = vst [vmem:[#allocation1] ss:$4 sm:$0xff] %v5510
    %8193 = vst [vmem:[%s7076] ss:$4 sm:$0xff] %v5514
    %8194 = vst [vmem:[%s7078] ss:$4 sm:$0xff] %v5518
    %8195 = vst [vmem:[%s7080] ss:$4 sm:$0xff] %v5522
    %8196 = vst [vmem:[%s7082] ss:$4 sm:$0xff] %v5526
    %8197 = vst [vmem:[%s7084] ss:$4 sm:$0xff] %v5530
    %8198 = vst [vmem:[%s7086] ss:$4 sm:$0xff] %v5534
    %8199 = vst [vmem:[%s7088] ss:$4 sm:$0xff] %v5538
    %v8200 = vld.sshfl [vmem:[#allocation1] sm:$0xff pattern:$0x73625140]
    %v8201 = vld.sshfl [vmem:[#allocation1 + $0x20] sm:$0xff pattern:$0x73625140]
    %8202 = vst [vmem:[#allocation1] ss:$4 sm:$0xff] %v5542
    %8203 = vst [vmem:[%s7076] ss:$4 sm:$0xff] %v5546
    %8204 = vst [vmem:[%s7078] ss:$4 sm:$0xff] %v5550
    %8205 = vst [vmem:[%s7080] ss:$4 sm:$0xff] %v5554
    %8206 = vst [vmem:[%s7082] ss:$4 sm:$0xff] %v5558
    %8207 = vst [vmem:[%s7084] ss:$4 sm:$0xff] %v5562
    %8208 = vst [vmem:[%s7086] ss:$4 sm:$0xff] %v5566
    %8209 = vst [vmem:[%s7088] ss:$4 sm:$0xff] %v5570
    %v8210 = vld.sshfl [vmem:[#allocation1] sm:$0xff pattern:$0x73625140]
    %v8211 = vld.sshfl [vmem:[#allocation1 + $0x20] sm:$0xff pattern:$0x73625140]
    %8212 = vst [vmem:[#allocation1] ss:$4 sm:$0xff] %v5574
    %8213 = vst [vmem:[%s7076] ss:$4 sm:$0xff] %v5578
    %8214 = vst [vmem:[%s7078] ss:$4 sm:$0xff] %v5582
    %8215 = vst [vmem:[%s7080] ss:$4 sm:$0xff] %v5586
    %8216 = vst [vmem:[%s7082] ss:$4 sm:$0xff] %v5590
    %8217 = vst [vmem:[%s7084] ss:$4 sm:$0xff] %v5594
    %8218 = vst [vmem:[%s7086] ss:$4 sm:$0xff] %v5598
    %8219 = vst [vmem:[%s7088] ss:$4 sm:$0xff] %v5602
    %v8220 = vld.sshfl [vmem:[#allocation1] sm:$0xff pattern:$0x73625140]
    %v8221 = vld.sshfl [vmem:[#allocation1 + $0x20] sm:$0xff pattern:$0x73625140]
    %8222 = vst [vmem:[#allocation1] ss:$4 sm:$0xff] %v5606
    %8223 = vst [vmem:[%s7076] ss:$4 sm:$0xff] %v5610
    %8224 = vst [vmem:[%s7078] ss:$4 sm:$0xff] %v5614
    %8225 = vst [vmem:[%s7080] ss:$4 sm:$0xff] %v5618
    %8226 = vst [vmem:[%s7082] ss:$4 sm:$0xff] %v5622
    %8227 = vst [vmem:[%s7084] ss:$4 sm:$0xff] %v5626
    %8228 = vst [vmem:[%s7086] ss:$4 sm:$0xff] %v5630
    %8229 = vst [vmem:[%s7088] ss:$4 sm:$0xff] %v5634
    %v8230 = vld.sshfl [vmem:[#allocation1] sm:$0xff pattern:$0x73625140]
    %v8231 = vld.sshfl [vmem:[#allocation1 + $0x20] sm:$0xff pattern:$0x73625140]
    %8232 = vst [vmem:[#allocation1] ss:$4 sm:$0xff] %v5638
    %8233 = vst [vmem:[%s7076] ss:$4 sm:$0xff] %v5642
    %8234 = vst [vmem:[%s7078] ss:$4 sm:$0xff] %v5646
    %8235 = vst [vmem:[%s7080] ss:$4 sm:$0xff] %v5650
    %8236 = vst [vmem:[%s7082] ss:$4 sm:$0xff] %v5654
    %8237 = vst [vmem:[%s7084] ss:$4 sm:$0xff] %v5658
    %8238 = vst [vmem:[%s7086] ss:$4 sm:$0xff] %v5662
    %8239 = vst [vmem:[%s7088] ss:$4 sm:$0xff] %v5666
    %v8240 = vld.sshfl [vmem:[#allocation1] sm:$0xff pattern:$0x73625140]
    %v8241 = vld.sshfl [vmem:[#allocation1 + $0x20] sm:$0xff pattern:$0x73625140]
    %8242 = vst [vmem:[#allocation1] ss:$4 sm:$0xff] %v5670
    %8243 = vst [vmem:[%s7076] ss:$4 sm:$0xff] %v5674
    %8244 = vst [vmem:[%s7078] ss:$4 sm:$0xff] %v5678
    %8245 = vst [vmem:[%s7080] ss:$4 sm:$0xff] %v5682
    %8246 = vst [vmem:[%s7082] ss:$4 sm:$0xff] %v5686
    %8247 = vst [vmem:[%s7084] ss:$4 sm:$0xff] %v5690
    %8248 = vst [vmem:[%s7086] ss:$4 sm:$0xff] %v5694
    %8249 = vst [vmem:[%s7088] ss:$4 sm:$0xff] %v5698
    %v8250 = vld.sshfl [vmem:[#allocation1] sm:$0xff pattern:$0x73625140]
    %v8251 = vld.sshfl [vmem:[#allocation1 + $0x20] sm:$0xff pattern:$0x73625140]
    %8252 = vst [vmem:[#allocation1] ss:$4 sm:$0xff] %v5702
    %8253 = vst [vmem:[%s7076] ss:$4 sm:$0xff] %v5706
    %8254 = vst [vmem:[%s7078] ss:$4 sm:$0xff] %v5710
    %8255 = vst [vmem:[%s7080] ss:$4 sm:$0xff] %v5714
    %8256 = vst [vmem:[%s7082] ss:$4 sm:$0xff] %v5718
    %8257 = vst [vmem:[%s7084] ss:$4 sm:$0xff] %v5722
    %8258 = vst [vmem:[%s7086] ss:$4 sm:$0xff] %v5726
    %8259 = vst [vmem:[%s7088] ss:$4 sm:$0xff] %v5730
    %v8260 = vld.sshfl [vmem:[#allocation1] sm:$0xff pattern:$0x73625140]
    %v8261 = vld.sshfl [vmem:[#allocation1 + $0x20] sm:$0xff pattern:$0x73625140]
    %8262 = vst [vmem:[#allocation1] ss:$4 sm:$0xff] %v5734
    %8263 = vst [vmem:[%s7076] ss:$4 sm:$0xff] %v5738
    %8264 = vst [vmem:[%s7078] ss:$4 sm:$0xff] %v5742
    %8265 = vst [vmem:[%s7080] ss:$4 sm:$0xff] %v5746
    %8266 = vst [vmem:[%s7082] ss:$4 sm:$0xff] %v5750
    %8267 = vst [vmem:[%s7084] ss:$4 sm:$0xff] %v5754
    %8268 = vst [vmem:[%s7086] ss:$4 sm:$0xff] %v5758
    %8269 = vst [vmem:[%s7088] ss:$4 sm:$0xff] %v5762
    %v8270 = vld.sshfl [vmem:[#allocation1] sm:$0xff pattern:$0x73625140]
    %v8271 = vld.sshfl [vmem:[#allocation1 + $0x20] sm:$0xff pattern:$0x73625140]
    %8272 = vst [vmem:[#allocation1] ss:$4 sm:$0xff] %v5766
    %8273 = vst [vmem:[%s7076] ss:$4 sm:$0xff] %v5770
    %8274 = vst [vmem:[%s7078] ss:$4 sm:$0xff] %v5774
    %8275 = vst [vmem:[%s7080] ss:$4 sm:$0xff] %v5778
    %8276 = vst [vmem:[%s7082] ss:$4 sm:$0xff] %v5782
    %8277 = vst [vmem:[%s7084] ss:$4 sm:$0xff] %v5786
    %8278 = vst [vmem:[%s7086] ss:$4 sm:$0xff] %v5790
    %8279 = vst [vmem:[%s7088] ss:$4 sm:$0xff] %v5794
    %v8280 = vld.sshfl [vmem:[#allocation1] sm:$0xff pattern:$0x73625140]
    %v8281 = vld.sshfl [vmem:[#allocation1 + $0x20] sm:$0xff pattern:$0x73625140]
    %8282 = vst [vmem:[#allocation1] ss:$4 sm:$0xff] %v5798
    %8283 = vst [vmem:[%s7076] ss:$4 sm:$0xff] %v5802
    %8284 = vst [vmem:[%s7078] ss:$4 sm:$0xff] %v5806
    %8285 = vst [vmem:[%s7080] ss:$4 sm:$0xff] %v5810
    %8286 = vst [vmem:[%s7082] ss:$4 sm:$0xff] %v5814
    %8287 = vst [vmem:[%s7084] ss:$4 sm:$0xff] %v5818
    %8288 = vst [vmem:[%s7086] ss:$4 sm:$0xff] %v5822
    %8289 = vst [vmem:[%s7088] ss:$4 sm:$0xff] %v5826
    %v8290 = vld.sshfl [vmem:[#allocation1] sm:$0xff pattern:$0x73625140]
    %v8291 = vld.sshfl [vmem:[#allocation1 + $0x20] sm:$0xff pattern:$0x73625140]
    %8292 = vst [vmem:[#allocation1] ss:$4 sm:$0xff] %v5830
    %8293 = vst [vmem:[%s7076] ss:$4 sm:$0xff] %v5834
    %8294 = vst [vmem:[%s7078] ss:$4 sm:$0xff] %v5838
    %8295 = vst [vmem:[%s7080] ss:$4 sm:$0xff] %v5842
    %8296 = vst [vmem:[%s7082] ss:$4 sm:$0xff] %v5846
    %8297 = vst [vmem:[%s7084] ss:$4 sm:$0xff] %v5850
    %8298 = vst [vmem:[%s7086] ss:$4 sm:$0xff] %v5854
    %8299 = vst [vmem:[%s7088] ss:$4 sm:$0xff] %v5858
    %v8300 = vld.sshfl [vmem:[#allocation1] sm:$0xff pattern:$0x73625140]
    %v8301 = vld.sshfl [vmem:[#allocation1 + $0x20] sm:$0xff pattern:$0x73625140]
    %8302 = vst [vmem:[#allocation1] ss:$4 sm:$0xff] %v5862
    %8303 = vst [vmem:[%s7076] ss:$4 sm:$0xff] %v5866
    %8304 = vst [vmem:[%s7078] ss:$4 sm:$0xff] %v5870
    %8305 = vst [vmem:[%s7080] ss:$4 sm:$0xff] %v5874
    %8306 = vst [vmem:[%s7082] ss:$4 sm:$0xff] %v5878
    %8307 = vst [vmem:[%s7084] ss:$4 sm:$0xff] %v5882
    %8308 = vst [vmem:[%s7086] ss:$4 sm:$0xff] %v5886
    %8309 = vst [vmem:[%s7088] ss:$4 sm:$0xff] %v5890
    %v8310 = vld.sshfl [vmem:[#allocation1] sm:$0xff pattern:$0x73625140]
    %v8311 = vld.sshfl [vmem:[#allocation1 + $0x20] sm:$0xff pattern:$0x73625140]
    %8312 = vst [vmem:[#allocation1] ss:$4 sm:$0xff] %v5894
    %8313 = vst [vmem:[%s7076] ss:$4 sm:$0xff] %v5898
    %8314 = vst [vmem:[%s7078] ss:$4 sm:$0xff] %v5902
    %8315 = vst [vmem:[%s7080] ss:$4 sm:$0xff] %v5906
    %8316 = vst [vmem:[%s7082] ss:$4 sm:$0xff] %v5910
    %8317 = vst [vmem:[%s7084] ss:$4 sm:$0xff] %v5914
    %8318 = vst [vmem:[%s7086] ss:$4 sm:$0xff] %v5918
    %8319 = vst [vmem:[%s7088] ss:$4 sm:$0xff] %v5922
    %v8320 = vld.sshfl [vmem:[#allocation1] sm:$0xff pattern:$0x73625140]
    %v8321 = vld.sshfl [vmem:[#allocation1 + $0x20] sm:$0xff pattern:$0x73625140]
    %8322 = vst [vmem:[#allocation1] ss:$4 sm:$0xff] %v5926
    %8323 = vst [vmem:[%s7076] ss:$4 sm:$0xff] %v5930
    %8324 = vst [vmem:[%s7078] ss:$4 sm:$0xff] %v5934
    %8325 = vst [vmem:[%s7080] ss:$4 sm:$0xff] %v5938
    %8326 = vst [vmem:[%s7082] ss:$4 sm:$0xff] %v5942
    %8327 = vst [vmem:[%s7084] ss:$4 sm:$0xff] %v5946
    %8328 = vst [vmem:[%s7086] ss:$4 sm:$0xff] %v5950
    %8329 = vst [vmem:[%s7088] ss:$4 sm:$0xff] %v5954
    %v8330 = vld.sshfl [vmem:[#allocation1] sm:$0xff pattern:$0x73625140]
    %v8331 = vld.sshfl [vmem:[#allocation1 + $0x20] sm:$0xff pattern:$0x73625140]
    %8332 = vst [vmem:[#allocation1] ss:$4 sm:$0xff] %v5958
    %8333 = vst [vmem:[%s7076] ss:$4 sm:$0xff] %v5962
    %8334 = vst [vmem:[%s7078] ss:$4 sm:$0xff] %v5966
    %8335 = vst [vmem:[%s7080] ss:$4 sm:$0xff] %v5970
    %8336 = vst [vmem:[%s7082] ss:$4 sm:$0xff] %v5974
    %8337 = vst [vmem:[%s7084] ss:$4 sm:$0xff] %v5978
    %8338 = vst [vmem:[%s7086] ss:$4 sm:$0xff] %v5982
    %8339 = vst [vmem:[%s7088] ss:$4 sm:$0xff] %v5986
    %v8340 = vld.sshfl [vmem:[#allocation1] sm:$0xff pattern:$0x73625140]
    %v8341 = vld.sshfl [vmem:[#allocation1 + $0x20] sm:$0xff pattern:$0x73625140]
    %8342 = vst [vmem:[#allocation1] ss:$4 sm:$0xff] %v5990
    %8343 = vst [vmem:[%s7076] ss:$4 sm:$0xff] %v5994
    %8344 = vst [vmem:[%s7078] ss:$4 sm:$0xff] %v5998
    %8345 = vst [vmem:[%s7080] ss:$4 sm:$0xff] %v6002
    %8346 = vst [vmem:[%s7082] ss:$4 sm:$0xff] %v6006
    %8347 = vst [vmem:[%s7084] ss:$4 sm:$0xff] %v6010
    %8348 = vst [vmem:[%s7086] ss:$4 sm:$0xff] %v6014
    %8349 = vst [vmem:[%s7088] ss:$4 sm:$0xff] %v6018
    %v8350 = vld.sshfl [vmem:[#allocation1] sm:$0xff pattern:$0x73625140]
    %v8351 = vld.sshfl [vmem:[#allocation1 + $0x20] sm:$0xff pattern:$0x73625140]
    %8352 = vst [vmem:[#allocation1] ss:$4 sm:$0xff] %v6022
    %8353 = vst [vmem:[%s7076] ss:$4 sm:$0xff] %v6026
    %8354 = vst [vmem:[%s7078] ss:$4 sm:$0xff] %v6030
    %8355 = vst [vmem:[%s7080] ss:$4 sm:$0xff] %v6034
    %8356 = vst [vmem:[%s7082] ss:$4 sm:$0xff] %v6038
    %8357 = vst [vmem:[%s7084] ss:$4 sm:$0xff] %v6042
    %8358 = vst [vmem:[%s7086] ss:$4 sm:$0xff] %v6046
    %8359 = vst [vmem:[%s7088] ss:$4 sm:$0xff] %v6050
    %v8360 = vld.sshfl [vmem:[#allocation1] sm:$0xff pattern:$0x73625140]
    %v8361 = vld.sshfl [vmem:[#allocation1 + $0x20] sm:$0xff pattern:$0x73625140]
    %8362 = vst [vmem:[#allocation1] ss:$4 sm:$0xff] %v6054
    %8363 = vst [vmem:[%s7076] ss:$4 sm:$0xff] %v6058
    %8364 = vst [vmem:[%s7078] ss:$4 sm:$0xff] %v6062
    %8365 = vst [vmem:[%s7080] ss:$4 sm:$0xff] %v6066
    %8366 = vst [vmem:[%s7082] ss:$4 sm:$0xff] %v6070
    %8367 = vst [vmem:[%s7084] ss:$4 sm:$0xff] %v6074
    %8368 = vst [vmem:[%s7086] ss:$4 sm:$0xff] %v6078
    %8369 = vst [vmem:[%s7088] ss:$4 sm:$0xff] %v6082
    %v8370 = vld.sshfl [vmem:[#allocation1] sm:$0xff pattern:$0x73625140]
    %v8371 = vld.sshfl [vmem:[#allocation1 + $0x20] sm:$0xff pattern:$0x73625140]
    %8372 = vst [vmem:[#allocation1] ss:$4 sm:$0xff] %v6086
    %8373 = vst [vmem:[%s7076] ss:$4 sm:$0xff] %v6090
    %8374 = vst [vmem:[%s7078] ss:$4 sm:$0xff] %v6094
    %8375 = vst [vmem:[%s7080] ss:$4 sm:$0xff] %v6098
    %8376 = vst [vmem:[%s7082] ss:$4 sm:$0xff] %v6102
    %8377 = vst [vmem:[%s7084] ss:$4 sm:$0xff] %v6106
    %8378 = vst [vmem:[%s7086] ss:$4 sm:$0xff] %v6110
    %8379 = vst [vmem:[%s7088] ss:$4 sm:$0xff] %v6114
    %v8380 = vld.sshfl [vmem:[#allocation1] sm:$0xff pattern:$0x73625140]
    %v8381 = vld.sshfl [vmem:[#allocation1 + $0x20] sm:$0xff pattern:$0x73625140]
    %8382 = vst [vmem:[#allocation1] ss:$4 sm:$0xff] %v6118
    %8383 = vst [vmem:[%s7076] ss:$4 sm:$0xff] %v6122
    %8384 = vst [vmem:[%s7078] ss:$4 sm:$0xff] %v6126
    %8385 = vst [vmem:[%s7080] ss:$4 sm:$0xff] %v6130
    %8386 = vst [vmem:[%s7082] ss:$4 sm:$0xff] %v6134
    %8387 = vst [vmem:[%s7084] ss:$4 sm:$0xff] %v6138
    %8388 = vst [vmem:[%s7086] ss:$4 sm:$0xff] %v6142
    %8389 = vst [vmem:[%s7088] ss:$4 sm:$0xff] %v6146
    %v8390 = vld.sshfl [vmem:[#allocation1] sm:$0xff pattern:$0x73625140]
    %v8391 = vld.sshfl [vmem:[#allocation1 + $0x20] sm:$0xff pattern:$0x73625140]
    %8392 = vst [vmem:[#allocation1] ss:$4 sm:$0xff] %v6150
    %8393 = vst [vmem:[%s7076] ss:$4 sm:$0xff] %v6154
    %8394 = vst [vmem:[%s7078] ss:$4 sm:$0xff] %v6158
    %8395 = vst [vmem:[%s7080] ss:$4 sm:$0xff] %v6162
    %8396 = vst [vmem:[%s7082] ss:$4 sm:$0xff] %v6166
    %8397 = vst [vmem:[%s7084] ss:$4 sm:$0xff] %v6170
    %8398 = vst [vmem:[%s7086] ss:$4 sm:$0xff] %v6174
    %8399 = vst [vmem:[%s7088] ss:$4 sm:$0xff] %v6178
    %v8400 = vld.sshfl [vmem:[#allocation1] sm:$0xff pattern:$0x73625140]
    %v8401 = vld.sshfl [vmem:[#allocation1 + $0x20] sm:$0xff pattern:$0x73625140]
    %8402 = vst [vmem:[#allocation1] ss:$4 sm:$0xff] %v6182
    %8403 = vst [vmem:[%s7076] ss:$4 sm:$0xff] %v6186
    %8404 = vst [vmem:[%s7078] ss:$4 sm:$0xff] %v6190
    %8405 = vst [vmem:[%s7080] ss:$4 sm:$0xff] %v6194
    %8406 = vst [vmem:[%s7082] ss:$4 sm:$0xff] %v6198
    %8407 = vst [vmem:[%s7084] ss:$4 sm:$0xff] %v6202
    %8408 = vst [vmem:[%s7086] ss:$4 sm:$0xff] %v6206
    %8409 = vst [vmem:[%s7088] ss:$4 sm:$0xff] %v6210
    %v8410 = vld.sshfl [vmem:[#allocation1] sm:$0xff pattern:$0x73625140]
    %v8411 = vld.sshfl [vmem:[#allocation1 + $0x20] sm:$0xff pattern:$0x73625140]
    %8412 = vst [vmem:[#allocation1] ss:$4 sm:$0xff] %v6214
    %8413 = vst [vmem:[%s7076] ss:$4 sm:$0xff] %v6218
    %8414 = vst [vmem:[%s7078] ss:$4 sm:$0xff] %v6222
    %8415 = vst [vmem:[%s7080] ss:$4 sm:$0xff] %v6226
    %8416 = vst [vmem:[%s7082] ss:$4 sm:$0xff] %v6230
    %8417 = vst [vmem:[%s7084] ss:$4 sm:$0xff] %v6234
    %8418 = vst [vmem:[%s7086] ss:$4 sm:$0xff] %v6238
    %8419 = vst [vmem:[%s7088] ss:$4 sm:$0xff] %v6242
    %v8420 = vld.sshfl [vmem:[#allocation1] sm:$0xff pattern:$0x73625140]
    %v8421 = vld.sshfl [vmem:[#allocation1 + $0x20] sm:$0xff pattern:$0x73625140]
    %8422 = vst [vmem:[#allocation1] ss:$4 sm:$0xff] %v6246
    %8423 = vst [vmem:[%s7076] ss:$4 sm:$0xff] %v6250
    %8424 = vst [vmem:[%s7078] ss:$4 sm:$0xff] %v6254
    %8425 = vst [vmem:[%s7080] ss:$4 sm:$0xff] %v6258
    %8426 = vst [vmem:[%s7082] ss:$4 sm:$0xff] %v6262
    %8427 = vst [vmem:[%s7084] ss:$4 sm:$0xff] %v6266
    %8428 = vst [vmem:[%s7086] ss:$4 sm:$0xff] %v6270
    %8429 = vst [vmem:[%s7088] ss:$4 sm:$0xff] %v6274
    %v8430 = vld.sshfl [vmem:[#allocation1] sm:$0xff pattern:$0x73625140]
    %v8431 = vld.sshfl [vmem:[#allocation1 + $0x20] sm:$0xff pattern:$0x73625140]
    %8432 = vst [vmem:[#allocation1] ss:$4 sm:$0xff] %v6278
    %8433 = vst [vmem:[%s7076] ss:$4 sm:$0xff] %v6282
    %8434 = vst [vmem:[%s7078] ss:$4 sm:$0xff] %v6286
    %8435 = vst [vmem:[%s7080] ss:$4 sm:$0xff] %v6290
    %8436 = vst [vmem:[%s7082] ss:$4 sm:$0xff] %v6294
    %8437 = vst [vmem:[%s7084] ss:$4 sm:$0xff] %v6298
    %8438 = vst [vmem:[%s7086] ss:$4 sm:$0xff] %v6302
    %8439 = vst [vmem:[%s7088] ss:$4 sm:$0xff] %v6306
    %v8440 = vld.sshfl [vmem:[#allocation1] sm:$0xff pattern:$0x73625140]
    %v8441 = vld.sshfl [vmem:[#allocation1 + $0x20] sm:$0xff pattern:$0x73625140]
    %8442 = vst [vmem:[#allocation1] ss:$4 sm:$0xff] %v6310
    %8443 = vst [vmem:[%s7076] ss:$4 sm:$0xff] %v6314
    %8444 = vst [vmem:[%s7078] ss:$4 sm:$0xff] %v6318
    %8445 = vst [vmem:[%s7080] ss:$4 sm:$0xff] %v6322
    %8446 = vst [vmem:[%s7082] ss:$4 sm:$0xff] %v6326
    %8447 = vst [vmem:[%s7084] ss:$4 sm:$0xff] %v6330
    %8448 = vst [vmem:[%s7086] ss:$4 sm:$0xff] %v6334
    %8449 = vst [vmem:[%s7088] ss:$4 sm:$0xff] %v6338
    %v8450 = vld.sshfl [vmem:[#allocation1] sm:$0xff pattern:$0x73625140]
    %v8451 = vld.sshfl [vmem:[#allocation1 + $0x20] sm:$0xff pattern:$0x73625140]
    %8452 = vst [vmem:[#allocation1] ss:$4 sm:$0xff] %v6342
    %8453 = vst [vmem:[%s7076] ss:$4 sm:$0xff] %v6346
    %8454 = vst [vmem:[%s7078] ss:$4 sm:$0xff] %v6350
    %8455 = vst [vmem:[%s7080] ss:$4 sm:$0xff] %v6354
    %8456 = vst [vmem:[%s7082] ss:$4 sm:$0xff] %v6358
    %8457 = vst [vmem:[%s7084] ss:$4 sm:$0xff] %v6362
    %8458 = vst [vmem:[%s7086] ss:$4 sm:$0xff] %v6366
    %8459 = vst [vmem:[%s7088] ss:$4 sm:$0xff] %v6370
    %v8460 = vld.sshfl [vmem:[#allocation1] sm:$0xff pattern:$0x73625140]
    %v8461 = vld.sshfl [vmem:[#allocation1 + $0x20] sm:$0xff pattern:$0x73625140]
    %8462 = vst [vmem:[#allocation1] ss:$4 sm:$0xff] %v6374
    %8463 = vst [vmem:[%s7076] ss:$4 sm:$0xff] %v6378
    %8464 = vst [vmem:[%s7078] ss:$4 sm:$0xff] %v6382
    %8465 = vst [vmem:[%s7080] ss:$4 sm:$0xff] %v6386
    %8466 = vst [vmem:[%s7082] ss:$4 sm:$0xff] %v6390
    %8467 = vst [vmem:[%s7084] ss:$4 sm:$0xff] %v6394
    %8468 = vst [vmem:[%s7086] ss:$4 sm:$0xff] %v6398
    %8469 = vst [vmem:[%s7088] ss:$4 sm:$0xff] %v6402
    %v8470 = vld.sshfl [vmem:[#allocation1] sm:$0xff pattern:$0x73625140]
    %v8471 = vld.sshfl [vmem:[#allocation1 + $0x20] sm:$0xff pattern:$0x73625140]
    %8472 = vst [vmem:[#allocation1] ss:$4 sm:$0xff] %v6406
    %8473 = vst [vmem:[%s7076] ss:$4 sm:$0xff] %v6410
    %8474 = vst [vmem:[%s7078] ss:$4 sm:$0xff] %v6414
    %8475 = vst [vmem:[%s7080] ss:$4 sm:$0xff] %v6418
    %8476 = vst [vmem:[%s7082] ss:$4 sm:$0xff] %v6422
    %8477 = vst [vmem:[%s7084] ss:$4 sm:$0xff] %v6426
    %8478 = vst [vmem:[%s7086] ss:$4 sm:$0xff] %v6430
    %8479 = vst [vmem:[%s7088] ss:$4 sm:$0xff] %v6434
    %v8480 = vld.sshfl [vmem:[#allocation1] sm:$0xff pattern:$0x73625140]
    %v8481 = vld.sshfl [vmem:[#allocation1 + $0x20] sm:$0xff pattern:$0x73625140]
    %8482 = vst [vmem:[#allocation1] ss:$4 sm:$0xff] %v6438
    %8483 = vst [vmem:[%s7076] ss:$4 sm:$0xff] %v6442
    %8484 = vst [vmem:[%s7078] ss:$4 sm:$0xff] %v6446
    %8485 = vst [vmem:[%s7080] ss:$4 sm:$0xff] %v6450
    %8486 = vst [vmem:[%s7082] ss:$4 sm:$0xff] %v6454
    %8487 = vst [vmem:[%s7084] ss:$4 sm:$0xff] %v6458
    %8488 = vst [vmem:[%s7086] ss:$4 sm:$0xff] %v6462
    %8489 = vst [vmem:[%s7088] ss:$4 sm:$0xff] %v6466
    %v8490 = vld.sshfl [vmem:[#allocation1] sm:$0xff pattern:$0x73625140]
    %v8491 = vld.sshfl [vmem:[#allocation1 + $0x20] sm:$0xff pattern:$0x73625140]
    %8492 = vst [vmem:[#allocation1] ss:$4 sm:$0xff] %v6470
    %8493 = vst [vmem:[%s7076] ss:$4 sm:$0xff] %v6474
    %8494 = vst [vmem:[%s7078] ss:$4 sm:$0xff] %v6478
    %8495 = vst [vmem:[%s7080] ss:$4 sm:$0xff] %v6482
    %8496 = vst [vmem:[%s7082] ss:$4 sm:$0xff] %v6486
    %8497 = vst [vmem:[%s7084] ss:$4 sm:$0xff] %v6490
    %8498 = vst [vmem:[%s7086] ss:$4 sm:$0xff] %v6494
    %8499 = vst [vmem:[%s7088] ss:$4 sm:$0xff] %v6498
    %v8500 = vld.sshfl [vmem:[#allocation1] sm:$0xff pattern:$0x73625140]
    %v8501 = vld.sshfl [vmem:[#allocation1 + $0x20] sm:$0xff pattern:$0x73625140]
    %8502 = vst [vmem:[#allocation1] ss:$4 sm:$0xff] %v6502
    %8503 = vst [vmem:[%s7076] ss:$4 sm:$0xff] %v6506
    %8504 = vst [vmem:[%s7078] ss:$4 sm:$0xff] %v6510
    %8505 = vst [vmem:[%s7080] ss:$4 sm:$0xff] %v6514
    %8506 = vst [vmem:[%s7082] ss:$4 sm:$0xff] %v6518
    %8507 = vst [vmem:[%s7084] ss:$4 sm:$0xff] %v6522
    %8508 = vst [vmem:[%s7086] ss:$4 sm:$0xff] %v6526
    %8509 = vst [vmem:[%s7088] ss:$4 sm:$0xff] %v6530
    %v8510 = vld.sshfl [vmem:[#allocation1] sm:$0xff pattern:$0x73625140]
    %v8511 = vld.sshfl [vmem:[#allocation1 + $0x20] sm:$0xff pattern:$0x73625140]
    %8512 = vst [vmem:[#allocation1] ss:$4 sm:$0xff] %v6534
    %8513 = vst [vmem:[%s7076] ss:$4 sm:$0xff] %v6538
    %8514 = vst [vmem:[%s7078] ss:$4 sm:$0xff] %v6542
    %8515 = vst [vmem:[%s7080] ss:$4 sm:$0xff] %v6546
    %8516 = vst [vmem:[%s7082] ss:$4 sm:$0xff] %v6550
    %8517 = vst [vmem:[%s7084] ss:$4 sm:$0xff] %v6554
    %8518 = vst [vmem:[%s7086] ss:$4 sm:$0xff] %v6558
    %8519 = vst [vmem:[%s7088] ss:$4 sm:$0xff] %v6562
    %v8520 = vld.sshfl [vmem:[#allocation1] sm:$0xff pattern:$0x73625140]
    %v8521 = vld.sshfl [vmem:[#allocation1 + $0x20] sm:$0xff pattern:$0x73625140]
    %8522 = vst [vmem:[#allocation1] ss:$4 sm:$0xff] %v6566
    %8523 = vst [vmem:[%s7076] ss:$4 sm:$0xff] %v6570
    %8524 = vst [vmem:[%s7078] ss:$4 sm:$0xff] %v6574
    %8525 = vst [vmem:[%s7080] ss:$4 sm:$0xff] %v6578
    %8526 = vst [vmem:[%s7082] ss:$4 sm:$0xff] %v6582
    %8527 = vst [vmem:[%s7084] ss:$4 sm:$0xff] %v6586
    %8528 = vst [vmem:[%s7086] ss:$4 sm:$0xff] %v6590
    %8529 = vst [vmem:[%s7088] ss:$4 sm:$0xff] %v6594
    %v8530 = vld.sshfl [vmem:[#allocation1] sm:$0xff pattern:$0x73625140]
    %v8531 = vld.sshfl [vmem:[#allocation1 + $0x20] sm:$0xff pattern:$0x73625140]
    %8532 = vst [vmem:[#allocation1] ss:$4 sm:$0xff] %v6598
    %8533 = vst [vmem:[%s7076] ss:$4 sm:$0xff] %v6602
    %8534 = vst [vmem:[%s7078] ss:$4 sm:$0xff] %v6606
    %8535 = vst [vmem:[%s7080] ss:$4 sm:$0xff] %v6610
    %8536 = vst [vmem:[%s7082] ss:$4 sm:$0xff] %v6614
    %8537 = vst [vmem:[%s7084] ss:$4 sm:$0xff] %v6618
    %8538 = vst [vmem:[%s7086] ss:$4 sm:$0xff] %v6622
    %8539 = vst [vmem:[%s7088] ss:$4 sm:$0xff] %v6626
    %v8540 = vld.sshfl [vmem:[#allocation1] sm:$0xff pattern:$0x73625140]
    %v8541 = vld.sshfl [vmem:[#allocation1 + $0x20] sm:$0xff pattern:$0x73625140]
    %8542 = vst [vmem:[#allocation1] ss:$4 sm:$0xff] %v6630
    %8543 = vst [vmem:[%s7076] ss:$4 sm:$0xff] %v6634
    %8544 = vst [vmem:[%s7078] ss:$4 sm:$0xff] %v6638
    %8545 = vst [vmem:[%s7080] ss:$4 sm:$0xff] %v6642
    %8546 = vst [vmem:[%s7082] ss:$4 sm:$0xff] %v6646
    %8547 = vst [vmem:[%s7084] ss:$4 sm:$0xff] %v6650
    %8548 = vst [vmem:[%s7086] ss:$4 sm:$0xff] %v6654
    %8549 = vst [vmem:[%s7088] ss:$4 sm:$0xff] %v6658
    %v8550 = vld.sshfl [vmem:[#allocation1] sm:$0xff pattern:$0x73625140]
    %v8551 = vld.sshfl [vmem:[#allocation1 + $0x20] sm:$0xff pattern:$0x73625140]
    %8552 = vst [vmem:[#allocation1] ss:$4 sm:$0xff] %v6662
    %8553 = vst [vmem:[%s7076] ss:$4 sm:$0xff] %v6666
    %8554 = vst [vmem:[%s7078] ss:$4 sm:$0xff] %v6670
    %8555 = vst [vmem:[%s7080] ss:$4 sm:$0xff] %v6674
    %8556 = vst [vmem:[%s7082] ss:$4 sm:$0xff] %v6678
    %8557 = vst [vmem:[%s7084] ss:$4 sm:$0xff] %v6682
    %8558 = vst [vmem:[%s7086] ss:$4 sm:$0xff] %v6686
    %8559 = vst [vmem:[%s7088] ss:$4 sm:$0xff] %v6690
    %v8560 = vld.sshfl [vmem:[#allocation1] sm:$0xff pattern:$0x73625140]
    %v8561 = vld.sshfl [vmem:[#allocation1 + $0x20] sm:$0xff pattern:$0x73625140]
    %8562 = vst [vmem:[#allocation1] ss:$4 sm:$0xff] %v6694
    %8563 = vst [vmem:[%s7076] ss:$4 sm:$0xff] %v6698
    %8564 = vst [vmem:[%s7078] ss:$4 sm:$0xff] %v6702
    %8565 = vst [vmem:[%s7080] ss:$4 sm:$0xff] %v6706
    %8566 = vst [vmem:[%s7082] ss:$4 sm:$0xff] %v6710
    %8567 = vst [vmem:[%s7084] ss:$4 sm:$0xff] %v6714
    %8568 = vst [vmem:[%s7086] ss:$4 sm:$0xff] %v6718
    %8569 = vst [vmem:[%s7088] ss:$4 sm:$0xff] %v6722
    %v8570 = vld.sshfl [vmem:[#allocation1] sm:$0xff pattern:$0x73625140]
    %v8571 = vld.sshfl [vmem:[#allocation1 + $0x20] sm:$0xff pattern:$0x73625140]
    %8572 = vst [vmem:[#allocation1] ss:$4 sm:$0xff] %v6726
    %8573 = vst [vmem:[%s7076] ss:$4 sm:$0xff] %v6730
    %8574 = vst [vmem:[%s7078] ss:$4 sm:$0xff] %v6734
    %8575 = vst [vmem:[%s7080] ss:$4 sm:$0xff] %v6738
    %8576 = vst [vmem:[%s7082] ss:$4 sm:$0xff] %v6742
    %8577 = vst [vmem:[%s7084] ss:$4 sm:$0xff] %v6746
    %8578 = vst [vmem:[%s7086] ss:$4 sm:$0xff] %v6750
    %8579 = vst [vmem:[%s7088] ss:$4 sm:$0xff] %v6754
    %v8580 = vld.sshfl [vmem:[#allocation1] sm:$0xff pattern:$0x73625140]
    %v8581 = vld.sshfl [vmem:[#allocation1 + $0x20] sm:$0xff pattern:$0x73625140]
    %8582 = vst [vmem:[#allocation1] ss:$4 sm:$0xff] %v6758
    %8583 = vst [vmem:[%s7076] ss:$4 sm:$0xff] %v6762
    %8584 = vst [vmem:[%s7078] ss:$4 sm:$0xff] %v6766
    %8585 = vst [vmem:[%s7080] ss:$4 sm:$0xff] %v6770
    %8586 = vst [vmem:[%s7082] ss:$4 sm:$0xff] %v6774
    %8587 = vst [vmem:[%s7084] ss:$4 sm:$0xff] %v6778
    %8588 = vst [vmem:[%s7086] ss:$4 sm:$0xff] %v6782
    %8589 = vst [vmem:[%s7088] ss:$4 sm:$0xff] %v6786
    %v8590 = vld.sshfl [vmem:[#allocation1] sm:$0xff pattern:$0x73625140]
    %v8591 = vld.sshfl [vmem:[#allocation1 + $0x20] sm:$0xff pattern:$0x73625140]
    %8592 = vst [vmem:[#allocation1] ss:$4 sm:$0xff] %v6790
    %8593 = vst [vmem:[%s7076] ss:$4 sm:$0xff] %v6794
    %8594 = vst [vmem:[%s7078] ss:$4 sm:$0xff] %v6798
    %8595 = vst [vmem:[%s7080] ss:$4 sm:$0xff] %v6802
    %8596 = vst [vmem:[%s7082] ss:$4 sm:$0xff] %v6806
    %8597 = vst [vmem:[%s7084] ss:$4 sm:$0xff] %v6810
    %8598 = vst [vmem:[%s7086] ss:$4 sm:$0xff] %v6814
    %8599 = vst [vmem:[%s7088] ss:$4 sm:$0xff] %v6818
    %v8600 = vld.sshfl [vmem:[#allocation1] sm:$0xff pattern:$0x73625140]
    %v8601 = vld.sshfl [vmem:[#allocation1 + $0x20] sm:$0xff pattern:$0x73625140]
    %8602 = vst [vmem:[#allocation1] ss:$4 sm:$0xff] %v6822
    %8603 = vst [vmem:[%s7076] ss:$4 sm:$0xff] %v6826
    %8604 = vst [vmem:[%s7078] ss:$4 sm:$0xff] %v6830
    %8605 = vst [vmem:[%s7080] ss:$4 sm:$0xff] %v6834
    %8606 = vst [vmem:[%s7082] ss:$4 sm:$0xff] %v6838
    %8607 = vst [vmem:[%s7084] ss:$4 sm:$0xff] %v6842
    %8608 = vst [vmem:[%s7086] ss:$4 sm:$0xff] %v6846
    %8609 = vst [vmem:[%s7088] ss:$4 sm:$0xff] %v6850
    %v8610 = vld.sshfl [vmem:[#allocation1] sm:$0xff pattern:$0x73625140]
    %v8611 = vld.sshfl [vmem:[#allocation1 + $0x20] sm:$0xff pattern:$0x73625140]
    %8612 = vst [vmem:[#allocation1] ss:$4 sm:$0xff] %v6854
    %8613 = vst [vmem:[%s7076] ss:$4 sm:$0xff] %v6858
    %8614 = vst [vmem:[%s7078] ss:$4 sm:$0xff] %v6862
    %8615 = vst [vmem:[%s7080] ss:$4 sm:$0xff] %v6866
    %8616 = vst [vmem:[%s7082] ss:$4 sm:$0xff] %v6870
    %8617 = vst [vmem:[%s7084] ss:$4 sm:$0xff] %v6874
    %8618 = vst [vmem:[%s7086] ss:$4 sm:$0xff] %v6878
    %8619 = vst [vmem:[%s7088] ss:$4 sm:$0xff] %v6882
    %v8620 = vld.sshfl [vmem:[#allocation1] sm:$0xff pattern:$0x73625140]
    %v8621 = vld.sshfl [vmem:[#allocation1 + $0x20] sm:$0xff pattern:$0x73625140]
    %8622 = vst [vmem:[#allocation1] ss:$4 sm:$0xff] %v6886
    %8623 = vst [vmem:[%s7076] ss:$4 sm:$0xff] %v6890
    %8624 = vst [vmem:[%s7078] ss:$4 sm:$0xff] %v6894
    %8625 = vst [vmem:[%s7080] ss:$4 sm:$0xff] %v6898
    %8626 = vst [vmem:[%s7082] ss:$4 sm:$0xff] %v6902
    %8627 = vst [vmem:[%s7084] ss:$4 sm:$0xff] %v6906
    %8628 = vst [vmem:[%s7086] ss:$4 sm:$0xff] %v6910
    %8629 = vst [vmem:[%s7088] ss:$4 sm:$0xff] %v6914
    %v8630 = vld.sshfl [vmem:[#allocation1] sm:$0xff pattern:$0x73625140]
    %v8631 = vld.sshfl [vmem:[#allocation1 + $0x20] sm:$0xff pattern:$0x73625140]
    %8632 = vst [vmem:[#allocation1] ss:$4 sm:$0xff] %v6918
    %8633 = vst [vmem:[%s7076] ss:$4 sm:$0xff] %v6922
    %8634 = vst [vmem:[%s7078] ss:$4 sm:$0xff] %v6926
    %8635 = vst [vmem:[%s7080] ss:$4 sm:$0xff] %v6930
    %8636 = vst [vmem:[%s7082] ss:$4 sm:$0xff] %v6934
    %8637 = vst [vmem:[%s7084] ss:$4 sm:$0xff] %v6938
    %8638 = vst [vmem:[%s7086] ss:$4 sm:$0xff] %v6942
    %8639 = vst [vmem:[%s7088] ss:$4 sm:$0xff] %v6946
    %v8640 = vld.sshfl [vmem:[#allocation1] sm:$0xff pattern:$0x73625140]
    %v8641 = vld.sshfl [vmem:[#allocation1 + $0x20] sm:$0xff pattern:$0x73625140]
    %8642 = vst [vmem:[#allocation1] ss:$4 sm:$0xff] %v6950
    %8643 = vst [vmem:[%s7076] ss:$4 sm:$0xff] %v6954
    %8644 = vst [vmem:[%s7078] ss:$4 sm:$0xff] %v6958
    %8645 = vst [vmem:[%s7080] ss:$4 sm:$0xff] %v6962
    %8646 = vst [vmem:[%s7082] ss:$4 sm:$0xff] %v6966
    %8647 = vst [vmem:[%s7084] ss:$4 sm:$0xff] %v6970
    %8648 = vst [vmem:[%s7086] ss:$4 sm:$0xff] %v6974
    %8649 = vst [vmem:[%s7088] ss:$4 sm:$0xff] %v6978
    %v8650 = vld.sshfl [vmem:[#allocation1] sm:$0xff pattern:$0x73625140]
    %v8651 = vld.sshfl [vmem:[#allocation1 + $0x20] sm:$0xff pattern:$0x73625140]
    %8652 = vst [vmem:[#allocation1] ss:$4 sm:$0xff] %v6982
    %8653 = vst [vmem:[%s7076] ss:$4 sm:$0xff] %v6986
    %8654 = vst [vmem:[%s7078] ss:$4 sm:$0xff] %v6990
    %8655 = vst [vmem:[%s7080] ss:$4 sm:$0xff] %v6994
    %8656 = vst [vmem:[%s7082] ss:$4 sm:$0xff] %v6998
    %8657 = vst [vmem:[%s7084] ss:$4 sm:$0xff] %v7002
    %8658 = vst [vmem:[%s7086] ss:$4 sm:$0xff] %v7006
    %8659 = vst [vmem:[%s7088] ss:$4 sm:$0xff] %v7010
    %v8660 = vld.sshfl [vmem:[#allocation1] sm:$0xff pattern:$0x73625140]
    %v8661 = vld.sshfl [vmem:[#allocation1 + $0x20] sm:$0xff pattern:$0x73625140]
    %8662 = vst [vmem:[#allocation1] ss:$4 sm:$0xff] %v7014
    %8663 = vst [vmem:[%s7076] ss:$4 sm:$0xff] %v7018
    %8664 = vst [vmem:[%s7078] ss:$4 sm:$0xff] %v7022
    %8665 = vst [vmem:[%s7080] ss:$4 sm:$0xff] %v7026
    %8666 = vst [vmem:[%s7082] ss:$4 sm:$0xff] %v7030
    %8667 = vst [vmem:[%s7084] ss:$4 sm:$0xff] %v7034
    %8668 = vst [vmem:[%s7086] ss:$4 sm:$0xff] %v7038
    %8669 = vst [vmem:[%s7088] ss:$4 sm:$0xff] %v7042
    %v8670 = vld.sshfl [vmem:[#allocation1] sm:$0xff pattern:$0x73625140]
    %v8671 = vld.sshfl [vmem:[#allocation1 + $0x20] sm:$0xff pattern:$0x73625140]
    %8672 = vst [vmem:[#allocation1] ss:$4 sm:$0xff] %v7046
    %8673 = vst [vmem:[%s7076] ss:$4 sm:$0xff] %v7050
    %8674 = vst [vmem:[%s7078] ss:$4 sm:$0xff] %v7054
    %8675 = vst [vmem:[%s7080] ss:$4 sm:$0xff] %v7058
    %8676 = vst [vmem:[%s7082] ss:$4 sm:$0xff] %v7062
    %8677 = vst [vmem:[%s7084] ss:$4 sm:$0xff] %v7066
    %8678 = vst [vmem:[%s7086] ss:$4 sm:$0xff] %v7070
    %8679 = vst [vmem:[%s7088] ss:$4 sm:$0xff] %v7074
    %v8680 = vld.sshfl [vmem:[#allocation1] sm:$0xff pattern:$0x73625140]
    %v8681 = vld.sshfl [vmem:[#allocation1 + $0x20] sm:$0xff pattern:$0x73625140]
    %8682 = vset.pattern.permute.xlu0 0
    %8683 = vperm.xlu0 %8682, %v7090
    %v8684 = vpop.permute.xlu0 %8683
    %8685 = vset.pattern.permute.xlu0 0
    %8686 = vperm.xlu0 %8685, %v7091
    %v8687 = vpop.permute.xlu0 %8686
    %8688 = vset.pattern.permute.xlu0 0
    %8689 = vperm.xlu0 %8688, %v7100
    %v8690 = vpop.permute.xlu0 %8689
    %8691 = vset.pattern.permute.xlu0 0
    %8692 = vperm.xlu0 %8691, %v7101
    %v8693 = vpop.permute.xlu0 %8692
    %8694 = vset.pattern.permute.xlu0 0
    %8695 = vperm.xlu0 %8694, %v7110
    %v8696 = vpop.permute.xlu0 %8695
    %8697 = vset.pattern.permute.xlu0 0
    %8698 = vperm.xlu0 %8697, %v7111
    %v8699 = vpop.permute.xlu0 %8698
    %8700 = vset.pattern.permute.xlu0 0
    %8701 = vperm.xlu0 %8700, %v7120
    %v8702 = vpop.permute.xlu0 %8701
    %8703 = vset.pattern.permute.xlu0 0
    %8704 = vperm.xlu0 %8703, %v7121
    %v8705 = vpop.permute.xlu0 %8704
    %8706 = vset.pattern.permute.xlu0 0
    %8707 = vperm.xlu0 %8706, %v7130
    %v8708 = vpop.permute.xlu0 %8707
    %8709 = vset.pattern.permute.xlu0 0
    %8710 = vperm.xlu0 %8709, %v7131
    %v8711 = vpop.permute.xlu0 %8710
    %8712 = vset.pattern.permute.xlu0 0
    %8713 = vperm.xlu0 %8712, %v7140
    %v8714 = vpop.permute.xlu0 %8713
    %8715 = vset.pattern.permute.xlu0 0
    %8716 = vperm.xlu0 %8715, %v7141
    %v8717 = vpop.permute.xlu0 %8716
    %8718 = vset.pattern.permute.xlu0 0
    %8719 = vperm.xlu0 %8718, %v7150
    %v8720 = vpop.permute.xlu0 %8719
    %8721 = vset.pattern.permute.xlu0 0
    %8722 = vperm.xlu0 %8721, %v7151
    %v8723 = vpop.permute.xlu0 %8722
    %8724 = vset.pattern.permute.xlu0 0
    %8725 = vperm.xlu0 %8724, %v7160
    %v8726 = vpop.permute.xlu0 %8725
    %8727 = vset.pattern.permute.xlu0 0
    %8728 = vperm.xlu0 %8727, %v7161
    %v8729 = vpop.permute.xlu0 %8728
    %8730 = vset.pattern.permute.xlu0 0
    %8731 = vperm.xlu0 %8730, %v7170
    %v8732 = vpop.permute.xlu0 %8731
    %8733 = vset.pattern.permute.xlu0 0
    %8734 = vperm.xlu0 %8733, %v7171
    %v8735 = vpop.permute.xlu0 %8734
    %8736 = vset.pattern.permute.xlu0 0
    %8737 = vperm.xlu0 %8736, %v7180
    %v8738 = vpop.permute.xlu0 %8737
    %8739 = vset.pattern.permute.xlu0 0
    %8740 = vperm.xlu0 %8739, %v7181
    %v8741 = vpop.permute.xlu0 %8740
    %8742 = vset.pattern.permute.xlu0 0
    %8743 = vperm.xlu0 %8742, %v7190
    %v8744 = vpop.permute.xlu0 %8743
    %8745 = vset.pattern.permute.xlu0 0
    %8746 = vperm.xlu0 %8745, %v7191
    %v8747 = vpop.permute.xlu0 %8746
    %8748 = vset.pattern.permute.xlu0 0
    %8749 = vperm.xlu0 %8748, %v7200
    %v8750 = vpop.permute.xlu0 %8749
    %8751 = vset.pattern.permute.xlu0 0
    %8752 = vperm.xlu0 %8751, %v7201
    %v8753 = vpop.permute.xlu0 %8752
    %8754 = vset.pattern.permute.xlu0 0
    %8755 = vperm.xlu0 %8754, %v7210
    %v8756 = vpop.permute.xlu0 %8755
    %8757 = vset.pattern.permute.xlu0 0
    %8758 = vperm.xlu0 %8757, %v7211
    %v8759 = vpop.permute.xlu0 %8758
    %8760 = vset.pattern.permute.xlu0 0
    %8761 = vperm.xlu0 %8760, %v7220
    %v8762 = vpop.permute.xlu0 %8761
    %8763 = vset.pattern.permute.xlu0 0
    %8764 = vperm.xlu0 %8763, %v7221
    %v8765 = vpop.permute.xlu0 %8764
    %8766 = vset.pattern.permute.xlu0 0
    %8767 = vperm.xlu0 %8766, %v7230
    %v8768 = vpop.permute.xlu0 %8767
    %8769 = vset.pattern.permute.xlu0 0
    %8770 = vperm.xlu0 %8769, %v7231
    %v8771 = vpop.permute.xlu0 %8770
    %8772 = vset.pattern.permute.xlu0 0
    %8773 = vperm.xlu0 %8772, %v7240
    %v8774 = vpop.permute.xlu0 %8773
    %8775 = vset.pattern.permute.xlu0 0
    %8776 = vperm.xlu0 %8775, %v7241
    %v8777 = vpop.permute.xlu0 %8776
    %8778 = vset.pattern.permute.xlu0 0
    %8779 = vperm.xlu0 %8778, %v7250
    %v8780 = vpop.permute.xlu0 %8779
    %8781 = vset.pattern.permute.xlu0 0
    %8782 = vperm.xlu0 %8781, %v7251
    %v8783 = vpop.permute.xlu0 %8782
    %8784 = vset.pattern.permute.xlu0 0
    %8785 = vperm.xlu0 %8784, %v7260
    %v8786 = vpop.permute.xlu0 %8785
    %8787 = vset.pattern.permute.xlu0 0
    %8788 = vperm.xlu0 %8787, %v7261
    %v8789 = vpop.permute.xlu0 %8788
    %8790 = vset.pattern.permute.xlu0 0
    %8791 = vperm.xlu0 %8790, %v7270
    %v8792 = vpop.permute.xlu0 %8791
    %8793 = vset.pattern.permute.xlu0 0
    %8794 = vperm.xlu0 %8793, %v7271
    %v8795 = vpop.permute.xlu0 %8794
    %8796 = vset.pattern.permute.xlu0 0
    %8797 = vperm.xlu0 %8796, %v7280
    %v8798 = vpop.permute.xlu0 %8797
    %8799 = vset.pattern.permute.xlu0 0
    %8800 = vperm.xlu0 %8799, %v7281
    %v8801 = vpop.permute.xlu0 %8800
    %8802 = vset.pattern.permute.xlu0 0
    %8803 = vperm.xlu0 %8802, %v7290
    %v8804 = vpop.permute.xlu0 %8803
    %8805 = vset.pattern.permute.xlu0 0
    %8806 = vperm.xlu0 %8805, %v7291
    %v8807 = vpop.permute.xlu0 %8806
    %8808 = vset.pattern.permute.xlu0 0
    %8809 = vperm.xlu0 %8808, %v7300
    %v8810 = vpop.permute.xlu0 %8809
    %8811 = vset.pattern.permute.xlu0 0
    %8812 = vperm.xlu0 %8811, %v7301
    %v8813 = vpop.permute.xlu0 %8812
    %8814 = vset.pattern.permute.xlu0 0
    %8815 = vperm.xlu0 %8814, %v7310
    %v8816 = vpop.permute.xlu0 %8815
    %8817 = vset.pattern.permute.xlu0 0
    %8818 = vperm.xlu0 %8817, %v7311
    %v8819 = vpop.permute.xlu0 %8818
    %8820 = vset.pattern.permute.xlu0 0
    %8821 = vperm.xlu0 %8820, %v7320
    %v8822 = vpop.permute.xlu0 %8821
    %8823 = vset.pattern.permute.xlu0 0
    %8824 = vperm.xlu0 %8823, %v7321
    %v8825 = vpop.permute.xlu0 %8824
    %8826 = vset.pattern.permute.xlu0 0
    %8827 = vperm.xlu0 %8826, %v7330
    %v8828 = vpop.permute.xlu0 %8827
    %8829 = vset.pattern.permute.xlu0 0
    %8830 = vperm.xlu0 %8829, %v7331
    %v8831 = vpop.permute.xlu0 %8830
    %8832 = vset.pattern.permute.xlu0 0
    %8833 = vperm.xlu0 %8832, %v7340
    %v8834 = vpop.permute.xlu0 %8833
    %8835 = vset.pattern.permute.xlu0 0
    %8836 = vperm.xlu0 %8835, %v7341
    %v8837 = vpop.permute.xlu0 %8836
    %8838 = vset.pattern.permute.xlu0 0
    %8839 = vperm.xlu0 %8838, %v7350
    %v8840 = vpop.permute.xlu0 %8839
    %8841 = vset.pattern.permute.xlu0 0
    %8842 = vperm.xlu0 %8841, %v7351
    %v8843 = vpop.permute.xlu0 %8842
    %8844 = vset.pattern.permute.xlu0 0
    %8845 = vperm.xlu0 %8844, %v7360
    %v8846 = vpop.permute.xlu0 %8845
    %8847 = vset.pattern.permute.xlu0 0
    %8848 = vperm.xlu0 %8847, %v7361
    %v8849 = vpop.permute.xlu0 %8848
    %8850 = vset.pattern.permute.xlu0 0
    %8851 = vperm.xlu0 %8850, %v7370
    %v8852 = vpop.permute.xlu0 %8851
    %8853 = vset.pattern.permute.xlu0 0
    %8854 = vperm.xlu0 %8853, %v7371
    %v8855 = vpop.permute.xlu0 %8854
    %8856 = vset.pattern.permute.xlu0 0
    %8857 = vperm.xlu0 %8856, %v7380
    %v8858 = vpop.permute.xlu0 %8857
    %8859 = vset.pattern.permute.xlu0 0
    %8860 = vperm.xlu0 %8859, %v7381
    %v8861 = vpop.permute.xlu0 %8860
    %8862 = vset.pattern.permute.xlu0 0
    %8863 = vperm.xlu0 %8862, %v7390
    %v8864 = vpop.permute.xlu0 %8863
    %8865 = vset.pattern.permute.xlu0 0
    %8866 = vperm.xlu0 %8865, %v7391
    %v8867 = vpop.permute.xlu0 %8866
    %8868 = vset.pattern.permute.xlu0 0
    %8869 = vperm.xlu0 %8868, %v7400
    %v8870 = vpop.permute.xlu0 %8869
    %8871 = vset.pattern.permute.xlu0 0
    %8872 = vperm.xlu0 %8871, %v7401
    %v8873 = vpop.permute.xlu0 %8872
    %8874 = vset.pattern.permute.xlu0 0
    %8875 = vperm.xlu0 %8874, %v7410
    %v8876 = vpop.permute.xlu0 %8875
    %8877 = vset.pattern.permute.xlu0 0
    %8878 = vperm.xlu0 %8877, %v7411
    %v8879 = vpop.permute.xlu0 %8878
    %8880 = vset.pattern.permute.xlu0 0
    %8881 = vperm.xlu0 %8880, %v7420
    %v8882 = vpop.permute.xlu0 %8881
    %8883 = vset.pattern.permute.xlu0 0
    %8884 = vperm.xlu0 %8883, %v7421
    %v8885 = vpop.permute.xlu0 %8884
    %8886 = vset.pattern.permute.xlu0 0
    %8887 = vperm.xlu0 %8886, %v7430
    %v8888 = vpop.permute.xlu0 %8887
    %8889 = vset.pattern.permute.xlu0 0
    %8890 = vperm.xlu0 %8889, %v7431
    %v8891 = vpop.permute.xlu0 %8890
    %8892 = vset.pattern.permute.xlu0 0
    %8893 = vperm.xlu0 %8892, %v7440
    %v8894 = vpop.permute.xlu0 %8893
    %8895 = vset.pattern.permute.xlu0 0
    %8896 = vperm.xlu0 %8895, %v7441
    %v8897 = vpop.permute.xlu0 %8896
    %8898 = vset.pattern.permute.xlu0 0
    %8899 = vperm.xlu0 %8898, %v7450
    %v8900 = vpop.permute.xlu0 %8899
    %8901 = vset.pattern.permute.xlu0 0
    %8902 = vperm.xlu0 %8901, %v7451
    %v8903 = vpop.permute.xlu0 %8902
    %8904 = vset.pattern.permute.xlu0 0
    %8905 = vperm.xlu0 %8904, %v7460
    %v8906 = vpop.permute.xlu0 %8905
    %8907 = vset.pattern.permute.xlu0 0
    %8908 = vperm.xlu0 %8907, %v7461
    %v8909 = vpop.permute.xlu0 %8908
    %8910 = vset.pattern.permute.xlu0 0
    %8911 = vperm.xlu0 %8910, %v7470
    %v8912 = vpop.permute.xlu0 %8911
    %8913 = vset.pattern.permute.xlu0 0
    %8914 = vperm.xlu0 %8913, %v7471
    %v8915 = vpop.permute.xlu0 %8914
    %8916 = vset.pattern.permute.xlu0 0
    %8917 = vperm.xlu0 %8916, %v7480
    %v8918 = vpop.permute.xlu0 %8917
    %8919 = vset.pattern.permute.xlu0 0
    %8920 = vperm.xlu0 %8919, %v7481
    %v8921 = vpop.permute.xlu0 %8920
    %8922 = vset.pattern.permute.xlu0 0
    %8923 = vperm.xlu0 %8922, %v7490
    %v8924 = vpop.permute.xlu0 %8923
    %8925 = vset.pattern.permute.xlu0 0
    %8926 = vperm.xlu0 %8925, %v7491
    %v8927 = vpop.permute.xlu0 %8926
    %8928 = vset.pattern.permute.xlu0 0
    %8929 = vperm.xlu0 %8928, %v7500
    %v8930 = vpop.permute.xlu0 %8929
    %8931 = vset.pattern.permute.xlu0 0
    %8932 = vperm.xlu0 %8931, %v7501
    %v8933 = vpop.permute.xlu0 %8932
    %8934 = vset.pattern.permute.xlu0 0
    %8935 = vperm.xlu0 %8934, %v7510
    %v8936 = vpop.permute.xlu0 %8935
    %8937 = vset.pattern.permute.xlu0 0
    %8938 = vperm.xlu0 %8937, %v7511
    %v8939 = vpop.permute.xlu0 %8938
    %8940 = vset.pattern.permute.xlu0 0
    %8941 = vperm.xlu0 %8940, %v7520
    %v8942 = vpop.permute.xlu0 %8941
    %8943 = vset.pattern.permute.xlu0 0
    %8944 = vperm.xlu0 %8943, %v7521
    %v8945 = vpop.permute.xlu0 %8944
    %8946 = vset.pattern.permute.xlu0 0
    %8947 = vperm.xlu0 %8946, %v7530
    %v8948 = vpop.permute.xlu0 %8947
    %8949 = vset.pattern.permute.xlu0 0
    %8950 = vperm.xlu0 %8949, %v7531
    %v8951 = vpop.permute.xlu0 %8950
    %8952 = vset.pattern.permute.xlu0 0
    %8953 = vperm.xlu0 %8952, %v7540
    %v8954 = vpop.permute.xlu0 %8953
    %8955 = vset.pattern.permute.xlu0 0
    %8956 = vperm.xlu0 %8955, %v7541
    %v8957 = vpop.permute.xlu0 %8956
    %8958 = vset.pattern.permute.xlu0 0
    %8959 = vperm.xlu0 %8958, %v7550
    %v8960 = vpop.permute.xlu0 %8959
    %8961 = vset.pattern.permute.xlu0 0
    %8962 = vperm.xlu0 %8961, %v7551
    %v8963 = vpop.permute.xlu0 %8962
    %8964 = vset.pattern.permute.xlu0 0
    %8965 = vperm.xlu0 %8964, %v7560
    %v8966 = vpop.permute.xlu0 %8965
    %8967 = vset.pattern.permute.xlu0 0
    %8968 = vperm.xlu0 %8967, %v7561
    %v8969 = vpop.permute.xlu0 %8968
    %8970 = vset.pattern.permute.xlu0 0
    %8971 = vperm.xlu0 %8970, %v7570
    %v8972 = vpop.permute.xlu0 %8971
    %8973 = vset.pattern.permute.xlu0 0
    %8974 = vperm.xlu0 %8973, %v7571
    %v8975 = vpop.permute.xlu0 %8974
    %8976 = vset.pattern.permute.xlu0 0
    %8977 = vperm.xlu0 %8976, %v7580
    %v8978 = vpop.permute.xlu0 %8977
    %8979 = vset.pattern.permute.xlu0 0
    %8980 = vperm.xlu0 %8979, %v7581
    %v8981 = vpop.permute.xlu0 %8980
    %8982 = vset.pattern.permute.xlu0 0
    %8983 = vperm.xlu0 %8982, %v7590
    %v8984 = vpop.permute.xlu0 %8983
    %8985 = vset.pattern.permute.xlu0 0
    %8986 = vperm.xlu0 %8985, %v7591
    %v8987 = vpop.permute.xlu0 %8986
    %8988 = vset.pattern.permute.xlu0 0
    %8989 = vperm.xlu0 %8988, %v7600
    %v8990 = vpop.permute.xlu0 %8989
    %8991 = vset.pattern.permute.xlu0 0
    %8992 = vperm.xlu0 %8991, %v7601
    %v8993 = vpop.permute.xlu0 %8992
    %8994 = vset.pattern.permute.xlu0 0
    %8995 = vperm.xlu0 %8994, %v7610
    %v8996 = vpop.permute.xlu0 %8995
    %8997 = vset.pattern.permute.xlu0 0
    %8998 = vperm.xlu0 %8997, %v7611
    %v8999 = vpop.permute.xlu0 %8998
    %9000 = vset.pattern.permute.xlu0 0
    %9001 = vperm.xlu0 %9000, %v7620
    %v9002 = vpop.permute.xlu0 %9001
    %9003 = vset.pattern.permute.xlu0 0
    %9004 = vperm.xlu0 %9003, %v7621
    %v9005 = vpop.permute.xlu0 %9004
    %9006 = vset.pattern.permute.xlu0 0
    %9007 = vperm.xlu0 %9006, %v7630
    %v9008 = vpop.permute.xlu0 %9007
    %9009 = vset.pattern.permute.xlu0 0
    %9010 = vperm.xlu0 %9009, %v7631
    %v9011 = vpop.permute.xlu0 %9010
    %9012 = vset.pattern.permute.xlu0 0
    %9013 = vperm.xlu0 %9012, %v7640
    %v9014 = vpop.permute.xlu0 %9013
    %9015 = vset.pattern.permute.xlu0 0
    %9016 = vperm.xlu0 %9015, %v7641
    %v9017 = vpop.permute.xlu0 %9016
    %9018 = vset.pattern.permute.xlu0 0
    %9019 = vperm.xlu0 %9018, %v7650
    %v9020 = vpop.permute.xlu0 %9019
    %9021 = vset.pattern.permute.xlu0 0
    %9022 = vperm.xlu0 %9021, %v7651
    %v9023 = vpop.permute.xlu0 %9022
    %9024 = vset.pattern.permute.xlu0 0
    %9025 = vperm.xlu0 %9024, %v7660
    %v9026 = vpop.permute.xlu0 %9025
    %9027 = vset.pattern.permute.xlu0 0
    %9028 = vperm.xlu0 %9027, %v7661
    %v9029 = vpop.permute.xlu0 %9028
    %9030 = vset.pattern.permute.xlu0 0
    %9031 = vperm.xlu0 %9030, %v7670
    %v9032 = vpop.permute.xlu0 %9031
    %9033 = vset.pattern.permute.xlu0 0
    %9034 = vperm.xlu0 %9033, %v7671
    %v9035 = vpop.permute.xlu0 %9034
    %9036 = vset.pattern.permute.xlu0 0
    %9037 = vperm.xlu0 %9036, %v7680
    %v9038 = vpop.permute.xlu0 %9037
    %9039 = vset.pattern.permute.xlu0 0
    %9040 = vperm.xlu0 %9039, %v7681
    %v9041 = vpop.permute.xlu0 %9040
    %9042 = vset.pattern.permute.xlu0 0
    %9043 = vperm.xlu0 %9042, %v7690
    %v9044 = vpop.permute.xlu0 %9043
    %9045 = vset.pattern.permute.xlu0 0
    %9046 = vperm.xlu0 %9045, %v7691
    %v9047 = vpop.permute.xlu0 %9046
    %9048 = vset.pattern.permute.xlu0 0
    %9049 = vperm.xlu0 %9048, %v7700
    %v9050 = vpop.permute.xlu0 %9049
    %9051 = vset.pattern.permute.xlu0 0
    %9052 = vperm.xlu0 %9051, %v7701
    %v9053 = vpop.permute.xlu0 %9052
    %9054 = vset.pattern.permute.xlu0 0
    %9055 = vperm.xlu0 %9054, %v7710
    %v9056 = vpop.permute.xlu0 %9055
    %9057 = vset.pattern.permute.xlu0 0
    %9058 = vperm.xlu0 %9057, %v7711
    %v9059 = vpop.permute.xlu0 %9058
    %9060 = vset.pattern.permute.xlu0 0
    %9061 = vperm.xlu0 %9060, %v7720
    %v9062 = vpop.permute.xlu0 %9061
    %9063 = vset.pattern.permute.xlu0 0
    %9064 = vperm.xlu0 %9063, %v7721
    %v9065 = vpop.permute.xlu0 %9064
    %9066 = vset.pattern.permute.xlu0 0
    %9067 = vperm.xlu0 %9066, %v7730
    %v9068 = vpop.permute.xlu0 %9067
    %9069 = vset.pattern.permute.xlu0 0
    %9070 = vperm.xlu0 %9069, %v7731
    %v9071 = vpop.permute.xlu0 %9070
    %9072 = vset.pattern.permute.xlu0 0
    %9073 = vperm.xlu0 %9072, %v7740
    %v9074 = vpop.permute.xlu0 %9073
    %9075 = vset.pattern.permute.xlu0 0
    %9076 = vperm.xlu0 %9075, %v7741
    %v9077 = vpop.permute.xlu0 %9076
    %9078 = vset.pattern.permute.xlu0 0
    %9079 = vperm.xlu0 %9078, %v7750
    %v9080 = vpop.permute.xlu0 %9079
    %9081 = vset.pattern.permute.xlu0 0
    %9082 = vperm.xlu0 %9081, %v7751
    %v9083 = vpop.permute.xlu0 %9082
    %9084 = vset.pattern.permute.xlu0 0
    %9085 = vperm.xlu0 %9084, %v7760
    %v9086 = vpop.permute.xlu0 %9085
    %9087 = vset.pattern.permute.xlu0 0
    %9088 = vperm.xlu0 %9087, %v7761
    %v9089 = vpop.permute.xlu0 %9088
    %9090 = vset.pattern.permute.xlu0 0
    %9091 = vperm.xlu0 %9090, %v7770
    %v9092 = vpop.permute.xlu0 %9091
    %9093 = vset.pattern.permute.xlu0 0
    %9094 = vperm.xlu0 %9093, %v7771
    %v9095 = vpop.permute.xlu0 %9094
    %9096 = vset.pattern.permute.xlu0 0
    %9097 = vperm.xlu0 %9096, %v7780
    %v9098 = vpop.permute.xlu0 %9097
    %9099 = vset.pattern.permute.xlu0 0
    %9100 = vperm.xlu0 %9099, %v7781
    %v9101 = vpop.permute.xlu0 %9100
    %9102 = vset.pattern.permute.xlu0 0
    %9103 = vperm.xlu0 %9102, %v7790
    %v9104 = vpop.permute.xlu0 %9103
    %9105 = vset.pattern.permute.xlu0 0
    %9106 = vperm.xlu0 %9105, %v7791
    %v9107 = vpop.permute.xlu0 %9106
    %9108 = vset.pattern.permute.xlu0 0
    %9109 = vperm.xlu0 %9108, %v7800
    %v9110 = vpop.permute.xlu0 %9109
    %9111 = vset.pattern.permute.xlu0 0
    %9112 = vperm.xlu0 %9111, %v7801
    %v9113 = vpop.permute.xlu0 %9112
    %9114 = vset.pattern.permute.xlu0 0
    %9115 = vperm.xlu0 %9114, %v7810
    %v9116 = vpop.permute.xlu0 %9115
    %9117 = vset.pattern.permute.xlu0 0
    %9118 = vperm.xlu0 %9117, %v7811
    %v9119 = vpop.permute.xlu0 %9118
    %9120 = vset.pattern.permute.xlu0 0
    %9121 = vperm.xlu0 %9120, %v7820
    %v9122 = vpop.permute.xlu0 %9121
    %9123 = vset.pattern.permute.xlu0 0
    %9124 = vperm.xlu0 %9123, %v7821
    %v9125 = vpop.permute.xlu0 %9124
    %9126 = vset.pattern.permute.xlu0 0
    %9127 = vperm.xlu0 %9126, %v7830
    %v9128 = vpop.permute.xlu0 %9127
    %9129 = vset.pattern.permute.xlu0 0
    %9130 = vperm.xlu0 %9129, %v7831
    %v9131 = vpop.permute.xlu0 %9130
    %9132 = vset.pattern.permute.xlu0 0
    %9133 = vperm.xlu0 %9132, %v7840
    %v9134 = vpop.permute.xlu0 %9133
    %9135 = vset.pattern.permute.xlu0 0
    %9136 = vperm.xlu0 %9135, %v7841
    %v9137 = vpop.permute.xlu0 %9136
    %9138 = vset.pattern.permute.xlu0 0
    %9139 = vperm.xlu0 %9138, %v7850
    %v9140 = vpop.permute.xlu0 %9139
    %9141 = vset.pattern.permute.xlu0 0
    %9142 = vperm.xlu0 %9141, %v7851
    %v9143 = vpop.permute.xlu0 %9142
    %9144 = vset.pattern.permute.xlu0 0
    %9145 = vperm.xlu0 %9144, %v7860
    %v9146 = vpop.permute.xlu0 %9145
    %9147 = vset.pattern.permute.xlu0 0
    %9148 = vperm.xlu0 %9147, %v7861
    %v9149 = vpop.permute.xlu0 %9148
    %9150 = vset.pattern.permute.xlu0 0
    %9151 = vperm.xlu0 %9150, %v7870
    %v9152 = vpop.permute.xlu0 %9151
    %9153 = vset.pattern.permute.xlu0 0
    %9154 = vperm.xlu0 %9153, %v7871
    %v9155 = vpop.permute.xlu0 %9154
    %9156 = vset.pattern.permute.xlu0 0
    %9157 = vperm.xlu0 %9156, %v7880
    %v9158 = vpop.permute.xlu0 %9157
    %9159 = vset.pattern.permute.xlu0 0
    %9160 = vperm.xlu0 %9159, %v7881
    %v9161 = vpop.permute.xlu0 %9160
    %9162 = vset.pattern.permute.xlu0 0
    %9163 = vperm.xlu0 %9162, %v7890
    %v9164 = vpop.permute.xlu0 %9163
    %9165 = vset.pattern.permute.xlu0 0
    %9166 = vperm.xlu0 %9165, %v7891
    %v9167 = vpop.permute.xlu0 %9166
    %9168 = vset.pattern.permute.xlu0 0
    %9169 = vperm.xlu0 %9168, %v7900
    %v9170 = vpop.permute.xlu0 %9169
    %9171 = vset.pattern.permute.xlu0 0
    %9172 = vperm.xlu0 %9171, %v7901
    %v9173 = vpop.permute.xlu0 %9172
    %9174 = vset.pattern.permute.xlu0 0
    %9175 = vperm.xlu0 %9174, %v7910
    %v9176 = vpop.permute.xlu0 %9175
    %9177 = vset.pattern.permute.xlu0 0
    %9178 = vperm.xlu0 %9177, %v7911
    %v9179 = vpop.permute.xlu0 %9178
    %9180 = vset.pattern.permute.xlu0 0
    %9181 = vperm.xlu0 %9180, %v7920
    %v9182 = vpop.permute.xlu0 %9181
    %9183 = vset.pattern.permute.xlu0 0
    %9184 = vperm.xlu0 %9183, %v7921
    %v9185 = vpop.permute.xlu0 %9184
    %9186 = vset.pattern.permute.xlu0 0
    %9187 = vperm.xlu0 %9186, %v7930
    %v9188 = vpop.permute.xlu0 %9187
    %9189 = vset.pattern.permute.xlu0 0
    %9190 = vperm.xlu0 %9189, %v7931
    %v9191 = vpop.permute.xlu0 %9190
    %9192 = vset.pattern.permute.xlu0 0
    %9193 = vperm.xlu0 %9192, %v7940
    %v9194 = vpop.permute.xlu0 %9193
    %9195 = vset.pattern.permute.xlu0 0
    %9196 = vperm.xlu0 %9195, %v7941
    %v9197 = vpop.permute.xlu0 %9196
    %9198 = vset.pattern.permute.xlu0 0
    %9199 = vperm.xlu0 %9198, %v7950
    %v9200 = vpop.permute.xlu0 %9199
    %9201 = vset.pattern.permute.xlu0 0
    %9202 = vperm.xlu0 %9201, %v7951
    %v9203 = vpop.permute.xlu0 %9202
    %9204 = vset.pattern.permute.xlu0 0
    %9205 = vperm.xlu0 %9204, %v7960
    %v9206 = vpop.permute.xlu0 %9205
    %9207 = vset.pattern.permute.xlu0 0
    %9208 = vperm.xlu0 %9207, %v7961
    %v9209 = vpop.permute.xlu0 %9208
    %9210 = vset.pattern.permute.xlu0 0
    %9211 = vperm.xlu0 %9210, %v7970
    %v9212 = vpop.permute.xlu0 %9211
    %9213 = vset.pattern.permute.xlu0 0
    %9214 = vperm.xlu0 %9213, %v7971
    %v9215 = vpop.permute.xlu0 %9214
    %9216 = vset.pattern.permute.xlu0 0
    %9217 = vperm.xlu0 %9216, %v7980
    %v9218 = vpop.permute.xlu0 %9217
    %9219 = vset.pattern.permute.xlu0 0
    %9220 = vperm.xlu0 %9219, %v7981
    %v9221 = vpop.permute.xlu0 %9220
    %9222 = vset.pattern.permute.xlu0 0
    %9223 = vperm.xlu0 %9222, %v7990
    %v9224 = vpop.permute.xlu0 %9223
    %9225 = vset.pattern.permute.xlu0 0
    %9226 = vperm.xlu0 %9225, %v7991
    %v9227 = vpop.permute.xlu0 %9226
    %9228 = vset.pattern.permute.xlu0 0
    %9229 = vperm.xlu0 %9228, %v8000
    %v9230 = vpop.permute.xlu0 %9229
    %9231 = vset.pattern.permute.xlu0 0
    %9232 = vperm.xlu0 %9231, %v8001
    %v9233 = vpop.permute.xlu0 %9232
    %9234 = vset.pattern.permute.xlu0 0
    %9235 = vperm.xlu0 %9234, %v8010
    %v9236 = vpop.permute.xlu0 %9235
    %9237 = vset.pattern.permute.xlu0 0
    %9238 = vperm.xlu0 %9237, %v8011
    %v9239 = vpop.permute.xlu0 %9238
    %9240 = vset.pattern.permute.xlu0 0
    %9241 = vperm.xlu0 %9240, %v8020
    %v9242 = vpop.permute.xlu0 %9241
    %9243 = vset.pattern.permute.xlu0 0
    %9244 = vperm.xlu0 %9243, %v8021
    %v9245 = vpop.permute.xlu0 %9244
    %9246 = vset.pattern.permute.xlu0 0
    %9247 = vperm.xlu0 %9246, %v8030
    %v9248 = vpop.permute.xlu0 %9247
    %9249 = vset.pattern.permute.xlu0 0
    %9250 = vperm.xlu0 %9249, %v8031
    %v9251 = vpop.permute.xlu0 %9250
    %9252 = vset.pattern.permute.xlu0 0
    %9253 = vperm.xlu0 %9252, %v8040
    %v9254 = vpop.permute.xlu0 %9253
    %9255 = vset.pattern.permute.xlu0 0
    %9256 = vperm.xlu0 %9255, %v8041
    %v9257 = vpop.permute.xlu0 %9256
    %9258 = vset.pattern.permute.xlu0 0
    %9259 = vperm.xlu0 %9258, %v8050
    %v9260 = vpop.permute.xlu0 %9259
    %9261 = vset.pattern.permute.xlu0 0
    %9262 = vperm.xlu0 %9261, %v8051
    %v9263 = vpop.permute.xlu0 %9262
    %9264 = vset.pattern.permute.xlu0 0
    %9265 = vperm.xlu0 %9264, %v8060
    %v9266 = vpop.permute.xlu0 %9265
    %9267 = vset.pattern.permute.xlu0 0
    %9268 = vperm.xlu0 %9267, %v8061
    %v9269 = vpop.permute.xlu0 %9268
    %9270 = vset.pattern.permute.xlu0 0
    %9271 = vperm.xlu0 %9270, %v8070
    %v9272 = vpop.permute.xlu0 %9271
    %9273 = vset.pattern.permute.xlu0 0
    %9274 = vperm.xlu0 %9273, %v8071
    %v9275 = vpop.permute.xlu0 %9274
    %9276 = vset.pattern.permute.xlu0 0
    %9277 = vperm.xlu0 %9276, %v8080
    %v9278 = vpop.permute.xlu0 %9277
    %9279 = vset.pattern.permute.xlu0 0
    %9280 = vperm.xlu0 %9279, %v8081
    %v9281 = vpop.permute.xlu0 %9280
    %9282 = vset.pattern.permute.xlu0 0
    %9283 = vperm.xlu0 %9282, %v8090
    %v9284 = vpop.permute.xlu0 %9283
    %9285 = vset.pattern.permute.xlu0 0
    %9286 = vperm.xlu0 %9285, %v8091
    %v9287 = vpop.permute.xlu0 %9286
    %9288 = vset.pattern.permute.xlu0 0
    %9289 = vperm.xlu0 %9288, %v8100
    %v9290 = vpop.permute.xlu0 %9289
    %9291 = vset.pattern.permute.xlu0 0
    %9292 = vperm.xlu0 %9291, %v8101
    %v9293 = vpop.permute.xlu0 %9292
    %9294 = vset.pattern.permute.xlu0 0
    %9295 = vperm.xlu0 %9294, %v8110
    %v9296 = vpop.permute.xlu0 %9295
    %9297 = vset.pattern.permute.xlu0 0
    %9298 = vperm.xlu0 %9297, %v8111
    %v9299 = vpop.permute.xlu0 %9298
    %9300 = vset.pattern.permute.xlu0 0
    %9301 = vperm.xlu0 %9300, %v8120
    %v9302 = vpop.permute.xlu0 %9301
    %9303 = vset.pattern.permute.xlu0 0
    %9304 = vperm.xlu0 %9303, %v8121
    %v9305 = vpop.permute.xlu0 %9304
    %9306 = vset.pattern.permute.xlu0 0
    %9307 = vperm.xlu0 %9306, %v8130
    %v9308 = vpop.permute.xlu0 %9307
    %9309 = vset.pattern.permute.xlu0 0
    %9310 = vperm.xlu0 %9309, %v8131
    %v9311 = vpop.permute.xlu0 %9310
    %9312 = vset.pattern.permute.xlu0 0
    %9313 = vperm.xlu0 %9312, %v8140
    %v9314 = vpop.permute.xlu0 %9313
    %9315 = vset.pattern.permute.xlu0 0
    %9316 = vperm.xlu0 %9315, %v8141
    %v9317 = vpop.permute.xlu0 %9316
    %9318 = vset.pattern.permute.xlu0 0
    %9319 = vperm.xlu0 %9318, %v8150
    %v9320 = vpop.permute.xlu0 %9319
    %9321 = vset.pattern.permute.xlu0 0
    %9322 = vperm.xlu0 %9321, %v8151
    %v9323 = vpop.permute.xlu0 %9322
    %9324 = vset.pattern.permute.xlu0 0
    %9325 = vperm.xlu0 %9324, %v8160
    %v9326 = vpop.permute.xlu0 %9325
    %9327 = vset.pattern.permute.xlu0 0
    %9328 = vperm.xlu0 %9327, %v8161
    %v9329 = vpop.permute.xlu0 %9328
    %9330 = vset.pattern.permute.xlu0 0
    %9331 = vperm.xlu0 %9330, %v8170
    %v9332 = vpop.permute.xlu0 %9331
    %9333 = vset.pattern.permute.xlu0 0
    %9334 = vperm.xlu0 %9333, %v8171
    %v9335 = vpop.permute.xlu0 %9334
    %9336 = vset.pattern.permute.xlu0 0
    %9337 = vperm.xlu0 %9336, %v8180
    %v9338 = vpop.permute.xlu0 %9337
    %9339 = vset.pattern.permute.xlu0 0
    %9340 = vperm.xlu0 %9339, %v8181
    %v9341 = vpop.permute.xlu0 %9340
    %9342 = vset.pattern.permute.xlu0 0
    %9343 = vperm.xlu0 %9342, %v8190
    %v9344 = vpop.permute.xlu0 %9343
    %9345 = vset.pattern.permute.xlu0 0
    %9346 = vperm.xlu0 %9345, %v8191
    %v9347 = vpop.permute.xlu0 %9346
    %9348 = vset.pattern.permute.xlu0 0
    %9349 = vperm.xlu0 %9348, %v8200
    %v9350 = vpop.permute.xlu0 %9349
    %9351 = vset.pattern.permute.xlu0 0
    %9352 = vperm.xlu0 %9351, %v8201
    %v9353 = vpop.permute.xlu0 %9352
    %9354 = vset.pattern.permute.xlu0 0
    %9355 = vperm.xlu0 %9354, %v8210
    %v9356 = vpop.permute.xlu0 %9355
    %9357 = vset.pattern.permute.xlu0 0
    %9358 = vperm.xlu0 %9357, %v8211
    %v9359 = vpop.permute.xlu0 %9358
    %9360 = vset.pattern.permute.xlu0 0
    %9361 = vperm.xlu0 %9360, %v8220
    %v9362 = vpop.permute.xlu0 %9361
    %9363 = vset.pattern.permute.xlu0 0
    %9364 = vperm.xlu0 %9363, %v8221
    %v9365 = vpop.permute.xlu0 %9364
    %9366 = vset.pattern.permute.xlu0 0
    %9367 = vperm.xlu0 %9366, %v8230
    %v9368 = vpop.permute.xlu0 %9367
    %9369 = vset.pattern.permute.xlu0 0
    %9370 = vperm.xlu0 %9369, %v8231
    %v9371 = vpop.permute.xlu0 %9370
    %9372 = vset.pattern.permute.xlu0 0
    %9373 = vperm.xlu0 %9372, %v8240
    %v9374 = vpop.permute.xlu0 %9373
    %9375 = vset.pattern.permute.xlu0 0
    %9376 = vperm.xlu0 %9375, %v8241
    %v9377 = vpop.permute.xlu0 %9376
    %9378 = vset.pattern.permute.xlu0 0
    %9379 = vperm.xlu0 %9378, %v8250
    %v9380 = vpop.permute.xlu0 %9379
    %9381 = vset.pattern.permute.xlu0 0
    %9382 = vperm.xlu0 %9381, %v8251
    %v9383 = vpop.permute.xlu0 %9382
    %9384 = vset.pattern.permute.xlu0 0
    %9385 = vperm.xlu0 %9384, %v8260
    %v9386 = vpop.permute.xlu0 %9385
    %9387 = vset.pattern.permute.xlu0 0
    %9388 = vperm.xlu0 %9387, %v8261
    %v9389 = vpop.permute.xlu0 %9388
    %9390 = vset.pattern.permute.xlu0 0
    %9391 = vperm.xlu0 %9390, %v8270
    %v9392 = vpop.permute.xlu0 %9391
    %9393 = vset.pattern.permute.xlu0 0
    %9394 = vperm.xlu0 %9393, %v8271
    %v9395 = vpop.permute.xlu0 %9394
    %9396 = vset.pattern.permute.xlu0 0
    %9397 = vperm.xlu0 %9396, %v8280
    %v9398 = vpop.permute.xlu0 %9397
    %9399 = vset.pattern.permute.xlu0 0
    %9400 = vperm.xlu0 %9399, %v8281
    %v9401 = vpop.permute.xlu0 %9400
    %9402 = vset.pattern.permute.xlu0 0
    %9403 = vperm.xlu0 %9402, %v8290
    %v9404 = vpop.permute.xlu0 %9403
    %9405 = vset.pattern.permute.xlu0 0
    %9406 = vperm.xlu0 %9405, %v8291
    %v9407 = vpop.permute.xlu0 %9406
    %9408 = vset.pattern.permute.xlu0 0
    %9409 = vperm.xlu0 %9408, %v8300
    %v9410 = vpop.permute.xlu0 %9409
    %9411 = vset.pattern.permute.xlu0 0
    %9412 = vperm.xlu0 %9411, %v8301
    %v9413 = vpop.permute.xlu0 %9412
    %9414 = vset.pattern.permute.xlu0 0
    %9415 = vperm.xlu0 %9414, %v8310
    %v9416 = vpop.permute.xlu0 %9415
    %9417 = vset.pattern.permute.xlu0 0
    %9418 = vperm.xlu0 %9417, %v8311
    %v9419 = vpop.permute.xlu0 %9418
    %9420 = vset.pattern.permute.xlu0 0
    %9421 = vperm.xlu0 %9420, %v8320
    %v9422 = vpop.permute.xlu0 %9421
    %9423 = vset.pattern.permute.xlu0 0
    %9424 = vperm.xlu0 %9423, %v8321
    %v9425 = vpop.permute.xlu0 %9424
    %9426 = vset.pattern.permute.xlu0 0
    %9427 = vperm.xlu0 %9426, %v8330
    %v9428 = vpop.permute.xlu0 %9427
    %9429 = vset.pattern.permute.xlu0 0
    %9430 = vperm.xlu0 %9429, %v8331
    %v9431 = vpop.permute.xlu0 %9430
    %9432 = vset.pattern.permute.xlu0 0
    %9433 = vperm.xlu0 %9432, %v8340
    %v9434 = vpop.permute.xlu0 %9433
    %9435 = vset.pattern.permute.xlu0 0
    %9436 = vperm.xlu0 %9435, %v8341
    %v9437 = vpop.permute.xlu0 %9436
    %9438 = vset.pattern.permute.xlu0 0
    %9439 = vperm.xlu0 %9438, %v8350
    %v9440 = vpop.permute.xlu0 %9439
    %9441 = vset.pattern.permute.xlu0 0
    %9442 = vperm.xlu0 %9441, %v8351
    %v9443 = vpop.permute.xlu0 %9442
    %9444 = vset.pattern.permute.xlu0 0
    %9445 = vperm.xlu0 %9444, %v8360
    %v9446 = vpop.permute.xlu0 %9445
    %9447 = vset.pattern.permute.xlu0 0
    %9448 = vperm.xlu0 %9447, %v8361
    %v9449 = vpop.permute.xlu0 %9448
    %9450 = vset.pattern.permute.xlu0 0
    %9451 = vperm.xlu0 %9450, %v8370
    %v9452 = vpop.permute.xlu0 %9451
    %9453 = vset.pattern.permute.xlu0 0
    %9454 = vperm.xlu0 %9453, %v8371
    %v9455 = vpop.permute.xlu0 %9454
    %9456 = vset.pattern.permute.xlu0 0
    %9457 = vperm.xlu0 %9456, %v8380
    %v9458 = vpop.permute.xlu0 %9457
    %9459 = vset.pattern.permute.xlu0 0
    %9460 = vperm.xlu0 %9459, %v8381
    %v9461 = vpop.permute.xlu0 %9460
    %9462 = vset.pattern.permute.xlu0 0
    %9463 = vperm.xlu0 %9462, %v8390
    %v9464 = vpop.permute.xlu0 %9463
    %9465 = vset.pattern.permute.xlu0 0
    %9466 = vperm.xlu0 %9465, %v8391
    %v9467 = vpop.permute.xlu0 %9466
    %9468 = vset.pattern.permute.xlu0 0
    %9469 = vperm.xlu0 %9468, %v8400
    %v9470 = vpop.permute.xlu0 %9469
    %9471 = vset.pattern.permute.xlu0 0
    %9472 = vperm.xlu0 %9471, %v8401
    %v9473 = vpop.permute.xlu0 %9472
    %9474 = vset.pattern.permute.xlu0 0
    %9475 = vperm.xlu0 %9474, %v8410
    %v9476 = vpop.permute.xlu0 %9475
    %9477 = vset.pattern.permute.xlu0 0
    %9478 = vperm.xlu0 %9477, %v8411
    %v9479 = vpop.permute.xlu0 %9478
    %9480 = vset.pattern.permute.xlu0 0
    %9481 = vperm.xlu0 %9480, %v8420
    %v9482 = vpop.permute.xlu0 %9481
    %9483 = vset.pattern.permute.xlu0 0
    %9484 = vperm.xlu0 %9483, %v8421
    %v9485 = vpop.permute.xlu0 %9484
    %9486 = vset.pattern.permute.xlu0 0
    %9487 = vperm.xlu0 %9486, %v8430
    %v9488 = vpop.permute.xlu0 %9487
    %9489 = vset.pattern.permute.xlu0 0
    %9490 = vperm.xlu0 %9489, %v8431
    %v9491 = vpop.permute.xlu0 %9490
    %9492 = vset.pattern.permute.xlu0 0
    %9493 = vperm.xlu0 %9492, %v8440
    %v9494 = vpop.permute.xlu0 %9493
    %9495 = vset.pattern.permute.xlu0 0
    %9496 = vperm.xlu0 %9495, %v8441
    %v9497 = vpop.permute.xlu0 %9496
    %9498 = vset.pattern.permute.xlu0 0
    %9499 = vperm.xlu0 %9498, %v8450
    %v9500 = vpop.permute.xlu0 %9499
    %9501 = vset.pattern.permute.xlu0 0
    %9502 = vperm.xlu0 %9501, %v8451
    %v9503 = vpop.permute.xlu0 %9502
    %9504 = vset.pattern.permute.xlu0 0
    %9505 = vperm.xlu0 %9504, %v8460
    %v9506 = vpop.permute.xlu0 %9505
    %9507 = vset.pattern.permute.xlu0 0
    %9508 = vperm.xlu0 %9507, %v8461
    %v9509 = vpop.permute.xlu0 %9508
    %9510 = vset.pattern.permute.xlu0 0
    %9511 = vperm.xlu0 %9510, %v8470
    %v9512 = vpop.permute.xlu0 %9511
    %9513 = vset.pattern.permute.xlu0 0
    %9514 = vperm.xlu0 %9513, %v8471
    %v9515 = vpop.permute.xlu0 %9514
    %9516 = vset.pattern.permute.xlu0 0
    %9517 = vperm.xlu0 %9516, %v8480
    %v9518 = vpop.permute.xlu0 %9517
    %9519 = vset.pattern.permute.xlu0 0
    %9520 = vperm.xlu0 %9519, %v8481
    %v9521 = vpop.permute.xlu0 %9520
    %9522 = vset.pattern.permute.xlu0 0
    %9523 = vperm.xlu0 %9522, %v8490
    %v9524 = vpop.permute.xlu0 %9523
    %9525 = vset.pattern.permute.xlu0 0
    %9526 = vperm.xlu0 %9525, %v8491
    %v9527 = vpop.permute.xlu0 %9526
    %9528 = vset.pattern.permute.xlu0 0
    %9529 = vperm.xlu0 %9528, %v8500
    %v9530 = vpop.permute.xlu0 %9529
    %9531 = vset.pattern.permute.xlu0 0
    %9532 = vperm.xlu0 %9531, %v8501
    %v9533 = vpop.permute.xlu0 %9532
    %9534 = vset.pattern.permute.xlu0 0
    %9535 = vperm.xlu0 %9534, %v8510
    %v9536 = vpop.permute.xlu0 %9535
    %9537 = vset.pattern.permute.xlu0 0
    %9538 = vperm.xlu0 %9537, %v8511
    %v9539 = vpop.permute.xlu0 %9538
    %9540 = vset.pattern.permute.xlu0 0
    %9541 = vperm.xlu0 %9540, %v8520
    %v9542 = vpop.permute.xlu0 %9541
    %9543 = vset.pattern.permute.xlu0 0
    %9544 = vperm.xlu0 %9543, %v8521
    %v9545 = vpop.permute.xlu0 %9544
    %9546 = vset.pattern.permute.xlu0 0
    %9547 = vperm.xlu0 %9546, %v8530
    %v9548 = vpop.permute.xlu0 %9547
    %9549 = vset.pattern.permute.xlu0 0
    %9550 = vperm.xlu0 %9549, %v8531
    %v9551 = vpop.permute.xlu0 %9550
    %9552 = vset.pattern.permute.xlu0 0
    %9553 = vperm.xlu0 %9552, %v8540
    %v9554 = vpop.permute.xlu0 %9553
    %9555 = vset.pattern.permute.xlu0 0
    %9556 = vperm.xlu0 %9555, %v8541
    %v9557 = vpop.permute.xlu0 %9556
    %9558 = vset.pattern.permute.xlu0 0
    %9559 = vperm.xlu0 %9558, %v8550
    %v9560 = vpop.permute.xlu0 %9559
    %9561 = vset.pattern.permute.xlu0 0
    %9562 = vperm.xlu0 %9561, %v8551
    %v9563 = vpop.permute.xlu0 %9562
    %9564 = vset.pattern.permute.xlu0 0
    %9565 = vperm.xlu0 %9564, %v8560
    %v9566 = vpop.permute.xlu0 %9565
    %9567 = vset.pattern.permute.xlu0 0
    %9568 = vperm.xlu0 %9567, %v8561
    %v9569 = vpop.permute.xlu0 %9568
    %9570 = vset.pattern.permute.xlu0 0
    %9571 = vperm.xlu0 %9570, %v8570
    %v9572 = vpop.permute.xlu0 %9571
    %9573 = vset.pattern.permute.xlu0 0
    %9574 = vperm.xlu0 %9573, %v8571
    %v9575 = vpop.permute.xlu0 %9574
    %9576 = vset.pattern.permute.xlu0 0
    %9577 = vperm.xlu0 %9576, %v8580
    %v9578 = vpop.permute.xlu0 %9577
    %9579 = vset.pattern.permute.xlu0 0
    %9580 = vperm.xlu0 %9579, %v8581
    %v9581 = vpop.permute.xlu0 %9580
    %9582 = vset.pattern.permute.xlu0 0
    %9583 = vperm.xlu0 %9582, %v8590
    %v9584 = vpop.permute.xlu0 %9583
    %9585 = vset.pattern.permute.xlu0 0
    %9586 = vperm.xlu0 %9585, %v8591
    %v9587 = vpop.permute.xlu0 %9586
    %9588 = vset.pattern.permute.xlu0 0
    %9589 = vperm.xlu0 %9588, %v8600
    %v9590 = vpop.permute.xlu0 %9589
    %9591 = vset.pattern.permute.xlu0 0
    %9592 = vperm.xlu0 %9591, %v8601
    %v9593 = vpop.permute.xlu0 %9592
    %9594 = vset.pattern.permute.xlu0 0
    %9595 = vperm.xlu0 %9594, %v8610
    %v9596 = vpop.permute.xlu0 %9595
    %9597 = vset.pattern.permute.xlu0 0
    %9598 = vperm.xlu0 %9597, %v8611
    %v9599 = vpop.permute.xlu0 %9598
    %9600 = vset.pattern.permute.xlu0 0
    %9601 = vperm.xlu0 %9600, %v8620
    %v9602 = vpop.permute.xlu0 %9601
    %9603 = vset.pattern.permute.xlu0 0
    %9604 = vperm.xlu0 %9603, %v8621
    %v9605 = vpop.permute.xlu0 %9604
    %9606 = vset.pattern.permute.xlu0 0
    %9607 = vperm.xlu0 %9606, %v8630
    %v9608 = vpop.permute.xlu0 %9607
    %9609 = vset.pattern.permute.xlu0 0
    %9610 = vperm.xlu0 %9609, %v8631
    %v9611 = vpop.permute.xlu0 %9610
    %9612 = vset.pattern.permute.xlu0 0
    %9613 = vperm.xlu0 %9612, %v8640
    %v9614 = vpop.permute.xlu0 %9613
    %9615 = vset.pattern.permute.xlu0 0
    %9616 = vperm.xlu0 %9615, %v8641
    %v9617 = vpop.permute.xlu0 %9616
    %9618 = vset.pattern.permute.xlu0 0
    %9619 = vperm.xlu0 %9618, %v8650
    %v9620 = vpop.permute.xlu0 %9619
    %9621 = vset.pattern.permute.xlu0 0
    %9622 = vperm.xlu0 %9621, %v8651
    %v9623 = vpop.permute.xlu0 %9622
    %9624 = vset.pattern.permute.xlu0 0
    %9625 = vperm.xlu0 %9624, %v8660
    %v9626 = vpop.permute.xlu0 %9625
    %9627 = vset.pattern.permute.xlu0 0
    %9628 = vperm.xlu0 %9627, %v8661
    %v9629 = vpop.permute.xlu0 %9628
    %9630 = vset.pattern.permute.xlu0 0
    %9631 = vperm.xlu0 %9630, %v8670
    %v9632 = vpop.permute.xlu0 %9631
    %9633 = vset.pattern.permute.xlu0 0
    %9634 = vperm.xlu0 %9633, %v8671
    %v9635 = vpop.permute.xlu0 %9634
    %9636 = vset.pattern.permute.xlu0 0
    %9637 = vperm.xlu0 %9636, %v8680
    %v9638 = vpop.permute.xlu0 %9637
    %9639 = vset.pattern.permute.xlu0 0
    %9640 = vperm.xlu0 %9639, %v8681
    %v9641 = vpop.permute.xlu0 %9640
    %v9642 = vlaneseq
    %v9643 = vand.u32 %v9642, 127
    %v9644 = vperm.slane %v8684, %v9643
    %v9645 = vadd.s32 %v9643, 4294967288
    %v9646 = vperm.slane %v8687, %v9645
    %vm9647 = vcmask 130112
    %v9648 = vsel %vm9647, %v9646, %v9644
    %v9649 = vadd.s32 %v9643, 4294967280
    %v9650 = vperm.slane %v8690, %v9649
    %vm9651 = vcmask 195712
    %v9652 = vsel %vm9651, %v9650, %v9648
    %v9653 = vadd.s32 %v9643, 4294967272
    %v9654 = vperm.slane %v8693, %v9653
    %vm9655 = vcmask 261312
    %v9656 = vsel %vm9655, %v9654, %v9652
    %v9657 = vadd.s32 %v9643, 4294967264
    %v9658 = vperm.slane %v8696, %v9657
    %vm9659 = vcmask 326912
    %v9660 = vsel %vm9659, %v9658, %v9656
    %v9661 = vadd.s32 %v9643, 4294967256
    %v9662 = vperm.slane %v8699, %v9661
    %vm9663 = vcmask 392512
    %v9664 = vsel %vm9663, %v9662, %v9660
    %v9665 = vadd.s32 %v9643, 4294967248
    %v9666 = vperm.slane %v8702, %v9665
    %vm9667 = vcmask 458112
    %v9668 = vsel %vm9667, %v9666, %v9664
    %v9669 = vadd.s32 %v9643, 4294967240
    %v9670 = vperm.slane %v8705, %v9669
    %vm9671 = vcmask 523712
    %v9672 = vsel %vm9671, %v9670, %v9668
    %v9673 = vadd.s32 %v9643, 4294967232
    %v9674 = vperm.slane %v8708, %v9673
    %vm9675 = vcmask 589312
    %v9676 = vsel %vm9675, %v9674, %v9672
    %v9677 = vadd.s32 %v9643, 4294967224
    %v9678 = vperm.slane %v8711, %v9677
    %vm9679 = vcmask 654912
    %v9680 = vsel %vm9679, %v9678, %v9676
    %v9681 = vadd.s32 %v9643, 4294967216
    %v9682 = vperm.slane %v8714, %v9681
    %vm9683 = vcmask 720512
    %v9684 = vsel %vm9683, %v9682, %v9680
    %v9685 = vadd.s32 %v9643, 4294967208
    %v9686 = vperm.slane %v8717, %v9685
    %vm9687 = vcmask 786112
    %v9688 = vsel %vm9687, %v9686, %v9684
    %v9689 = vadd.s32 %v9643, 4294967200
    %v9690 = vperm.slane %v8720, %v9689
    %vm9691 = vcmask 851712
    %v9692 = vsel %vm9691, %v9690, %v9688
    %v9693 = vadd.s32 %v9643, 4294967192
    %v9694 = vperm.slane %v8723, %v9693
    %vm9695 = vcmask 917312
    %v9696 = vsel %vm9695, %v9694, %v9692
    %v9697 = vadd.s32 %v9643, 4294967184
    %v9698 = vperm.slane %v8726, %v9697
    %vm9699 = vcmask 982912
    %v9700 = vsel %vm9699, %v9698, %v9696
    %v9701 = vadd.s32 %v9643, 4294967176
    %v9702 = vperm.slane %v8729, %v9701
    %vm9703 = vcmask 1048512
    %v9704 = vsel %vm9703, %v9702, %v9700
    %v9705 = vperm.slane %v8732, %v9643
    %v9706 = vperm.slane %v8735, %v9645
    %v9707 = vsel %vm9647, %v9706, %v9705
    %v9708 = vperm.slane %v8738, %v9649
    %v9709 = vsel %vm9651, %v9708, %v9707
    %v9710 = vperm.slane %v8741, %v9653
    %v9711 = vsel %vm9655, %v9710, %v9709
    %v9712 = vperm.slane %v8744, %v9657
    %v9713 = vsel %vm9659, %v9712, %v9711
    %v9714 = vperm.slane %v8747, %v9661
    %v9715 = vsel %vm9663, %v9714, %v9713
    %v9716 = vperm.slane %v8750, %v9665
    %v9717 = vsel %vm9667, %v9716, %v9715
    %v9718 = vperm.slane %v8753, %v9669
    %v9719 = vsel %vm9671, %v9718, %v9717
    %v9720 = vperm.slane %v8756, %v9673
    %v9721 = vsel %vm9675, %v9720, %v9719
    %v9722 = vperm.slane %v8759, %v9677
    %v9723 = vsel %vm9679, %v9722, %v9721
    %v9724 = vperm.slane %v8762, %v9681
    %v9725 = vsel %vm9683, %v9724, %v9723
    %v9726 = vperm.slane %v8765, %v9685
    %v9727 = vsel %vm9687, %v9726, %v9725
    %v9728 = vperm.slane %v8768, %v9689
    %v9729 = vsel %vm9691, %v9728, %v9727
    %v9730 = vperm.slane %v8771, %v9693
    %v9731 = vsel %vm9695, %v9730, %v9729
    %v9732 = vperm.slane %v8774, %v9697
    %v9733 = vsel %vm9699, %v9732, %v9731
    %v9734 = vperm.slane %v8777, %v9701
    %v9735 = vsel %vm9703, %v9734, %v9733
    %v9736 = vperm.slane %v8780, %v9643
    %v9737 = vperm.slane %v8783, %v9645
    %v9738 = vsel %vm9647, %v9737, %v9736
    %v9739 = vperm.slane %v8786, %v9649
    %v9740 = vsel %vm9651, %v9739, %v9738
    %v9741 = vperm.slane %v8789, %v9653
    %v9742 = vsel %vm9655, %v9741, %v9740
    %v9743 = vperm.slane %v8792, %v9657
    %v9744 = vsel %vm9659, %v9743, %v9742
    %v9745 = vperm.slane %v8795, %v9661
    %v9746 = vsel %vm9663, %v9745, %v9744
    %v9747 = vperm.slane %v8798, %v9665
    %v9748 = vsel %vm9667, %v9747, %v9746
    %v9749 = vperm.slane %v8801, %v9669
    %v9750 = vsel %vm9671, %v9749, %v9748
    %v9751 = vperm.slane %v8804, %v9673
    %v9752 = vsel %vm9675, %v9751, %v9750
    %v9753 = vperm.slane %v8807, %v9677
    %v9754 = vsel %vm9679, %v9753, %v9752
    %v9755 = vperm.slane %v8810, %v9681
    %v9756 = vsel %vm9683, %v9755, %v9754
    %v9757 = vperm.slane %v8813, %v9685
    %v9758 = vsel %vm9687, %v9757, %v9756
    %v9759 = vperm.slane %v8816, %v9689
    %v9760 = vsel %vm9691, %v9759, %v9758
    %v9761 = vperm.slane %v8819, %v9693
    %v9762 = vsel %vm9695, %v9761, %v9760
    %v9763 = vperm.slane %v8822, %v9697
    %v9764 = vsel %vm9699, %v9763, %v9762
    %v9765 = vperm.slane %v8825, %v9701
    %v9766 = vsel %vm9703, %v9765, %v9764
    %v9767 = vperm.slane %v8828, %v9643
    %v9768 = vperm.slane %v8831, %v9645
    %v9769 = vsel %vm9647, %v9768, %v9767
    %v9770 = vperm.slane %v8834, %v9649
    %v9771 = vsel %vm9651, %v9770, %v9769
    %v9772 = vperm.slane %v8837, %v9653
    %v9773 = vsel %vm9655, %v9772, %v9771
    %v9774 = vperm.slane %v8840, %v9657
    %v9775 = vsel %vm9659, %v9774, %v9773
    %v9776 = vperm.slane %v8843, %v9661
    %v9777 = vsel %vm9663, %v9776, %v9775
    %v9778 = vperm.slane %v8846, %v9665
    %v9779 = vsel %vm9667, %v9778, %v9777
    %v9780 = vperm.slane %v8849, %v9669
    %v9781 = vsel %vm9671, %v9780, %v9779
    %v9782 = vperm.slane %v8852, %v9673
    %v9783 = vsel %vm9675, %v9782, %v9781
    %v9784 = vperm.slane %v8855, %v9677
    %v9785 = vsel %vm9679, %v9784, %v9783
    %v9786 = vperm.slane %v8858, %v9681
    %v9787 = vsel %vm9683, %v9786, %v9785
    %v9788 = vperm.slane %v8861, %v9685
    %v9789 = vsel %vm9687, %v9788, %v9787
    %v9790 = vperm.slane %v8864, %v9689
    %v9791 = vsel %vm9691, %v9790, %v9789
    %v9792 = vperm.slane %v8867, %v9693
    %v9793 = vsel %vm9695, %v9792, %v9791
    %v9794 = vperm.slane %v8870, %v9697
    %v9795 = vsel %vm9699, %v9794, %v9793
    %v9796 = vperm.slane %v8873, %v9701
    %v9797 = vsel %vm9703, %v9796, %v9795
    %v9798 = vperm.slane %v8876, %v9643
    %v9799 = vperm.slane %v8879, %v9645
    %v9800 = vsel %vm9647, %v9799, %v9798
    %v9801 = vperm.slane %v8882, %v9649
    %v9802 = vsel %vm9651, %v9801, %v9800
    %v9803 = vperm.slane %v8885, %v9653
    %v9804 = vsel %vm9655, %v9803, %v9802
    %v9805 = vperm.slane %v8888, %v9657
    %v9806 = vsel %vm9659, %v9805, %v9804
    %v9807 = vperm.slane %v8891, %v9661
    %v9808 = vsel %vm9663, %v9807, %v9806
    %v9809 = vperm.slane %v8894, %v9665
    %v9810 = vsel %vm9667, %v9809, %v9808
    %v9811 = vperm.slane %v8897, %v9669
    %v9812 = vsel %vm9671, %v9811, %v9810
    %v9813 = vperm.slane %v8900, %v9673
    %v9814 = vsel %vm9675, %v9813, %v9812
    %v9815 = vperm.slane %v8903, %v9677
    %v9816 = vsel %vm9679, %v9815, %v9814
    %v9817 = vperm.slane %v8906, %v9681
    %v9818 = vsel %vm9683, %v9817, %v9816
    %v9819 = vperm.slane %v8909, %v9685
    %v9820 = vsel %vm9687, %v9819, %v9818
    %v9821 = vperm.slane %v8912, %v9689
    %v9822 = vsel %vm9691, %v9821, %v9820
    %v9823 = vperm.slane %v8915, %v9693
    %v9824 = vsel %vm9695, %v9823, %v9822
    %v9825 = vperm.slane %v8918, %v9697
    %v9826 = vsel %vm9699, %v9825, %v9824
    %v9827 = vperm.slane %v8921, %v9701
    %v9828 = vsel %vm9703, %v9827, %v9826
    %v9829 = vperm.slane %v8924, %v9643
    %v9830 = vperm.slane %v8927, %v9645
    %v9831 = vsel %vm9647, %v9830, %v9829
    %v9832 = vperm.slane %v8930, %v9649
    %v9833 = vsel %vm9651, %v9832, %v9831
    %v9834 = vperm.slane %v8933, %v9653
    %v9835 = vsel %vm9655, %v9834, %v9833
    %v9836 = vperm.slane %v8936, %v9657
    %v9837 = vsel %vm9659, %v9836, %v9835
    %v9838 = vperm.slane %v8939, %v9661
    %v9839 = vsel %vm9663, %v9838, %v9837
    %v9840 = vperm.slane %v8942, %v9665
    %v9841 = vsel %vm9667, %v9840, %v9839
    %v9842 = vperm.slane %v8945, %v9669
    %v9843 = vsel %vm9671, %v9842, %v9841
    %v9844 = vperm.slane %v8948, %v9673
    %v9845 = vsel %vm9675, %v9844, %v9843
    %v9846 = vperm.slane %v8951, %v9677
    %v9847 = vsel %vm9679, %v9846, %v9845
    %v9848 = vperm.slane %v8954, %v9681
    %v9849 = vsel %vm9683, %v9848, %v9847
    %v9850 = vperm.slane %v8957, %v9685
    %v9851 = vsel %vm9687, %v9850, %v9849
    %v9852 = vperm.slane %v8960, %v9689
    %v9853 = vsel %vm9691, %v9852, %v9851
    %v9854 = vperm.slane %v8963, %v9693
    %v9855 = vsel %vm9695, %v9854, %v9853
    %v9856 = vperm.slane %v8966, %v9697
    %v9857 = vsel %vm9699, %v9856, %v9855
    %v9858 = vperm.slane %v8969, %v9701
    %v9859 = vsel %vm9703, %v9858, %v9857
    %v9860 = vperm.slane %v8972, %v9643
    %v9861 = vperm.slane %v8975, %v9645
    %v9862 = vsel %vm9647, %v9861, %v9860
    %v9863 = vperm.slane %v8978, %v9649
    %v9864 = vsel %vm9651, %v9863, %v9862
    %v9865 = vperm.slane %v8981, %v9653
    %v9866 = vsel %vm9655, %v9865, %v9864
    %v9867 = vperm.slane %v8984, %v9657
    %v9868 = vsel %vm9659, %v9867, %v9866
    %v9869 = vperm.slane %v8987, %v9661
    %v9870 = vsel %vm9663, %v9869, %v9868
    %v9871 = vperm.slane %v8990, %v9665
    %v9872 = vsel %vm9667, %v9871, %v9870
    %v9873 = vperm.slane %v8993, %v9669
    %v9874 = vsel %vm9671, %v9873, %v9872
    %v9875 = vperm.slane %v8996, %v9673
    %v9876 = vsel %vm9675, %v9875, %v9874
    %v9877 = vperm.slane %v8999, %v9677
    %v9878 = vsel %vm9679, %v9877, %v9876
    %v9879 = vperm.slane %v9002, %v9681
    %v9880 = vsel %vm9683, %v9879, %v9878
    %v9881 = vperm.slane %v9005, %v9685
    %v9882 = vsel %vm9687, %v9881, %v9880
    %v9883 = vperm.slane %v9008, %v9689
    %v9884 = vsel %vm9691, %v9883, %v9882
    %v9885 = vperm.slane %v9011, %v9693
    %v9886 = vsel %vm9695, %v9885, %v9884
    %v9887 = vperm.slane %v9014, %v9697
    %v9888 = vsel %vm9699, %v9887, %v9886
    %v9889 = vperm.slane %v9017, %v9701
    %v9890 = vsel %vm9703, %v9889, %v9888
    %v9891 = vperm.slane %v9020, %v9643
    %v9892 = vperm.slane %v9023, %v9645
    %v9893 = vsel %vm9647, %v9892, %v9891
    %v9894 = vperm.slane %v9026, %v9649
    %v9895 = vsel %vm9651, %v9894, %v9893
    %v9896 = vperm.slane %v9029, %v9653
    %v9897 = vsel %vm9655, %v9896, %v9895
    %v9898 = vperm.slane %v9032, %v9657
    %v9899 = vsel %vm9659, %v9898, %v9897
    %v9900 = vperm.slane %v9035, %v9661
    %v9901 = vsel %vm9663, %v9900, %v9899
    %v9902 = vperm.slane %v9038, %v9665
    %v9903 = vsel %vm9667, %v9902, %v9901
    %v9904 = vperm.slane %v9041, %v9669
    %v9905 = vsel %vm9671, %v9904, %v9903
    %v9906 = vperm.slane %v9044, %v9673
    %v9907 = vsel %vm9675, %v9906, %v9905
    %v9908 = vperm.slane %v9047, %v9677
    %v9909 = vsel %vm9679, %v9908, %v9907
    %v9910 = vperm.slane %v9050, %v9681
    %v9911 = vsel %vm9683, %v9910, %v9909
    %v9912 = vperm.slane %v9053, %v9685
    %v9913 = vsel %vm9687, %v9912, %v9911
    %v9914 = vperm.slane %v9056, %v9689
    %v9915 = vsel %vm9691, %v9914, %v9913
    %v9916 = vperm.slane %v9059, %v9693
    %v9917 = vsel %vm9695, %v9916, %v9915
    %v9918 = vperm.slane %v9062, %v9697
    %v9919 = vsel %vm9699, %v9918, %v9917
    %v9920 = vperm.slane %v9065, %v9701
    %v9921 = vsel %vm9703, %v9920, %v9919
    %v9922 = vperm.slane %v9068, %v9643
    %v9923 = vperm.slane %v9071, %v9645
    %v9924 = vsel %vm9647, %v9923, %v9922
    %v9925 = vperm.slane %v9074, %v9649
    %v9926 = vsel %vm9651, %v9925, %v9924
    %v9927 = vperm.slane %v9077, %v9653
    %v9928 = vsel %vm9655, %v9927, %v9926
    %v9929 = vperm.slane %v9080, %v9657
    %v9930 = vsel %vm9659, %v9929, %v9928
    %v9931 = vperm.slane %v9083, %v9661
    %v9932 = vsel %vm9663, %v9931, %v9930
    %v9933 = vperm.slane %v9086, %v9665
    %v9934 = vsel %vm9667, %v9933, %v9932
    %v9935 = vperm.slane %v9089, %v9669
    %v9936 = vsel %vm9671, %v9935, %v9934
    %v9937 = vperm.slane %v9092, %v9673
    %v9938 = vsel %vm9675, %v9937, %v9936
    %v9939 = vperm.slane %v9095, %v9677
    %v9940 = vsel %vm9679, %v9939, %v9938
    %v9941 = vperm.slane %v9098, %v9681
    %v9942 = vsel %vm9683, %v9941, %v9940
    %v9943 = vperm.slane %v9101, %v9685
    %v9944 = vsel %vm9687, %v9943, %v9942
    %v9945 = vperm.slane %v9104, %v9689
    %v9946 = vsel %vm9691, %v9945, %v9944
    %v9947 = vperm.slane %v9107, %v9693
    %v9948 = vsel %vm9695, %v9947, %v9946
    %v9949 = vperm.slane %v9110, %v9697
    %v9950 = vsel %vm9699, %v9949, %v9948
    %v9951 = vperm.slane %v9113, %v9701
    %v9952 = vsel %vm9703, %v9951, %v9950
    %v9953 = vperm.slane %v9116, %v9643
    %v9954 = vperm.slane %v9119, %v9645
    %v9955 = vsel %vm9647, %v9954, %v9953
    %v9956 = vperm.slane %v9122, %v9649
    %v9957 = vsel %vm9651, %v9956, %v9955
    %v9958 = vperm.slane %v9125, %v9653
    %v9959 = vsel %vm9655, %v9958, %v9957
    %v9960 = vperm.slane %v9128, %v9657
    %v9961 = vsel %vm9659, %v9960, %v9959
    %v9962 = vperm.slane %v9131, %v9661
    %v9963 = vsel %vm9663, %v9962, %v9961
    %v9964 = vperm.slane %v9134, %v9665
    %v9965 = vsel %vm9667, %v9964, %v9963
    %v9966 = vperm.slane %v9137, %v9669
    %v9967 = vsel %vm9671, %v9966, %v9965
    %v9968 = vperm.slane %v9140, %v9673
    %v9969 = vsel %vm9675, %v9968, %v9967
    %v9970 = vperm.slane %v9143, %v9677
    %v9971 = vsel %vm9679, %v9970, %v9969
    %v9972 = vperm.slane %v9146, %v9681
    %v9973 = vsel %vm9683, %v9972, %v9971
    %v9974 = vperm.slane %v9149, %v9685
    %v9975 = vsel %vm9687, %v9974, %v9973
    %v9976 = vperm.slane %v9152, %v9689
    %v9977 = vsel %vm9691, %v9976, %v9975
    %v9978 = vperm.slane %v9155, %v9693
    %v9979 = vsel %vm9695, %v9978, %v9977
    %v9980 = vperm.slane %v9158, %v9697
    %v9981 = vsel %vm9699, %v9980, %v9979
    %v9982 = vperm.slane %v9161, %v9701
    %v9983 = vsel %vm9703, %v9982, %v9981
    %v9984 = vperm.slane %v9164, %v9643
    %v9985 = vperm.slane %v9167, %v9645
    %v9986 = vsel %vm9647, %v9985, %v9984
    %v9987 = vperm.slane %v9170, %v9649
    %v9988 = vsel %vm9651, %v9987, %v9986
    %v9989 = vperm.slane %v9173, %v9653
    %v9990 = vsel %vm9655, %v9989, %v9988
    %v9991 = vperm.slane %v9176, %v9657
    %v9992 = vsel %vm9659, %v9991, %v9990
    %v9993 = vperm.slane %v9179, %v9661
    %v9994 = vsel %vm9663, %v9993, %v9992
    %v9995 = vperm.slane %v9182, %v9665
    %v9996 = vsel %vm9667, %v9995, %v9994
    %v9997 = vperm.slane %v9185, %v9669
    %v9998 = vsel %vm9671, %v9997, %v9996
    %v9999 = vperm.slane %v9188, %v9673
    %v10000 = vsel %vm9675, %v9999, %v9998
    %v10001 = vperm.slane %v9191, %v9677
    %v10002 = vsel %vm9679, %v10001, %v10000
    %v10003 = vperm.slane %v9194, %v9681
    %v10004 = vsel %vm9683, %v10003, %v10002
    %v10005 = vperm.slane %v9197, %v9685
    %v10006 = vsel %vm9687, %v10005, %v10004
    %v10007 = vperm.slane %v9200, %v9689
    %v10008 = vsel %vm9691, %v10007, %v10006
    %v10009 = vperm.slane %v9203, %v9693
    %v10010 = vsel %vm9695, %v10009, %v10008
    %v10011 = vperm.slane %v9206, %v9697
    %v10012 = vsel %vm9699, %v10011, %v10010
    %v10013 = vperm.slane %v9209, %v9701
    %v10014 = vsel %vm9703, %v10013, %v10012
    %v10015 = vperm.slane %v9212, %v9643
    %v10016 = vperm.slane %v9215, %v9645
    %v10017 = vsel %vm9647, %v10016, %v10015
    %v10018 = vperm.slane %v9218, %v9649
    %v10019 = vsel %vm9651, %v10018, %v10017
    %v10020 = vperm.slane %v9221, %v9653
    %v10021 = vsel %vm9655, %v10020, %v10019
    %v10022 = vperm.slane %v9224, %v9657
    %v10023 = vsel %vm9659, %v10022, %v10021
    %v10024 = vperm.slane %v9227, %v9661
    %v10025 = vsel %vm9663, %v10024, %v10023
    %v10026 = vperm.slane %v9230, %v9665
    %v10027 = vsel %vm9667, %v10026, %v10025
    %v10028 = vperm.slane %v9233, %v9669
    %v10029 = vsel %vm9671, %v10028, %v10027
    %v10030 = vperm.slane %v9236, %v9673
    %v10031 = vsel %vm9675, %v10030, %v10029
    %v10032 = vperm.slane %v9239, %v9677
    %v10033 = vsel %vm9679, %v10032, %v10031
    %v10034 = vperm.slane %v9242, %v9681
    %v10035 = vsel %vm9683, %v10034, %v10033
    %v10036 = vperm.slane %v9245, %v9685
    %v10037 = vsel %vm9687, %v10036, %v10035
    %v10038 = vperm.slane %v9248, %v9689
    %v10039 = vsel %vm9691, %v10038, %v10037
    %v10040 = vperm.slane %v9251, %v9693
    %v10041 = vsel %vm9695, %v10040, %v10039
    %v10042 = vperm.slane %v9254, %v9697
    %v10043 = vsel %vm9699, %v10042, %v10041
    %v10044 = vperm.slane %v9257, %v9701
    %v10045 = vsel %vm9703, %v10044, %v10043
    %v10046 = vperm.slane %v9260, %v9643
    %v10047 = vperm.slane %v9263, %v9645
    %v10048 = vsel %vm9647, %v10047, %v10046
    %v10049 = vperm.slane %v9266, %v9649
    %v10050 = vsel %vm9651, %v10049, %v10048
    %v10051 = vperm.slane %v9269, %v9653
    %v10052 = vsel %vm9655, %v10051, %v10050
    %v10053 = vperm.slane %v9272, %v9657
    %v10054 = vsel %vm9659, %v10053, %v10052
    %v10055 = vperm.slane %v9275, %v9661
    %v10056 = vsel %vm9663, %v10055, %v10054
    %v10057 = vperm.slane %v9278, %v9665
    %v10058 = vsel %vm9667, %v10057, %v10056
    %v10059 = vperm.slane %v9281, %v9669
    %v10060 = vsel %vm9671, %v10059, %v10058
    %v10061 = vperm.slane %v9284, %v9673
    %v10062 = vsel %vm9675, %v10061, %v10060
    %v10063 = vperm.slane %v9287, %v9677
    %v10064 = vsel %vm9679, %v10063, %v10062
    %v10065 = vperm.slane %v9290, %v9681
    %v10066 = vsel %vm9683, %v10065, %v10064
    %v10067 = vperm.slane %v9293, %v9685
    %v10068 = vsel %vm9687, %v10067, %v10066
    %v10069 = vperm.slane %v9296, %v9689
    %v10070 = vsel %vm9691, %v10069, %v10068
    %v10071 = vperm.slane %v9299, %v9693
    %v10072 = vsel %vm9695, %v10071, %v10070
    %v10073 = vperm.slane %v9302, %v9697
    %v10074 = vsel %vm9699, %v10073, %v10072
    %v10075 = vperm.slane %v9305, %v9701
    %v10076 = vsel %vm9703, %v10075, %v10074
    %v10077 = vperm.slane %v9308, %v9643
    %v10078 = vperm.slane %v9311, %v9645
    %v10079 = vsel %vm9647, %v10078, %v10077
    %v10080 = vperm.slane %v9314, %v9649
    %v10081 = vsel %vm9651, %v10080, %v10079
    %v10082 = vperm.slane %v9317, %v9653
    %v10083 = vsel %vm9655, %v10082, %v10081
    %v10084 = vperm.slane %v9320, %v9657
    %v10085 = vsel %vm9659, %v10084, %v10083
    %v10086 = vperm.slane %v9323, %v9661
    %v10087 = vsel %vm9663, %v10086, %v10085
    %v10088 = vperm.slane %v9326, %v9665
    %v10089 = vsel %vm9667, %v10088, %v10087
    %v10090 = vperm.slane %v9329, %v9669
    %v10091 = vsel %vm9671, %v10090, %v10089
    %v10092 = vperm.slane %v9332, %v9673
    %v10093 = vsel %vm9675, %v10092, %v10091
    %v10094 = vperm.slane %v9335, %v9677
    %v10095 = vsel %vm9679, %v10094, %v10093
    %v10096 = vperm.slane %v9338, %v9681
    %v10097 = vsel %vm9683, %v10096, %v10095
    %v10098 = vperm.slane %v9341, %v9685
    %v10099 = vsel %vm9687, %v10098, %v10097
    %v10100 = vperm.slane %v9344, %v9689
    %v10101 = vsel %vm9691, %v10100, %v10099
    %v10102 = vperm.slane %v9347, %v9693
    %v10103 = vsel %vm9695, %v10102, %v10101
    %v10104 = vperm.slane %v9350, %v9697
    %v10105 = vsel %vm9699, %v10104, %v10103
    %v10106 = vperm.slane %v9353, %v9701
    %v10107 = vsel %vm9703, %v10106, %v10105
    %v10108 = vperm.slane %v9356, %v9643
    %v10109 = vperm.slane %v9359, %v9645
    %v10110 = vsel %vm9647, %v10109, %v10108
    %v10111 = vperm.slane %v9362, %v9649
    %v10112 = vsel %vm9651, %v10111, %v10110
    %v10113 = vperm.slane %v9365, %v9653
    %v10114 = vsel %vm9655, %v10113, %v10112
    %v10115 = vperm.slane %v9368, %v9657
    %v10116 = vsel %vm9659, %v10115, %v10114
    %v10117 = vperm.slane %v9371, %v9661
    %v10118 = vsel %vm9663, %v10117, %v10116
    %v10119 = vperm.slane %v9374, %v9665
    %v10120 = vsel %vm9667, %v10119, %v10118
    %v10121 = vperm.slane %v9377, %v9669
    %v10122 = vsel %vm9671, %v10121, %v10120
    %v10123 = vperm.slane %v9380, %v9673
    %v10124 = vsel %vm9675, %v10123, %v10122
    %v10125 = vperm.slane %v9383, %v9677
    %v10126 = vsel %vm9679, %v10125, %v10124
    %v10127 = vperm.slane %v9386, %v9681
    %v10128 = vsel %vm9683, %v10127, %v10126
    %v10129 = vperm.slane %v9389, %v9685
    %v10130 = vsel %vm9687, %v10129, %v10128
    %v10131 = vperm.slane %v9392, %v9689
    %v10132 = vsel %vm9691, %v10131, %v10130
    %v10133 = vperm.slane %v9395, %v9693
    %v10134 = vsel %vm9695, %v10133, %v10132
    %v10135 = vperm.slane %v9398, %v9697
    %v10136 = vsel %vm9699, %v10135, %v10134
    %v10137 = vperm.slane %v9401, %v9701
    %v10138 = vsel %vm9703, %v10137, %v10136
    %v10139 = vperm.slane %v9404, %v9643
    %v10140 = vperm.slane %v9407, %v9645
    %v10141 = vsel %vm9647, %v10140, %v10139
    %v10142 = vperm.slane %v9410, %v9649
    %v10143 = vsel %vm9651, %v10142, %v10141
    %v10144 = vperm.slane %v9413, %v9653
    %v10145 = vsel %vm9655, %v10144, %v10143
    %v10146 = vperm.slane %v9416, %v9657
    %v10147 = vsel %vm9659, %v10146, %v10145
    %v10148 = vperm.slane %v9419, %v9661
    %v10149 = vsel %vm9663, %v10148, %v10147
    %v10150 = vperm.slane %v9422, %v9665
    %v10151 = vsel %vm9667, %v10150, %v10149
    %v10152 = vperm.slane %v9425, %v9669
    %v10153 = vsel %vm9671, %v10152, %v10151
    %v10154 = vperm.slane %v9428, %v9673
    %v10155 = vsel %vm9675, %v10154, %v10153
    %v10156 = vperm.slane %v9431, %v9677
    %v10157 = vsel %vm9679, %v10156, %v10155
    %v10158 = vperm.slane %v9434, %v9681
    %v10159 = vsel %vm9683, %v10158, %v10157
    %v10160 = vperm.slane %v9437, %v9685
    %v10161 = vsel %vm9687, %v10160, %v10159
    %v10162 = vperm.slane %v9440, %v9689
    %v10163 = vsel %vm9691, %v10162, %v10161
    %v10164 = vperm.slane %v9443, %v9693
    %v10165 = vsel %vm9695, %v10164, %v10163
    %v10166 = vperm.slane %v9446, %v9697
    %v10167 = vsel %vm9699, %v10166, %v10165
    %v10168 = vperm.slane %v9449, %v9701
    %v10169 = vsel %vm9703, %v10168, %v10167
    %v10170 = vperm.slane %v9452, %v9643
    %v10171 = vperm.slane %v9455, %v9645
    %v10172 = vsel %vm9647, %v10171, %v10170
    %v10173 = vperm.slane %v9458, %v9649
    %v10174 = vsel %vm9651, %v10173, %v10172
    %v10175 = vperm.slane %v9461, %v9653
    %v10176 = vsel %vm9655, %v10175, %v10174
    %v10177 = vperm.slane %v9464, %v9657
    %v10178 = vsel %vm9659, %v10177, %v10176
    %v10179 = vperm.slane %v9467, %v9661
    %v10180 = vsel %vm9663, %v10179, %v10178
    %v10181 = vperm.slane %v9470, %v9665
    %v10182 = vsel %vm9667, %v10181, %v10180
    %v10183 = vperm.slane %v9473, %v9669
    %v10184 = vsel %vm9671, %v10183, %v10182
    %v10185 = vperm.slane %v9476, %v9673
    %v10186 = vsel %vm9675, %v10185, %v10184
    %v10187 = vperm.slane %v9479, %v9677
    %v10188 = vsel %vm9679, %v10187, %v10186
    %v10189 = vperm.slane %v9482, %v9681
    %v10190 = vsel %vm9683, %v10189, %v10188
    %v10191 = vperm.slane %v9485, %v9685
    %v10192 = vsel %vm9687, %v10191, %v10190
    %v10193 = vperm.slane %v9488, %v9689
    %v10194 = vsel %vm9691, %v10193, %v10192
    %v10195 = vperm.slane %v9491, %v9693
    %v10196 = vsel %vm9695, %v10195, %v10194
    %v10197 = vperm.slane %v9494, %v9697
    %v10198 = vsel %vm9699, %v10197, %v10196
    %v10199 = vperm.slane %v9497, %v9701
    %v10200 = vsel %vm9703, %v10199, %v10198
    %v10201 = vperm.slane %v9500, %v9643
    %v10202 = vperm.slane %v9503, %v9645
    %v10203 = vsel %vm9647, %v10202, %v10201
    %v10204 = vperm.slane %v9506, %v9649
    %v10205 = vsel %vm9651, %v10204, %v10203
    %v10206 = vperm.slane %v9509, %v9653
    %v10207 = vsel %vm9655, %v10206, %v10205
    %v10208 = vperm.slane %v9512, %v9657
    %v10209 = vsel %vm9659, %v10208, %v10207
    %v10210 = vperm.slane %v9515, %v9661
    %v10211 = vsel %vm9663, %v10210, %v10209
    %v10212 = vperm.slane %v9518, %v9665
    %v10213 = vsel %vm9667, %v10212, %v10211
    %v10214 = vperm.slane %v9521, %v9669
    %v10215 = vsel %vm9671, %v10214, %v10213
    %v10216 = vperm.slane %v9524, %v9673
    %v10217 = vsel %vm9675, %v10216, %v10215
    %v10218 = vperm.slane %v9527, %v9677
    %v10219 = vsel %vm9679, %v10218, %v10217
    %v10220 = vperm.slane %v9530, %v9681
    %v10221 = vsel %vm9683, %v10220, %v10219
    %v10222 = vperm.slane %v9533, %v9685
    %v10223 = vsel %vm9687, %v10222, %v10221
    %v10224 = vperm.slane %v9536, %v9689
    %v10225 = vsel %vm9691, %v10224, %v10223
    %v10226 = vperm.slane %v9539, %v9693
    %v10227 = vsel %vm9695, %v10226, %v10225
    %v10228 = vperm.slane %v9542, %v9697
    %v10229 = vsel %vm9699, %v10228, %v10227
    %v10230 = vperm.slane %v9545, %v9701
    %v10231 = vsel %vm9703, %v10230, %v10229
    %v10232 = vperm.slane %v9548, %v9643
    %v10233 = vperm.slane %v9551, %v9645
    %v10234 = vsel %vm9647, %v10233, %v10232
    %v10235 = vperm.slane %v9554, %v9649
    %v10236 = vsel %vm9651, %v10235, %v10234
    %v10237 = vperm.slane %v9557, %v9653
    %v10238 = vsel %vm9655, %v10237, %v10236
    %v10239 = vperm.slane %v9560, %v9657
    %v10240 = vsel %vm9659, %v10239, %v10238
    %v10241 = vperm.slane %v9563, %v9661
    %v10242 = vsel %vm9663, %v10241, %v10240
    %v10243 = vperm.slane %v9566, %v9665
    %v10244 = vsel %vm9667, %v10243, %v10242
    %v10245 = vperm.slane %v9569, %v9669
    %v10246 = vsel %vm9671, %v10245, %v10244
    %v10247 = vperm.slane %v9572, %v9673
    %v10248 = vsel %vm9675, %v10247, %v10246
    %v10249 = vperm.slane %v9575, %v9677
    %v10250 = vsel %vm9679, %v10249, %v10248
    %v10251 = vperm.slane %v9578, %v9681
    %v10252 = vsel %vm9683, %v10251, %v10250
    %v10253 = vperm.slane %v9581, %v9685
    %v10254 = vsel %vm9687, %v10253, %v10252
    %v10255 = vperm.slane %v9584, %v9689
    %v10256 = vsel %vm9691, %v10255, %v10254
    %v10257 = vperm.slane %v9587, %v9693
    %v10258 = vsel %vm9695, %v10257, %v10256
    %v10259 = vperm.slane %v9590, %v9697
    %v10260 = vsel %vm9699, %v10259, %v10258
    %v10261 = vperm.slane %v9593, %v9701
    %v10262 = vsel %vm9703, %v10261, %v10260
    %v10263 = vperm.slane %v9596, %v9643
    %v10264 = vperm.slane %v9599, %v9645
    %v10265 = vsel %vm9647, %v10264, %v10263
    %v10266 = vperm.slane %v9602, %v9649
    %v10267 = vsel %vm9651, %v10266, %v10265
    %v10268 = vperm.slane %v9605, %v9653
    %v10269 = vsel %vm9655, %v10268, %v10267
    %v10270 = vperm.slane %v9608, %v9657
    %v10271 = vsel %vm9659, %v10270, %v10269
    %v10272 = vperm.slane %v9611, %v9661
    %v10273 = vsel %vm9663, %v10272, %v10271
    %v10274 = vperm.slane %v9614, %v9665
    %v10275 = vsel %vm9667, %v10274, %v10273
    %v10276 = vperm.slane %v9617, %v9669
    %v10277 = vsel %vm9671, %v10276, %v10275
    %v10278 = vperm.slane %v9620, %v9673
    %v10279 = vsel %vm9675, %v10278, %v10277
    %v10280 = vperm.slane %v9623, %v9677
    %v10281 = vsel %vm9679, %v10280, %v10279
    %v10282 = vperm.slane %v9626, %v9681
    %v10283 = vsel %vm9683, %v10282, %v10281
    %v10284 = vperm.slane %v9629, %v9685
    %v10285 = vsel %vm9687, %v10284, %v10283
    %v10286 = vperm.slane %v9632, %v9689
    %v10287 = vsel %vm9691, %v10286, %v10285
    %v10288 = vperm.slane %v9635, %v9693
    %v10289 = vsel %vm9695, %v10288, %v10287
    %v10290 = vperm.slane %v9638, %v9697
    %v10291 = vsel %vm9699, %v10290, %v10289
    %v10292 = vperm.slane %v9641, %v9701
    %v10293 = vsel %vm9703, %v10292, %v10291
    %vm10294 = vcmask 1041409
    %v10295 = vsel %vm10294, %v10014, %v9704
    %v10296 = vsel %vm10294, %v10045, %v9735
    %v10297 = vsel %vm10294, %v10076, %v9766
    %v10298 = vsel %vm10294, %v10107, %v9797
    %v10299 = vsel %vm10294, %v10138, %v9828
    %v10300 = vsel %vm10294, %v10169, %v9859
    %v10301 = vsel %vm10294, %v10200, %v9890
    %v10302 = vsel %vm10294, %v10231, %v9921
    %v10303 = vsel %vm10294, %v10262, %v9952
    %v10304 = vsel %vm10294, %v10293, %v9983
    %v10305 = vrot.slane %v10296, 6
    %v10306 = vrot.slane %v10297, 4
    %v10307 = vrot.slane %v10298, 2
    %v10308 = vrot.slane %v10300, 6
    %v10309 = vrot.slane %v10301, 4
    %v10310 = vrot.slane %v10302, 2
    %v10311 = vrot.slane %v10304, 6
    %vm10312 = vcmask 1041408
    %v10313 = vsel %vm10312, %v10295, %v10305
    %vm10314 = vcmask 1045508
    %v10315 = vsel %vm10314, %v10306, %v10307
    %vm10316 = vcmask 1043456
    %v10317 = vsel %vm10316, %v10313, %v10315
    %v10318 = vsel %vm10312, %v10299, %v10308
    %v10319 = vsel %vm10314, %v10309, %v10310
    %v10320 = vsel %vm10316, %v10318, %v10319
    %v10321 = vsel %vm10312, %v10303, %v10311
    %v10325 = vadd.f32 %v351, %v10317
    %v10326 = vadd.f32 %v352, %v10320
    %v10327 = vadd.f32 %v353, %v10321
    %10328 = vst [vmem:[#allocation2] sm:$0xff] %v10325
    %10329 = vst [vmem:[#allocation2 + $0x8] sm:$0xff] %v10326
    %10330 = vst [vmem:[#allocation2 + $0x10] sm:$0xf] %v10327
    // Predicated region
    $region30: #{fake_image_model_head.1} parent=1 // pred_check
      %p10331 = pneg %p24
    $region31: #{fake_image_model_head.1} parent=1 // pred_check_branch
      %10333 = sbr.rel (%p10331) target = $region33
    $region32: #{fake_image_model_head.1} parent=1 // pred_region
      %v10334 = vld [vmem:[#allocation2] sm:$0xff]
      %v10335 = vld [vmem:[#allocation2 + $0x8] sm:$0xff]
      %v10336 = vld [vmem:[#allocation2 + $0x10] sm:$0xf]
      %v10337 = vmul.f32 %v10334, 0.0625
      %v10338 = vmul.f32 %v10335, 0.0625
      %v10339 = vmul.f32 %v10336, 0.0625
      %10343 = vst [vmem:[#allocation1] ss:$4 sm:$0xff] %v10337
      %s10344 = scalar_lea.vmem [#allocation1], 32
      %10345 = vst [vmem:[%s10344] ss:$4 sm:$0xff] %v10338
      %v10346 = vld.sshfl [vmem:[#allocation1] sm:$0xff pattern:$0x73625140]
      %v10347 = vld.sshfl [vmem:[#allocation1 + $0x8] sm:$0xff pattern:$0x73625140]
      %v10348 = vld.sshfl [vmem:[#allocation1 + $0x10] sm:$0xff pattern:$0x73625140]
      %v10349 = vld.sshfl [vmem:[#allocation1 + $0x18] sm:$0xff pattern:$0x73625140]
      %v10350 = vld.sshfl [vmem:[#allocation1 + $0x20] sm:$0xff pattern:$0x73625140]
      %v10351 = vld.sshfl [vmem:[#allocation1 + $0x28] sm:$0xff pattern:$0x73625140]
      %v10352 = vld.sshfl [vmem:[#allocation1 + $0x30] sm:$0xff pattern:$0x73625140]
      %v10353 = vld.sshfl [vmem:[#allocation1 + $0x38] sm:$0xff pattern:$0x73625140]
      %10354 = vst [vmem:[#allocation1] ss:$4 sm:$0xff] %v10339
      %v10355 = vld.sshfl [vmem:[#allocation1] sm:$0xff pattern:$0x73625140]
      %v10356 = vld.sshfl [vmem:[#allocation1 + $0x8] sm:$0xff pattern:$0x73625140]
      %v10367 = vpack.c.bf16 %v10346, %v10346
      %v10368 = vpack.c.bf16 %v10347, %v10347
      %v10369 = vpack.c.bf16 %v10348, %v10348
      %v10370 = vpack.c.bf16 %v10349, %v10349
      %v10371 = vpack.c.bf16 %v10350, %v10350
      %v10372 = vpack.c.bf16 %v10351, %v10351
      %v10373 = vpack.c.bf16 %v10352, %v10352
      %v10374 = vpack.c.bf16 %v10353, %v10353
      %v10375 = vpack.c.bf16 %v10355, %v10355
      %v10376 = vpack.c.bf16 %v10356, %v10356
      %v10377 = vld [vmem:[%s1] sm:$0xf]
      %v10378 = vld [vmem:[%s1 + $0x4] sm:$0xf]
      %v10379 = vld [vmem:[%s1 + $0x8] sm:$0xf]
      %v10380 = vld [vmem:[%s1 + $0xc] sm:$0xf]
      %v10381 = vld [vmem:[%s1 + $0x10] sm:$0xf]
      %v10382 = vld [vmem:[%s1 + $0x14] sm:$0xf]
      %v10383 = vld [vmem:[%s1 + $0x18] sm:$0xf]
      %v10384 = vld [vmem:[%s1 + $0x1c] sm:$0xf]
      %v10385 = vld [vmem:[%s1 + $0x20] sm:$0xf]
      %v10386 = vld [vmem:[%s1 + $0x24] sm:$0xf]
      %v10387 = vld [vmem:[%s1 + $0x28] sm:$0xf]
      %v10388 = vld [vmem:[%s1 + $0x2c] sm:$0xf]
      %v10389 = vld [vmem:[%s1 + $0x30] sm:$0xf]
      %v10390 = vld [vmem:[%s1 + $0x34] sm:$0xf]
      %v10391 = vld [vmem:[%s1 + $0x38] sm:$0xf]
      %v10392 = vld [vmem:[%s1 + $0x3c] sm:$0xf]
      %v10393 = vld [vmem:[%s1 + $0x40] sm:$0xf]
      %v10394 = vld [vmem:[%s1 + $0x44] sm:$0xf]
      %v10395 = vld [vmem:[%s1 + $0x48] sm:$0xf]
      %v10396 = vld [vmem:[%s1 + $0x4c] sm:$0xf]
      %v10397 = vld [vmem:[%s1 + $0x50] sm:$0xf]
      %v10398 = vld [vmem:[%s1 + $0x54] sm:$0xf]
      %v10399 = vld [vmem:[%s1 + $0x58] sm:$0xf]
      %v10400 = vld [vmem:[%s1 + $0x5c] sm:$0xf]
      %v10401 = vld [vmem:[%s1 + $0x60] sm:$0xf]
      %v10402 = vld [vmem:[%s1 + $0x64] sm:$0xf]
      %v10403 = vld [vmem:[%s1 + $0x68] sm:$0xf]
      %v10404 = vld [vmem:[%s1 + $0x6c] sm:$0xf]
      %v10405 = vld [vmem:[%s1 + $0x70] sm:$0xf]
      %v10406 = vld [vmem:[%s1 + $0x74] sm:$0xf]
      %v10407 = vld [vmem:[%s1 + $0x78] sm:$0xf]
      %v10408 = vld [vmem:[%s1 + $0x7c] sm:$0xf]
      %v10409 = vld [vmem:[%s1 + $0x80] sm:$0xf]
      %v10410 = vld [vmem:[%s1 + $0x84] sm:$0xf]
      %v10411 = vld [vmem:[%s1 + $0x88] sm:$0xf]
      %v10412 = vld [vmem:[%s1 + $0x8c] sm:$0xf]
      %v10413 = vld [vmem:[%s1 + $0x90] sm:$0xf]
      %v10414 = vld [vmem:[%s1 + $0x94] sm:$0xf]
      %v10415 = vld [vmem:[%s1 + $0x98] sm:$0xf]
      %v10416 = vld [vmem:[%s1 + $0x9c] sm:$0xf]
      %v10417 = vld [vmem:[%s1 + $0xa0] sm:$0xf]
      %v10418 = vld [vmem:[%s1 + $0xa4] sm:$0xf]
      %v10419 = vld [vmem:[%s1 + $0xa8] sm:$0xf]
      %v10420 = vld [vmem:[%s1 + $0xac] sm:$0xf]
      %v10421 = vld [vmem:[%s1 + $0xb0] sm:$0xf]
      %v10422 = vld [vmem:[%s1 + $0xb4] sm:$0xf]
      %v10423 = vld [vmem:[%s1 + $0xb8] sm:$0xf]
      %v10424 = vld [vmem:[%s1 + $0xbc] sm:$0xf]
      %v10425 = vld [vmem:[%s1 + $0xc0] sm:$0xf]
      %v10426 = vld [vmem:[%s1 + $0xc4] sm:$0xf]
      %v10427 = vld [vmem:[%s1 + $0xc8] sm:$0xf]
      %v10428 = vld [vmem:[%s1 + $0xcc] sm:$0xf]
      %v10429 = vld [vmem:[%s1 + $0xd0] sm:$0xf]
      %v10430 = vld [vmem:[%s1 + $0xd4] sm:$0xf]
      %v10431 = vld [vmem:[%s1 + $0xd8] sm:$0xf]
      %v10432 = vld [vmem:[%s1 + $0xdc] sm:$0xf]
      %v10433 = vld [vmem:[%s1 + $0xe0] sm:$0xf]
      %v10434 = vld [vmem:[%s1 + $0xe4] sm:$0xf]
      %v10435 = vld [vmem:[%s1 + $0xe8] sm:$0xf]
      %v10436 = vld [vmem:[%s1 + $0xec] sm:$0xf]
      %v10437 = vld [vmem:[%s1 + $0xf0] sm:$0xf]
      %v10438 = vld [vmem:[%s1 + $0xf4] sm:$0xf]
      %v10439 = vld [vmem:[%s1 + $0xf8] sm:$0xf]
      %v10440 = vld [vmem:[%s1 + $0xfc] sm:$0xf]
      %v10441 = vld [vmem:[%s1 + $0x100] sm:$0xf]
      %v10442 = vld [vmem:[%s1 + $0x104] sm:$0xf]
      %v10443 = vld [vmem:[%s1 + $0x108] sm:$0xf]
      %v10444 = vld [vmem:[%s1 + $0x10c] sm:$0xf]
      %v10445 = vld [vmem:[%s1 + $0x110] sm:$0xf]
      %v10446 = vld [vmem:[%s1 + $0x114] sm:$0xf]
      %v10447 = vld [vmem:[%s1 + $0x118] sm:$0xf]
      %v10448 = vld [vmem:[%s1 + $0x11c] sm:$0xf]
      %v10449 = vld [vmem:[%s1 + $0x120] sm:$0xf]
      %v10450 = vld [vmem:[%s1 + $0x124] sm:$0xf]
      %v10451 = vld [vmem:[%s1 + $0x128] sm:$0xf]
      %v10452 = vld [vmem:[%s1 + $0x12c] sm:$0xf]
      %v10453 = vld [vmem:[%s1 + $0x130] sm:$0xf]
      %v10454 = vld [vmem:[%s1 + $0x134] sm:$0xf]
      %v10455 = vld [vmem:[%s1 + $0x138] sm:$0xf]
      %v10456 = vld [vmem:[%s1 + $0x13c] sm:$0xf]
      %v10457 = vld [vmem:[%s1 + $0x140] sm:$0xf]
      %v10458 = vld [vmem:[%s1 + $0x144] sm:$0xf]
      %v10459 = vld [vmem:[%s1 + $0x148] sm:$0xf]
      %v10460 = vld [vmem:[%s1 + $0x14c] sm:$0xf]
      %v10461 = vld [vmem:[%s1 + $0x150] sm:$0xf]
      %v10462 = vld [vmem:[%s1 + $0x154] sm:$0xf]
      %v10463 = vld [vmem:[%s1 + $0x158] sm:$0xf]
      %v10464 = vld [vmem:[%s1 + $0x15c] sm:$0xf]
      %v10465 = vld [vmem:[%s1 + $0x160] sm:$0xf]
      %v10466 = vld [vmem:[%s1 + $0x164] sm:$0xf]
      %v10467 = vld [vmem:[%s1 + $0x168] sm:$0xf]
      %v10468 = vld [vmem:[%s1 + $0x16c] sm:$0xf]
      %v10469 = vld [vmem:[%s1 + $0x170] sm:$0xf]
      %v10470 = vld [vmem:[%s1 + $0x174] sm:$0xf]
      %v10471 = vld [vmem:[%s1 + $0x178] sm:$0xf]
      %v10472 = vld [vmem:[%s1 + $0x17c] sm:$0xf]
      %v10473 = vld [vmem:[%s1 + $0x180] sm:$0xf]
      %v10474 = vld [vmem:[%s1 + $0x184] sm:$0xf]
      %v10475 = vld [vmem:[%s1 + $0x188] sm:$0xf]
      %v10476 = vld [vmem:[%s1 + $0x18c] sm:$0xf]
      %v10477 = vld [vmem:[%s1 + $0x190] sm:$0xf]
      %v10478 = vld [vmem:[%s1 + $0x194] sm:$0xf]
      %v10479 = vld [vmem:[%s1 + $0x198] sm:$0xf]
      %v10480 = vld [vmem:[%s1 + $0x19c] sm:$0xf]
      %v10481 = vld [vmem:[%s1 + $0x1a0] sm:$0xf]
      %v10482 = vld [vmem:[%s1 + $0x1a4] sm:$0xf]
      %v10483 = vld [vmem:[%s1 + $0x1a8] sm:$0xf]
      %v10484 = vld [vmem:[%s1 + $0x1ac] sm:$0xf]
      %v10485 = vld [vmem:[%s1 + $0x1b0] sm:$0xf]
      %v10486 = vld [vmem:[%s1 + $0x1b4] sm:$0xf]
      %v10487 = vld [vmem:[%s1 + $0x1b8] sm:$0xf]
      %v10488 = vld [vmem:[%s1 + $0x1bc] sm:$0xf]
      %v10489 = vld [vmem:[%s1 + $0x1c0] sm:$0xf]
      %v10490 = vld [vmem:[%s1 + $0x1c4] sm:$0xf]
      %v10491 = vld [vmem:[%s1 + $0x1c8] sm:$0xf]
      %v10492 = vld [vmem:[%s1 + $0x1cc] sm:$0xf]
      %v10493 = vld [vmem:[%s1 + $0x1d0] sm:$0xf]
      %v10494 = vld [vmem:[%s1 + $0x1d4] sm:$0xf]
      %v10495 = vld [vmem:[%s1 + $0x1d8] sm:$0xf]
      %v10496 = vld [vmem:[%s1 + $0x1dc] sm:$0xf]
      %v10497 = vld [vmem:[%s1 + $0x1e0] sm:$0xf]
      %v10498 = vld [vmem:[%s1 + $0x1e4] sm:$0xf]
      %v10499 = vld [vmem:[%s1 + $0x1e8] sm:$0xf]
      %v10500 = vld [vmem:[%s1 + $0x1ec] sm:$0xf]
      %v10501 = vld [vmem:[%s1 + $0x1f0] sm:$0xf]
      %v10502 = vld [vmem:[%s1 + $0x1f4] sm:$0xf]
      %v10503 = vld [vmem:[%s1 + $0x1f8] sm:$0xf]
      %v10504 = vld [vmem:[%s1 + $0x1fc] sm:$0xf]
      %v10505 = vld [vmem:[%s1 + $0x200] sm:$0xf]
      %v10506 = vld [vmem:[%s1 + $0x204] sm:$0xf]
      %v10507 = vld [vmem:[%s1 + $0x208] sm:$0xf]
      %v10508 = vld [vmem:[%s1 + $0x20c] sm:$0xf]
      %v10509 = vld [vmem:[%s1 + $0x210] sm:$0xf]
      %v10510 = vld [vmem:[%s1 + $0x214] sm:$0xf]
      %v10511 = vld [vmem:[%s1 + $0x218] sm:$0xf]
      %v10512 = vld [vmem:[%s1 + $0x21c] sm:$0xf]
      %v10513 = vld [vmem:[%s1 + $0x220] sm:$0xf]
      %v10514 = vld [vmem:[%s1 + $0x224] sm:$0xf]
      %v10515 = vld [vmem:[%s1 + $0x228] sm:$0xf]
      %v10516 = vld [vmem:[%s1 + $0x22c] sm:$0xf]
      %v10517 = vld [vmem:[%s1 + $0x230] sm:$0xf]
      %v10518 = vld [vmem:[%s1 + $0x234] sm:$0xf]
      %v10519 = vld [vmem:[%s1 + $0x238] sm:$0xf]
      %v10520 = vld [vmem:[%s1 + $0x23c] sm:$0xf]
      %v10521 = vld [vmem:[%s1 + $0x240] sm:$0xf]
      %v10522 = vld [vmem:[%s1 + $0x244] sm:$0xf]
      %v10523 = vld [vmem:[%s1 + $0x248] sm:$0xf]
      %v10524 = vld [vmem:[%s1 + $0x24c] sm:$0xf]
      %v10525 = vld [vmem:[%s1 + $0x250] sm:$0xf]
      %v10526 = vld [vmem:[%s1 + $0x254] sm:$0xf]
      %v10527 = vld [vmem:[%s1 + $0x258] sm:$0xf]
      %v10528 = vld [vmem:[%s1 + $0x25c] sm:$0xf]
      %v10529 = vld [vmem:[%s1 + $0x260] sm:$0xf]
      %v10530 = vld [vmem:[%s1 + $0x264] sm:$0xf]
      %v10531 = vld [vmem:[%s1 + $0x268] sm:$0xf]
      %v10532 = vld [vmem:[%s1 + $0x26c] sm:$0xf]
      %v10533 = vld [vmem:[%s1 + $0x270] sm:$0xf]
      %v10534 = vld [vmem:[%s1 + $0x274] sm:$0xf]
      %v10535 = vld [vmem:[%s1 + $0x278] sm:$0xf]
      %v10536 = vld [vmem:[%s1 + $0x27c] sm:$0xf]
      %v10537 = vld [vmem:[%s2] sm:$0x1]
      %v10539 = vperm.slane %v10537, 0
      %v10701 = vunpack.c.l.b16 %v10377
      %v10702 = vunpack.c.l.b16 %v10378
      %v10703 = vunpack.c.l.b16 %v10379
      %v10704 = vunpack.c.l.b16 %v10380
      %v10705 = vunpack.c.l.b16 %v10381
      %v10706 = vunpack.c.l.b16 %v10382
      %v10707 = vunpack.c.l.b16 %v10383
      %v10708 = vunpack.c.l.b16 %v10384
      %v10709 = vunpack.c.l.b16 %v10385
      %v10710 = vunpack.c.l.b16 %v10386
      %v10711 = vunpack.c.l.b16 %v10387
      %v10712 = vunpack.c.l.b16 %v10388
      %v10713 = vunpack.c.l.b16 %v10389
      %v10714 = vunpack.c.l.b16 %v10390
      %v10715 = vunpack.c.l.b16 %v10391
      %v10716 = vunpack.c.l.b16 %v10392
      %v10717 = vunpack.c.l.b16 %v10393
      %v10718 = vunpack.c.l.b16 %v10394
      %v10719 = vunpack.c.l.b16 %v10395
      %v10720 = vunpack.c.l.b16 %v10396
      %v10721 = vunpack.c.l.b16 %v10397
      %v10722 = vunpack.c.l.b16 %v10398
      %v10723 = vunpack.c.l.b16 %v10399
      %v10724 = vunpack.c.l.b16 %v10400
      %v10725 = vunpack.c.l.b16 %v10401
      %v10726 = vunpack.c.l.b16 %v10402
      %v10727 = vunpack.c.l.b16 %v10403
      %v10728 = vunpack.c.l.b16 %v10404
      %v10729 = vunpack.c.l.b16 %v10405
      %v10730 = vunpack.c.l.b16 %v10406
      %v10731 = vunpack.c.l.b16 %v10407
      %v10732 = vunpack.c.l.b16 %v10408
      %v10733 = vunpack.c.l.b16 %v10409
      %v10734 = vunpack.c.l.b16 %v10410
      %v10735 = vunpack.c.l.b16 %v10411
      %v10736 = vunpack.c.l.b16 %v10412
      %v10737 = vunpack.c.l.b16 %v10413
      %v10738 = vunpack.c.l.b16 %v10414
      %v10739 = vunpack.c.l.b16 %v10415
      %v10740 = vunpack.c.l.b16 %v10416
      %v10741 = vunpack.c.l.b16 %v10417
      %v10742 = vunpack.c.l.b16 %v10418
      %v10743 = vunpack.c.l.b16 %v10419
      %v10744 = vunpack.c.l.b16 %v10420
      %v10745 = vunpack.c.l.b16 %v10421
      %v10746 = vunpack.c.l.b16 %v10422
      %v10747 = vunpack.c.l.b16 %v10423
      %v10748 = vunpack.c.l.b16 %v10424
      %v10749 = vunpack.c.l.b16 %v10425
      %v10750 = vunpack.c.l.b16 %v10426
      %v10751 = vunpack.c.l.b16 %v10427
      %v10752 = vunpack.c.l.b16 %v10428
      %v10753 = vunpack.c.l.b16 %v10429
      %v10754 = vunpack.c.l.b16 %v10430
      %v10755 = vunpack.c.l.b16 %v10431
      %v10756 = vunpack.c.l.b16 %v10432
      %v10757 = vunpack.c.l.b16 %v10433
      %v10758 = vunpack.c.l.b16 %v10434
      %v10759 = vunpack.c.l.b16 %v10435
      %v10760 = vunpack.c.l.b16 %v10436
      %v10761 = vunpack.c.l.b16 %v10437
      %v10762 = vunpack.c.l.b16 %v10438
      %v10763 = vunpack.c.l.b16 %v10439
      %v10764 = vunpack.c.l.b16 %v10440
      %v10765 = vunpack.c.l.b16 %v10441
      %v10766 = vunpack.c.l.b16 %v10442
      %v10767 = vunpack.c.l.b16 %v10443
      %v10768 = vunpack.c.l.b16 %v10444
      %v10769 = vunpack.c.l.b16 %v10445
      %v10770 = vunpack.c.l.b16 %v10446
      %v10771 = vunpack.c.l.b16 %v10447
      %v10772 = vunpack.c.l.b16 %v10448
      %v10773 = vunpack.c.l.b16 %v10449
      %v10774 = vunpack.c.l.b16 %v10450
      %v10775 = vunpack.c.l.b16 %v10451
      %v10776 = vunpack.c.l.b16 %v10452
      %v10777 = vunpack.c.l.b16 %v10453
      %v10778 = vunpack.c.l.b16 %v10454
      %v10779 = vunpack.c.l.b16 %v10455
      %v10780 = vunpack.c.l.b16 %v10456
      %v10781 = vunpack.c.l.b16 %v10457
      %v10782 = vunpack.c.l.b16 %v10458
      %v10783 = vunpack.c.l.b16 %v10459
      %v10784 = vunpack.c.l.b16 %v10460
      %v10785 = vunpack.c.l.b16 %v10461
      %v10786 = vunpack.c.l.b16 %v10462
      %v10787 = vunpack.c.l.b16 %v10463
      %v10788 = vunpack.c.l.b16 %v10464
      %v10789 = vunpack.c.l.b16 %v10465
      %v10790 = vunpack.c.l.b16 %v10466
      %v10791 = vunpack.c.l.b16 %v10467
      %v10792 = vunpack.c.l.b16 %v10468
      %v10793 = vunpack.c.l.b16 %v10469
      %v10794 = vunpack.c.l.b16 %v10470
      %v10795 = vunpack.c.l.b16 %v10471
      %v10796 = vunpack.c.l.b16 %v10472
      %v10797 = vunpack.c.l.b16 %v10473
      %v10798 = vunpack.c.l.b16 %v10474
      %v10799 = vunpack.c.l.b16 %v10475
      %v10800 = vunpack.c.l.b16 %v10476
      %v10801 = vunpack.c.l.b16 %v10477
      %v10802 = vunpack.c.l.b16 %v10478
      %v10803 = vunpack.c.l.b16 %v10479
      %v10804 = vunpack.c.l.b16 %v10480
      %v10805 = vunpack.c.l.b16 %v10481
      %v10806 = vunpack.c.l.b16 %v10482
      %v10807 = vunpack.c.l.b16 %v10483
      %v10808 = vunpack.c.l.b16 %v10484
      %v10809 = vunpack.c.l.b16 %v10485
      %v10810 = vunpack.c.l.b16 %v10486
      %v10811 = vunpack.c.l.b16 %v10487
      %v10812 = vunpack.c.l.b16 %v10488
      %v10813 = vunpack.c.l.b16 %v10489
      %v10814 = vunpack.c.l.b16 %v10490
      %v10815 = vunpack.c.l.b16 %v10491
      %v10816 = vunpack.c.l.b16 %v10492
      %v10817 = vunpack.c.l.b16 %v10493
      %v10818 = vunpack.c.l.b16 %v10494
      %v10819 = vunpack.c.l.b16 %v10495
      %v10820 = vunpack.c.l.b16 %v10496
      %v10821 = vunpack.c.l.b16 %v10497
      %v10822 = vunpack.c.l.b16 %v10498
      %v10823 = vunpack.c.l.b16 %v10499
      %v10824 = vunpack.c.l.b16 %v10500
      %v10825 = vunpack.c.l.b16 %v10501
      %v10826 = vunpack.c.l.b16 %v10502
      %v10827 = vunpack.c.l.b16 %v10503
      %v10828 = vunpack.c.l.b16 %v10504
      %v10829 = vunpack.c.l.b16 %v10505
      %v10830 = vunpack.c.l.b16 %v10506
      %v10831 = vunpack.c.l.b16 %v10507
      %v10832 = vunpack.c.l.b16 %v10508
      %v10833 = vunpack.c.l.b16 %v10509
      %v10834 = vunpack.c.l.b16 %v10510
      %v10835 = vunpack.c.l.b16 %v10511
      %v10836 = vunpack.c.l.b16 %v10512
      %v10837 = vunpack.c.l.b16 %v10513
      %v10838 = vunpack.c.l.b16 %v10514
      %v10839 = vunpack.c.l.b16 %v10515
      %v10840 = vunpack.c.l.b16 %v10516
      %v10841 = vunpack.c.l.b16 %v10517
      %v10842 = vunpack.c.l.b16 %v10518
      %v10843 = vunpack.c.l.b16 %v10519
      %v10844 = vunpack.c.l.b16 %v10520
      %v10845 = vunpack.c.l.b16 %v10521
      %v10846 = vunpack.c.l.b16 %v10522
      %v10847 = vunpack.c.l.b16 %v10523
      %v10848 = vunpack.c.l.b16 %v10524
      %v10849 = vunpack.c.l.b16 %v10525
      %v10850 = vunpack.c.l.b16 %v10526
      %v10851 = vunpack.c.l.b16 %v10527
      %v10852 = vunpack.c.l.b16 %v10528
      %v10853 = vunpack.c.l.b16 %v10529
      %v10854 = vunpack.c.l.b16 %v10530
      %v10855 = vunpack.c.l.b16 %v10531
      %v10856 = vunpack.c.l.b16 %v10532
      %v10857 = vunpack.c.l.b16 %v10533
      %v10858 = vunpack.c.l.b16 %v10534
      %v10859 = vunpack.c.l.b16 %v10535
      %v10860 = vunpack.c.l.b16 %v10536
      %v10861 = vpack.c.b16 %v10702, %v10701
      %v10862 = vpack.c.b16 %v10704, %v10703
      %v10863 = vpack.c.b16 %v10706, %v10705
      %v10864 = vpack.c.b16 %v10708, %v10707
      %v10865 = vpack.c.b16 %v10710, %v10709
      %v10866 = vpack.c.b16 %v10712, %v10711
      %v10867 = vpack.c.b16 %v10714, %v10713
      %v10868 = vpack.c.b16 %v10716, %v10715
      %v10869 = vpack.c.b16 %v10718, %v10717
      %v10870 = vpack.c.b16 %v10720, %v10719
      %v10871 = vpack.c.b16 %v10722, %v10721
      %v10872 = vpack.c.b16 %v10724, %v10723
      %v10873 = vpack.c.b16 %v10726, %v10725
      %v10874 = vpack.c.b16 %v10728, %v10727
      %v10875 = vpack.c.b16 %v10730, %v10729
      %v10876 = vpack.c.b16 %v10732, %v10731
      %v10877 = vpack.c.b16 %v10734, %v10733
      %v10878 = vpack.c.b16 %v10736, %v10735
      %v10879 = vpack.c.b16 %v10738, %v10737
      %v10880 = vpack.c.b16 %v10740, %v10739
      %v10881 = vpack.c.b16 %v10742, %v10741
      %v10882 = vpack.c.b16 %v10744, %v10743
      %v10883 = vpack.c.b16 %v10746, %v10745
      %v10884 = vpack.c.b16 %v10748, %v10747
      %v10885 = vpack.c.b16 %v10750, %v10749
      %v10886 = vpack.c.b16 %v10752, %v10751
      %v10887 = vpack.c.b16 %v10754, %v10753
      %v10888 = vpack.c.b16 %v10756, %v10755
      %v10889 = vpack.c.b16 %v10758, %v10757
      %v10890 = vpack.c.b16 %v10760, %v10759
      %v10891 = vpack.c.b16 %v10762, %v10761
      %v10892 = vpack.c.b16 %v10764, %v10763
      %v10893 = vpack.c.b16 %v10766, %v10765
      %v10894 = vpack.c.b16 %v10768, %v10767
      %v10895 = vpack.c.b16 %v10770, %v10769
      %v10896 = vpack.c.b16 %v10772, %v10771
      %v10897 = vpack.c.b16 %v10774, %v10773
      %v10898 = vpack.c.b16 %v10776, %v10775
      %v10899 = vpack.c.b16 %v10778, %v10777
      %v10900 = vpack.c.b16 %v10780, %v10779
      %v10901 = vpack.c.b16 %v10782, %v10781
      %v10902 = vpack.c.b16 %v10784, %v10783
      %v10903 = vpack.c.b16 %v10786, %v10785
      %v10904 = vpack.c.b16 %v10788, %v10787
      %v10905 = vpack.c.b16 %v10790, %v10789
      %v10906 = vpack.c.b16 %v10792, %v10791
      %v10907 = vpack.c.b16 %v10794, %v10793
      %v10908 = vpack.c.b16 %v10796, %v10795
      %v10909 = vpack.c.b16 %v10798, %v10797
      %v10910 = vpack.c.b16 %v10800, %v10799
      %v10911 = vpack.c.b16 %v10802, %v10801
      %v10912 = vpack.c.b16 %v10804, %v10803
      %v10913 = vpack.c.b16 %v10806, %v10805
      %v10914 = vpack.c.b16 %v10808, %v10807
      %v10915 = vpack.c.b16 %v10810, %v10809
      %v10916 = vpack.c.b16 %v10812, %v10811
      %v10917 = vpack.c.b16 %v10814, %v10813
      %v10918 = vpack.c.b16 %v10816, %v10815
      %v10919 = vpack.c.b16 %v10818, %v10817
      %v10920 = vpack.c.b16 %v10820, %v10819
      %v10921 = vpack.c.b16 %v10822, %v10821
      %v10922 = vpack.c.b16 %v10824, %v10823
      %v10923 = vpack.c.b16 %v10826, %v10825
      %v10924 = vpack.c.b16 %v10828, %v10827
      %v10925 = vpack.c.b16 %v10830, %v10829
      %v10926 = vpack.c.b16 %v10832, %v10831
      %v10927 = vpack.c.b16 %v10834, %v10833
      %v10928 = vpack.c.b16 %v10836, %v10835
      %v10929 = vpack.c.b16 %v10838, %v10837
      %v10930 = vpack.c.b16 %v10840, %v10839
      %v10931 = vpack.c.b16 %v10842, %v10841
      %v10932 = vpack.c.b16 %v10844, %v10843
      %v10933 = vpack.c.b16 %v10846, %v10845
      %v10934 = vpack.c.b16 %v10848, %v10847
      %v10935 = vpack.c.b16 %v10850, %v10849
      %v10936 = vpack.c.b16 %v10852, %v10851
      %v10937 = vpack.c.b16 %v10854, %v10853
      %v10938 = vpack.c.b16 %v10856, %v10855
      %v10939 = vpack.c.b16 %v10858, %v10857
      %v10940 = vpack.c.b16 %v10860, %v10859
      %11021 = vmatpush.bf16.msra.mxu0 %v10868
      %11022 = vmatpush.bf16.msra.mxu0 %v10867
      %11023 = vmatpush.bf16.msra.mxu0 %v10866
      %11024 = vmatpush.bf16.msra.mxu0 %v10865
      %11025 = vmatpush.bf16.msra.mxu0 %v10864
      %11026 = vmatpush.bf16.msra.mxu0 %v10863
      %11027 = vmatpush.bf16.msra.mxu0 %v10862
      %11028 = vmatpush.bf16.msra.mxu0 %v10861
      %11029 = vmatmul.bf16.gmra.mxu0 %v10367
      %v11030 = vpop.f32.mrf.mxu0
      %v11031 = vadd.f32 %v10539, %v11030
      %v11032 = vpop.f32.mrf.mxu0
      %11033 = vdwg.mxu0
      %11034 = vmatpush.bf16.msra.mxu0 %v10876
      %11035 = vmatpush.bf16.msra.mxu0 %v10875
      %11036 = vmatpush.bf16.msra.mxu0 %v10874
      %11037 = vmatpush.bf16.msra.mxu0 %v10873
      %11038 = vmatpush.bf16.msra.mxu0 %v10872
      %11039 = vmatpush.bf16.msra.mxu0 %v10871
      %11040 = vmatpush.bf16.msra.mxu0 %v10870
      %11041 = vmatpush.bf16.msra.mxu0 %v10869
      %11042 = vmatmul.bf16.gmra.mxu0 %v10368
      %v11043 = vpop.f32.mrf.mxu0
      %v11044 = vadd.f32 %v11031, %v11043
      %v11045 = vpop.f32.mrf.mxu0
      %11046 = vdwg.mxu0
      %11047 = vmatpush.bf16.msra.mxu0 %v10884
      %11048 = vmatpush.bf16.msra.mxu0 %v10883
      %11049 = vmatpush.bf16.msra.mxu0 %v10882
      %11050 = vmatpush.bf16.msra.mxu0 %v10881
      %11051 = vmatpush.bf16.msra.mxu0 %v10880
      %11052 = vmatpush.bf16.msra.mxu0 %v10879
      %11053 = vmatpush.bf16.msra.mxu0 %v10878
      %11054 = vmatpush.bf16.msra.mxu0 %v10877
      %11055 = vmatmul.bf16.gmra.mxu0 %v10369
      %v11056 = vpop.f32.mrf.mxu0
      %v11057 = vadd.f32 %v11044, %v11056
      %v11058 = vpop.f32.mrf.mxu0
      %11059 = vdwg.mxu0
      %11060 = vmatpush.bf16.msra.mxu0 %v10892
      %11061 = vmatpush.bf16.msra.mxu0 %v10891
      %11062 = vmatpush.bf16.msra.mxu0 %v10890
      %11063 = vmatpush.bf16.msra.mxu0 %v10889
      %11064 = vmatpush.bf16.msra.mxu0 %v10888
      %11065 = vmatpush.bf16.msra.mxu0 %v10887
      %11066 = vmatpush.bf16.msra.mxu0 %v10886
      %11067 = vmatpush.bf16.msra.mxu0 %v10885
      %11068 = vmatmul.bf16.gmra.mxu0 %v10370
      %v11069 = vpop.f32.mrf.mxu0
      %v11070 = vadd.f32 %v11057, %v11069
      %v11071 = vpop.f32.mrf.mxu0
      %11072 = vdwg.mxu0
      %11073 = vmatpush.bf16.msra.mxu0 %v10900
      %11074 = vmatpush.bf16.msra.mxu0 %v10899
      %11075 = vmatpush.bf16.msra.mxu0 %v10898
      %11076 = vmatpush.bf16.msra.mxu0 %v10897
      %11077 = vmatpush.bf16.msra.mxu0 %v10896
      %11078 = vmatpush.bf16.msra.mxu0 %v10895
      %11079 = vmatpush.bf16.msra.mxu0 %v10894
      %11080 = vmatpush.bf16.msra.mxu0 %v10893
      %11081 = vmatmul.bf16.gmra.mxu0 %v10371
      %v11082 = vpop.f32.mrf.mxu0
      %v11083 = vadd.f32 %v11070, %v11082
      %v11084 = vpop.f32.mrf.mxu0
      %11085 = vdwg.mxu0
      %11086 = vmatpush.bf16.msra.mxu0 %v10908
      %11087 = vmatpush.bf16.msra.mxu0 %v10907
      %11088 = vmatpush.bf16.msra.mxu0 %v10906
      %11089 = vmatpush.bf16.msra.mxu0 %v10905
      %11090 = vmatpush.bf16.msra.mxu0 %v10904
      %11091 = vmatpush.bf16.msra.mxu0 %v10903
      %11092 = vmatpush.bf16.msra.mxu0 %v10902
      %11093 = vmatpush.bf16.msra.mxu0 %v10901
      %11094 = vmatmul.bf16.gmra.mxu0 %v10372
      %v11095 = vpop.f32.mrf.mxu0
      %v11096 = vadd.f32 %v11083, %v11095
      %v11097 = vpop.f32.mrf.mxu0
      %11098 = vdwg.mxu0
      %11099 = vmatpush.bf16.msra.mxu0 %v10916
      %11100 = vmatpush.bf16.msra.mxu0 %v10915
      %11101 = vmatpush.bf16.msra.mxu0 %v10914
      %11102 = vmatpush.bf16.msra.mxu0 %v10913
      %11103 = vmatpush.bf16.msra.mxu0 %v10912
      %11104 = vmatpush.bf16.msra.mxu0 %v10911
      %11105 = vmatpush.bf16.msra.mxu0 %v10910
      %11106 = vmatpush.bf16.msra.mxu0 %v10909
      %11107 = vmatmul.bf16.gmra.mxu0 %v10373
      %v11108 = vpop.f32.mrf.mxu0
      %v11109 = vadd.f32 %v11096, %v11108
      %v11110 = vpop.f32.mrf.mxu0
      %11111 = vdwg.mxu0
      %11112 = vmatpush.bf16.msra.mxu0 %v10924
      %11113 = vmatpush.bf16.msra.mxu0 %v10923
      %11114 = vmatpush.bf16.msra.mxu0 %v10922
      %11115 = vmatpush.bf16.msra.mxu0 %v10921
      %11116 = vmatpush.bf16.msra.mxu0 %v10920
      %11117 = vmatpush.bf16.msra.mxu0 %v10919
      %11118 = vmatpush.bf16.msra.mxu0 %v10918
      %11119 = vmatpush.bf16.msra.mxu0 %v10917
      %11120 = vmatmul.bf16.gmra.mxu0 %v10374
      %v11121 = vpop.f32.mrf.mxu0
      %v11122 = vadd.f32 %v11109, %v11121
      %v11123 = vpop.f32.mrf.mxu0
      %11124 = vdwg.mxu0
      %11125 = vmatpush.bf16.msra.mxu0 %v10932
      %11126 = vmatpush.bf16.msra.mxu0 %v10931
      %11127 = vmatpush.bf16.msra.mxu0 %v10930
      %11128 = vmatpush.bf16.msra.mxu0 %v10929
      %11129 = vmatpush.bf16.msra.mxu0 %v10928
      %11130 = vmatpush.bf16.msra.mxu0 %v10927
      %11131 = vmatpush.bf16.msra.mxu0 %v10926
      %11132 = vmatpush.bf16.msra.mxu0 %v10925
      %11133 = vmatmul.bf16.gmra.mxu0 %v10375
      %v11134 = vpop.f32.mrf.mxu0
      %v11135 = vadd.f32 %v11122, %v11134
      %v11136 = vpop.f32.mrf.mxu0
      %11137 = vdwg.mxu0
      %11138 = vmatpush.bf16.msra.mxu0 %v10940
      %11139 = vmatpush.bf16.msra.mxu0 %v10939
      %11140 = vmatpush.bf16.msra.mxu0 %v10938
      %11141 = vmatpush.bf16.msra.mxu0 %v10937
      %11142 = vmatpush.bf16.msra.mxu0 %v10936
      %11143 = vmatpush.bf16.msra.mxu0 %v10935
      %11144 = vmatpush.bf16.msra.mxu0 %v10934
      %11145 = vmatpush.bf16.msra.mxu0 %v10933
      %11146 = vmatmul.bf16.gmra.mxu0 %v10376
      %v11147 = vpop.f32.mrf.mxu0
      %v11148 = vadd.f32 %v11135, %v11147
      %v11149 = vpop.f32.mrf.mxu0
      %11150 = vdwg.mxu0
      %v11151 = vmax.f32 %v11148, 0.0
      %v11152 = vpack.c.bf16 %v11151, %v11151
      %v11153 = vld [vmem:[%s3] sm:$0xf]
      %v11154 = vld [vmem:[%s3 + $0x4] sm:$0xf]
      %v11155 = vld [vmem:[%s3 + $0x8] sm:$0xf]
      %v11156 = vld [vmem:[%s3 + $0xc] sm:$0xf]
      %v11157 = vld [vmem:[%s3 + $0x10] sm:$0xf]
      %v11158 = vld [vmem:[%s3 + $0x14] sm:$0xf]
      %v11159 = vld [vmem:[%s3 + $0x18] sm:$0xf]
      %v11160 = vld [vmem:[%s3 + $0x1c] sm:$0xf]
      %v11161 = vld [vmem:[%s3 + $0x20] sm:$0xf]
      %v11162 = vld [vmem:[%s3 + $0x24] sm:$0xf]
      %v11163 = vld [vmem:[%s3 + $0x28] sm:$0xf]
      %v11164 = vld [vmem:[%s3 + $0x2c] sm:$0xf]
      %v11165 = vld [vmem:[%s3 + $0x30] sm:$0xf]
      %v11166 = vld [vmem:[%s3 + $0x34] sm:$0xf]
      %v11167 = vld [vmem:[%s3 + $0x38] sm:$0xf]
      %v11168 = vld [vmem:[%s3 + $0x3c] sm:$0xf]
      %v11169 = vld [vmem:[%s4] sm:$0x1]
      %v11171 = vperm.slane %v11169, 0
      %v11189 = vunpack.c.l.b16 %v11153
      %v11190 = vunpack.c.l.b16 %v11154
      %v11191 = vunpack.c.l.b16 %v11155
      %v11192 = vunpack.c.l.b16 %v11156
      %v11193 = vunpack.c.l.b16 %v11157
      %v11194 = vunpack.c.l.b16 %v11158
      %v11195 = vunpack.c.l.b16 %v11159
      %v11196 = vunpack.c.l.b16 %v11160
      %v11197 = vunpack.c.l.b16 %v11161
      %v11198 = vunpack.c.l.b16 %v11162
      %v11199 = vunpack.c.l.b16 %v11163
      %v11200 = vunpack.c.l.b16 %v11164
      %v11201 = vunpack.c.l.b16 %v11165
      %v11202 = vunpack.c.l.b16 %v11166
      %v11203 = vunpack.c.l.b16 %v11167
      %v11204 = vunpack.c.l.b16 %v11168
      %v11205 = vpack.c.b16 %v11190, %v11189
      %v11206 = vpack.c.b16 %v11192, %v11191
      %v11207 = vpack.c.b16 %v11194, %v11193
      %v11208 = vpack.c.b16 %v11196, %v11195
      %v11209 = vpack.c.b16 %v11198, %v11197
      %v11210 = vpack.c.b16 %v11200, %v11199
      %v11211 = vpack.c.b16 %v11202, %v11201
      %v11212 = vpack.c.b16 %v11204, %v11203
      %11221 = vmatpush.bf16.msra.mxu0 %v11212
      %11222 = vmatpush.bf16.msra.mxu0 %v11211
      %11223 = vmatpush.bf16.msra.mxu0 %v11210
      %11224 = vmatpush.bf16.msra.mxu0 %v11209
      %11225 = vmatpush.bf16.msra.mxu0 %v11208
      %11226 = vmatpush.bf16.msra.mxu0 %v11207
      %11227 = vmatpush.bf16.msra.mxu0 %v11206
      %11228 = vmatpush.bf16.msra.mxu0 %v11205
      %11229 = vmatmul.bf16.gmra.mxu0 %v11152
      %v11230 = vpop.f32.mrf.mxu0
      %v11231 = vadd.f32 %v11171, %v11230
      %v11232 = vpop.f32.mrf.mxu0
      %11233 = vdwg.mxu0
      %11234 = vst [vmem:[#allocation3] sm:$0x3] %v11231
    $region33: #{fake_image_model_head.1} parent=1 // pred_fallthru
      _
    // Predicated region
    $region34: #{fake_image_model_head.1} parent=1 // pred_check
      _
    $region35: #{fake_image_model_head.1} parent=1 // pred_check_branch
      %11236 = sbr.rel (0) target = $region37
    $region36: #{fake_image_model_head.1} parent=1 // pred_region
      %11238 = vsyncadd [#allocation4], 0
      %s11240 = sshll.u32 [#allocation3], 4
      %s11241 = int_to_ptr.vmem [resolvable:$true] %s11240
      %s11242 = sshll.u32 %s6, 4
      %s11243 = int_to_ptr.hbm [resolvable:$true] %s11242
      %11245 = dma.vmem_to_hbm [thread:$0]  %s11241, 32, %s11243, [#allocation4]
    $region37: #{fake_image_model_head.1} parent=1 // pred_fallthru
      _
    // Predicated region
    $region38: #{fake_image_model_head.1} parent=1 // pred_check
      _
    $region39: #{fake_image_model_head.1} parent=1 // pred_check_branch
      %11247 = sbr.rel (0) target = $region41
    $region40: #{fake_image_model_head.1} parent=1 // pred_region
      %11249 = dma.done [#allocation4], 32
    $region41: #{fake_image_model_head.1} parent=1 // pred_fallthru
      _
    %11250 = vsyncpa [#allocation4], 1

</llo_original>
